<compile_context>
chip_gen: v6e
topology: v6e:2x2x1
jax: 0.10.0
libtpu: 0.0.40
codegen_flags: <defaults>
</compile_context>

<pallas_src>
import functools

import jax
import jax.numpy as jnp
from jax.experimental import pallas as pl
from jax.experimental.pallas import tpu as pltpu


def _siren_kernel(*refs, n_linear, output_linear):
    """Whole-MLP hot path for one lane-tile of points.

    refs = (x_ref, w0, b0, w1, b1, ..., w_{L-1}, b_{L-1}, o_ref)
    x_ref : (in_c, tm)   -- channels on sublanes, points on lanes
    w_i   : (out_i, in_i) -- scale/omega already folded in by the wrapper
    b_i   : (out_i, 1)    -- scale/omega already folded in by the wrapper
    o_ref : (out_c, tm)
    """
    x_ref, o_ref = refs[0], refs[-1]
    wb_refs = refs[1:-1]

    h = x_ref[...].astype(jnp.float32)
    for li in range(n_linear):
        w = wb_refs[2 * li][...]
        b = wb_refs[2 * li + 1][...]
        h = jnp.dot(w, h, preferred_element_type=jnp.float32) + b
        if li < n_linear - 1 or not output_linear:
            h = jnp.sin(h)

    o_ref[...] = h.astype(o_ref.dtype)


def _pick_tile(n_points, tm_req):
    """Lane-tile size: multiple of 128, keep >= 4 grid steps when N allows."""
    tm = max(128, (int(tm_req) // 128) * 128)
    tm = min(tm, max(128, pl.cdiv(n_points, 128) * 128))
    while tm > 128 and pl.cdiv(n_points, tm) < 4:
        tm = max(128, ((tm // 2) // 128) * 128)
    return tm


def siren_forward(x, params, *, scale=100.0, omega=30.0,
                  output_linear=True, tm=512):
    """x: (N, in_c). params: list of (W, b) pairs matching the PyTorch linear_maps."""
    N, in_c = x.shape
    out_c = params[-1][0].shape[0]
    n_lin = len(params)

    # One-time constant fold: sin(m*(xW^T+b)) == sin(x(mW)^T + m b).
    folded = []
    for i, (w, b) in enumerate(params):
        if i == 0:
            m = float(scale)
        elif i < n_lin - 1:
            m = float(omega)
        else:
            m = float(omega) if not output_linear else 1.0
        wf = jnp.asarray(w, jnp.float32) * m
        bf = (jnp.asarray(b, jnp.float32) * m).reshape(-1, 1)
        folded.append((wf, bf))

    tile = _pick_tile(N, tm)
    n_pad = pl.cdiv(N, tile) * tile

    # Transpose so the point axis maps to lanes; zero-pad ragged N.
    xt = jnp.asarray(x, jnp.float32).T                      # (in_c, N)
    if n_pad != N:
        xt = jnp.pad(xt, ((0, 0), (0, n_pad - N)))

    flat_args = [xt]
    in_specs = [pl.BlockSpec((in_c, tile), lambda i: (0, i))]
    for (wf, bf) in folded:
        flat_args.append(wf)
        flat_args.append(bf)
        # Small resident weights/biases: full block, constant index map.
        # (Left on default buffering to keep the lowering simple; they never
        #  change across the grid so DMA traffic is negligible.)
        in_specs.append(pl.BlockSpec(wf.shape, lambda i: (0, 0)))
        in_specs.append(pl.BlockSpec(bf.shape, lambda i: (0, 0)))

    kernel = functools.partial(_siren_kernel,
                               n_linear=n_lin,
                               output_linear=bool(output_linear))

    out_t = pl.pallas_call(
        kernel,
        out_shape=jax.ShapeDtypeStruct((out_c, n_pad), x.dtype),
        grid_spec=pltpu.PrefetchScalarGridSpec(
            num_scalar_prefetch=0,
            grid=(n_pad // tile,),
            in_specs=in_specs,
            out_specs=pl.BlockSpec((out_c, tile), lambda i: (0, i)),
        ),
        compiler_params=pltpu.CompilerParams(
            dimension_semantics=("parallel",)),
    )(*flat_args)

    # Layout plumbing back to the PyTorch-facing (N, out_c) shape.
    return {'output': out_t[:, :N].T}


def init_siren_params(key, in_channels, interm_channels, out_channels,
                      n_layers=4, omega=30.0):
    """Deterministic init mirroring the PyTorch module's shapes + init scheme."""
    dims = ([(in_channels, interm_channels)]
            + [(interm_channels, interm_channels)] * (n_layers - 1)
            + [(interm_channels, out_channels)])
    params = []
    for idx, (fan_in, fan_out) in enumerate(dims):
        key, kw, kb = jax.random.split(key, 3)
        if idx == 0:
            bound_w = 1.0 / in_channels
        else:
            bound_w = jnp.sqrt(6.0 / interm_channels) / omega
        w = jax.random.uniform(kw, (fan_out, fan_in), jnp.float32,
                               -bound_w, bound_w)
        # PyTorch nn.Linear default bias init: U(-1/sqrt(fan_in), 1/sqrt(fan_in))
        bound_b = 1.0 / jnp.sqrt(fan_in)
        b = jax.random.uniform(kb, (fan_out,), jnp.float32, -bound_b, bound_b)
        params.append((w, b))
    return params


def siren_reference(x, params, *, scale=100.0, omega=30.0, output_linear=True):
    """Pure-JAX reference with the exact PyTorch op ordering (unfolded)."""
    h = x
    n = len(params)
    for i in range(n - 1):
        w, b = params[i]
        mult = scale if i == 0 else omega
        h = jnp.sin(mult * (h @ w.T + b))
    w, b = params[-1]
    h = h @ w.T + b
    if not output_linear:
        h = jnp.sin(omega * h)
    return h


if __name__ == "__main__":
    key = jax.random.PRNGKey(0)
    in_channels, interm_channels, out_channels = 2, 32, 3
    n_layers = 4
    scale, omega = 100.0, 30.0

    k_x, k_p = jax.random.split(key)
    params = init_siren_params(k_p, in_channels, interm_channels, out_channels,
                               n_layers=n_layers, omega=omega)

    # Main check: N a multiple of the tile.
    N = 2048
    x = jax.random.uniform(k_x, (N, in_channels), jnp.float32, -1.0, 1.0)
    out = siren_forward(x, params, scale=scale, omega=omega,
                        output_linear=True, tm=512)
    y = jax.block_until_ready(out['output'])
    y_ref = siren_reference(x, params, scale=scale, omega=omega,
                            output_linear=True)
    assert y.shape == (N, out_channels)
    assert jnp.allclose(y, y_ref, atol=1e-3, rtol=1e-3), "mismatch vs reference"

    # Ragged-N check: exercises the pad + slice path (and output_linear=False).
    N2 = 1000
    x2 = jax.random.uniform(jax.random.PRNGKey(1), (N2, in_channels),
                            jnp.float32, -1.0, 1.0)
    out2 = siren_forward(x2, params, scale=scale, omega=omega,
                         output_linear=False)
    y2 = jax.block_until_ready(out2['output'])
    y2_ref = siren_reference(x2, params, scale=scale, omega=omega,
                             output_linear=False)
    assert y2.shape == (N2, out_channels)
    assert jnp.allclose(y2, y2_ref, atol=1e-3, rtol=1e-3), "mismatch (ragged N)"

    print("KERNEL_OK")
</pallas_src>

<mosaic_0001>
module attributes {stable_mosaic.version = 11 : i64} {
  func.func @_siren_kernel(%arg0: i32, %arg1: memref<2x512xf32, #tpu.memory_space<vmem>>, %arg2: memref<32x2xf32, #tpu.memory_space<vmem>>, %arg3: memref<32x1xf32, #tpu.memory_space<vmem>>, %arg4: memref<32x32xf32, #tpu.memory_space<vmem>>, %arg5: memref<32x1xf32, #tpu.memory_space<vmem>>, %arg6: memref<32x32xf32, #tpu.memory_space<vmem>>, %arg7: memref<32x1xf32, #tpu.memory_space<vmem>>, %arg8: memref<32x32xf32, #tpu.memory_space<vmem>>, %arg9: memref<32x1xf32, #tpu.memory_space<vmem>>, %arg10: memref<3x32xf32, #tpu.memory_space<vmem>>, %arg11: memref<3x1xf32, #tpu.memory_space<vmem>>, %arg12: memref<3x512xf32, #tpu.memory_space<vmem>>) attributes {dimension_semantics = [#tpu.dimension_semantics<parallel>], iteration_bounds = array<i64: 4>, scalar_prefetch = 0 : i64, scratch_operands = 0 : i64, tpu.core_type = #tpu.core_type<tc>, window_params = [{transform_indices = @transform_0, window_bounds = array<i64: 2, 512>}, {pipeline_mode = #tpu.pipeline_mode<synchronous>, transform_indices = @transform_1, window_bounds = array<i64: 32, 2>}, {pipeline_mode = #tpu.pipeline_mode<synchronous>, transform_indices = @transform_2, window_bounds = array<i64: 32, 1>}, {pipeline_mode = #tpu.pipeline_mode<synchronous>, transform_indices = @transform_3, window_bounds = array<i64: 32, 32>}, {pipeline_mode = #tpu.pipeline_mode<synchronous>, transform_indices = @transform_4, window_bounds = array<i64: 32, 1>}, {pipeline_mode = #tpu.pipeline_mode<synchronous>, transform_indices = @transform_5, window_bounds = array<i64: 32, 32>}, {pipeline_mode = #tpu.pipeline_mode<synchronous>, transform_indices = @transform_6, window_bounds = array<i64: 32, 1>}, {pipeline_mode = #tpu.pipeline_mode<synchronous>, transform_indices = @transform_7, window_bounds = array<i64: 32, 32>}, {pipeline_mode = #tpu.pipeline_mode<synchronous>, transform_indices = @transform_8, window_bounds = array<i64: 32, 1>}, {pipeline_mode = #tpu.pipeline_mode<synchronous>, transform_indices = @transform_9, window_bounds = array<i64: 3, 32>}, {pipeline_mode = #tpu.pipeline_mode<synchronous>, transform_indices = @transform_10, window_bounds = array<i64: 3, 1>}, {transform_indices = @transform_11, window_bounds = array<i64: 3, 512>}]} {
    %c0 = arith.constant 0 : index
    %c0_0 = arith.constant 0 : index
    %0 = vector.load %arg1[%c0, %c0_0] : memref<2x512xf32, #tpu.memory_space<vmem>>, vector<2x512xf32>
    %c0_1 = arith.constant 0 : index
    %c0_2 = arith.constant 0 : index
    %1 = vector.load %arg2[%c0_1, %c0_2] : memref<32x2xf32, #tpu.memory_space<vmem>>, vector<32x2xf32>
    %c0_3 = arith.constant 0 : index
    %c0_4 = arith.constant 0 : index
    %2 = vector.load %arg3[%c0_3, %c0_4] : memref<32x1xf32, #tpu.memory_space<vmem>>, vector<32x1xf32>
    %cst = arith.constant dense<0.000000e+00> : vector<32x512xf32>
    %3 = tpu.matmul %1, %0, %cst {dimension_numbers = #tpu.dot_dimension_numbers<[1], [0], [0], [1], [0, 0, 1, 1], [], []>} : vector<32x2xf32>, vector<2x512xf32>, vector<32x512xf32> -> vector<32x512xf32>
    %4 = vector.broadcast %2 : vector<32x1xf32> to vector<32x512xf32>
    %5 = arith.addf %3, %4 : vector<32x512xf32>
    %6 = math.sin %5 : vector<32x512xf32>
    %c0_5 = arith.constant 0 : index
    %c0_6 = arith.constant 0 : index
    %7 = vector.load %arg4[%c0_5, %c0_6] : memref<32x32xf32, #tpu.memory_space<vmem>>, vector<32x32xf32>
    %c0_7 = arith.constant 0 : index
    %c0_8 = arith.constant 0 : index
    %8 = vector.load %arg5[%c0_7, %c0_8] : memref<32x1xf32, #tpu.memory_space<vmem>>, vector<32x1xf32>
    %cst_9 = arith.constant dense<0.000000e+00> : vector<32x512xf32>
    %9 = tpu.matmul %7, %6, %cst_9 {dimension_numbers = #tpu.dot_dimension_numbers<[1], [0], [0], [1], [0, 0, 1, 1], [], []>} : vector<32x32xf32>, vector<32x512xf32>, vector<32x512xf32> -> vector<32x512xf32>
    %10 = vector.broadcast %8 : vector<32x1xf32> to vector<32x512xf32>
    %11 = arith.addf %9, %10 : vector<32x512xf32>
    %12 = math.sin %11 : vector<32x512xf32>
    %c0_10 = arith.constant 0 : index
    %c0_11 = arith.constant 0 : index
    %13 = vector.load %arg6[%c0_10, %c0_11] : memref<32x32xf32, #tpu.memory_space<vmem>>, vector<32x32xf32>
    %c0_12 = arith.constant 0 : index
    %c0_13 = arith.constant 0 : index
    %14 = vector.load %arg7[%c0_12, %c0_13] : memref<32x1xf32, #tpu.memory_space<vmem>>, vector<32x1xf32>
    %cst_14 = arith.constant dense<0.000000e+00> : vector<32x512xf32>
    %15 = tpu.matmul %13, %12, %cst_14 {dimension_numbers = #tpu.dot_dimension_numbers<[1], [0], [0], [1], [0, 0, 1, 1], [], []>} : vector<32x32xf32>, vector<32x512xf32>, vector<32x512xf32> -> vector<32x512xf32>
    %16 = vector.broadcast %14 : vector<32x1xf32> to vector<32x512xf32>
    %17 = arith.addf %15, %16 : vector<32x512xf32>
    %18 = math.sin %17 : vector<32x512xf32>
    %c0_15 = arith.constant 0 : index
    %c0_16 = arith.constant 0 : index
    %19 = vector.load %arg8[%c0_15, %c0_16] : memref<32x32xf32, #tpu.memory_space<vmem>>, vector<32x32xf32>
    %c0_17 = arith.constant 0 : index
    %c0_18 = arith.constant 0 : index
    %20 = vector.load %arg9[%c0_17, %c0_18] : memref<32x1xf32, #tpu.memory_space<vmem>>, vector<32x1xf32>
    %cst_19 = arith.constant dense<0.000000e+00> : vector<32x512xf32>
    %21 = tpu.matmul %19, %18, %cst_19 {dimension_numbers = #tpu.dot_dimension_numbers<[1], [0], [0], [1], [0, 0, 1, 1], [], []>} : vector<32x32xf32>, vector<32x512xf32>, vector<32x512xf32> -> vector<32x512xf32>
    %22 = vector.broadcast %20 : vector<32x1xf32> to vector<32x512xf32>
    %23 = arith.addf %21, %22 : vector<32x512xf32>
    %24 = math.sin %23 : vector<32x512xf32>
    %c0_20 = arith.constant 0 : index
    %c0_21 = arith.constant 0 : index
    %25 = vector.load %arg10[%c0_20, %c0_21] : memref<3x32xf32, #tpu.memory_space<vmem>>, vector<3x32xf32>
    %c0_22 = arith.constant 0 : index
    %c0_23 = arith.constant 0 : index
    %26 = vector.load %arg11[%c0_22, %c0_23] : memref<3x1xf32, #tpu.memory_space<vmem>>, vector<3x1xf32>
    %cst_24 = arith.constant dense<0.000000e+00> : vector<3x512xf32>
    %27 = tpu.matmul %25, %24, %cst_24 {dimension_numbers = #tpu.dot_dimension_numbers<[1], [0], [0], [1], [0, 0, 1, 1], [], []>} : vector<3x32xf32>, vector<32x512xf32>, vector<3x512xf32> -> vector<3x512xf32>
    %28 = vector.broadcast %26 : vector<3x1xf32> to vector<3x512xf32>
    %29 = arith.addf %27, %28 : vector<3x512xf32>
    %c0_25 = arith.constant 0 : index
    %c0_26 = arith.constant 0 : index
    %30 = vector.load %arg12[%c0_25, %c0_26] : memref<3x512xf32, #tpu.memory_space<vmem>>, vector<3x512xf32>
    tpu.vector_store %arg12[%c0_25, %c0_26], %29 {strides = array<i32>} : memref<3x512xf32, #tpu.memory_space<vmem>>, vector<3x512xf32>,
    return
  }
  func.func @transform_0(%arg0: i32) -> (i32, i32) {
    %c0_i32 = arith.constant 0 : i32
    %c0_i32_0 = arith.constant 0 : i32
    return %c0_i32, %arg0 : i32, i32
  }
  func.func @transform_1(%arg0: i32) -> (i32, i32) {
    %c0_i32 = arith.constant 0 : i32
    %c0_i32_0 = arith.constant 0 : i32
    %c0_i32_1 = arith.constant 0 : i32
    return %c0_i32, %c0_i32_0 : i32, i32
  }
  func.func @transform_2(%arg0: i32) -> (i32, i32) {
    %c0_i32 = arith.constant 0 : i32
    %c0_i32_0 = arith.constant 0 : i32
    %c0_i32_1 = arith.constant 0 : i32
    return %c0_i32, %c0_i32_0 : i32, i32
  }
  func.func @transform_3(%arg0: i32) -> (i32, i32) {
    %c0_i32 = arith.constant 0 : i32
    %c0_i32_0 = arith.constant 0 : i32
    %c0_i32_1 = arith.constant 0 : i32
    return %c0_i32, %c0_i32_0 : i32, i32
  }
  func.func @transform_4(%arg0: i32) -> (i32, i32) {
    %c0_i32 = arith.constant 0 : i32
    %c0_i32_0 = arith.constant 0 : i32
    %c0_i32_1 = arith.constant 0 : i32
    return %c0_i32, %c0_i32_0 : i32, i32
  }
  func.func @transform_5(%arg0: i32) -> (i32, i32) {
    %c0_i32 = arith.constant 0 : i32
    %c0_i32_0 = arith.constant 0 : i32
    %c0_i32_1 = arith.constant 0 : i32
    return %c0_i32, %c0_i32_0 : i32, i32
  }
  func.func @transform_6(%arg0: i32) -> (i32, i32) {
    %c0_i32 = arith.constant 0 : i32
    %c0_i32_0 = arith.constant 0 : i32
    %c0_i32_1 = arith.constant 0 : i32
    return %c0_i32, %c0_i32_0 : i32, i32
  }
  func.func @transform_7(%arg0: i32) -> (i32, i32) {
    %c0_i32 = arith.constant 0 : i32
    %c0_i32_0 = arith.constant 0 : i32
    %c0_i32_1 = arith.constant 0 : i32
    return %c0_i32, %c0_i32_0 : i32, i32
  }
  func.func @transform_8(%arg0: i32) -> (i32, i32) {
    %c0_i32 = arith.constant 0 : i32
    %c0_i32_0 = arith.constant 0 : i32
    %c0_i32_1 = arith.constant 0 : i32
    return %c0_i32, %c0_i32_0 : i32, i32
  }
  func.func @transform_9(%arg0: i32) -> (i32, i32) {
    %c0_i32 = arith.constant 0 : i32
    %c0_i32_0 = arith.constant 0 : i32
    %c0_i32_1 = arith.constant 0 : i32
    return %c0_i32, %c0_i32_0 : i32, i32
  }
  func.func @transform_10(%arg0: i32) -> (i32, i32) {
    %c0_i32 = arith.constant 0 : i32
    %c0_i32_0 = arith.constant 0 : i32
    %c0_i32_1 = arith.constant 0 : i32
    return %c0_i32, %c0_i32_0 : i32, i32
  }
  func.func @transform_11(%arg0: i32) -> (i32, i32) {
    %c0_i32 = arith.constant 0 : i32
    %c0_i32_0 = arith.constant 0 : i32
    return %c0_i32, %arg0 : i32, i32
  }
}

</mosaic_0001>

<llo_original>
// kernel: tpu_custom_call.1
$region0: #{tpu_custom_call.1}
  #allocation0 [shape = 'u32[]', space=smem, size = 0x4, offset = 0x4, fixed_abs, tag = 'smem constant byte address 0x4 - core index']
  #allocation1 [shape = 'u32[144,128]{1,0:T(1,128)}', space=vmem, size = 0x12000, scoped, tag = 'internal scratch']
  %s0 = inlined_call_operand.vmem [shape: f32[2,2048], index: 0, kind: input, shape index: {}]
  %s1 = inlined_call_operand.vmem [shape: f32[32,2], index: 1, kind: input, shape index: {}]
  %s2 = inlined_call_operand.vmem [shape: f32[32,1], index: 2, kind: input, shape index: {}]
  %s3 = inlined_call_operand.vmem [shape: f32[32,32], index: 3, kind: input, shape index: {}]
  %s4 = inlined_call_operand.vmem [shape: f32[32,1], index: 4, kind: input, shape index: {}]
  %s5 = inlined_call_operand.vmem [shape: f32[32,32], index: 5, kind: input, shape index: {}]
  %s6 = inlined_call_operand.vmem [shape: f32[32,1], index: 6, kind: input, shape index: {}]
  %s7 = inlined_call_operand.vmem [shape: f32[32,32], index: 7, kind: input, shape index: {}]
  %s8 = inlined_call_operand.vmem [shape: f32[32,1], index: 8, kind: input, shape index: {}]
  %s9 = inlined_call_operand.vmem [shape: f32[3,32], index: 9, kind: input, shape index: {}]
  %s10 = inlined_call_operand.vmem [shape: f32[3,1], index: 10, kind: input, shape index: {}]
  %s11 = inlined_call_operand.hbm [shape: f32[3,2048], index: 11, kind: output, shape index: {}]
  %s12 = sld [smem:[#allocation0]]
  $region77: #{tpu_custom_call.1} parent=0
    _
  %s14 = ssub.s32 1, %s12
  %s15 = scalar_select 0, %s14, %s12
  $region1: #{tpu_custom_call.1} parent=0
    #allocation2 [shape = 'u8[16384]{0}', space=vmem, size = 0x4000, scoped, tag = 'output window, operand 0']
    #allocation3 [shape = 's32[2]{0}', space=sflag, size = 0x8, scoped, tag = 'scoped memory for tpu_custom_call.1']
    %16 = vsyncpa [#allocation3], 0
    %s17 = scalar_lea.sflag [#allocation3], 1
    %18 = vsyncpa %s17, 0
    loop: start=0, step=1, limit=6
    $region2: #{tpu_custom_call.1} parent=1 // loop_pre_header
      _
    $region3: #{tpu_custom_call.1} parent=1 // loop_header
      %s20 = sphi 0, %s24
      %p21 = scmp.ge.s32.totalorder %s20, 6
      %s30 = sphi 0, %s32
      %s33 = sphi 0, %s30
      %s34 = sphi 0, %s33
      %s50 = sphi 0, %s34
      %s54 = sphi 0, %s54
      %s56 = sphi 0, %s54
      %s57 = sphi 0, %s56
      %s71 = sphi 0, %s57
      %s75 = sphi 0, %s75
      %s77 = sphi 0, %s75
      %s78 = sphi 0, %s77
      %s92 = sphi 0, %s78
      %s96 = sphi 0, %s96
      %s98 = sphi 0, %s96
      %s99 = sphi 0, %s98
      %s113 = sphi 0, %s99
      %s117 = sphi 0, %s117
      %s119 = sphi 0, %s117
      %s120 = sphi 0, %s119
      %s134 = sphi 0, %s120
      %s138 = sphi 0, %s138
      %s140 = sphi 0, %s138
      %s141 = sphi 0, %s140
      %s155 = sphi 0, %s141
      %s159 = sphi 0, %s159
      %s161 = sphi 0, %s159
      %s162 = sphi 0, %s161
      %s176 = sphi 0, %s162
      %s180 = sphi 0, %s180
      %s182 = sphi 0, %s180
      %s183 = sphi 0, %s182
      %s197 = sphi 0, %s183
      %s201 = sphi 0, %s201
      %s203 = sphi 0, %s201
      %s204 = sphi 0, %s203
      %s218 = sphi 0, %s204
      %s222 = sphi 0, %s222
      %s224 = sphi 0, %s222
      %s225 = sphi 0, %s224
      %s239 = sphi 0, %s225
      %s243 = sphi 0, %s243
      %s245 = sphi 0, %s243
      %s246 = sphi 0, %s245
      %s260 = sphi 0, %s246
      %s266 = sphi 0, %s268
      %s269 = sphi 0, %s266
      %s270 = sphi 0, %s269
      %s286 = sphi 0, %s270
    $region4: #{tpu_custom_call.1} parent=1 // loop_header_branch
      %23 = sbr.rel (%p21) target = $region8
    $region5: #{tpu_custom_call.1} parent=1 // loop_body
      %s25 = ssub.s32 %s20, 1
      %s26 = ssub.s32 %s20, 2
      %s27 = sadd.s32 %s20, 1
      %s28 = ssub.s32 %s20, %s27
      %p29 = scmp.eq.s32.totalorder %s28, 0
      %s31 = sadd.s32 %s30, 1
      %s32 = scalar_select %p29, %s30, %s31
      %p35 = pneg %p29
      %p36 = scmp.eq.s32.totalorder %s20, 3
      %p37 = por %p35, %p36
      %p38 = scmp.ne.s32.totalorder %s30, %s33
      %p39 = scmp.eq.s32.totalorder %s20, 0
      %p40 = por %p38, %p39
      %p41 = scmp.ne.s32.totalorder %s30, %s33
      %p42 = scmp.eq.s32.totalorder %s25, 3
      %p43 = por %p41, %p42
      %p44 = scmp.ne.s32.totalorder %s33, %s34
      %p45 = scmp.eq.s32.totalorder %s25, 0
      %p46 = por %p44, %p45
      %p47 = scmp.ne.s32.totalorder %s33, %s34
      %p48 = scmp.eq.s32.totalorder %s26, 3
      %p49 = por %p47, %p48
      %p51 = scmp.ne.s32.totalorder %s34, %s50
      %p52 = scmp.eq.s32.totalorder %s26, 0
      %p53 = por %p51, %p52
      %s55 = sadd.s32 %s54, 1
      %p58 = scmp.eq.s32.totalorder %s20, 3
      %p59 = scmp.ne.s32.totalorder %s54, %s56
      %p60 = scmp.eq.s32.totalorder %s20, 0
      %p61 = por %p59, %p60
      %p62 = scmp.ne.s32.totalorder %s54, %s56
      %p63 = scmp.eq.s32.totalorder %s25, 3
      %p64 = por %p62, %p63
      %p65 = scmp.ne.s32.totalorder %s56, %s57
      %p66 = scmp.eq.s32.totalorder %s25, 0
      %p67 = por %p65, %p66
      %p68 = scmp.ne.s32.totalorder %s56, %s57
      %p69 = scmp.eq.s32.totalorder %s26, 3
      %p70 = por %p68, %p69
      %p72 = scmp.ne.s32.totalorder %s57, %s71
      %p73 = scmp.eq.s32.totalorder %s26, 0
      %p74 = por %p72, %p73
      %s76 = sadd.s32 %s75, 1
      %p79 = scmp.eq.s32.totalorder %s20, 3
      %p80 = scmp.ne.s32.totalorder %s75, %s77
      %p81 = scmp.eq.s32.totalorder %s20, 0
      %p82 = por %p80, %p81
      %p83 = scmp.ne.s32.totalorder %s75, %s77
      %p84 = scmp.eq.s32.totalorder %s25, 3
      %p85 = por %p83, %p84
      %p86 = scmp.ne.s32.totalorder %s77, %s78
      %p87 = scmp.eq.s32.totalorder %s25, 0
      %p88 = por %p86, %p87
      %p89 = scmp.ne.s32.totalorder %s77, %s78
      %p90 = scmp.eq.s32.totalorder %s26, 3
      %p91 = por %p89, %p90
      %p93 = scmp.ne.s32.totalorder %s78, %s92
      %p94 = scmp.eq.s32.totalorder %s26, 0
      %p95 = por %p93, %p94
      %s97 = sadd.s32 %s96, 1
      %p100 = scmp.eq.s32.totalorder %s20, 3
      %p101 = scmp.ne.s32.totalorder %s96, %s98
      %p102 = scmp.eq.s32.totalorder %s20, 0
      %p103 = por %p101, %p102
      %p104 = scmp.ne.s32.totalorder %s96, %s98
      %p105 = scmp.eq.s32.totalorder %s25, 3
      %p106 = por %p104, %p105
      %p107 = scmp.ne.s32.totalorder %s98, %s99
      %p108 = scmp.eq.s32.totalorder %s25, 0
      %p109 = por %p107, %p108
      %p110 = scmp.ne.s32.totalorder %s98, %s99
      %p111 = scmp.eq.s32.totalorder %s26, 3
      %p112 = por %p110, %p111
      %p114 = scmp.ne.s32.totalorder %s99, %s113
      %p115 = scmp.eq.s32.totalorder %s26, 0
      %p116 = por %p114, %p115
      %s118 = sadd.s32 %s117, 1
      %p121 = scmp.eq.s32.totalorder %s20, 3
      %p122 = scmp.ne.s32.totalorder %s117, %s119
      %p123 = scmp.eq.s32.totalorder %s20, 0
      %p124 = por %p122, %p123
      %p125 = scmp.ne.s32.totalorder %s117, %s119
      %p126 = scmp.eq.s32.totalorder %s25, 3
      %p127 = por %p125, %p126
      %p128 = scmp.ne.s32.totalorder %s119, %s120
      %p129 = scmp.eq.s32.totalorder %s25, 0
      %p130 = por %p128, %p129
      %p131 = scmp.ne.s32.totalorder %s119, %s120
      %p132 = scmp.eq.s32.totalorder %s26, 3
      %p133 = por %p131, %p132
      %p135 = scmp.ne.s32.totalorder %s120, %s134
      %p136 = scmp.eq.s32.totalorder %s26, 0
      %p137 = por %p135, %p136
      %s139 = sadd.s32 %s138, 1
      %p142 = scmp.eq.s32.totalorder %s20, 3
      %p143 = scmp.ne.s32.totalorder %s138, %s140
      %p144 = scmp.eq.s32.totalorder %s20, 0
      %p145 = por %p143, %p144
      %p146 = scmp.ne.s32.totalorder %s138, %s140
      %p147 = scmp.eq.s32.totalorder %s25, 3
      %p148 = por %p146, %p147
      %p149 = scmp.ne.s32.totalorder %s140, %s141
      %p150 = scmp.eq.s32.totalorder %s25, 0
      %p151 = por %p149, %p150
      %p152 = scmp.ne.s32.totalorder %s140, %s141
      %p153 = scmp.eq.s32.totalorder %s26, 3
      %p154 = por %p152, %p153
      %p156 = scmp.ne.s32.totalorder %s141, %s155
      %p157 = scmp.eq.s32.totalorder %s26, 0
      %p158 = por %p156, %p157
      %s160 = sadd.s32 %s159, 1
      %p163 = scmp.eq.s32.totalorder %s20, 3
      %p164 = scmp.ne.s32.totalorder %s159, %s161
      %p165 = scmp.eq.s32.totalorder %s20, 0
      %p166 = por %p164, %p165
      %p167 = scmp.ne.s32.totalorder %s159, %s161
      %p168 = scmp.eq.s32.totalorder %s25, 3
      %p169 = por %p167, %p168
      %p170 = scmp.ne.s32.totalorder %s161, %s162
      %p171 = scmp.eq.s32.totalorder %s25, 0
      %p172 = por %p170, %p171
      %p173 = scmp.ne.s32.totalorder %s161, %s162
      %p174 = scmp.eq.s32.totalorder %s26, 3
      %p175 = por %p173, %p174
      %p177 = scmp.ne.s32.totalorder %s162, %s176
      %p178 = scmp.eq.s32.totalorder %s26, 0
      %p179 = por %p177, %p178
      %s181 = sadd.s32 %s180, 1
      %p184 = scmp.eq.s32.totalorder %s20, 3
      %p185 = scmp.ne.s32.totalorder %s180, %s182
      %p186 = scmp.eq.s32.totalorder %s20, 0
      %p187 = por %p185, %p186
      %p188 = scmp.ne.s32.totalorder %s180, %s182
      %p189 = scmp.eq.s32.totalorder %s25, 3
      %p190 = por %p188, %p189
      %p191 = scmp.ne.s32.totalorder %s182, %s183
      %p192 = scmp.eq.s32.totalorder %s25, 0
      %p193 = por %p191, %p192
      %p194 = scmp.ne.s32.totalorder %s182, %s183
      %p195 = scmp.eq.s32.totalorder %s26, 3
      %p196 = por %p194, %p195
      %p198 = scmp.ne.s32.totalorder %s183, %s197
      %p199 = scmp.eq.s32.totalorder %s26, 0
      %p200 = por %p198, %p199
      %s202 = sadd.s32 %s201, 1
      %p205 = scmp.eq.s32.totalorder %s20, 3
      %p206 = scmp.ne.s32.totalorder %s201, %s203
      %p207 = scmp.eq.s32.totalorder %s20, 0
      %p208 = por %p206, %p207
      %p209 = scmp.ne.s32.totalorder %s201, %s203
      %p210 = scmp.eq.s32.totalorder %s25, 3
      %p211 = por %p209, %p210
      %p212 = scmp.ne.s32.totalorder %s203, %s204
      %p213 = scmp.eq.s32.totalorder %s25, 0
      %p214 = por %p212, %p213
      %p215 = scmp.ne.s32.totalorder %s203, %s204
      %p216 = scmp.eq.s32.totalorder %s26, 3
      %p217 = por %p215, %p216
      %p219 = scmp.ne.s32.totalorder %s204, %s218
      %p220 = scmp.eq.s32.totalorder %s26, 0
      %p221 = por %p219, %p220
      %s223 = sadd.s32 %s222, 1
      %p226 = scmp.eq.s32.totalorder %s20, 3
      %p227 = scmp.ne.s32.totalorder %s222, %s224
      %p228 = scmp.eq.s32.totalorder %s20, 0
      %p229 = por %p227, %p228
      %p230 = scmp.ne.s32.totalorder %s222, %s224
      %p231 = scmp.eq.s32.totalorder %s25, 3
      %p232 = por %p230, %p231
      %p233 = scmp.ne.s32.totalorder %s224, %s225
      %p234 = scmp.eq.s32.totalorder %s25, 0
      %p235 = por %p233, %p234
      %p236 = scmp.ne.s32.totalorder %s224, %s225
      %p237 = scmp.eq.s32.totalorder %s26, 3
      %p238 = por %p236, %p237
      %p240 = scmp.ne.s32.totalorder %s225, %s239
      %p241 = scmp.eq.s32.totalorder %s26, 0
      %p242 = por %p240, %p241
      %s244 = sadd.s32 %s243, 1
      %p247 = scmp.eq.s32.totalorder %s20, 3
      %p248 = scmp.ne.s32.totalorder %s243, %s245
      %p249 = scmp.eq.s32.totalorder %s20, 0
      %p250 = por %p248, %p249
      %p251 = scmp.ne.s32.totalorder %s243, %s245
      %p252 = scmp.eq.s32.totalorder %s25, 3
      %p253 = por %p251, %p252
      %p254 = scmp.ne.s32.totalorder %s245, %s246
      %p255 = scmp.eq.s32.totalorder %s25, 0
      %p256 = por %p254, %p255
      %p257 = scmp.ne.s32.totalorder %s245, %s246
      %p258 = scmp.eq.s32.totalorder %s26, 3
      %p259 = por %p257, %p258
      %p261 = scmp.ne.s32.totalorder %s246, %s260
      %p262 = scmp.eq.s32.totalorder %s26, 0
      %p263 = por %p261, %p262
      %s264 = ssub.s32 %s20, %s27
      %p265 = scmp.eq.s32.totalorder %s264, 0
      %s267 = sadd.s32 %s266, 1
      %s268 = scalar_select %p265, %s266, %s267
      %p271 = pneg %p265
      %p272 = scmp.eq.s32.totalorder %s20, 3
      %p273 = por %p271, %p272
      %p274 = scmp.ne.s32.totalorder %s266, %s269
      %p275 = scmp.eq.s32.totalorder %s20, 0
      %p276 = por %p274, %p275
      %p277 = scmp.ne.s32.totalorder %s266, %s269
      %p278 = scmp.eq.s32.totalorder %s25, 3
      %p279 = por %p277, %p278
      %p280 = scmp.ne.s32.totalorder %s269, %s270
      %p281 = scmp.eq.s32.totalorder %s25, 0
      %p282 = por %p280, %p281
      %p283 = scmp.ne.s32.totalorder %s269, %s270
      %p284 = scmp.eq.s32.totalorder %s26, 3
      %p285 = por %p283, %p284
      %p287 = scmp.ne.s32.totalorder %s270, %s286
      %p288 = scmp.eq.s32.totalorder %s26, 0
      %p289 = por %p287, %p288
      %p290 = scmp.le.s32.totalorder 1, %s20
      %p291 = scmp.lt.s32.totalorder %s20, 5
      %p292 = pnand %p290, %p291
      %p293 = pneg %p292
      // Predicated region
      $region9: #{tpu_custom_call.1} parent=5 // pred_check
        _
      $region10: #{tpu_custom_call.1} parent=5 // pred_check_branch
        %295 = sbr.rel (%p292) target = $region12
      $region11: #{tpu_custom_call.1} parent=5 // pred_region
        %s296 = ssub.s32 %s20, 1
        // Predicated region
        $region13: #{tpu_custom_call.1} parent=11 // pred_check
          %p297 = pneg %p67
        $region14: #{tpu_custom_call.1} parent=11 // pred_check_branch
          %299 = sbr.rel (%p297) target = $region16
        $region15: #{tpu_custom_call.1} parent=11 // pred_region
          _
        $region16: #{tpu_custom_call.1} parent=11 // pred_fallthru
          _
        // Predicated region
        $region17: #{tpu_custom_call.1} parent=11 // pred_check
          %p300 = pneg %p88
        $region18: #{tpu_custom_call.1} parent=11 // pred_check_branch
          %302 = sbr.rel (%p300) target = $region20
        $region19: #{tpu_custom_call.1} parent=11 // pred_region
          _
        $region20: #{tpu_custom_call.1} parent=11 // pred_fallthru
          _
        // Predicated region
        $region21: #{tpu_custom_call.1} parent=11 // pred_check
          %p303 = pneg %p109
        $region22: #{tpu_custom_call.1} parent=11 // pred_check_branch
          %305 = sbr.rel (%p303) target = $region24
        $region23: #{tpu_custom_call.1} parent=11 // pred_region
          _
        $region24: #{tpu_custom_call.1} parent=11 // pred_fallthru
          _
        // Predicated region
        $region25: #{tpu_custom_call.1} parent=11 // pred_check
          %p306 = pneg %p130
        $region26: #{tpu_custom_call.1} parent=11 // pred_check_branch
          %308 = sbr.rel (%p306) target = $region28
        $region27: #{tpu_custom_call.1} parent=11 // pred_region
          _
        $region28: #{tpu_custom_call.1} parent=11 // pred_fallthru
          _
        // Predicated region
        $region29: #{tpu_custom_call.1} parent=11 // pred_check
          %p309 = pneg %p151
        $region30: #{tpu_custom_call.1} parent=11 // pred_check_branch
          %311 = sbr.rel (%p309) target = $region32
        $region31: #{tpu_custom_call.1} parent=11 // pred_region
          _
        $region32: #{tpu_custom_call.1} parent=11 // pred_fallthru
          _
        // Predicated region
        $region33: #{tpu_custom_call.1} parent=11 // pred_check
          %p312 = pneg %p172
        $region34: #{tpu_custom_call.1} parent=11 // pred_check_branch
          %314 = sbr.rel (%p312) target = $region36
        $region35: #{tpu_custom_call.1} parent=11 // pred_region
          _
        $region36: #{tpu_custom_call.1} parent=11 // pred_fallthru
          _
        // Predicated region
        $region37: #{tpu_custom_call.1} parent=11 // pred_check
          %p315 = pneg %p193
        $region38: #{tpu_custom_call.1} parent=11 // pred_check_branch
          %317 = sbr.rel (%p315) target = $region40
        $region39: #{tpu_custom_call.1} parent=11 // pred_region
          _
        $region40: #{tpu_custom_call.1} parent=11 // pred_fallthru
          _
        // Predicated region
        $region41: #{tpu_custom_call.1} parent=11 // pred_check
          %p318 = pneg %p214
        $region42: #{tpu_custom_call.1} parent=11 // pred_check_branch
          %320 = sbr.rel (%p318) target = $region44
        $region43: #{tpu_custom_call.1} parent=11 // pred_region
          _
        $region44: #{tpu_custom_call.1} parent=11 // pred_fallthru
          _
        // Predicated region
        $region45: #{tpu_custom_call.1} parent=11 // pred_check
          %p321 = pneg %p235
        $region46: #{tpu_custom_call.1} parent=11 // pred_check_branch
          %323 = sbr.rel (%p321) target = $region48
        $region47: #{tpu_custom_call.1} parent=11 // pred_region
          _
        $region48: #{tpu_custom_call.1} parent=11 // pred_fallthru
          _
        // Predicated region
        $region49: #{tpu_custom_call.1} parent=11 // pred_check
          %p324 = pneg %p256
        $region50: #{tpu_custom_call.1} parent=11 // pred_check_branch
          %326 = sbr.rel (%p324) target = $region52
        $region51: #{tpu_custom_call.1} parent=11 // pred_region
          _
        $region52: #{tpu_custom_call.1} parent=11 // pred_fallthru
          _
      $region12: #{tpu_custom_call.1} parent=5 // pred_fallthru
        _
      %p327 = scmp.lt.s32.totalorder %s20, 4
      // Predicated region
      $region53: #{tpu_custom_call.1} parent=5 // pred_check
        %p328 = pneg %p327
      $region54: #{tpu_custom_call.1} parent=5 // pred_check_branch
        %330 = sbr.rel (%p328) target = $region56
      $region55: #{tpu_custom_call.1} parent=5 // pred_region
        // Predicated region
        $region57: #{tpu_custom_call.1} parent=55 // pred_check
          %p331 = pneg %p40
        $region58: #{tpu_custom_call.1} parent=55 // pred_check_branch
          %333 = sbr.rel (%p331) target = $region60
        $region59: #{tpu_custom_call.1} parent=55 // pred_region
          %s334 = smul.u32 4, %s20
          %p335 = scmp.lt.s32.totalorder %s334, 15
          %s336 = scalar_select %p335, %s334, 15
          %s337 = smul.addr %s336, 2
          %s338 = scalar_lea.vmem %s0, %s337
          %s339 = smul.u32 4, %s20
        $region60: #{tpu_custom_call.1} parent=55 // pred_fallthru
          _
      $region56: #{tpu_custom_call.1} parent=5 // pred_fallthru
        _
      %p340 = scmp.le.s32.totalorder 1, %s20
      %p341 = scmp.lt.s32.totalorder %s20, 5
      %p342 = pnand %p340, %p341
      %p343 = pneg %p342
      // Predicated region
      $region61: #{tpu_custom_call.1} parent=5 // pred_check
        _
      $region62: #{tpu_custom_call.1} parent=5 // pred_check_branch
        %345 = sbr.rel (%p342) target = $region64
      $region63: #{tpu_custom_call.1} parent=5 // pred_region
        %s346 = ssub.s32 %s20, 1
        %s347 = smul.u32 4, %s25
        %p348 = scmp.lt.s32.totalorder %s347, 15
        %s349 = scalar_select %p348, %s347, 15
        %s350 = smul.addr %s349, 2
        %s351 = scalar_lea.vmem %s0, %s350
        %p352 = pneg %p46
        %p353 = pneg %p43
        %p354 = pneg %p67
        %p355 = pneg %p64
        %p356 = pneg %p88
        %p357 = pneg %p85
        %p358 = pneg %p109
        %p359 = pneg %p106
        %p360 = pneg %p130
        %p361 = pneg %p127
        %p362 = pneg %p151
        %p363 = pneg %p148
        %p364 = pneg %p172
        %p365 = pneg %p169
        %p366 = pneg %p193
        %p367 = pneg %p190
        %p368 = pneg %p214
        %p369 = pneg %p211
        %p370 = pneg %p235
        %p371 = pneg %p232
        %p372 = pneg %p256
        %p373 = pneg %p253
        %p374 = pneg %p282
        %p375 = pneg %p279
        %s376 = sand.u32 %s269, 1
        %s377 = scalar_lea.sflag [#allocation3], %s376
        %s378 = sand.u32 %s269, 1
        %s379 = smul.addr %s378, 16
        %s380 = scalar_lea.vmem [#allocation2], %s379
        %s381 = smul.u32 4, %s25
        %p382 = scmp.lt.s32.totalorder %s381, 15
        %s383 = scalar_select %p382, %s381, 15
        %s384 = smul.addr %s383, 2
        %s385 = scalar_lea.vmem %s0, %s384
        %s386 = smul.u32 4, %s25
        %s387 = smul.u32 4, %s25
        %v388 = vld [vmem:[%s385] sm:$0xff]
        %v389 = vld [vmem:[%s1] sm:$0xff]
        %v390 = vld [vmem:[%s1 + $0x8] sm:$0xff]
        %v391 = vld [vmem:[%s1 + $0x10] sm:$0xff]
        %v392 = vld [vmem:[%s1 + $0x18] sm:$0xff]
        %v393 = vld [vmem:[%s2] sm:$0xff]
        %v394 = vld [vmem:[%s2 + $0x8] sm:$0xff]
        %v395 = vld [vmem:[%s2 + $0x10] sm:$0xff]
        %v396 = vld [vmem:[%s2 + $0x18] sm:$0xff]
        %398 = vset.pattern.permute.xlu0 0
        %399 = vperm.xlu0 %398, %v393
        %v400 = vpop.permute.xlu0 %399
        %403 = vset.pattern.permute.xlu0 0
        %404 = vperm.xlu0 %403, %v394
        %v405 = vpop.permute.xlu0 %404
        %408 = vset.pattern.permute.xlu0 0
        %409 = vperm.xlu0 %408, %v395
        %v410 = vpop.permute.xlu0 %409
        %413 = vset.pattern.permute.xlu0 0
        %414 = vperm.xlu0 %413, %v396
        %v415 = vpop.permute.xlu0 %414
        %v418 = vcombine.high %v388, %v388
        %v420 = vunpack.c.l.s4 1983009808
        %v421 = vunpack.c.0.s8 %v420
        %v422 = vlaneseq
        %v423 = vshrl.u32 %v422, 7
        %v424 = vsub.s32 %v421, %v423
        %v425 = vrot.slane %v388, %v424
        %v427 = vunpack.c.l.s4 1983009808
        %v428 = vunpack.c.0.s8 %v427
        %v429 = vlaneseq
        %v430 = vshrl.u32 %v429, 7
        %v431 = vsub.s32 %v428, %v430
        %v432 = vrot.slane %v418, %v431
        %v433 = vcombine.high %v425, %v425
        %v434 = vcombine.high %v432, %v432
        %vm435 = vcmask 15360
        %v437 = vsel %vm435, %v389, 0
        %v440 = vsel %vm435, %v390, 0
        %v443 = vsel %vm435, %v391, 0
        %v446 = vsel %vm435, %v392, 0
        %vm448 = vcmask 1041408
        %v449 = vsel %vm448, %v425, 0
        %v451 = vsel %vm448, %v433, 0
        %v453 = vsel %vm448, %v432, 0
        %v455 = vsel %vm448, %v434, 0
        %457 = vmatprep.subr.mxu0 0.0
        %458 = vmatpush1.msra.mxu0 0.0
        %459 = vmatprep.subr.mxu0 0.0
        %460 = vmatpush1.msra.mxu0 0.0
        %461 = vmatprep.subr.mxu0 0.0
        %462 = vmatpush1.msra.mxu0 0.0
        %463 = vmatprep.subr.mxu0 0.0
        %464 = vmatpush1.msra.mxu0 0.0
        %465 = vmatprep.subr.mxu0 0.0
        %466 = vmatpush1.msra.mxu0 0.0
        %467 = vmatprep.subr.mxu0 0.0
        %468 = vmatpush1.msra.mxu0 0.0
        %469 = vmatprep.subr.mxu0 0.0
        %470 = vmatpush1.msra.mxu0 0.0
        %471 = vmatprep.subr.mxu0 0.0
        %472 = vmatpush1.msra.mxu0 0.0
        %473 = vmatprep.subr.mxu0 0.0
        %474 = vmatpush1.msra.mxu0 0.0
        %475 = vmatprep.subr.mxu0 0.0
        %476 = vmatpush1.msra.mxu0 0.0
        %477 = vmatprep.subr.mxu0 0.0
        %478 = vmatpush1.msra.mxu0 0.0
        %479 = vmatprep.subr.mxu0 0.0
        %480 = vmatpush1.msra.mxu0 0.0
        %481 = vmatprep.subr.mxu0 0.0
        %482 = vmatpush1.msra.mxu0 0.0
        %483 = vmatprep.subr.mxu0 0.0
        %484 = vmatpush1.msra.mxu0 0.0
        %485 = vmatprep.subr.mxu0 0.0
        %486 = vmatpush1.msra.mxu0 0.0
        %487 = vmatprep.subr.mxu0 %v451
        %488 = vmatpush1.msra.mxu0 %v449
        %489 = vmatprep.subr.mxu0 0.0
        %490 = vmatpush2.msra.mxu0 0.0
        %491 = vmatprep.subr.mxu0 0.0
        %492 = vmatpush2.msra.mxu0 0.0
        %493 = vmatprep.subr.mxu0 0.0
        %494 = vmatpush2.msra.mxu0 0.0
        %495 = vmatprep.subr.mxu0 0.0
        %496 = vmatpush2.msra.mxu0 0.0
        %497 = vmatprep.subr.mxu0 0.0
        %498 = vmatpush2.msra.mxu0 0.0
        %499 = vmatprep.subr.mxu0 0.0
        %500 = vmatpush2.msra.mxu0 0.0
        %501 = vmatprep.subr.mxu0 0.0
        %502 = vmatpush2.msra.mxu0 0.0
        %503 = vmatprep.subr.mxu0 0.0
        %504 = vmatpush2.msra.mxu0 0.0
        %505 = vmatprep.subr.mxu0 0.0
        %506 = vmatpush2.msra.mxu0 0.0
        %507 = vmatprep.subr.mxu0 0.0
        %508 = vmatpush2.msra.mxu0 0.0
        %509 = vmatprep.subr.mxu0 0.0
        %510 = vmatpush2.msra.mxu0 0.0
        %511 = vmatprep.subr.mxu0 0.0
        %512 = vmatpush2.msra.mxu0 0.0
        %513 = vmatprep.subr.mxu0 0.0
        %514 = vmatpush2.msra.mxu0 0.0
        %515 = vmatprep.subr.mxu0 0.0
        %516 = vmatpush2.msra.mxu0 0.0
        %517 = vmatprep.subr.mxu0 0.0
        %518 = vmatpush2.msra.mxu0 0.0
        %519 = vmatprep.subr.mxu0 0.0
        %520 = vmatpush2.msra.mxu0 0.0
        %521 = vmatprep.mubr.f32.mxu0 0.0
        %522 = vmatmul.mubr.f32.gmra.mxu0 %v437
        %v523 = vpop.f32.mrf.mxu0
        %v524 = vadd.f32 %v400, %v523
        %v525 = vpop.f32.mrf.mxu0
        %v526 = vadd.f32 %v400, %v525
        %527 = vmatprep.mubr.f32.mxu0 0.0
        %528 = vmatmul.mubr.f32.gmra.mxu0 %v440
        %v529 = vpop.f32.mrf.mxu0
        %v530 = vadd.f32 %v405, %v529
        %v531 = vpop.f32.mrf.mxu0
        %v532 = vadd.f32 %v405, %v531
        %533 = vmatprep.mubr.f32.mxu0 0.0
        %534 = vmatmul.mubr.f32.gmra.mxu0 %v443
        %v535 = vpop.f32.mrf.mxu0
        %v536 = vadd.f32 %v410, %v535
        %v537 = vpop.f32.mrf.mxu0
        %v538 = vadd.f32 %v410, %v537
        %539 = vmatprep.mubr.f32.mxu0 0.0
        %540 = vmatmul.mubr.f32.gmra.mxu0 %v446
        %v541 = vpop.f32.mrf.mxu0
        %v542 = vadd.f32 %v415, %v541
        %v543 = vpop.f32.mrf.mxu0
        %v544 = vadd.f32 %v415, %v543
        %545 = vdwg.mxu0
        %546 = vmatprep.subr.mxu0 0.0
        %547 = vmatpush1.msra.mxu0 0.0
        %548 = vmatprep.subr.mxu0 0.0
        %549 = vmatpush1.msra.mxu0 0.0
        %550 = vmatprep.subr.mxu0 0.0
        %551 = vmatpush1.msra.mxu0 0.0
        %552 = vmatprep.subr.mxu0 0.0
        %553 = vmatpush1.msra.mxu0 0.0
        %554 = vmatprep.subr.mxu0 0.0
        %555 = vmatpush1.msra.mxu0 0.0
        %556 = vmatprep.subr.mxu0 0.0
        %557 = vmatpush1.msra.mxu0 0.0
        %558 = vmatprep.subr.mxu0 0.0
        %559 = vmatpush1.msra.mxu0 0.0
        %560 = vmatprep.subr.mxu0 0.0
        %561 = vmatpush1.msra.mxu0 0.0
        %562 = vmatprep.subr.mxu0 0.0
        %563 = vmatpush1.msra.mxu0 0.0
        %564 = vmatprep.subr.mxu0 0.0
        %565 = vmatpush1.msra.mxu0 0.0
        %566 = vmatprep.subr.mxu0 0.0
        %567 = vmatpush1.msra.mxu0 0.0
        %568 = vmatprep.subr.mxu0 0.0
        %569 = vmatpush1.msra.mxu0 0.0
        %570 = vmatprep.subr.mxu0 0.0
        %571 = vmatpush1.msra.mxu0 0.0
        %572 = vmatprep.subr.mxu0 0.0
        %573 = vmatpush1.msra.mxu0 0.0
        %574 = vmatprep.subr.mxu0 0.0
        %575 = vmatpush1.msra.mxu0 0.0
        %576 = vmatprep.subr.mxu0 %v455
        %577 = vmatpush1.msra.mxu0 %v453
        %578 = vmatprep.subr.mxu0 0.0
        %579 = vmatpush2.msra.mxu0 0.0
        %580 = vmatprep.subr.mxu0 0.0
        %581 = vmatpush2.msra.mxu0 0.0
        %582 = vmatprep.subr.mxu0 0.0
        %583 = vmatpush2.msra.mxu0 0.0
        %584 = vmatprep.subr.mxu0 0.0
        %585 = vmatpush2.msra.mxu0 0.0
        %586 = vmatprep.subr.mxu0 0.0
        %587 = vmatpush2.msra.mxu0 0.0
        %588 = vmatprep.subr.mxu0 0.0
        %589 = vmatpush2.msra.mxu0 0.0
        %590 = vmatprep.subr.mxu0 0.0
        %591 = vmatpush2.msra.mxu0 0.0
        %592 = vmatprep.subr.mxu0 0.0
        %593 = vmatpush2.msra.mxu0 0.0
        %594 = vmatprep.subr.mxu0 0.0
        %595 = vmatpush2.msra.mxu0 0.0
        %596 = vmatprep.subr.mxu0 0.0
        %597 = vmatpush2.msra.mxu0 0.0
        %598 = vmatprep.subr.mxu0 0.0
        %599 = vmatpush2.msra.mxu0 0.0
        %600 = vmatprep.subr.mxu0 0.0
        %601 = vmatpush2.msra.mxu0 0.0
        %602 = vmatprep.subr.mxu0 0.0
        %603 = vmatpush2.msra.mxu0 0.0
        %604 = vmatprep.subr.mxu0 0.0
        %605 = vmatpush2.msra.mxu0 0.0
        %606 = vmatprep.subr.mxu0 0.0
        %607 = vmatpush2.msra.mxu0 0.0
        %608 = vmatprep.subr.mxu0 0.0
        %609 = vmatpush2.msra.mxu0 0.0
        %610 = vmatprep.mubr.f32.mxu0 0.0
        %611 = vmatmul.mubr.f32.gmra.mxu0 %v437
        %v612 = vpop.f32.mrf.mxu0
        %v613 = vadd.f32 %v400, %v612
        %v614 = vpop.f32.mrf.mxu0
        %v615 = vadd.f32 %v400, %v614
        %616 = vmatprep.mubr.f32.mxu0 0.0
        %617 = vmatmul.mubr.f32.gmra.mxu0 %v440
        %v618 = vpop.f32.mrf.mxu0
        %v619 = vadd.f32 %v405, %v618
        %v620 = vpop.f32.mrf.mxu0
        %v621 = vadd.f32 %v405, %v620
        %622 = vmatprep.mubr.f32.mxu0 0.0
        %623 = vmatmul.mubr.f32.gmra.mxu0 %v443
        %v624 = vpop.f32.mrf.mxu0
        %v625 = vadd.f32 %v410, %v624
        %v626 = vpop.f32.mrf.mxu0
        %v627 = vadd.f32 %v410, %v626
        %628 = vmatprep.mubr.f32.mxu0 0.0
        %629 = vmatmul.mubr.f32.gmra.mxu0 %v446
        %v630 = vpop.f32.mrf.mxu0
        %v631 = vadd.f32 %v415, %v630
        %v632 = vpop.f32.mrf.mxu0
        %v633 = vadd.f32 %v415, %v632
        %634 = vdwg.mxu0
        %v635 = vand.u32 2147483647, %v524
        %vm636 = vcmp.le.f32.partialorder %v635, 0.7853982
        %vm637 = vcmp.lt.s32.totalorder %v524, 0
        %v638 = vand.u32 %v524, 2139095040
        %v639 = vshrl.u32 %v638, 23
        %v640 = vsub.s32 %v639, 127
        %v641 = vand.u32 2147483647, %v524
        %v642 = vand.u32 %v641, 8388607
        %v643 = vor.u32 %v642, 8388608
        %v644 = vsub.s32 0, %v643
        %v645 = vadd.s32 %v640, 1
        %vm646 = vcmp.gt.s32.totalorder %v645, 0
        %v647 = vsel %vm646, %v645, 0
        %v648 = vshrl.u32 %v647, 5
        %v649 = vand.u32 %v647, 31
        %v650 = vsub.s32 32, %v649
        %v651 = vshrl.u32 683565275, %v650
        %v652 = vshll.u32 683565275, %v649
        %v653 = vshrl.u32 2475754826, %v650
        %v654 = vor.u32 %v652, %v653
        %v655 = vshll.u32 2475754826, %v649
        %v656 = vshrl.u32 2131351028, %v650
        %v657 = vor.u32 %v655, %v656
        %v658 = vshll.u32 2131351028, %v649
        %v659 = vshrl.u32 2102212464, %v650
        %v660 = vor.u32 %v658, %v659
        %v661 = vshll.u32 2102212464, %v649
        %v662 = vshrl.u32 920167782, %v650
        %v663 = vor.u32 %v661, %v662
        %v664 = vshll.u32 920167782, %v649
        %v665 = vshrl.u32 1326507024, %v650
        %v666 = vor.u32 %v664, %v665
        %vm667 = vcmp.lt.s32.totalorder %v648, 1
        %vm668 = vcmp.lt.s32.totalorder %v648, 2
        %vm669 = vcmp.lt.s32.totalorder %v648, 3
        %vm670 = vcmp.lt.s32.totalorder %v648, 4
        %v671 = vsel %vm667, %v651, %v654
        %v672 = vsel %vm670, %v660, 2102212464
        %v673 = vsel %vm669, %v657, %v672
        %v674 = vsel %vm668, %v671, %v673
        %v675 = vsel %vm667, %v654, %v657
        %v676 = vsel %vm670, %v663, 920167782
        %v677 = vsel %vm669, %v660, %v676
        %v678 = vsel %vm668, %v675, %v677
        %v679 = vsel %vm667, %v657, %v660
        %v680 = vsel %vm670, %v666, 1326507024
        %v681 = vsel %vm669, %v663, %v680
        %v682 = vsel %vm668, %v679, %v681
        %v683 = vshll.u32 %v643, 8
        %v684 = vmul.u32.u64.compose %v683, %v682
        %v685 = vextract.low.u32 %v684
        %v686 = vextract.high.u32 %v684
        %v687 = vmul.u32.u64.compose %v683, %v678
        %v688 = vextract.low.u32 %v687
        %v689 = vextract.high.u32 %v687
        %v690 = vmul.u32 %v683, %v674
        %v691 = vadd.s32 %v686, %v688
        %vm692 = vc.u32 %v686, %v688
        %v693 = vadd.s32 %v689, 1
        %v694 = vsel %vm692, %v693, %v689
        %v695 = vadd.s32 %v690, %v694
        %v696 = vadd.s32 %v695, 536870912
        %v697 = vshrl.u32 %v696, 30
        %v698 = vshll.u32 %v697, 30
        %v699 = vsub.s32 %v695, %v698
        %vm700 = vcmp.lt.s32.totalorder %v699, 0
        %v701 = vsub.s32 0, %v699
        %v702 = vsel %vm700, %v701, %v699
        %v703 = vclz %v702
        %v704 = vsub.s32 %v703, 2
        %vm705 = vcmp.gt.s32.totalorder 0, %v704
        %v706 = vsel %vm705, 0, %v704
        %v707 = vsub.s32 32, %v706
        %v708 = vshll.u32 %v699, %v706
        %v709 = vshrl.u32 %v691, %v707
        %v710 = vor.u32 %v708, %v709
        %v711 = vsub.s32 4294967266, %v706
        %v712 = vadd.s32 %v711, 127
        %v713 = vshll.u32 %v712, 23
        %v714 = vor.u32 4788187, %v713
        %v715 = vand.u32 2147483647, %v714
        %v717 = vcvt.s32.f32 %v710
        %v718 = vmul.f32 %v717, %v715
        %v719 = vxor.u32 %v718, 2147483648
        %v720 = vsel %vm637, %v719, %v718
        %v721 = vsub.s32 4, %v697
        %v722 = vsel %vm637, %v721, %v697
        %v723 = vsel %vm636, %v524, %v720
        %v724 = vsel %vm636, 0, %v722
        %v725 = vcosq.f32.pop %v723
        %v726 = vsinq.f32.pop %v723
        %vm727 = vweird.f32 %v524
        %v728 = vadd.s32 %v724, 3
        %v729 = vand.u32 %v728, 3
        %vm730 = vcmp.lt.s32.totalorder %v729, 2
        %vm731 = vcmp.eq.s32.totalorder %v729, 0
        %v732 = vxor.u32 %v726, 2147483648
        %v733 = vsel %vm731, %v725, %v732
        %vm734 = vcmp.eq.s32.totalorder %v729, 2
        %v735 = vxor.u32 %v725, 2147483648
        %v736 = vsel %vm734, %v735, %v726
        %v737 = vsel %vm730, %v733, %v736
        %v738 = vsel %vm727, nan, %v737
        %v739 = vand.u32 2147483647, %v526
        %vm740 = vcmp.le.f32.partialorder %v739, 0.7853982
        %vm741 = vcmp.lt.s32.totalorder %v526, 0
        %v742 = vand.u32 %v526, 2139095040
        %v743 = vshrl.u32 %v742, 23
        %v744 = vsub.s32 %v743, 127
        %v745 = vand.u32 2147483647, %v526
        %v746 = vand.u32 %v745, 8388607
        %v747 = vor.u32 %v746, 8388608
        %v748 = vsub.s32 0, %v747
        %v749 = vadd.s32 %v744, 1
        %vm750 = vcmp.gt.s32.totalorder %v749, 0
        %v751 = vsel %vm750, %v749, 0
        %v752 = vshrl.u32 %v751, 5
        %v753 = vand.u32 %v751, 31
        %v754 = vsub.s32 32, %v753
        %v755 = vshrl.u32 683565275, %v754
        %v756 = vshll.u32 683565275, %v753
        %v757 = vshrl.u32 2475754826, %v754
        %v758 = vor.u32 %v756, %v757
        %v759 = vshll.u32 2475754826, %v753
        %v760 = vshrl.u32 2131351028, %v754
        %v761 = vor.u32 %v759, %v760
        %v762 = vshll.u32 2131351028, %v753
        %v763 = vshrl.u32 2102212464, %v754
        %v764 = vor.u32 %v762, %v763
        %v765 = vshll.u32 2102212464, %v753
        %v766 = vshrl.u32 920167782, %v754
        %v767 = vor.u32 %v765, %v766
        %v768 = vshll.u32 920167782, %v753
        %v769 = vshrl.u32 1326507024, %v754
        %v770 = vor.u32 %v768, %v769
        %vm771 = vcmp.lt.s32.totalorder %v752, 1
        %vm772 = vcmp.lt.s32.totalorder %v752, 2
        %vm773 = vcmp.lt.s32.totalorder %v752, 3
        %vm774 = vcmp.lt.s32.totalorder %v752, 4
        %v775 = vsel %vm771, %v755, %v758
        %v776 = vsel %vm774, %v764, 2102212464
        %v777 = vsel %vm773, %v761, %v776
        %v778 = vsel %vm772, %v775, %v777
        %v779 = vsel %vm771, %v758, %v761
        %v780 = vsel %vm774, %v767, 920167782
        %v781 = vsel %vm773, %v764, %v780
        %v782 = vsel %vm772, %v779, %v781
        %v783 = vsel %vm771, %v761, %v764
        %v784 = vsel %vm774, %v770, 1326507024
        %v785 = vsel %vm773, %v767, %v784
        %v786 = vsel %vm772, %v783, %v785
        %v787 = vshll.u32 %v747, 8
        %v788 = vmul.u32.u64.compose %v787, %v786
        %v789 = vextract.low.u32 %v788
        %v790 = vextract.high.u32 %v788
        %v791 = vmul.u32.u64.compose %v787, %v782
        %v792 = vextract.low.u32 %v791
        %v793 = vextract.high.u32 %v791
        %v794 = vmul.u32 %v787, %v778
        %v795 = vadd.s32 %v790, %v792
        %vm796 = vc.u32 %v790, %v792
        %v797 = vadd.s32 %v793, 1
        %v798 = vsel %vm796, %v797, %v793
        %v799 = vadd.s32 %v794, %v798
        %v800 = vadd.s32 %v799, 536870912
        %v801 = vshrl.u32 %v800, 30
        %v802 = vshll.u32 %v801, 30
        %v803 = vsub.s32 %v799, %v802
        %vm804 = vcmp.lt.s32.totalorder %v803, 0
        %v805 = vsub.s32 0, %v803
        %v806 = vsel %vm804, %v805, %v803
        %v807 = vclz %v806
        %v808 = vsub.s32 %v807, 2
        %vm809 = vcmp.gt.s32.totalorder 0, %v808
        %v810 = vsel %vm809, 0, %v808
        %v811 = vsub.s32 32, %v810
        %v812 = vshll.u32 %v803, %v810
        %v813 = vshrl.u32 %v795, %v811
        %v814 = vor.u32 %v812, %v813
        %v815 = vsub.s32 4294967266, %v810
        %v816 = vadd.s32 %v815, 127
        %v817 = vshll.u32 %v816, 23
        %v818 = vor.u32 4788187, %v817
        %v819 = vand.u32 2147483647, %v818
        %v821 = vcvt.s32.f32 %v814
        %v822 = vmul.f32 %v821, %v819
        %v823 = vxor.u32 %v822, 2147483648
        %v824 = vsel %vm741, %v823, %v822
        %v825 = vsub.s32 4, %v801
        %v826 = vsel %vm741, %v825, %v801
        %v827 = vsel %vm740, %v526, %v824
        %v828 = vsel %vm740, 0, %v826
        %v829 = vcosq.f32.pop %v827
        %v830 = vsinq.f32.pop %v827
        %vm831 = vweird.f32 %v526
        %v832 = vadd.s32 %v828, 3
        %v833 = vand.u32 %v832, 3
        %vm834 = vcmp.lt.s32.totalorder %v833, 2
        %vm835 = vcmp.eq.s32.totalorder %v833, 0
        %v836 = vxor.u32 %v830, 2147483648
        %v837 = vsel %vm835, %v829, %v836
        %vm838 = vcmp.eq.s32.totalorder %v833, 2
        %v839 = vxor.u32 %v829, 2147483648
        %v840 = vsel %vm838, %v839, %v830
        %v841 = vsel %vm834, %v837, %v840
        %v842 = vsel %vm831, nan, %v841
        %v843 = vand.u32 2147483647, %v613
        %vm844 = vcmp.le.f32.partialorder %v843, 0.7853982
        %vm845 = vcmp.lt.s32.totalorder %v613, 0
        %v846 = vand.u32 %v613, 2139095040
        %v847 = vshrl.u32 %v846, 23
        %v848 = vsub.s32 %v847, 127
        %v849 = vand.u32 2147483647, %v613
        %v850 = vand.u32 %v849, 8388607
        %v851 = vor.u32 %v850, 8388608
        %v852 = vsub.s32 0, %v851
        %v853 = vadd.s32 %v848, 1
        %vm854 = vcmp.gt.s32.totalorder %v853, 0
        %v855 = vsel %vm854, %v853, 0
        %v856 = vshrl.u32 %v855, 5
        %v857 = vand.u32 %v855, 31
        %v858 = vsub.s32 32, %v857
        %v859 = vshrl.u32 683565275, %v858
        %v860 = vshll.u32 683565275, %v857
        %v861 = vshrl.u32 2475754826, %v858
        %v862 = vor.u32 %v860, %v861
        %v863 = vshll.u32 2475754826, %v857
        %v864 = vshrl.u32 2131351028, %v858
        %v865 = vor.u32 %v863, %v864
        %v866 = vshll.u32 2131351028, %v857
        %v867 = vshrl.u32 2102212464, %v858
        %v868 = vor.u32 %v866, %v867
        %v869 = vshll.u32 2102212464, %v857
        %v870 = vshrl.u32 920167782, %v858
        %v871 = vor.u32 %v869, %v870
        %v872 = vshll.u32 920167782, %v857
        %v873 = vshrl.u32 1326507024, %v858
        %v874 = vor.u32 %v872, %v873
        %vm875 = vcmp.lt.s32.totalorder %v856, 1
        %vm876 = vcmp.lt.s32.totalorder %v856, 2
        %vm877 = vcmp.lt.s32.totalorder %v856, 3
        %vm878 = vcmp.lt.s32.totalorder %v856, 4
        %v879 = vsel %vm875, %v859, %v862
        %v880 = vsel %vm878, %v868, 2102212464
        %v881 = vsel %vm877, %v865, %v880
        %v882 = vsel %vm876, %v879, %v881
        %v883 = vsel %vm875, %v862, %v865
        %v884 = vsel %vm878, %v871, 920167782
        %v885 = vsel %vm877, %v868, %v884
        %v886 = vsel %vm876, %v883, %v885
        %v887 = vsel %vm875, %v865, %v868
        %v888 = vsel %vm878, %v874, 1326507024
        %v889 = vsel %vm877, %v871, %v888
        %v890 = vsel %vm876, %v887, %v889
        %v891 = vshll.u32 %v851, 8
        %v892 = vmul.u32.u64.compose %v891, %v890
        %v893 = vextract.low.u32 %v892
        %v894 = vextract.high.u32 %v892
        %v895 = vmul.u32.u64.compose %v891, %v886
        %v896 = vextract.low.u32 %v895
        %v897 = vextract.high.u32 %v895
        %v898 = vmul.u32 %v891, %v882
        %v899 = vadd.s32 %v894, %v896
        %vm900 = vc.u32 %v894, %v896
        %v901 = vadd.s32 %v897, 1
        %v902 = vsel %vm900, %v901, %v897
        %v903 = vadd.s32 %v898, %v902
        %v904 = vadd.s32 %v903, 536870912
        %v905 = vshrl.u32 %v904, 30
        %v906 = vshll.u32 %v905, 30
        %v907 = vsub.s32 %v903, %v906
        %vm908 = vcmp.lt.s32.totalorder %v907, 0
        %v909 = vsub.s32 0, %v907
        %v910 = vsel %vm908, %v909, %v907
        %v911 = vclz %v910
        %v912 = vsub.s32 %v911, 2
        %vm913 = vcmp.gt.s32.totalorder 0, %v912
        %v914 = vsel %vm913, 0, %v912
        %v915 = vsub.s32 32, %v914
        %v916 = vshll.u32 %v907, %v914
        %v917 = vshrl.u32 %v899, %v915
        %v918 = vor.u32 %v916, %v917
        %v919 = vsub.s32 4294967266, %v914
        %v920 = vadd.s32 %v919, 127
        %v921 = vshll.u32 %v920, 23
        %v922 = vor.u32 4788187, %v921
        %v923 = vand.u32 2147483647, %v922
        %v925 = vcvt.s32.f32 %v918
        %v926 = vmul.f32 %v925, %v923
        %v927 = vxor.u32 %v926, 2147483648
        %v928 = vsel %vm845, %v927, %v926
        %v929 = vsub.s32 4, %v905
        %v930 = vsel %vm845, %v929, %v905
        %v931 = vsel %vm844, %v613, %v928
        %v932 = vsel %vm844, 0, %v930
        %v933 = vcosq.f32.pop %v931
        %v934 = vsinq.f32.pop %v931
        %vm935 = vweird.f32 %v613
        %v936 = vadd.s32 %v932, 3
        %v937 = vand.u32 %v936, 3
        %vm938 = vcmp.lt.s32.totalorder %v937, 2
        %vm939 = vcmp.eq.s32.totalorder %v937, 0
        %v940 = vxor.u32 %v934, 2147483648
        %v941 = vsel %vm939, %v933, %v940
        %vm942 = vcmp.eq.s32.totalorder %v937, 2
        %v943 = vxor.u32 %v933, 2147483648
        %v944 = vsel %vm942, %v943, %v934
        %v945 = vsel %vm938, %v941, %v944
        %v946 = vsel %vm935, nan, %v945
        %v947 = vand.u32 2147483647, %v615
        %vm948 = vcmp.le.f32.partialorder %v947, 0.7853982
        %vm949 = vcmp.lt.s32.totalorder %v615, 0
        %v950 = vand.u32 %v615, 2139095040
        %v951 = vshrl.u32 %v950, 23
        %v952 = vsub.s32 %v951, 127
        %v953 = vand.u32 2147483647, %v615
        %v954 = vand.u32 %v953, 8388607
        %v955 = vor.u32 %v954, 8388608
        %v956 = vsub.s32 0, %v955
        %v957 = vadd.s32 %v952, 1
        %vm958 = vcmp.gt.s32.totalorder %v957, 0
        %v959 = vsel %vm958, %v957, 0
        %v960 = vshrl.u32 %v959, 5
        %v961 = vand.u32 %v959, 31
        %v962 = vsub.s32 32, %v961
        %v963 = vshrl.u32 683565275, %v962
        %v964 = vshll.u32 683565275, %v961
        %v965 = vshrl.u32 2475754826, %v962
        %v966 = vor.u32 %v964, %v965
        %v967 = vshll.u32 2475754826, %v961
        %v968 = vshrl.u32 2131351028, %v962
        %v969 = vor.u32 %v967, %v968
        %v970 = vshll.u32 2131351028, %v961
        %v971 = vshrl.u32 2102212464, %v962
        %v972 = vor.u32 %v970, %v971
        %v973 = vshll.u32 2102212464, %v961
        %v974 = vshrl.u32 920167782, %v962
        %v975 = vor.u32 %v973, %v974
        %v976 = vshll.u32 920167782, %v961
        %v977 = vshrl.u32 1326507024, %v962
        %v978 = vor.u32 %v976, %v977
        %vm979 = vcmp.lt.s32.totalorder %v960, 1
        %vm980 = vcmp.lt.s32.totalorder %v960, 2
        %vm981 = vcmp.lt.s32.totalorder %v960, 3
        %vm982 = vcmp.lt.s32.totalorder %v960, 4
        %v983 = vsel %vm979, %v963, %v966
        %v984 = vsel %vm982, %v972, 2102212464
        %v985 = vsel %vm981, %v969, %v984
        %v986 = vsel %vm980, %v983, %v985
        %v987 = vsel %vm979, %v966, %v969
        %v988 = vsel %vm982, %v975, 920167782
        %v989 = vsel %vm981, %v972, %v988
        %v990 = vsel %vm980, %v987, %v989
        %v991 = vsel %vm979, %v969, %v972
        %v992 = vsel %vm982, %v978, 1326507024
        %v993 = vsel %vm981, %v975, %v992
        %v994 = vsel %vm980, %v991, %v993
        %v995 = vshll.u32 %v955, 8
        %v996 = vmul.u32.u64.compose %v995, %v994
        %v997 = vextract.low.u32 %v996
        %v998 = vextract.high.u32 %v996
        %v999 = vmul.u32.u64.compose %v995, %v990
        %v1000 = vextract.low.u32 %v999
        %v1001 = vextract.high.u32 %v999
        %v1002 = vmul.u32 %v995, %v986
        %v1003 = vadd.s32 %v998, %v1000
        %vm1004 = vc.u32 %v998, %v1000
        %v1005 = vadd.s32 %v1001, 1
        %v1006 = vsel %vm1004, %v1005, %v1001
        %v1007 = vadd.s32 %v1002, %v1006
        %v1008 = vadd.s32 %v1007, 536870912
        %v1009 = vshrl.u32 %v1008, 30
        %v1010 = vshll.u32 %v1009, 30
        %v1011 = vsub.s32 %v1007, %v1010
        %vm1012 = vcmp.lt.s32.totalorder %v1011, 0
        %v1013 = vsub.s32 0, %v1011
        %v1014 = vsel %vm1012, %v1013, %v1011
        %v1015 = vclz %v1014
        %v1016 = vsub.s32 %v1015, 2
        %vm1017 = vcmp.gt.s32.totalorder 0, %v1016
        %v1018 = vsel %vm1017, 0, %v1016
        %v1019 = vsub.s32 32, %v1018
        %v1020 = vshll.u32 %v1011, %v1018
        %v1021 = vshrl.u32 %v1003, %v1019
        %v1022 = vor.u32 %v1020, %v1021
        %v1023 = vsub.s32 4294967266, %v1018
        %v1024 = vadd.s32 %v1023, 127
        %v1025 = vshll.u32 %v1024, 23
        %v1026 = vor.u32 4788187, %v1025
        %v1027 = vand.u32 2147483647, %v1026
        %v1029 = vcvt.s32.f32 %v1022
        %v1030 = vmul.f32 %v1029, %v1027
        %v1031 = vxor.u32 %v1030, 2147483648
        %v1032 = vsel %vm949, %v1031, %v1030
        %v1033 = vsub.s32 4, %v1009
        %v1034 = vsel %vm949, %v1033, %v1009
        %v1035 = vsel %vm948, %v615, %v1032
        %v1036 = vsel %vm948, 0, %v1034
        %v1037 = vcosq.f32.pop %v1035
        %v1038 = vsinq.f32.pop %v1035
        %vm1039 = vweird.f32 %v615
        %v1040 = vadd.s32 %v1036, 3
        %v1041 = vand.u32 %v1040, 3
        %vm1042 = vcmp.lt.s32.totalorder %v1041, 2
        %vm1043 = vcmp.eq.s32.totalorder %v1041, 0
        %v1044 = vxor.u32 %v1038, 2147483648
        %v1045 = vsel %vm1043, %v1037, %v1044
        %vm1046 = vcmp.eq.s32.totalorder %v1041, 2
        %v1047 = vxor.u32 %v1037, 2147483648
        %v1048 = vsel %vm1046, %v1047, %v1038
        %v1049 = vsel %vm1042, %v1045, %v1048
        %v1050 = vsel %vm1039, nan, %v1049
        %v1051 = vand.u32 2147483647, %v530
        %vm1052 = vcmp.le.f32.partialorder %v1051, 0.7853982
        %vm1053 = vcmp.lt.s32.totalorder %v530, 0
        %v1054 = vand.u32 %v530, 2139095040
        %v1055 = vshrl.u32 %v1054, 23
        %v1056 = vsub.s32 %v1055, 127
        %v1057 = vand.u32 2147483647, %v530
        %v1058 = vand.u32 %v1057, 8388607
        %v1059 = vor.u32 %v1058, 8388608
        %v1060 = vsub.s32 0, %v1059
        %v1061 = vadd.s32 %v1056, 1
        %vm1062 = vcmp.gt.s32.totalorder %v1061, 0
        %v1063 = vsel %vm1062, %v1061, 0
        %v1064 = vshrl.u32 %v1063, 5
        %v1065 = vand.u32 %v1063, 31
        %v1066 = vsub.s32 32, %v1065
        %v1067 = vshrl.u32 683565275, %v1066
        %v1068 = vshll.u32 683565275, %v1065
        %v1069 = vshrl.u32 2475754826, %v1066
        %v1070 = vor.u32 %v1068, %v1069
        %v1071 = vshll.u32 2475754826, %v1065
        %v1072 = vshrl.u32 2131351028, %v1066
        %v1073 = vor.u32 %v1071, %v1072
        %v1074 = vshll.u32 2131351028, %v1065
        %v1075 = vshrl.u32 2102212464, %v1066
        %v1076 = vor.u32 %v1074, %v1075
        %v1077 = vshll.u32 2102212464, %v1065
        %v1078 = vshrl.u32 920167782, %v1066
        %v1079 = vor.u32 %v1077, %v1078
        %v1080 = vshll.u32 920167782, %v1065
        %v1081 = vshrl.u32 1326507024, %v1066
        %v1082 = vor.u32 %v1080, %v1081
        %vm1083 = vcmp.lt.s32.totalorder %v1064, 1
        %vm1084 = vcmp.lt.s32.totalorder %v1064, 2
        %vm1085 = vcmp.lt.s32.totalorder %v1064, 3
        %vm1086 = vcmp.lt.s32.totalorder %v1064, 4
        %v1087 = vsel %vm1083, %v1067, %v1070
        %v1088 = vsel %vm1086, %v1076, 2102212464
        %v1089 = vsel %vm1085, %v1073, %v1088
        %v1090 = vsel %vm1084, %v1087, %v1089
        %v1091 = vsel %vm1083, %v1070, %v1073
        %v1092 = vsel %vm1086, %v1079, 920167782
        %v1093 = vsel %vm1085, %v1076, %v1092
        %v1094 = vsel %vm1084, %v1091, %v1093
        %v1095 = vsel %vm1083, %v1073, %v1076
        %v1096 = vsel %vm1086, %v1082, 1326507024
        %v1097 = vsel %vm1085, %v1079, %v1096
        %v1098 = vsel %vm1084, %v1095, %v1097
        %v1099 = vshll.u32 %v1059, 8
        %v1100 = vmul.u32.u64.compose %v1099, %v1098
        %v1101 = vextract.low.u32 %v1100
        %v1102 = vextract.high.u32 %v1100
        %v1103 = vmul.u32.u64.compose %v1099, %v1094
        %v1104 = vextract.low.u32 %v1103
        %v1105 = vextract.high.u32 %v1103
        %v1106 = vmul.u32 %v1099, %v1090
        %v1107 = vadd.s32 %v1102, %v1104
        %vm1108 = vc.u32 %v1102, %v1104
        %v1109 = vadd.s32 %v1105, 1
        %v1110 = vsel %vm1108, %v1109, %v1105
        %v1111 = vadd.s32 %v1106, %v1110
        %v1112 = vadd.s32 %v1111, 536870912
        %v1113 = vshrl.u32 %v1112, 30
        %v1114 = vshll.u32 %v1113, 30
        %v1115 = vsub.s32 %v1111, %v1114
        %vm1116 = vcmp.lt.s32.totalorder %v1115, 0
        %v1117 = vsub.s32 0, %v1115
        %v1118 = vsel %vm1116, %v1117, %v1115
        %v1119 = vclz %v1118
        %v1120 = vsub.s32 %v1119, 2
        %vm1121 = vcmp.gt.s32.totalorder 0, %v1120
        %v1122 = vsel %vm1121, 0, %v1120
        %v1123 = vsub.s32 32, %v1122
        %v1124 = vshll.u32 %v1115, %v1122
        %v1125 = vshrl.u32 %v1107, %v1123
        %v1126 = vor.u32 %v1124, %v1125
        %v1127 = vsub.s32 4294967266, %v1122
        %v1128 = vadd.s32 %v1127, 127
        %v1129 = vshll.u32 %v1128, 23
        %v1130 = vor.u32 4788187, %v1129
        %v1131 = vand.u32 2147483647, %v1130
        %v1133 = vcvt.s32.f32 %v1126
        %v1134 = vmul.f32 %v1133, %v1131
        %v1135 = vxor.u32 %v1134, 2147483648
        %v1136 = vsel %vm1053, %v1135, %v1134
        %v1137 = vsub.s32 4, %v1113
        %v1138 = vsel %vm1053, %v1137, %v1113
        %v1139 = vsel %vm1052, %v530, %v1136
        %v1140 = vsel %vm1052, 0, %v1138
        %v1141 = vcosq.f32.pop %v1139
        %v1142 = vsinq.f32.pop %v1139
        %vm1143 = vweird.f32 %v530
        %v1144 = vadd.s32 %v1140, 3
        %v1145 = vand.u32 %v1144, 3
        %vm1146 = vcmp.lt.s32.totalorder %v1145, 2
        %vm1147 = vcmp.eq.s32.totalorder %v1145, 0
        %v1148 = vxor.u32 %v1142, 2147483648
        %v1149 = vsel %vm1147, %v1141, %v1148
        %vm1150 = vcmp.eq.s32.totalorder %v1145, 2
        %v1151 = vxor.u32 %v1141, 2147483648
        %v1152 = vsel %vm1150, %v1151, %v1142
        %v1153 = vsel %vm1146, %v1149, %v1152
        %v1154 = vsel %vm1143, nan, %v1153
        %v1155 = vand.u32 2147483647, %v532
        %vm1156 = vcmp.le.f32.partialorder %v1155, 0.7853982
        %vm1157 = vcmp.lt.s32.totalorder %v532, 0
        %v1158 = vand.u32 %v532, 2139095040
        %v1159 = vshrl.u32 %v1158, 23
        %v1160 = vsub.s32 %v1159, 127
        %v1161 = vand.u32 2147483647, %v532
        %v1162 = vand.u32 %v1161, 8388607
        %v1163 = vor.u32 %v1162, 8388608
        %v1164 = vsub.s32 0, %v1163
        %v1165 = vadd.s32 %v1160, 1
        %vm1166 = vcmp.gt.s32.totalorder %v1165, 0
        %v1167 = vsel %vm1166, %v1165, 0
        %v1168 = vshrl.u32 %v1167, 5
        %v1169 = vand.u32 %v1167, 31
        %v1170 = vsub.s32 32, %v1169
        %v1171 = vshrl.u32 683565275, %v1170
        %v1172 = vshll.u32 683565275, %v1169
        %v1173 = vshrl.u32 2475754826, %v1170
        %v1174 = vor.u32 %v1172, %v1173
        %v1175 = vshll.u32 2475754826, %v1169
        %v1176 = vshrl.u32 2131351028, %v1170
        %v1177 = vor.u32 %v1175, %v1176
        %v1178 = vshll.u32 2131351028, %v1169
        %v1179 = vshrl.u32 2102212464, %v1170
        %v1180 = vor.u32 %v1178, %v1179
        %v1181 = vshll.u32 2102212464, %v1169
        %v1182 = vshrl.u32 920167782, %v1170
        %v1183 = vor.u32 %v1181, %v1182
        %v1184 = vshll.u32 920167782, %v1169
        %v1185 = vshrl.u32 1326507024, %v1170
        %v1186 = vor.u32 %v1184, %v1185
        %vm1187 = vcmp.lt.s32.totalorder %v1168, 1
        %vm1188 = vcmp.lt.s32.totalorder %v1168, 2
        %vm1189 = vcmp.lt.s32.totalorder %v1168, 3
        %vm1190 = vcmp.lt.s32.totalorder %v1168, 4
        %v1191 = vsel %vm1187, %v1171, %v1174
        %v1192 = vsel %vm1190, %v1180, 2102212464
        %v1193 = vsel %vm1189, %v1177, %v1192
        %v1194 = vsel %vm1188, %v1191, %v1193
        %v1195 = vsel %vm1187, %v1174, %v1177
        %v1196 = vsel %vm1190, %v1183, 920167782
        %v1197 = vsel %vm1189, %v1180, %v1196
        %v1198 = vsel %vm1188, %v1195, %v1197
        %v1199 = vsel %vm1187, %v1177, %v1180
        %v1200 = vsel %vm1190, %v1186, 1326507024
        %v1201 = vsel %vm1189, %v1183, %v1200
        %v1202 = vsel %vm1188, %v1199, %v1201
        %v1203 = vshll.u32 %v1163, 8
        %v1204 = vmul.u32.u64.compose %v1203, %v1202
        %v1205 = vextract.low.u32 %v1204
        %v1206 = vextract.high.u32 %v1204
        %v1207 = vmul.u32.u64.compose %v1203, %v1198
        %v1208 = vextract.low.u32 %v1207
        %v1209 = vextract.high.u32 %v1207
        %v1210 = vmul.u32 %v1203, %v1194
        %v1211 = vadd.s32 %v1206, %v1208
        %vm1212 = vc.u32 %v1206, %v1208
        %v1213 = vadd.s32 %v1209, 1
        %v1214 = vsel %vm1212, %v1213, %v1209
        %v1215 = vadd.s32 %v1210, %v1214
        %v1216 = vadd.s32 %v1215, 536870912
        %v1217 = vshrl.u32 %v1216, 30
        %v1218 = vshll.u32 %v1217, 30
        %v1219 = vsub.s32 %v1215, %v1218
        %vm1220 = vcmp.lt.s32.totalorder %v1219, 0
        %v1221 = vsub.s32 0, %v1219
        %v1222 = vsel %vm1220, %v1221, %v1219
        %v1223 = vclz %v1222
        %v1224 = vsub.s32 %v1223, 2
        %vm1225 = vcmp.gt.s32.totalorder 0, %v1224
        %v1226 = vsel %vm1225, 0, %v1224
        %v1227 = vsub.s32 32, %v1226
        %v1228 = vshll.u32 %v1219, %v1226
        %v1229 = vshrl.u32 %v1211, %v1227
        %v1230 = vor.u32 %v1228, %v1229
        %v1231 = vsub.s32 4294967266, %v1226
        %v1232 = vadd.s32 %v1231, 127
        %v1233 = vshll.u32 %v1232, 23
        %v1234 = vor.u32 4788187, %v1233
        %v1235 = vand.u32 2147483647, %v1234
        %v1237 = vcvt.s32.f32 %v1230
        %v1238 = vmul.f32 %v1237, %v1235
        %v1239 = vxor.u32 %v1238, 2147483648
        %v1240 = vsel %vm1157, %v1239, %v1238
        %v1241 = vsub.s32 4, %v1217
        %v1242 = vsel %vm1157, %v1241, %v1217
        %v1243 = vsel %vm1156, %v532, %v1240
        %v1244 = vsel %vm1156, 0, %v1242
        %v1245 = vcosq.f32.pop %v1243
        %v1246 = vsinq.f32.pop %v1243
        %vm1247 = vweird.f32 %v532
        %v1248 = vadd.s32 %v1244, 3
        %v1249 = vand.u32 %v1248, 3
        %vm1250 = vcmp.lt.s32.totalorder %v1249, 2
        %vm1251 = vcmp.eq.s32.totalorder %v1249, 0
        %v1252 = vxor.u32 %v1246, 2147483648
        %v1253 = vsel %vm1251, %v1245, %v1252
        %vm1254 = vcmp.eq.s32.totalorder %v1249, 2
        %v1255 = vxor.u32 %v1245, 2147483648
        %v1256 = vsel %vm1254, %v1255, %v1246
        %v1257 = vsel %vm1250, %v1253, %v1256
        %v1258 = vsel %vm1247, nan, %v1257
        %v1259 = vand.u32 2147483647, %v619
        %vm1260 = vcmp.le.f32.partialorder %v1259, 0.7853982
        %vm1261 = vcmp.lt.s32.totalorder %v619, 0
        %v1262 = vand.u32 %v619, 2139095040
        %v1263 = vshrl.u32 %v1262, 23
        %v1264 = vsub.s32 %v1263, 127
        %v1265 = vand.u32 2147483647, %v619
        %v1266 = vand.u32 %v1265, 8388607
        %v1267 = vor.u32 %v1266, 8388608
        %v1268 = vsub.s32 0, %v1267
        %v1269 = vadd.s32 %v1264, 1
        %vm1270 = vcmp.gt.s32.totalorder %v1269, 0
        %v1271 = vsel %vm1270, %v1269, 0
        %v1272 = vshrl.u32 %v1271, 5
        %v1273 = vand.u32 %v1271, 31
        %v1274 = vsub.s32 32, %v1273
        %v1275 = vshrl.u32 683565275, %v1274
        %v1276 = vshll.u32 683565275, %v1273
        %v1277 = vshrl.u32 2475754826, %v1274
        %v1278 = vor.u32 %v1276, %v1277
        %v1279 = vshll.u32 2475754826, %v1273
        %v1280 = vshrl.u32 2131351028, %v1274
        %v1281 = vor.u32 %v1279, %v1280
        %v1282 = vshll.u32 2131351028, %v1273
        %v1283 = vshrl.u32 2102212464, %v1274
        %v1284 = vor.u32 %v1282, %v1283
        %v1285 = vshll.u32 2102212464, %v1273
        %v1286 = vshrl.u32 920167782, %v1274
        %v1287 = vor.u32 %v1285, %v1286
        %v1288 = vshll.u32 920167782, %v1273
        %v1289 = vshrl.u32 1326507024, %v1274
        %v1290 = vor.u32 %v1288, %v1289
        %vm1291 = vcmp.lt.s32.totalorder %v1272, 1
        %vm1292 = vcmp.lt.s32.totalorder %v1272, 2
        %vm1293 = vcmp.lt.s32.totalorder %v1272, 3
        %vm1294 = vcmp.lt.s32.totalorder %v1272, 4
        %v1295 = vsel %vm1291, %v1275, %v1278
        %v1296 = vsel %vm1294, %v1284, 2102212464
        %v1297 = vsel %vm1293, %v1281, %v1296
        %v1298 = vsel %vm1292, %v1295, %v1297
        %v1299 = vsel %vm1291, %v1278, %v1281
        %v1300 = vsel %vm1294, %v1287, 920167782
        %v1301 = vsel %vm1293, %v1284, %v1300
        %v1302 = vsel %vm1292, %v1299, %v1301
        %v1303 = vsel %vm1291, %v1281, %v1284
        %v1304 = vsel %vm1294, %v1290, 1326507024
        %v1305 = vsel %vm1293, %v1287, %v1304
        %v1306 = vsel %vm1292, %v1303, %v1305
        %v1307 = vshll.u32 %v1267, 8
        %v1308 = vmul.u32.u64.compose %v1307, %v1306
        %v1309 = vextract.low.u32 %v1308
        %v1310 = vextract.high.u32 %v1308
        %v1311 = vmul.u32.u64.compose %v1307, %v1302
        %v1312 = vextract.low.u32 %v1311
        %v1313 = vextract.high.u32 %v1311
        %v1314 = vmul.u32 %v1307, %v1298
        %v1315 = vadd.s32 %v1310, %v1312
        %vm1316 = vc.u32 %v1310, %v1312
        %v1317 = vadd.s32 %v1313, 1
        %v1318 = vsel %vm1316, %v1317, %v1313
        %v1319 = vadd.s32 %v1314, %v1318
        %v1320 = vadd.s32 %v1319, 536870912
        %v1321 = vshrl.u32 %v1320, 30
        %v1322 = vshll.u32 %v1321, 30
        %v1323 = vsub.s32 %v1319, %v1322
        %vm1324 = vcmp.lt.s32.totalorder %v1323, 0
        %v1325 = vsub.s32 0, %v1323
        %v1326 = vsel %vm1324, %v1325, %v1323
        %v1327 = vclz %v1326
        %v1328 = vsub.s32 %v1327, 2
        %vm1329 = vcmp.gt.s32.totalorder 0, %v1328
        %v1330 = vsel %vm1329, 0, %v1328
        %v1331 = vsub.s32 32, %v1330
        %v1332 = vshll.u32 %v1323, %v1330
        %v1333 = vshrl.u32 %v1315, %v1331
        %v1334 = vor.u32 %v1332, %v1333
        %v1335 = vsub.s32 4294967266, %v1330
        %v1336 = vadd.s32 %v1335, 127
        %v1337 = vshll.u32 %v1336, 23
        %v1338 = vor.u32 4788187, %v1337
        %v1339 = vand.u32 2147483647, %v1338
        %v1341 = vcvt.s32.f32 %v1334
        %v1342 = vmul.f32 %v1341, %v1339
        %v1343 = vxor.u32 %v1342, 2147483648
        %v1344 = vsel %vm1261, %v1343, %v1342
        %v1345 = vsub.s32 4, %v1321
        %v1346 = vsel %vm1261, %v1345, %v1321
        %v1347 = vsel %vm1260, %v619, %v1344
        %v1348 = vsel %vm1260, 0, %v1346
        %v1349 = vcosq.f32.pop %v1347
        %v1350 = vsinq.f32.pop %v1347
        %vm1351 = vweird.f32 %v619
        %v1352 = vadd.s32 %v1348, 3
        %v1353 = vand.u32 %v1352, 3
        %vm1354 = vcmp.lt.s32.totalorder %v1353, 2
        %vm1355 = vcmp.eq.s32.totalorder %v1353, 0
        %v1356 = vxor.u32 %v1350, 2147483648
        %v1357 = vsel %vm1355, %v1349, %v1356
        %vm1358 = vcmp.eq.s32.totalorder %v1353, 2
        %v1359 = vxor.u32 %v1349, 2147483648
        %v1360 = vsel %vm1358, %v1359, %v1350
        %v1361 = vsel %vm1354, %v1357, %v1360
        %v1362 = vsel %vm1351, nan, %v1361
        %v1363 = vand.u32 2147483647, %v621
        %vm1364 = vcmp.le.f32.partialorder %v1363, 0.7853982
        %vm1365 = vcmp.lt.s32.totalorder %v621, 0
        %v1366 = vand.u32 %v621, 2139095040
        %v1367 = vshrl.u32 %v1366, 23
        %v1368 = vsub.s32 %v1367, 127
        %v1369 = vand.u32 2147483647, %v621
        %v1370 = vand.u32 %v1369, 8388607
        %v1371 = vor.u32 %v1370, 8388608
        %v1372 = vsub.s32 0, %v1371
        %v1373 = vadd.s32 %v1368, 1
        %vm1374 = vcmp.gt.s32.totalorder %v1373, 0
        %v1375 = vsel %vm1374, %v1373, 0
        %v1376 = vshrl.u32 %v1375, 5
        %v1377 = vand.u32 %v1375, 31
        %v1378 = vsub.s32 32, %v1377
        %v1379 = vshrl.u32 683565275, %v1378
        %v1380 = vshll.u32 683565275, %v1377
        %v1381 = vshrl.u32 2475754826, %v1378
        %v1382 = vor.u32 %v1380, %v1381
        %v1383 = vshll.u32 2475754826, %v1377
        %v1384 = vshrl.u32 2131351028, %v1378
        %v1385 = vor.u32 %v1383, %v1384
        %v1386 = vshll.u32 2131351028, %v1377
        %v1387 = vshrl.u32 2102212464, %v1378
        %v1388 = vor.u32 %v1386, %v1387
        %v1389 = vshll.u32 2102212464, %v1377
        %v1390 = vshrl.u32 920167782, %v1378
        %v1391 = vor.u32 %v1389, %v1390
        %v1392 = vshll.u32 920167782, %v1377
        %v1393 = vshrl.u32 1326507024, %v1378
        %v1394 = vor.u32 %v1392, %v1393
        %vm1395 = vcmp.lt.s32.totalorder %v1376, 1
        %vm1396 = vcmp.lt.s32.totalorder %v1376, 2
        %vm1397 = vcmp.lt.s32.totalorder %v1376, 3
        %vm1398 = vcmp.lt.s32.totalorder %v1376, 4
        %v1399 = vsel %vm1395, %v1379, %v1382
        %v1400 = vsel %vm1398, %v1388, 2102212464
        %v1401 = vsel %vm1397, %v1385, %v1400
        %v1402 = vsel %vm1396, %v1399, %v1401
        %v1403 = vsel %vm1395, %v1382, %v1385
        %v1404 = vsel %vm1398, %v1391, 920167782
        %v1405 = vsel %vm1397, %v1388, %v1404
        %v1406 = vsel %vm1396, %v1403, %v1405
        %v1407 = vsel %vm1395, %v1385, %v1388
        %v1408 = vsel %vm1398, %v1394, 1326507024
        %v1409 = vsel %vm1397, %v1391, %v1408
        %v1410 = vsel %vm1396, %v1407, %v1409
        %v1411 = vshll.u32 %v1371, 8
        %v1412 = vmul.u32.u64.compose %v1411, %v1410
        %v1413 = vextract.low.u32 %v1412
        %v1414 = vextract.high.u32 %v1412
        %v1415 = vmul.u32.u64.compose %v1411, %v1406
        %v1416 = vextract.low.u32 %v1415
        %v1417 = vextract.high.u32 %v1415
        %v1418 = vmul.u32 %v1411, %v1402
        %v1419 = vadd.s32 %v1414, %v1416
        %vm1420 = vc.u32 %v1414, %v1416
        %v1421 = vadd.s32 %v1417, 1
        %v1422 = vsel %vm1420, %v1421, %v1417
        %v1423 = vadd.s32 %v1418, %v1422
        %v1424 = vadd.s32 %v1423, 536870912
        %v1425 = vshrl.u32 %v1424, 30
        %v1426 = vshll.u32 %v1425, 30
        %v1427 = vsub.s32 %v1423, %v1426
        %vm1428 = vcmp.lt.s32.totalorder %v1427, 0
        %v1429 = vsub.s32 0, %v1427
        %v1430 = vsel %vm1428, %v1429, %v1427
        %v1431 = vclz %v1430
        %v1432 = vsub.s32 %v1431, 2
        %vm1433 = vcmp.gt.s32.totalorder 0, %v1432
        %v1434 = vsel %vm1433, 0, %v1432
        %v1435 = vsub.s32 32, %v1434
        %v1436 = vshll.u32 %v1427, %v1434
        %v1437 = vshrl.u32 %v1419, %v1435
        %v1438 = vor.u32 %v1436, %v1437
        %v1439 = vsub.s32 4294967266, %v1434
        %v1440 = vadd.s32 %v1439, 127
        %v1441 = vshll.u32 %v1440, 23
        %v1442 = vor.u32 4788187, %v1441
        %v1443 = vand.u32 2147483647, %v1442
        %v1445 = vcvt.s32.f32 %v1438
        %v1446 = vmul.f32 %v1445, %v1443
        %v1447 = vxor.u32 %v1446, 2147483648
        %v1448 = vsel %vm1365, %v1447, %v1446
        %v1449 = vsub.s32 4, %v1425
        %v1450 = vsel %vm1365, %v1449, %v1425
        %v1451 = vsel %vm1364, %v621, %v1448
        %v1452 = vsel %vm1364, 0, %v1450
        %v1453 = vcosq.f32.pop %v1451
        %v1454 = vsinq.f32.pop %v1451
        %vm1455 = vweird.f32 %v621
        %v1456 = vadd.s32 %v1452, 3
        %v1457 = vand.u32 %v1456, 3
        %vm1458 = vcmp.lt.s32.totalorder %v1457, 2
        %vm1459 = vcmp.eq.s32.totalorder %v1457, 0
        %v1460 = vxor.u32 %v1454, 2147483648
        %v1461 = vsel %vm1459, %v1453, %v1460
        %vm1462 = vcmp.eq.s32.totalorder %v1457, 2
        %v1463 = vxor.u32 %v1453, 2147483648
        %v1464 = vsel %vm1462, %v1463, %v1454
        %v1465 = vsel %vm1458, %v1461, %v1464
        %v1466 = vsel %vm1455, nan, %v1465
        %v1467 = vand.u32 2147483647, %v536
        %vm1468 = vcmp.le.f32.partialorder %v1467, 0.7853982
        %vm1469 = vcmp.lt.s32.totalorder %v536, 0
        %v1470 = vand.u32 %v536, 2139095040
        %v1471 = vshrl.u32 %v1470, 23
        %v1472 = vsub.s32 %v1471, 127
        %v1473 = vand.u32 2147483647, %v536
        %v1474 = vand.u32 %v1473, 8388607
        %v1475 = vor.u32 %v1474, 8388608
        %v1476 = vsub.s32 0, %v1475
        %v1477 = vadd.s32 %v1472, 1
        %vm1478 = vcmp.gt.s32.totalorder %v1477, 0
        %v1479 = vsel %vm1478, %v1477, 0
        %v1480 = vshrl.u32 %v1479, 5
        %v1481 = vand.u32 %v1479, 31
        %v1482 = vsub.s32 32, %v1481
        %v1483 = vshrl.u32 683565275, %v1482
        %v1484 = vshll.u32 683565275, %v1481
        %v1485 = vshrl.u32 2475754826, %v1482
        %v1486 = vor.u32 %v1484, %v1485
        %v1487 = vshll.u32 2475754826, %v1481
        %v1488 = vshrl.u32 2131351028, %v1482
        %v1489 = vor.u32 %v1487, %v1488
        %v1490 = vshll.u32 2131351028, %v1481
        %v1491 = vshrl.u32 2102212464, %v1482
        %v1492 = vor.u32 %v1490, %v1491
        %v1493 = vshll.u32 2102212464, %v1481
        %v1494 = vshrl.u32 920167782, %v1482
        %v1495 = vor.u32 %v1493, %v1494
        %v1496 = vshll.u32 920167782, %v1481
        %v1497 = vshrl.u32 1326507024, %v1482
        %v1498 = vor.u32 %v1496, %v1497
        %vm1499 = vcmp.lt.s32.totalorder %v1480, 1
        %vm1500 = vcmp.lt.s32.totalorder %v1480, 2
        %vm1501 = vcmp.lt.s32.totalorder %v1480, 3
        %vm1502 = vcmp.lt.s32.totalorder %v1480, 4
        %v1503 = vsel %vm1499, %v1483, %v1486
        %v1504 = vsel %vm1502, %v1492, 2102212464
        %v1505 = vsel %vm1501, %v1489, %v1504
        %v1506 = vsel %vm1500, %v1503, %v1505
        %v1507 = vsel %vm1499, %v1486, %v1489
        %v1508 = vsel %vm1502, %v1495, 920167782
        %v1509 = vsel %vm1501, %v1492, %v1508
        %v1510 = vsel %vm1500, %v1507, %v1509
        %v1511 = vsel %vm1499, %v1489, %v1492
        %v1512 = vsel %vm1502, %v1498, 1326507024
        %v1513 = vsel %vm1501, %v1495, %v1512
        %v1514 = vsel %vm1500, %v1511, %v1513
        %v1515 = vshll.u32 %v1475, 8
        %v1516 = vmul.u32.u64.compose %v1515, %v1514
        %v1517 = vextract.low.u32 %v1516
        %v1518 = vextract.high.u32 %v1516
        %v1519 = vmul.u32.u64.compose %v1515, %v1510
        %v1520 = vextract.low.u32 %v1519
        %v1521 = vextract.high.u32 %v1519
        %v1522 = vmul.u32 %v1515, %v1506
        %v1523 = vadd.s32 %v1518, %v1520
        %vm1524 = vc.u32 %v1518, %v1520
        %v1525 = vadd.s32 %v1521, 1
        %v1526 = vsel %vm1524, %v1525, %v1521
        %v1527 = vadd.s32 %v1522, %v1526
        %v1528 = vadd.s32 %v1527, 536870912
        %v1529 = vshrl.u32 %v1528, 30
        %v1530 = vshll.u32 %v1529, 30
        %v1531 = vsub.s32 %v1527, %v1530
        %vm1532 = vcmp.lt.s32.totalorder %v1531, 0
        %v1533 = vsub.s32 0, %v1531
        %v1534 = vsel %vm1532, %v1533, %v1531
        %v1535 = vclz %v1534
        %v1536 = vsub.s32 %v1535, 2
        %vm1537 = vcmp.gt.s32.totalorder 0, %v1536
        %v1538 = vsel %vm1537, 0, %v1536
        %v1539 = vsub.s32 32, %v1538
        %v1540 = vshll.u32 %v1531, %v1538
        %v1541 = vshrl.u32 %v1523, %v1539
        %v1542 = vor.u32 %v1540, %v1541
        %v1543 = vsub.s32 4294967266, %v1538
        %v1544 = vadd.s32 %v1543, 127
        %v1545 = vshll.u32 %v1544, 23
        %v1546 = vor.u32 4788187, %v1545
        %v1547 = vand.u32 2147483647, %v1546
        %v1549 = vcvt.s32.f32 %v1542
        %v1550 = vmul.f32 %v1549, %v1547
        %v1551 = vxor.u32 %v1550, 2147483648
        %v1552 = vsel %vm1469, %v1551, %v1550
        %v1553 = vsub.s32 4, %v1529
        %v1554 = vsel %vm1469, %v1553, %v1529
        %v1555 = vsel %vm1468, %v536, %v1552
        %v1556 = vsel %vm1468, 0, %v1554
        %v1557 = vcosq.f32.pop %v1555
        %v1558 = vsinq.f32.pop %v1555
        %vm1559 = vweird.f32 %v536
        %v1560 = vadd.s32 %v1556, 3
        %v1561 = vand.u32 %v1560, 3
        %vm1562 = vcmp.lt.s32.totalorder %v1561, 2
        %vm1563 = vcmp.eq.s32.totalorder %v1561, 0
        %v1564 = vxor.u32 %v1558, 2147483648
        %v1565 = vsel %vm1563, %v1557, %v1564
        %vm1566 = vcmp.eq.s32.totalorder %v1561, 2
        %v1567 = vxor.u32 %v1557, 2147483648
        %v1568 = vsel %vm1566, %v1567, %v1558
        %v1569 = vsel %vm1562, %v1565, %v1568
        %v1570 = vsel %vm1559, nan, %v1569
        %v1571 = vand.u32 2147483647, %v538
        %vm1572 = vcmp.le.f32.partialorder %v1571, 0.7853982
        %vm1573 = vcmp.lt.s32.totalorder %v538, 0
        %v1574 = vand.u32 %v538, 2139095040
        %v1575 = vshrl.u32 %v1574, 23
        %v1576 = vsub.s32 %v1575, 127
        %v1577 = vand.u32 2147483647, %v538
        %v1578 = vand.u32 %v1577, 8388607
        %v1579 = vor.u32 %v1578, 8388608
        %v1580 = vsub.s32 0, %v1579
        %v1581 = vadd.s32 %v1576, 1
        %vm1582 = vcmp.gt.s32.totalorder %v1581, 0
        %v1583 = vsel %vm1582, %v1581, 0
        %v1584 = vshrl.u32 %v1583, 5
        %v1585 = vand.u32 %v1583, 31
        %v1586 = vsub.s32 32, %v1585
        %v1587 = vshrl.u32 683565275, %v1586
        %v1588 = vshll.u32 683565275, %v1585
        %v1589 = vshrl.u32 2475754826, %v1586
        %v1590 = vor.u32 %v1588, %v1589
        %v1591 = vshll.u32 2475754826, %v1585
        %v1592 = vshrl.u32 2131351028, %v1586
        %v1593 = vor.u32 %v1591, %v1592
        %v1594 = vshll.u32 2131351028, %v1585
        %v1595 = vshrl.u32 2102212464, %v1586
        %v1596 = vor.u32 %v1594, %v1595
        %v1597 = vshll.u32 2102212464, %v1585
        %v1598 = vshrl.u32 920167782, %v1586
        %v1599 = vor.u32 %v1597, %v1598
        %v1600 = vshll.u32 920167782, %v1585
        %v1601 = vshrl.u32 1326507024, %v1586
        %v1602 = vor.u32 %v1600, %v1601
        %vm1603 = vcmp.lt.s32.totalorder %v1584, 1
        %vm1604 = vcmp.lt.s32.totalorder %v1584, 2
        %vm1605 = vcmp.lt.s32.totalorder %v1584, 3
        %vm1606 = vcmp.lt.s32.totalorder %v1584, 4
        %v1607 = vsel %vm1603, %v1587, %v1590
        %v1608 = vsel %vm1606, %v1596, 2102212464
        %v1609 = vsel %vm1605, %v1593, %v1608
        %v1610 = vsel %vm1604, %v1607, %v1609
        %v1611 = vsel %vm1603, %v1590, %v1593
        %v1612 = vsel %vm1606, %v1599, 920167782
        %v1613 = vsel %vm1605, %v1596, %v1612
        %v1614 = vsel %vm1604, %v1611, %v1613
        %v1615 = vsel %vm1603, %v1593, %v1596
        %v1616 = vsel %vm1606, %v1602, 1326507024
        %v1617 = vsel %vm1605, %v1599, %v1616
        %v1618 = vsel %vm1604, %v1615, %v1617
        %v1619 = vshll.u32 %v1579, 8
        %v1620 = vmul.u32.u64.compose %v1619, %v1618
        %v1621 = vextract.low.u32 %v1620
        %v1622 = vextract.high.u32 %v1620
        %v1623 = vmul.u32.u64.compose %v1619, %v1614
        %v1624 = vextract.low.u32 %v1623
        %v1625 = vextract.high.u32 %v1623
        %v1626 = vmul.u32 %v1619, %v1610
        %v1627 = vadd.s32 %v1622, %v1624
        %vm1628 = vc.u32 %v1622, %v1624
        %v1629 = vadd.s32 %v1625, 1
        %v1630 = vsel %vm1628, %v1629, %v1625
        %v1631 = vadd.s32 %v1626, %v1630
        %v1632 = vadd.s32 %v1631, 536870912
        %v1633 = vshrl.u32 %v1632, 30
        %v1634 = vshll.u32 %v1633, 30
        %v1635 = vsub.s32 %v1631, %v1634
        %vm1636 = vcmp.lt.s32.totalorder %v1635, 0
        %v1637 = vsub.s32 0, %v1635
        %v1638 = vsel %vm1636, %v1637, %v1635
        %v1639 = vclz %v1638
        %v1640 = vsub.s32 %v1639, 2
        %vm1641 = vcmp.gt.s32.totalorder 0, %v1640
        %v1642 = vsel %vm1641, 0, %v1640
        %v1643 = vsub.s32 32, %v1642
        %v1644 = vshll.u32 %v1635, %v1642
        %v1645 = vshrl.u32 %v1627, %v1643
        %v1646 = vor.u32 %v1644, %v1645
        %v1647 = vsub.s32 4294967266, %v1642
        %v1648 = vadd.s32 %v1647, 127
        %v1649 = vshll.u32 %v1648, 23
        %v1650 = vor.u32 4788187, %v1649
        %v1651 = vand.u32 2147483647, %v1650
        %v1653 = vcvt.s32.f32 %v1646
        %v1654 = vmul.f32 %v1653, %v1651
        %v1655 = vxor.u32 %v1654, 2147483648
        %v1656 = vsel %vm1573, %v1655, %v1654
        %v1657 = vsub.s32 4, %v1633
        %v1658 = vsel %vm1573, %v1657, %v1633
        %v1659 = vsel %vm1572, %v538, %v1656
        %v1660 = vsel %vm1572, 0, %v1658
        %v1661 = vcosq.f32.pop %v1659
        %v1662 = vsinq.f32.pop %v1659
        %vm1663 = vweird.f32 %v538
        %v1664 = vadd.s32 %v1660, 3
        %v1665 = vand.u32 %v1664, 3
        %vm1666 = vcmp.lt.s32.totalorder %v1665, 2
        %vm1667 = vcmp.eq.s32.totalorder %v1665, 0
        %v1668 = vxor.u32 %v1662, 2147483648
        %v1669 = vsel %vm1667, %v1661, %v1668
        %vm1670 = vcmp.eq.s32.totalorder %v1665, 2
        %v1671 = vxor.u32 %v1661, 2147483648
        %v1672 = vsel %vm1670, %v1671, %v1662
        %v1673 = vsel %vm1666, %v1669, %v1672
        %v1674 = vsel %vm1663, nan, %v1673
        %v1675 = vand.u32 2147483647, %v625
        %vm1676 = vcmp.le.f32.partialorder %v1675, 0.7853982
        %vm1677 = vcmp.lt.s32.totalorder %v625, 0
        %v1678 = vand.u32 %v625, 2139095040
        %v1679 = vshrl.u32 %v1678, 23
        %v1680 = vsub.s32 %v1679, 127
        %v1681 = vand.u32 2147483647, %v625
        %v1682 = vand.u32 %v1681, 8388607
        %v1683 = vor.u32 %v1682, 8388608
        %v1684 = vsub.s32 0, %v1683
        %v1685 = vadd.s32 %v1680, 1
        %vm1686 = vcmp.gt.s32.totalorder %v1685, 0
        %v1687 = vsel %vm1686, %v1685, 0
        %v1688 = vshrl.u32 %v1687, 5
        %v1689 = vand.u32 %v1687, 31
        %v1690 = vsub.s32 32, %v1689
        %v1691 = vshrl.u32 683565275, %v1690
        %v1692 = vshll.u32 683565275, %v1689
        %v1693 = vshrl.u32 2475754826, %v1690
        %v1694 = vor.u32 %v1692, %v1693
        %v1695 = vshll.u32 2475754826, %v1689
        %v1696 = vshrl.u32 2131351028, %v1690
        %v1697 = vor.u32 %v1695, %v1696
        %v1698 = vshll.u32 2131351028, %v1689
        %v1699 = vshrl.u32 2102212464, %v1690
        %v1700 = vor.u32 %v1698, %v1699
        %v1701 = vshll.u32 2102212464, %v1689
        %v1702 = vshrl.u32 920167782, %v1690
        %v1703 = vor.u32 %v1701, %v1702
        %v1704 = vshll.u32 920167782, %v1689
        %v1705 = vshrl.u32 1326507024, %v1690
        %v1706 = vor.u32 %v1704, %v1705
        %vm1707 = vcmp.lt.s32.totalorder %v1688, 1
        %vm1708 = vcmp.lt.s32.totalorder %v1688, 2
        %vm1709 = vcmp.lt.s32.totalorder %v1688, 3
        %vm1710 = vcmp.lt.s32.totalorder %v1688, 4
        %v1711 = vsel %vm1707, %v1691, %v1694
        %v1712 = vsel %vm1710, %v1700, 2102212464
        %v1713 = vsel %vm1709, %v1697, %v1712
        %v1714 = vsel %vm1708, %v1711, %v1713
        %v1715 = vsel %vm1707, %v1694, %v1697
        %v1716 = vsel %vm1710, %v1703, 920167782
        %v1717 = vsel %vm1709, %v1700, %v1716
        %v1718 = vsel %vm1708, %v1715, %v1717
        %v1719 = vsel %vm1707, %v1697, %v1700
        %v1720 = vsel %vm1710, %v1706, 1326507024
        %v1721 = vsel %vm1709, %v1703, %v1720
        %v1722 = vsel %vm1708, %v1719, %v1721
        %v1723 = vshll.u32 %v1683, 8
        %v1724 = vmul.u32.u64.compose %v1723, %v1722
        %v1725 = vextract.low.u32 %v1724
        %v1726 = vextract.high.u32 %v1724
        %v1727 = vmul.u32.u64.compose %v1723, %v1718
        %v1728 = vextract.low.u32 %v1727
        %v1729 = vextract.high.u32 %v1727
        %v1730 = vmul.u32 %v1723, %v1714
        %v1731 = vadd.s32 %v1726, %v1728
        %vm1732 = vc.u32 %v1726, %v1728
        %v1733 = vadd.s32 %v1729, 1
        %v1734 = vsel %vm1732, %v1733, %v1729
        %v1735 = vadd.s32 %v1730, %v1734
        %v1736 = vadd.s32 %v1735, 536870912
        %v1737 = vshrl.u32 %v1736, 30
        %v1738 = vshll.u32 %v1737, 30
        %v1739 = vsub.s32 %v1735, %v1738
        %vm1740 = vcmp.lt.s32.totalorder %v1739, 0
        %v1741 = vsub.s32 0, %v1739
        %v1742 = vsel %vm1740, %v1741, %v1739
        %v1743 = vclz %v1742
        %v1744 = vsub.s32 %v1743, 2
        %vm1745 = vcmp.gt.s32.totalorder 0, %v1744
        %v1746 = vsel %vm1745, 0, %v1744
        %v1747 = vsub.s32 32, %v1746
        %v1748 = vshll.u32 %v1739, %v1746
        %v1749 = vshrl.u32 %v1731, %v1747
        %v1750 = vor.u32 %v1748, %v1749
        %v1751 = vsub.s32 4294967266, %v1746
        %v1752 = vadd.s32 %v1751, 127
        %v1753 = vshll.u32 %v1752, 23
        %v1754 = vor.u32 4788187, %v1753
        %v1755 = vand.u32 2147483647, %v1754
        %v1757 = vcvt.s32.f32 %v1750
        %v1758 = vmul.f32 %v1757, %v1755
        %v1759 = vxor.u32 %v1758, 2147483648
        %v1760 = vsel %vm1677, %v1759, %v1758
        %v1761 = vsub.s32 4, %v1737
        %v1762 = vsel %vm1677, %v1761, %v1737
        %v1763 = vsel %vm1676, %v625, %v1760
        %v1764 = vsel %vm1676, 0, %v1762
        %v1765 = vcosq.f32.pop %v1763
        %v1766 = vsinq.f32.pop %v1763
        %vm1767 = vweird.f32 %v625
        %v1768 = vadd.s32 %v1764, 3
        %v1769 = vand.u32 %v1768, 3
        %vm1770 = vcmp.lt.s32.totalorder %v1769, 2
        %vm1771 = vcmp.eq.s32.totalorder %v1769, 0
        %v1772 = vxor.u32 %v1766, 2147483648
        %v1773 = vsel %vm1771, %v1765, %v1772
        %vm1774 = vcmp.eq.s32.totalorder %v1769, 2
        %v1775 = vxor.u32 %v1765, 2147483648
        %v1776 = vsel %vm1774, %v1775, %v1766
        %v1777 = vsel %vm1770, %v1773, %v1776
        %v1778 = vsel %vm1767, nan, %v1777
        %v1779 = vand.u32 2147483647, %v627
        %vm1780 = vcmp.le.f32.partialorder %v1779, 0.7853982
        %vm1781 = vcmp.lt.s32.totalorder %v627, 0
        %v1782 = vand.u32 %v627, 2139095040
        %v1783 = vshrl.u32 %v1782, 23
        %v1784 = vsub.s32 %v1783, 127
        %v1785 = vand.u32 2147483647, %v627
        %v1786 = vand.u32 %v1785, 8388607
        %v1787 = vor.u32 %v1786, 8388608
        %v1788 = vsub.s32 0, %v1787
        %v1789 = vadd.s32 %v1784, 1
        %vm1790 = vcmp.gt.s32.totalorder %v1789, 0
        %v1791 = vsel %vm1790, %v1789, 0
        %v1792 = vshrl.u32 %v1791, 5
        %v1793 = vand.u32 %v1791, 31
        %v1794 = vsub.s32 32, %v1793
        %v1795 = vshrl.u32 683565275, %v1794
        %v1796 = vshll.u32 683565275, %v1793
        %v1797 = vshrl.u32 2475754826, %v1794
        %v1798 = vor.u32 %v1796, %v1797
        %v1799 = vshll.u32 2475754826, %v1793
        %v1800 = vshrl.u32 2131351028, %v1794
        %v1801 = vor.u32 %v1799, %v1800
        %v1802 = vshll.u32 2131351028, %v1793
        %v1803 = vshrl.u32 2102212464, %v1794
        %v1804 = vor.u32 %v1802, %v1803
        %v1805 = vshll.u32 2102212464, %v1793
        %v1806 = vshrl.u32 920167782, %v1794
        %v1807 = vor.u32 %v1805, %v1806
        %v1808 = vshll.u32 920167782, %v1793
        %v1809 = vshrl.u32 1326507024, %v1794
        %v1810 = vor.u32 %v1808, %v1809
        %vm1811 = vcmp.lt.s32.totalorder %v1792, 1
        %vm1812 = vcmp.lt.s32.totalorder %v1792, 2
        %vm1813 = vcmp.lt.s32.totalorder %v1792, 3
        %vm1814 = vcmp.lt.s32.totalorder %v1792, 4
        %v1815 = vsel %vm1811, %v1795, %v1798
        %v1816 = vsel %vm1814, %v1804, 2102212464
        %v1817 = vsel %vm1813, %v1801, %v1816
        %v1818 = vsel %vm1812, %v1815, %v1817
        %v1819 = vsel %vm1811, %v1798, %v1801
        %v1820 = vsel %vm1814, %v1807, 920167782
        %v1821 = vsel %vm1813, %v1804, %v1820
        %v1822 = vsel %vm1812, %v1819, %v1821
        %v1823 = vsel %vm1811, %v1801, %v1804
        %v1824 = vsel %vm1814, %v1810, 1326507024
        %v1825 = vsel %vm1813, %v1807, %v1824
        %v1826 = vsel %vm1812, %v1823, %v1825
        %v1827 = vshll.u32 %v1787, 8
        %v1828 = vmul.u32.u64.compose %v1827, %v1826
        %v1829 = vextract.low.u32 %v1828
        %v1830 = vextract.high.u32 %v1828
        %v1831 = vmul.u32.u64.compose %v1827, %v1822
        %v1832 = vextract.low.u32 %v1831
        %v1833 = vextract.high.u32 %v1831
        %v1834 = vmul.u32 %v1827, %v1818
        %v1835 = vadd.s32 %v1830, %v1832
        %vm1836 = vc.u32 %v1830, %v1832
        %v1837 = vadd.s32 %v1833, 1
        %v1838 = vsel %vm1836, %v1837, %v1833
        %v1839 = vadd.s32 %v1834, %v1838
        %v1840 = vadd.s32 %v1839, 536870912
        %v1841 = vshrl.u32 %v1840, 30
        %v1842 = vshll.u32 %v1841, 30
        %v1843 = vsub.s32 %v1839, %v1842
        %vm1844 = vcmp.lt.s32.totalorder %v1843, 0
        %v1845 = vsub.s32 0, %v1843
        %v1846 = vsel %vm1844, %v1845, %v1843
        %v1847 = vclz %v1846
        %v1848 = vsub.s32 %v1847, 2
        %vm1849 = vcmp.gt.s32.totalorder 0, %v1848
        %v1850 = vsel %vm1849, 0, %v1848
        %v1851 = vsub.s32 32, %v1850
        %v1852 = vshll.u32 %v1843, %v1850
        %v1853 = vshrl.u32 %v1835, %v1851
        %v1854 = vor.u32 %v1852, %v1853
        %v1855 = vsub.s32 4294967266, %v1850
        %v1856 = vadd.s32 %v1855, 127
        %v1857 = vshll.u32 %v1856, 23
        %v1858 = vor.u32 4788187, %v1857
        %v1859 = vand.u32 2147483647, %v1858
        %v1861 = vcvt.s32.f32 %v1854
        %v1862 = vmul.f32 %v1861, %v1859
        %v1863 = vxor.u32 %v1862, 2147483648
        %v1864 = vsel %vm1781, %v1863, %v1862
        %v1865 = vsub.s32 4, %v1841
        %v1866 = vsel %vm1781, %v1865, %v1841
        %v1867 = vsel %vm1780, %v627, %v1864
        %v1868 = vsel %vm1780, 0, %v1866
        %v1869 = vcosq.f32.pop %v1867
        %v1870 = vsinq.f32.pop %v1867
        %vm1871 = vweird.f32 %v627
        %v1872 = vadd.s32 %v1868, 3
        %v1873 = vand.u32 %v1872, 3
        %vm1874 = vcmp.lt.s32.totalorder %v1873, 2
        %vm1875 = vcmp.eq.s32.totalorder %v1873, 0
        %v1876 = vxor.u32 %v1870, 2147483648
        %v1877 = vsel %vm1875, %v1869, %v1876
        %vm1878 = vcmp.eq.s32.totalorder %v1873, 2
        %v1879 = vxor.u32 %v1869, 2147483648
        %v1880 = vsel %vm1878, %v1879, %v1870
        %v1881 = vsel %vm1874, %v1877, %v1880
        %v1882 = vsel %vm1871, nan, %v1881
        %v1883 = vand.u32 2147483647, %v542
        %vm1884 = vcmp.le.f32.partialorder %v1883, 0.7853982
        %vm1885 = vcmp.lt.s32.totalorder %v542, 0
        %v1886 = vand.u32 %v542, 2139095040
        %v1887 = vshrl.u32 %v1886, 23
        %v1888 = vsub.s32 %v1887, 127
        %v1889 = vand.u32 2147483647, %v542
        %v1890 = vand.u32 %v1889, 8388607
        %v1891 = vor.u32 %v1890, 8388608
        %v1892 = vsub.s32 0, %v1891
        %v1893 = vadd.s32 %v1888, 1
        %vm1894 = vcmp.gt.s32.totalorder %v1893, 0
        %v1895 = vsel %vm1894, %v1893, 0
        %v1896 = vshrl.u32 %v1895, 5
        %v1897 = vand.u32 %v1895, 31
        %v1898 = vsub.s32 32, %v1897
        %v1899 = vshrl.u32 683565275, %v1898
        %v1900 = vshll.u32 683565275, %v1897
        %v1901 = vshrl.u32 2475754826, %v1898
        %v1902 = vor.u32 %v1900, %v1901
        %v1903 = vshll.u32 2475754826, %v1897
        %v1904 = vshrl.u32 2131351028, %v1898
        %v1905 = vor.u32 %v1903, %v1904
        %v1906 = vshll.u32 2131351028, %v1897
        %v1907 = vshrl.u32 2102212464, %v1898
        %v1908 = vor.u32 %v1906, %v1907
        %v1909 = vshll.u32 2102212464, %v1897
        %v1910 = vshrl.u32 920167782, %v1898
        %v1911 = vor.u32 %v1909, %v1910
        %v1912 = vshll.u32 920167782, %v1897
        %v1913 = vshrl.u32 1326507024, %v1898
        %v1914 = vor.u32 %v1912, %v1913
        %vm1915 = vcmp.lt.s32.totalorder %v1896, 1
        %vm1916 = vcmp.lt.s32.totalorder %v1896, 2
        %vm1917 = vcmp.lt.s32.totalorder %v1896, 3
        %vm1918 = vcmp.lt.s32.totalorder %v1896, 4
        %v1919 = vsel %vm1915, %v1899, %v1902
        %v1920 = vsel %vm1918, %v1908, 2102212464
        %v1921 = vsel %vm1917, %v1905, %v1920
        %v1922 = vsel %vm1916, %v1919, %v1921
        %v1923 = vsel %vm1915, %v1902, %v1905
        %v1924 = vsel %vm1918, %v1911, 920167782
        %v1925 = vsel %vm1917, %v1908, %v1924
        %v1926 = vsel %vm1916, %v1923, %v1925
        %v1927 = vsel %vm1915, %v1905, %v1908
        %v1928 = vsel %vm1918, %v1914, 1326507024
        %v1929 = vsel %vm1917, %v1911, %v1928
        %v1930 = vsel %vm1916, %v1927, %v1929
        %v1931 = vshll.u32 %v1891, 8
        %v1932 = vmul.u32.u64.compose %v1931, %v1930
        %v1933 = vextract.low.u32 %v1932
        %v1934 = vextract.high.u32 %v1932
        %v1935 = vmul.u32.u64.compose %v1931, %v1926
        %v1936 = vextract.low.u32 %v1935
        %v1937 = vextract.high.u32 %v1935
        %v1938 = vmul.u32 %v1931, %v1922
        %v1939 = vadd.s32 %v1934, %v1936
        %vm1940 = vc.u32 %v1934, %v1936
        %v1941 = vadd.s32 %v1937, 1
        %v1942 = vsel %vm1940, %v1941, %v1937
        %v1943 = vadd.s32 %v1938, %v1942
        %v1944 = vadd.s32 %v1943, 536870912
        %v1945 = vshrl.u32 %v1944, 30
        %v1946 = vshll.u32 %v1945, 30
        %v1947 = vsub.s32 %v1943, %v1946
        %vm1948 = vcmp.lt.s32.totalorder %v1947, 0
        %v1949 = vsub.s32 0, %v1947
        %v1950 = vsel %vm1948, %v1949, %v1947
        %v1951 = vclz %v1950
        %v1952 = vsub.s32 %v1951, 2
        %vm1953 = vcmp.gt.s32.totalorder 0, %v1952
        %v1954 = vsel %vm1953, 0, %v1952
        %v1955 = vsub.s32 32, %v1954
        %v1956 = vshll.u32 %v1947, %v1954
        %v1957 = vshrl.u32 %v1939, %v1955
        %v1958 = vor.u32 %v1956, %v1957
        %v1959 = vsub.s32 4294967266, %v1954
        %v1960 = vadd.s32 %v1959, 127
        %v1961 = vshll.u32 %v1960, 23
        %v1962 = vor.u32 4788187, %v1961
        %v1963 = vand.u32 2147483647, %v1962
        %v1965 = vcvt.s32.f32 %v1958
        %v1966 = vmul.f32 %v1965, %v1963
        %v1967 = vxor.u32 %v1966, 2147483648
        %v1968 = vsel %vm1885, %v1967, %v1966
        %v1969 = vsub.s32 4, %v1945
        %v1970 = vsel %vm1885, %v1969, %v1945
        %v1971 = vsel %vm1884, %v542, %v1968
        %v1972 = vsel %vm1884, 0, %v1970
        %v1973 = vcosq.f32.pop %v1971
        %v1974 = vsinq.f32.pop %v1971
        %vm1975 = vweird.f32 %v542
        %v1976 = vadd.s32 %v1972, 3
        %v1977 = vand.u32 %v1976, 3
        %vm1978 = vcmp.lt.s32.totalorder %v1977, 2
        %vm1979 = vcmp.eq.s32.totalorder %v1977, 0
        %v1980 = vxor.u32 %v1974, 2147483648
        %v1981 = vsel %vm1979, %v1973, %v1980
        %vm1982 = vcmp.eq.s32.totalorder %v1977, 2
        %v1983 = vxor.u32 %v1973, 2147483648
        %v1984 = vsel %vm1982, %v1983, %v1974
        %v1985 = vsel %vm1978, %v1981, %v1984
        %v1986 = vsel %vm1975, nan, %v1985
        %v1987 = vand.u32 2147483647, %v544
        %vm1988 = vcmp.le.f32.partialorder %v1987, 0.7853982
        %vm1989 = vcmp.lt.s32.totalorder %v544, 0
        %v1990 = vand.u32 %v544, 2139095040
        %v1991 = vshrl.u32 %v1990, 23
        %v1992 = vsub.s32 %v1991, 127
        %v1993 = vand.u32 2147483647, %v544
        %v1994 = vand.u32 %v1993, 8388607
        %v1995 = vor.u32 %v1994, 8388608
        %v1996 = vsub.s32 0, %v1995
        %v1997 = vadd.s32 %v1992, 1
        %vm1998 = vcmp.gt.s32.totalorder %v1997, 0
        %v1999 = vsel %vm1998, %v1997, 0
        %v2000 = vshrl.u32 %v1999, 5
        %v2001 = vand.u32 %v1999, 31
        %v2002 = vsub.s32 32, %v2001
        %v2003 = vshrl.u32 683565275, %v2002
        %v2004 = vshll.u32 683565275, %v2001
        %v2005 = vshrl.u32 2475754826, %v2002
        %v2006 = vor.u32 %v2004, %v2005
        %v2007 = vshll.u32 2475754826, %v2001
        %v2008 = vshrl.u32 2131351028, %v2002
        %v2009 = vor.u32 %v2007, %v2008
        %v2010 = vshll.u32 2131351028, %v2001
        %v2011 = vshrl.u32 2102212464, %v2002
        %v2012 = vor.u32 %v2010, %v2011
        %v2013 = vshll.u32 2102212464, %v2001
        %v2014 = vshrl.u32 920167782, %v2002
        %v2015 = vor.u32 %v2013, %v2014
        %v2016 = vshll.u32 920167782, %v2001
        %v2017 = vshrl.u32 1326507024, %v2002
        %v2018 = vor.u32 %v2016, %v2017
        %vm2019 = vcmp.lt.s32.totalorder %v2000, 1
        %vm2020 = vcmp.lt.s32.totalorder %v2000, 2
        %vm2021 = vcmp.lt.s32.totalorder %v2000, 3
        %vm2022 = vcmp.lt.s32.totalorder %v2000, 4
        %v2023 = vsel %vm2019, %v2003, %v2006
        %v2024 = vsel %vm2022, %v2012, 2102212464
        %v2025 = vsel %vm2021, %v2009, %v2024
        %v2026 = vsel %vm2020, %v2023, %v2025
        %v2027 = vsel %vm2019, %v2006, %v2009
        %v2028 = vsel %vm2022, %v2015, 920167782
        %v2029 = vsel %vm2021, %v2012, %v2028
        %v2030 = vsel %vm2020, %v2027, %v2029
        %v2031 = vsel %vm2019, %v2009, %v2012
        %v2032 = vsel %vm2022, %v2018, 1326507024
        %v2033 = vsel %vm2021, %v2015, %v2032
        %v2034 = vsel %vm2020, %v2031, %v2033
        %v2035 = vshll.u32 %v1995, 8
        %v2036 = vmul.u32.u64.compose %v2035, %v2034
        %v2037 = vextract.low.u32 %v2036
        %v2038 = vextract.high.u32 %v2036
        %v2039 = vmul.u32.u64.compose %v2035, %v2030
        %v2040 = vextract.low.u32 %v2039
        %v2041 = vextract.high.u32 %v2039
        %v2042 = vmul.u32 %v2035, %v2026
        %v2043 = vadd.s32 %v2038, %v2040
        %vm2044 = vc.u32 %v2038, %v2040
        %v2045 = vadd.s32 %v2041, 1
        %v2046 = vsel %vm2044, %v2045, %v2041
        %v2047 = vadd.s32 %v2042, %v2046
        %v2048 = vadd.s32 %v2047, 536870912
        %v2049 = vshrl.u32 %v2048, 30
        %v2050 = vshll.u32 %v2049, 30
        %v2051 = vsub.s32 %v2047, %v2050
        %vm2052 = vcmp.lt.s32.totalorder %v2051, 0
        %v2053 = vsub.s32 0, %v2051
        %v2054 = vsel %vm2052, %v2053, %v2051
        %v2055 = vclz %v2054
        %v2056 = vsub.s32 %v2055, 2
        %vm2057 = vcmp.gt.s32.totalorder 0, %v2056
        %v2058 = vsel %vm2057, 0, %v2056
        %v2059 = vsub.s32 32, %v2058
        %v2060 = vshll.u32 %v2051, %v2058
        %v2061 = vshrl.u32 %v2043, %v2059
        %v2062 = vor.u32 %v2060, %v2061
        %v2063 = vsub.s32 4294967266, %v2058
        %v2064 = vadd.s32 %v2063, 127
        %v2065 = vshll.u32 %v2064, 23
        %v2066 = vor.u32 4788187, %v2065
        %v2067 = vand.u32 2147483647, %v2066
        %v2069 = vcvt.s32.f32 %v2062
        %v2070 = vmul.f32 %v2069, %v2067
        %v2071 = vxor.u32 %v2070, 2147483648
        %v2072 = vsel %vm1989, %v2071, %v2070
        %v2073 = vsub.s32 4, %v2049
        %v2074 = vsel %vm1989, %v2073, %v2049
        %v2075 = vsel %vm1988, %v544, %v2072
        %v2076 = vsel %vm1988, 0, %v2074
        %v2077 = vcosq.f32.pop %v2075
        %v2078 = vsinq.f32.pop %v2075
        %vm2079 = vweird.f32 %v544
        %v2080 = vadd.s32 %v2076, 3
        %v2081 = vand.u32 %v2080, 3
        %vm2082 = vcmp.lt.s32.totalorder %v2081, 2
        %vm2083 = vcmp.eq.s32.totalorder %v2081, 0
        %v2084 = vxor.u32 %v2078, 2147483648
        %v2085 = vsel %vm2083, %v2077, %v2084
        %vm2086 = vcmp.eq.s32.totalorder %v2081, 2
        %v2087 = vxor.u32 %v2077, 2147483648
        %v2088 = vsel %vm2086, %v2087, %v2078
        %v2089 = vsel %vm2082, %v2085, %v2088
        %v2090 = vsel %vm2079, nan, %v2089
        %v2091 = vand.u32 2147483647, %v631
        %vm2092 = vcmp.le.f32.partialorder %v2091, 0.7853982
        %vm2093 = vcmp.lt.s32.totalorder %v631, 0
        %v2094 = vand.u32 %v631, 2139095040
        %v2095 = vshrl.u32 %v2094, 23
        %v2096 = vsub.s32 %v2095, 127
        %v2097 = vand.u32 2147483647, %v631
        %v2098 = vand.u32 %v2097, 8388607
        %v2099 = vor.u32 %v2098, 8388608
        %v2100 = vsub.s32 0, %v2099
        %v2101 = vadd.s32 %v2096, 1
        %vm2102 = vcmp.gt.s32.totalorder %v2101, 0
        %v2103 = vsel %vm2102, %v2101, 0
        %v2104 = vshrl.u32 %v2103, 5
        %v2105 = vand.u32 %v2103, 31
        %v2106 = vsub.s32 32, %v2105
        %v2107 = vshrl.u32 683565275, %v2106
        %v2108 = vshll.u32 683565275, %v2105
        %v2109 = vshrl.u32 2475754826, %v2106
        %v2110 = vor.u32 %v2108, %v2109
        %v2111 = vshll.u32 2475754826, %v2105
        %v2112 = vshrl.u32 2131351028, %v2106
        %v2113 = vor.u32 %v2111, %v2112
        %v2114 = vshll.u32 2131351028, %v2105
        %v2115 = vshrl.u32 2102212464, %v2106
        %v2116 = vor.u32 %v2114, %v2115
        %v2117 = vshll.u32 2102212464, %v2105
        %v2118 = vshrl.u32 920167782, %v2106
        %v2119 = vor.u32 %v2117, %v2118
        %v2120 = vshll.u32 920167782, %v2105
        %v2121 = vshrl.u32 1326507024, %v2106
        %v2122 = vor.u32 %v2120, %v2121
        %vm2123 = vcmp.lt.s32.totalorder %v2104, 1
        %vm2124 = vcmp.lt.s32.totalorder %v2104, 2
        %vm2125 = vcmp.lt.s32.totalorder %v2104, 3
        %vm2126 = vcmp.lt.s32.totalorder %v2104, 4
        %v2127 = vsel %vm2123, %v2107, %v2110
        %v2128 = vsel %vm2126, %v2116, 2102212464
        %v2129 = vsel %vm2125, %v2113, %v2128
        %v2130 = vsel %vm2124, %v2127, %v2129
        %v2131 = vsel %vm2123, %v2110, %v2113
        %v2132 = vsel %vm2126, %v2119, 920167782
        %v2133 = vsel %vm2125, %v2116, %v2132
        %v2134 = vsel %vm2124, %v2131, %v2133
        %v2135 = vsel %vm2123, %v2113, %v2116
        %v2136 = vsel %vm2126, %v2122, 1326507024
        %v2137 = vsel %vm2125, %v2119, %v2136
        %v2138 = vsel %vm2124, %v2135, %v2137
        %v2139 = vshll.u32 %v2099, 8
        %v2140 = vmul.u32.u64.compose %v2139, %v2138
        %v2141 = vextract.low.u32 %v2140
        %v2142 = vextract.high.u32 %v2140
        %v2143 = vmul.u32.u64.compose %v2139, %v2134
        %v2144 = vextract.low.u32 %v2143
        %v2145 = vextract.high.u32 %v2143
        %v2146 = vmul.u32 %v2139, %v2130
        %v2147 = vadd.s32 %v2142, %v2144
        %vm2148 = vc.u32 %v2142, %v2144
        %v2149 = vadd.s32 %v2145, 1
        %v2150 = vsel %vm2148, %v2149, %v2145
        %v2151 = vadd.s32 %v2146, %v2150
        %v2152 = vadd.s32 %v2151, 536870912
        %v2153 = vshrl.u32 %v2152, 30
        %v2154 = vshll.u32 %v2153, 30
        %v2155 = vsub.s32 %v2151, %v2154
        %vm2156 = vcmp.lt.s32.totalorder %v2155, 0
        %v2157 = vsub.s32 0, %v2155
        %v2158 = vsel %vm2156, %v2157, %v2155
        %v2159 = vclz %v2158
        %v2160 = vsub.s32 %v2159, 2
        %vm2161 = vcmp.gt.s32.totalorder 0, %v2160
        %v2162 = vsel %vm2161, 0, %v2160
        %v2163 = vsub.s32 32, %v2162
        %v2164 = vshll.u32 %v2155, %v2162
        %v2165 = vshrl.u32 %v2147, %v2163
        %v2166 = vor.u32 %v2164, %v2165
        %v2167 = vsub.s32 4294967266, %v2162
        %v2168 = vadd.s32 %v2167, 127
        %v2169 = vshll.u32 %v2168, 23
        %v2170 = vor.u32 4788187, %v2169
        %v2171 = vand.u32 2147483647, %v2170
        %v2173 = vcvt.s32.f32 %v2166
        %v2174 = vmul.f32 %v2173, %v2171
        %v2175 = vxor.u32 %v2174, 2147483648
        %v2176 = vsel %vm2093, %v2175, %v2174
        %v2177 = vsub.s32 4, %v2153
        %v2178 = vsel %vm2093, %v2177, %v2153
        %v2179 = vsel %vm2092, %v631, %v2176
        %v2180 = vsel %vm2092, 0, %v2178
        %v2181 = vcosq.f32.pop %v2179
        %v2182 = vsinq.f32.pop %v2179
        %vm2183 = vweird.f32 %v631
        %v2184 = vadd.s32 %v2180, 3
        %v2185 = vand.u32 %v2184, 3
        %vm2186 = vcmp.lt.s32.totalorder %v2185, 2
        %vm2187 = vcmp.eq.s32.totalorder %v2185, 0
        %v2188 = vxor.u32 %v2182, 2147483648
        %v2189 = vsel %vm2187, %v2181, %v2188
        %vm2190 = vcmp.eq.s32.totalorder %v2185, 2
        %v2191 = vxor.u32 %v2181, 2147483648
        %v2192 = vsel %vm2190, %v2191, %v2182
        %v2193 = vsel %vm2186, %v2189, %v2192
        %v2194 = vsel %vm2183, nan, %v2193
        %v2195 = vand.u32 2147483647, %v633
        %vm2196 = vcmp.le.f32.partialorder %v2195, 0.7853982
        %vm2197 = vcmp.lt.s32.totalorder %v633, 0
        %v2198 = vand.u32 %v633, 2139095040
        %v2199 = vshrl.u32 %v2198, 23
        %v2200 = vsub.s32 %v2199, 127
        %v2201 = vand.u32 2147483647, %v633
        %v2202 = vand.u32 %v2201, 8388607
        %v2203 = vor.u32 %v2202, 8388608
        %v2204 = vsub.s32 0, %v2203
        %v2205 = vadd.s32 %v2200, 1
        %vm2206 = vcmp.gt.s32.totalorder %v2205, 0
        %v2207 = vsel %vm2206, %v2205, 0
        %v2208 = vshrl.u32 %v2207, 5
        %v2209 = vand.u32 %v2207, 31
        %v2210 = vsub.s32 32, %v2209
        %v2211 = vshrl.u32 683565275, %v2210
        %v2212 = vshll.u32 683565275, %v2209
        %v2213 = vshrl.u32 2475754826, %v2210
        %v2214 = vor.u32 %v2212, %v2213
        %v2215 = vshll.u32 2475754826, %v2209
        %v2216 = vshrl.u32 2131351028, %v2210
        %v2217 = vor.u32 %v2215, %v2216
        %v2218 = vshll.u32 2131351028, %v2209
        %v2219 = vshrl.u32 2102212464, %v2210
        %v2220 = vor.u32 %v2218, %v2219
        %v2221 = vshll.u32 2102212464, %v2209
        %v2222 = vshrl.u32 920167782, %v2210
        %v2223 = vor.u32 %v2221, %v2222
        %v2224 = vshll.u32 920167782, %v2209
        %v2225 = vshrl.u32 1326507024, %v2210
        %v2226 = vor.u32 %v2224, %v2225
        %vm2227 = vcmp.lt.s32.totalorder %v2208, 1
        %vm2228 = vcmp.lt.s32.totalorder %v2208, 2
        %vm2229 = vcmp.lt.s32.totalorder %v2208, 3
        %vm2230 = vcmp.lt.s32.totalorder %v2208, 4
        %v2231 = vsel %vm2227, %v2211, %v2214
        %v2232 = vsel %vm2230, %v2220, 2102212464
        %v2233 = vsel %vm2229, %v2217, %v2232
        %v2234 = vsel %vm2228, %v2231, %v2233
        %v2235 = vsel %vm2227, %v2214, %v2217
        %v2236 = vsel %vm2230, %v2223, 920167782
        %v2237 = vsel %vm2229, %v2220, %v2236
        %v2238 = vsel %vm2228, %v2235, %v2237
        %v2239 = vsel %vm2227, %v2217, %v2220
        %v2240 = vsel %vm2230, %v2226, 1326507024
        %v2241 = vsel %vm2229, %v2223, %v2240
        %v2242 = vsel %vm2228, %v2239, %v2241
        %v2243 = vshll.u32 %v2203, 8
        %v2244 = vmul.u32.u64.compose %v2243, %v2242
        %v2245 = vextract.low.u32 %v2244
        %v2246 = vextract.high.u32 %v2244
        %v2247 = vmul.u32.u64.compose %v2243, %v2238
        %v2248 = vextract.low.u32 %v2247
        %v2249 = vextract.high.u32 %v2247
        %v2250 = vmul.u32 %v2243, %v2234
        %v2251 = vadd.s32 %v2246, %v2248
        %vm2252 = vc.u32 %v2246, %v2248
        %v2253 = vadd.s32 %v2249, 1
        %v2254 = vsel %vm2252, %v2253, %v2249
        %v2255 = vadd.s32 %v2250, %v2254
        %v2256 = vadd.s32 %v2255, 536870912
        %v2257 = vshrl.u32 %v2256, 30
        %v2258 = vshll.u32 %v2257, 30
        %v2259 = vsub.s32 %v2255, %v2258
        %vm2260 = vcmp.lt.s32.totalorder %v2259, 0
        %v2261 = vsub.s32 0, %v2259
        %v2262 = vsel %vm2260, %v2261, %v2259
        %v2263 = vclz %v2262
        %v2264 = vsub.s32 %v2263, 2
        %vm2265 = vcmp.gt.s32.totalorder 0, %v2264
        %v2266 = vsel %vm2265, 0, %v2264
        %v2267 = vsub.s32 32, %v2266
        %v2268 = vshll.u32 %v2259, %v2266
        %v2269 = vshrl.u32 %v2251, %v2267
        %v2270 = vor.u32 %v2268, %v2269
        %v2271 = vsub.s32 4294967266, %v2266
        %v2272 = vadd.s32 %v2271, 127
        %v2273 = vshll.u32 %v2272, 23
        %v2274 = vor.u32 4788187, %v2273
        %v2275 = vand.u32 2147483647, %v2274
        %v2277 = vcvt.s32.f32 %v2270
        %v2278 = vmul.f32 %v2277, %v2275
        %v2279 = vxor.u32 %v2278, 2147483648
        %v2280 = vsel %vm2197, %v2279, %v2278
        %v2281 = vsub.s32 4, %v2257
        %v2282 = vsel %vm2197, %v2281, %v2257
        %v2283 = vsel %vm2196, %v633, %v2280
        %v2284 = vsel %vm2196, 0, %v2282
        %v2285 = vcosq.f32.pop %v2283
        %v2286 = vsinq.f32.pop %v2283
        %vm2287 = vweird.f32 %v633
        %v2288 = vadd.s32 %v2284, 3
        %v2289 = vand.u32 %v2288, 3
        %vm2290 = vcmp.lt.s32.totalorder %v2289, 2
        %vm2291 = vcmp.eq.s32.totalorder %v2289, 0
        %v2292 = vxor.u32 %v2286, 2147483648
        %v2293 = vsel %vm2291, %v2285, %v2292
        %vm2294 = vcmp.eq.s32.totalorder %v2289, 2
        %v2295 = vxor.u32 %v2285, 2147483648
        %v2296 = vsel %vm2294, %v2295, %v2286
        %v2297 = vsel %vm2290, %v2293, %v2296
        %v2298 = vsel %vm2287, nan, %v2297
        %v2299 = vld [vmem:[%s3] sm:$0xff]
        %v2300 = vld [vmem:[%s3 + $0x8] sm:$0xff]
        %v2301 = vld [vmem:[%s3 + $0x10] sm:$0xff]
        %v2302 = vld [vmem:[%s3 + $0x18] sm:$0xff]
        %v2303 = vld [vmem:[%s4] sm:$0xff]
        %v2304 = vld [vmem:[%s4 + $0x8] sm:$0xff]
        %v2305 = vld [vmem:[%s4 + $0x10] sm:$0xff]
        %v2306 = vld [vmem:[%s4 + $0x18] sm:$0xff]
        %2308 = vset.pattern.permute.xlu0 0
        %2309 = vperm.xlu0 %2308, %v2303
        %v2310 = vpop.permute.xlu0 %2309
        %2313 = vset.pattern.permute.xlu0 0
        %2314 = vperm.xlu0 %2313, %v2304
        %v2315 = vpop.permute.xlu0 %2314
        %2318 = vset.pattern.permute.xlu0 0
        %2319 = vperm.xlu0 %2318, %v2305
        %v2320 = vpop.permute.xlu0 %2319
        %2323 = vset.pattern.permute.xlu0 0
        %2324 = vperm.xlu0 %2323, %v2306
        %v2325 = vpop.permute.xlu0 %2324
        %vm2327 = vcmask 261120
        %v2329 = vsel %vm2327, %v2299, 0
        %v2332 = vsel %vm2327, %v2300, 0
        %v2335 = vsel %vm2327, %v2301, 0
        %v2338 = vsel %vm2327, %v2302, 0
        %2340 = vmatprep.subr.mxu0 0.0
        %2341 = vmatpush1.msra.mxu0 0.0
        %2342 = vmatprep.subr.mxu0 0.0
        %2343 = vmatpush1.msra.mxu0 0.0
        %2344 = vmatprep.subr.mxu0 0.0
        %2345 = vmatpush1.msra.mxu0 0.0
        %2346 = vmatprep.subr.mxu0 0.0
        %2347 = vmatpush1.msra.mxu0 0.0
        %2348 = vmatprep.subr.mxu0 0.0
        %2349 = vmatpush1.msra.mxu0 0.0
        %2350 = vmatprep.subr.mxu0 0.0
        %2351 = vmatpush1.msra.mxu0 0.0
        %2352 = vmatprep.subr.mxu0 0.0
        %2353 = vmatpush1.msra.mxu0 0.0
        %2354 = vmatprep.subr.mxu0 0.0
        %2355 = vmatpush1.msra.mxu0 0.0
        %2356 = vmatprep.subr.mxu0 0.0
        %2357 = vmatpush1.msra.mxu0 0.0
        %2358 = vmatprep.subr.mxu0 0.0
        %2359 = vmatpush1.msra.mxu0 0.0
        %2360 = vmatprep.subr.mxu0 0.0
        %2361 = vmatpush1.msra.mxu0 0.0
        %2362 = vmatprep.subr.mxu0 0.0
        %2363 = vmatpush1.msra.mxu0 0.0
        %2364 = vmatprep.subr.mxu0 %v2090
        %2365 = vmatpush1.msra.mxu0 %v1986
        %2366 = vmatprep.subr.mxu0 %v1674
        %2367 = vmatpush1.msra.mxu0 %v1570
        %2368 = vmatprep.subr.mxu0 %v1258
        %2369 = vmatpush1.msra.mxu0 %v1154
        %2370 = vmatprep.subr.mxu0 %v842
        %2371 = vmatpush1.msra.mxu0 %v738
        %2372 = vmatprep.subr.mxu0 0.0
        %2373 = vmatpush2.msra.mxu0 0.0
        %2374 = vmatprep.subr.mxu0 0.0
        %2375 = vmatpush2.msra.mxu0 0.0
        %2376 = vmatprep.subr.mxu0 0.0
        %2377 = vmatpush2.msra.mxu0 0.0
        %2378 = vmatprep.subr.mxu0 0.0
        %2379 = vmatpush2.msra.mxu0 0.0
        %2380 = vmatprep.subr.mxu0 0.0
        %2381 = vmatpush2.msra.mxu0 0.0
        %2382 = vmatprep.subr.mxu0 0.0
        %2383 = vmatpush2.msra.mxu0 0.0
        %2384 = vmatprep.subr.mxu0 0.0
        %2385 = vmatpush2.msra.mxu0 0.0
        %2386 = vmatprep.subr.mxu0 0.0
        %2387 = vmatpush2.msra.mxu0 0.0
        %2388 = vmatprep.subr.mxu0 0.0
        %2389 = vmatpush2.msra.mxu0 0.0
        %2390 = vmatprep.subr.mxu0 0.0
        %2391 = vmatpush2.msra.mxu0 0.0
        %2392 = vmatprep.subr.mxu0 0.0
        %2393 = vmatpush2.msra.mxu0 0.0
        %2394 = vmatprep.subr.mxu0 0.0
        %2395 = vmatpush2.msra.mxu0 0.0
        %2396 = vmatprep.subr.mxu0 0.0
        %2397 = vmatpush2.msra.mxu0 0.0
        %2398 = vmatprep.subr.mxu0 0.0
        %2399 = vmatpush2.msra.mxu0 0.0
        %2400 = vmatprep.subr.mxu0 0.0
        %2401 = vmatpush2.msra.mxu0 0.0
        %2402 = vmatprep.subr.mxu0 0.0
        %2403 = vmatpush2.msra.mxu0 0.0
        %2404 = vmatprep.mubr.f32.mxu0 0.0
        %2405 = vmatmul.mubr.f32.gmra.mxu0 %v2329
        %v2406 = vpop.f32.mrf.mxu0
        %v2407 = vadd.f32 %v2310, %v2406
        %v2408 = vpop.f32.mrf.mxu0
        %v2409 = vadd.f32 %v2310, %v2408
        %2410 = vmatprep.mubr.f32.mxu0 0.0
        %2411 = vmatmul.mubr.f32.gmra.mxu0 %v2332
        %v2412 = vpop.f32.mrf.mxu0
        %v2413 = vadd.f32 %v2315, %v2412
        %v2414 = vpop.f32.mrf.mxu0
        %v2415 = vadd.f32 %v2315, %v2414
        %2416 = vmatprep.mubr.f32.mxu0 0.0
        %2417 = vmatmul.mubr.f32.gmra.mxu0 %v2335
        %v2418 = vpop.f32.mrf.mxu0
        %v2419 = vadd.f32 %v2320, %v2418
        %v2420 = vpop.f32.mrf.mxu0
        %v2421 = vadd.f32 %v2320, %v2420
        %2422 = vmatprep.mubr.f32.mxu0 0.0
        %2423 = vmatmul.mubr.f32.gmra.mxu0 %v2338
        %v2424 = vpop.f32.mrf.mxu0
        %v2425 = vadd.f32 %v2325, %v2424
        %v2426 = vpop.f32.mrf.mxu0
        %v2427 = vadd.f32 %v2325, %v2426
        %2428 = vdwg.mxu0
        %2429 = vmatprep.subr.mxu0 0.0
        %2430 = vmatpush1.msra.mxu0 0.0
        %2431 = vmatprep.subr.mxu0 0.0
        %2432 = vmatpush1.msra.mxu0 0.0
        %2433 = vmatprep.subr.mxu0 0.0
        %2434 = vmatpush1.msra.mxu0 0.0
        %2435 = vmatprep.subr.mxu0 0.0
        %2436 = vmatpush1.msra.mxu0 0.0
        %2437 = vmatprep.subr.mxu0 0.0
        %2438 = vmatpush1.msra.mxu0 0.0
        %2439 = vmatprep.subr.mxu0 0.0
        %2440 = vmatpush1.msra.mxu0 0.0
        %2441 = vmatprep.subr.mxu0 0.0
        %2442 = vmatpush1.msra.mxu0 0.0
        %2443 = vmatprep.subr.mxu0 0.0
        %2444 = vmatpush1.msra.mxu0 0.0
        %2445 = vmatprep.subr.mxu0 0.0
        %2446 = vmatpush1.msra.mxu0 0.0
        %2447 = vmatprep.subr.mxu0 0.0
        %2448 = vmatpush1.msra.mxu0 0.0
        %2449 = vmatprep.subr.mxu0 0.0
        %2450 = vmatpush1.msra.mxu0 0.0
        %2451 = vmatprep.subr.mxu0 0.0
        %2452 = vmatpush1.msra.mxu0 0.0
        %2453 = vmatprep.subr.mxu0 %v2298
        %2454 = vmatpush1.msra.mxu0 %v2194
        %2455 = vmatprep.subr.mxu0 %v1882
        %2456 = vmatpush1.msra.mxu0 %v1778
        %2457 = vmatprep.subr.mxu0 %v1466
        %2458 = vmatpush1.msra.mxu0 %v1362
        %2459 = vmatprep.subr.mxu0 %v1050
        %2460 = vmatpush1.msra.mxu0 %v946
        %2461 = vmatprep.subr.mxu0 0.0
        %2462 = vmatpush2.msra.mxu0 0.0
        %2463 = vmatprep.subr.mxu0 0.0
        %2464 = vmatpush2.msra.mxu0 0.0
        %2465 = vmatprep.subr.mxu0 0.0
        %2466 = vmatpush2.msra.mxu0 0.0
        %2467 = vmatprep.subr.mxu0 0.0
        %2468 = vmatpush2.msra.mxu0 0.0
        %2469 = vmatprep.subr.mxu0 0.0
        %2470 = vmatpush2.msra.mxu0 0.0
        %2471 = vmatprep.subr.mxu0 0.0
        %2472 = vmatpush2.msra.mxu0 0.0
        %2473 = vmatprep.subr.mxu0 0.0
        %2474 = vmatpush2.msra.mxu0 0.0
        %2475 = vmatprep.subr.mxu0 0.0
        %2476 = vmatpush2.msra.mxu0 0.0
        %2477 = vmatprep.subr.mxu0 0.0
        %2478 = vmatpush2.msra.mxu0 0.0
        %2479 = vmatprep.subr.mxu0 0.0
        %2480 = vmatpush2.msra.mxu0 0.0
        %2481 = vmatprep.subr.mxu0 0.0
        %2482 = vmatpush2.msra.mxu0 0.0
        %2483 = vmatprep.subr.mxu0 0.0
        %2484 = vmatpush2.msra.mxu0 0.0
        %2485 = vmatprep.subr.mxu0 0.0
        %2486 = vmatpush2.msra.mxu0 0.0
        %2487 = vmatprep.subr.mxu0 0.0
        %2488 = vmatpush2.msra.mxu0 0.0
        %2489 = vmatprep.subr.mxu0 0.0
        %2490 = vmatpush2.msra.mxu0 0.0
        %2491 = vmatprep.subr.mxu0 0.0
        %2492 = vmatpush2.msra.mxu0 0.0
        %2493 = vmatprep.mubr.f32.mxu0 0.0
        %2494 = vmatmul.mubr.f32.gmra.mxu0 %v2329
        %v2495 = vpop.f32.mrf.mxu0
        %v2496 = vadd.f32 %v2310, %v2495
        %v2497 = vpop.f32.mrf.mxu0
        %v2498 = vadd.f32 %v2310, %v2497
        %2499 = vmatprep.mubr.f32.mxu0 0.0
        %2500 = vmatmul.mubr.f32.gmra.mxu0 %v2332
        %v2501 = vpop.f32.mrf.mxu0
        %v2502 = vadd.f32 %v2315, %v2501
        %v2503 = vpop.f32.mrf.mxu0
        %v2504 = vadd.f32 %v2315, %v2503
        %2505 = vmatprep.mubr.f32.mxu0 0.0
        %2506 = vmatmul.mubr.f32.gmra.mxu0 %v2335
        %v2507 = vpop.f32.mrf.mxu0
        %v2508 = vadd.f32 %v2320, %v2507
        %v2509 = vpop.f32.mrf.mxu0
        %v2510 = vadd.f32 %v2320, %v2509
        %2511 = vmatprep.mubr.f32.mxu0 0.0
        %2512 = vmatmul.mubr.f32.gmra.mxu0 %v2338
        %v2513 = vpop.f32.mrf.mxu0
        %v2514 = vadd.f32 %v2325, %v2513
        %v2515 = vpop.f32.mrf.mxu0
        %v2516 = vadd.f32 %v2325, %v2515
        %2517 = vdwg.mxu0
        %v2518 = vand.u32 2147483647, %v2407
        %vm2519 = vcmp.le.f32.partialorder %v2518, 0.7853982
        %vm2520 = vcmp.lt.s32.totalorder %v2407, 0
        %v2521 = vand.u32 %v2407, 2139095040
        %v2522 = vshrl.u32 %v2521, 23
        %v2523 = vsub.s32 %v2522, 127
        %v2524 = vand.u32 2147483647, %v2407
        %v2525 = vand.u32 %v2524, 8388607
        %v2526 = vor.u32 %v2525, 8388608
        %v2527 = vsub.s32 0, %v2526
        %v2528 = vadd.s32 %v2523, 1
        %vm2529 = vcmp.gt.s32.totalorder %v2528, 0
        %v2530 = vsel %vm2529, %v2528, 0
        %v2531 = vshrl.u32 %v2530, 5
        %v2532 = vand.u32 %v2530, 31
        %v2533 = vsub.s32 32, %v2532
        %v2534 = vshrl.u32 683565275, %v2533
        %v2535 = vshll.u32 683565275, %v2532
        %v2536 = vshrl.u32 2475754826, %v2533
        %v2537 = vor.u32 %v2535, %v2536
        %v2538 = vshll.u32 2475754826, %v2532
        %v2539 = vshrl.u32 2131351028, %v2533
        %v2540 = vor.u32 %v2538, %v2539
        %v2541 = vshll.u32 2131351028, %v2532
        %v2542 = vshrl.u32 2102212464, %v2533
        %v2543 = vor.u32 %v2541, %v2542
        %v2544 = vshll.u32 2102212464, %v2532
        %v2545 = vshrl.u32 920167782, %v2533
        %v2546 = vor.u32 %v2544, %v2545
        %v2547 = vshll.u32 920167782, %v2532
        %v2548 = vshrl.u32 1326507024, %v2533
        %v2549 = vor.u32 %v2547, %v2548
        %vm2550 = vcmp.lt.s32.totalorder %v2531, 1
        %vm2551 = vcmp.lt.s32.totalorder %v2531, 2
        %vm2552 = vcmp.lt.s32.totalorder %v2531, 3
        %vm2553 = vcmp.lt.s32.totalorder %v2531, 4
        %v2554 = vsel %vm2550, %v2534, %v2537
        %v2555 = vsel %vm2553, %v2543, 2102212464
        %v2556 = vsel %vm2552, %v2540, %v2555
        %v2557 = vsel %vm2551, %v2554, %v2556
        %v2558 = vsel %vm2550, %v2537, %v2540
        %v2559 = vsel %vm2553, %v2546, 920167782
        %v2560 = vsel %vm2552, %v2543, %v2559
        %v2561 = vsel %vm2551, %v2558, %v2560
        %v2562 = vsel %vm2550, %v2540, %v2543
        %v2563 = vsel %vm2553, %v2549, 1326507024
        %v2564 = vsel %vm2552, %v2546, %v2563
        %v2565 = vsel %vm2551, %v2562, %v2564
        %v2566 = vshll.u32 %v2526, 8
        %v2567 = vmul.u32.u64.compose %v2566, %v2565
        %v2568 = vextract.low.u32 %v2567
        %v2569 = vextract.high.u32 %v2567
        %v2570 = vmul.u32.u64.compose %v2566, %v2561
        %v2571 = vextract.low.u32 %v2570
        %v2572 = vextract.high.u32 %v2570
        %v2573 = vmul.u32 %v2566, %v2557
        %v2574 = vadd.s32 %v2569, %v2571
        %vm2575 = vc.u32 %v2569, %v2571
        %v2576 = vadd.s32 %v2572, 1
        %v2577 = vsel %vm2575, %v2576, %v2572
        %v2578 = vadd.s32 %v2573, %v2577
        %v2579 = vadd.s32 %v2578, 536870912
        %v2580 = vshrl.u32 %v2579, 30
        %v2581 = vshll.u32 %v2580, 30
        %v2582 = vsub.s32 %v2578, %v2581
        %vm2583 = vcmp.lt.s32.totalorder %v2582, 0
        %v2584 = vsub.s32 0, %v2582
        %v2585 = vsel %vm2583, %v2584, %v2582
        %v2586 = vclz %v2585
        %v2587 = vsub.s32 %v2586, 2
        %vm2588 = vcmp.gt.s32.totalorder 0, %v2587
        %v2589 = vsel %vm2588, 0, %v2587
        %v2590 = vsub.s32 32, %v2589
        %v2591 = vshll.u32 %v2582, %v2589
        %v2592 = vshrl.u32 %v2574, %v2590
        %v2593 = vor.u32 %v2591, %v2592
        %v2594 = vsub.s32 4294967266, %v2589
        %v2595 = vadd.s32 %v2594, 127
        %v2596 = vshll.u32 %v2595, 23
        %v2597 = vor.u32 4788187, %v2596
        %v2598 = vand.u32 2147483647, %v2597
        %v2600 = vcvt.s32.f32 %v2593
        %v2601 = vmul.f32 %v2600, %v2598
        %v2602 = vxor.u32 %v2601, 2147483648
        %v2603 = vsel %vm2520, %v2602, %v2601
        %v2604 = vsub.s32 4, %v2580
        %v2605 = vsel %vm2520, %v2604, %v2580
        %v2606 = vsel %vm2519, %v2407, %v2603
        %v2607 = vsel %vm2519, 0, %v2605
        %v2608 = vcosq.f32.pop %v2606
        %v2609 = vsinq.f32.pop %v2606
        %vm2610 = vweird.f32 %v2407
        %v2611 = vadd.s32 %v2607, 3
        %v2612 = vand.u32 %v2611, 3
        %vm2613 = vcmp.lt.s32.totalorder %v2612, 2
        %vm2614 = vcmp.eq.s32.totalorder %v2612, 0
        %v2615 = vxor.u32 %v2609, 2147483648
        %v2616 = vsel %vm2614, %v2608, %v2615
        %vm2617 = vcmp.eq.s32.totalorder %v2612, 2
        %v2618 = vxor.u32 %v2608, 2147483648
        %v2619 = vsel %vm2617, %v2618, %v2609
        %v2620 = vsel %vm2613, %v2616, %v2619
        %v2621 = vsel %vm2610, nan, %v2620
        %v2622 = vand.u32 2147483647, %v2409
        %vm2623 = vcmp.le.f32.partialorder %v2622, 0.7853982
        %vm2624 = vcmp.lt.s32.totalorder %v2409, 0
        %v2625 = vand.u32 %v2409, 2139095040
        %v2626 = vshrl.u32 %v2625, 23
        %v2627 = vsub.s32 %v2626, 127
        %v2628 = vand.u32 2147483647, %v2409
        %v2629 = vand.u32 %v2628, 8388607
        %v2630 = vor.u32 %v2629, 8388608
        %v2631 = vsub.s32 0, %v2630
        %v2632 = vadd.s32 %v2627, 1
        %vm2633 = vcmp.gt.s32.totalorder %v2632, 0
        %v2634 = vsel %vm2633, %v2632, 0
        %v2635 = vshrl.u32 %v2634, 5
        %v2636 = vand.u32 %v2634, 31
        %v2637 = vsub.s32 32, %v2636
        %v2638 = vshrl.u32 683565275, %v2637
        %v2639 = vshll.u32 683565275, %v2636
        %v2640 = vshrl.u32 2475754826, %v2637
        %v2641 = vor.u32 %v2639, %v2640
        %v2642 = vshll.u32 2475754826, %v2636
        %v2643 = vshrl.u32 2131351028, %v2637
        %v2644 = vor.u32 %v2642, %v2643
        %v2645 = vshll.u32 2131351028, %v2636
        %v2646 = vshrl.u32 2102212464, %v2637
        %v2647 = vor.u32 %v2645, %v2646
        %v2648 = vshll.u32 2102212464, %v2636
        %v2649 = vshrl.u32 920167782, %v2637
        %v2650 = vor.u32 %v2648, %v2649
        %v2651 = vshll.u32 920167782, %v2636
        %v2652 = vshrl.u32 1326507024, %v2637
        %v2653 = vor.u32 %v2651, %v2652
        %vm2654 = vcmp.lt.s32.totalorder %v2635, 1
        %vm2655 = vcmp.lt.s32.totalorder %v2635, 2
        %vm2656 = vcmp.lt.s32.totalorder %v2635, 3
        %vm2657 = vcmp.lt.s32.totalorder %v2635, 4
        %v2658 = vsel %vm2654, %v2638, %v2641
        %v2659 = vsel %vm2657, %v2647, 2102212464
        %v2660 = vsel %vm2656, %v2644, %v2659
        %v2661 = vsel %vm2655, %v2658, %v2660
        %v2662 = vsel %vm2654, %v2641, %v2644
        %v2663 = vsel %vm2657, %v2650, 920167782
        %v2664 = vsel %vm2656, %v2647, %v2663
        %v2665 = vsel %vm2655, %v2662, %v2664
        %v2666 = vsel %vm2654, %v2644, %v2647
        %v2667 = vsel %vm2657, %v2653, 1326507024
        %v2668 = vsel %vm2656, %v2650, %v2667
        %v2669 = vsel %vm2655, %v2666, %v2668
        %v2670 = vshll.u32 %v2630, 8
        %v2671 = vmul.u32.u64.compose %v2670, %v2669
        %v2672 = vextract.low.u32 %v2671
        %v2673 = vextract.high.u32 %v2671
        %v2674 = vmul.u32.u64.compose %v2670, %v2665
        %v2675 = vextract.low.u32 %v2674
        %v2676 = vextract.high.u32 %v2674
        %v2677 = vmul.u32 %v2670, %v2661
        %v2678 = vadd.s32 %v2673, %v2675
        %vm2679 = vc.u32 %v2673, %v2675
        %v2680 = vadd.s32 %v2676, 1
        %v2681 = vsel %vm2679, %v2680, %v2676
        %v2682 = vadd.s32 %v2677, %v2681
        %v2683 = vadd.s32 %v2682, 536870912
        %v2684 = vshrl.u32 %v2683, 30
        %v2685 = vshll.u32 %v2684, 30
        %v2686 = vsub.s32 %v2682, %v2685
        %vm2687 = vcmp.lt.s32.totalorder %v2686, 0
        %v2688 = vsub.s32 0, %v2686
        %v2689 = vsel %vm2687, %v2688, %v2686
        %v2690 = vclz %v2689
        %v2691 = vsub.s32 %v2690, 2
        %vm2692 = vcmp.gt.s32.totalorder 0, %v2691
        %v2693 = vsel %vm2692, 0, %v2691
        %v2694 = vsub.s32 32, %v2693
        %v2695 = vshll.u32 %v2686, %v2693
        %v2696 = vshrl.u32 %v2678, %v2694
        %v2697 = vor.u32 %v2695, %v2696
        %v2698 = vsub.s32 4294967266, %v2693
        %v2699 = vadd.s32 %v2698, 127
        %v2700 = vshll.u32 %v2699, 23
        %v2701 = vor.u32 4788187, %v2700
        %v2702 = vand.u32 2147483647, %v2701
        %v2704 = vcvt.s32.f32 %v2697
        %v2705 = vmul.f32 %v2704, %v2702
        %v2706 = vxor.u32 %v2705, 2147483648
        %v2707 = vsel %vm2624, %v2706, %v2705
        %v2708 = vsub.s32 4, %v2684
        %v2709 = vsel %vm2624, %v2708, %v2684
        %v2710 = vsel %vm2623, %v2409, %v2707
        %v2711 = vsel %vm2623, 0, %v2709
        %v2712 = vcosq.f32.pop %v2710
        %v2713 = vsinq.f32.pop %v2710
        %vm2714 = vweird.f32 %v2409
        %v2715 = vadd.s32 %v2711, 3
        %v2716 = vand.u32 %v2715, 3
        %vm2717 = vcmp.lt.s32.totalorder %v2716, 2
        %vm2718 = vcmp.eq.s32.totalorder %v2716, 0
        %v2719 = vxor.u32 %v2713, 2147483648
        %v2720 = vsel %vm2718, %v2712, %v2719
        %vm2721 = vcmp.eq.s32.totalorder %v2716, 2
        %v2722 = vxor.u32 %v2712, 2147483648
        %v2723 = vsel %vm2721, %v2722, %v2713
        %v2724 = vsel %vm2717, %v2720, %v2723
        %v2725 = vsel %vm2714, nan, %v2724
        %v2726 = vand.u32 2147483647, %v2496
        %vm2727 = vcmp.le.f32.partialorder %v2726, 0.7853982
        %vm2728 = vcmp.lt.s32.totalorder %v2496, 0
        %v2729 = vand.u32 %v2496, 2139095040
        %v2730 = vshrl.u32 %v2729, 23
        %v2731 = vsub.s32 %v2730, 127
        %v2732 = vand.u32 2147483647, %v2496
        %v2733 = vand.u32 %v2732, 8388607
        %v2734 = vor.u32 %v2733, 8388608
        %v2735 = vsub.s32 0, %v2734
        %v2736 = vadd.s32 %v2731, 1
        %vm2737 = vcmp.gt.s32.totalorder %v2736, 0
        %v2738 = vsel %vm2737, %v2736, 0
        %v2739 = vshrl.u32 %v2738, 5
        %v2740 = vand.u32 %v2738, 31
        %v2741 = vsub.s32 32, %v2740
        %v2742 = vshrl.u32 683565275, %v2741
        %v2743 = vshll.u32 683565275, %v2740
        %v2744 = vshrl.u32 2475754826, %v2741
        %v2745 = vor.u32 %v2743, %v2744
        %v2746 = vshll.u32 2475754826, %v2740
        %v2747 = vshrl.u32 2131351028, %v2741
        %v2748 = vor.u32 %v2746, %v2747
        %v2749 = vshll.u32 2131351028, %v2740
        %v2750 = vshrl.u32 2102212464, %v2741
        %v2751 = vor.u32 %v2749, %v2750
        %v2752 = vshll.u32 2102212464, %v2740
        %v2753 = vshrl.u32 920167782, %v2741
        %v2754 = vor.u32 %v2752, %v2753
        %v2755 = vshll.u32 920167782, %v2740
        %v2756 = vshrl.u32 1326507024, %v2741
        %v2757 = vor.u32 %v2755, %v2756
        %vm2758 = vcmp.lt.s32.totalorder %v2739, 1
        %vm2759 = vcmp.lt.s32.totalorder %v2739, 2
        %vm2760 = vcmp.lt.s32.totalorder %v2739, 3
        %vm2761 = vcmp.lt.s32.totalorder %v2739, 4
        %v2762 = vsel %vm2758, %v2742, %v2745
        %v2763 = vsel %vm2761, %v2751, 2102212464
        %v2764 = vsel %vm2760, %v2748, %v2763
        %v2765 = vsel %vm2759, %v2762, %v2764
        %v2766 = vsel %vm2758, %v2745, %v2748
        %v2767 = vsel %vm2761, %v2754, 920167782
        %v2768 = vsel %vm2760, %v2751, %v2767
        %v2769 = vsel %vm2759, %v2766, %v2768
        %v2770 = vsel %vm2758, %v2748, %v2751
        %v2771 = vsel %vm2761, %v2757, 1326507024
        %v2772 = vsel %vm2760, %v2754, %v2771
        %v2773 = vsel %vm2759, %v2770, %v2772
        %v2774 = vshll.u32 %v2734, 8
        %v2775 = vmul.u32.u64.compose %v2774, %v2773
        %v2776 = vextract.low.u32 %v2775
        %v2777 = vextract.high.u32 %v2775
        %v2778 = vmul.u32.u64.compose %v2774, %v2769
        %v2779 = vextract.low.u32 %v2778
        %v2780 = vextract.high.u32 %v2778
        %v2781 = vmul.u32 %v2774, %v2765
        %v2782 = vadd.s32 %v2777, %v2779
        %vm2783 = vc.u32 %v2777, %v2779
        %v2784 = vadd.s32 %v2780, 1
        %v2785 = vsel %vm2783, %v2784, %v2780
        %v2786 = vadd.s32 %v2781, %v2785
        %v2787 = vadd.s32 %v2786, 536870912
        %v2788 = vshrl.u32 %v2787, 30
        %v2789 = vshll.u32 %v2788, 30
        %v2790 = vsub.s32 %v2786, %v2789
        %vm2791 = vcmp.lt.s32.totalorder %v2790, 0
        %v2792 = vsub.s32 0, %v2790
        %v2793 = vsel %vm2791, %v2792, %v2790
        %v2794 = vclz %v2793
        %v2795 = vsub.s32 %v2794, 2
        %vm2796 = vcmp.gt.s32.totalorder 0, %v2795
        %v2797 = vsel %vm2796, 0, %v2795
        %v2798 = vsub.s32 32, %v2797
        %v2799 = vshll.u32 %v2790, %v2797
        %v2800 = vshrl.u32 %v2782, %v2798
        %v2801 = vor.u32 %v2799, %v2800
        %v2802 = vsub.s32 4294967266, %v2797
        %v2803 = vadd.s32 %v2802, 127
        %v2804 = vshll.u32 %v2803, 23
        %v2805 = vor.u32 4788187, %v2804
        %v2806 = vand.u32 2147483647, %v2805
        %v2808 = vcvt.s32.f32 %v2801
        %v2809 = vmul.f32 %v2808, %v2806
        %v2810 = vxor.u32 %v2809, 2147483648
        %v2811 = vsel %vm2728, %v2810, %v2809
        %v2812 = vsub.s32 4, %v2788
        %v2813 = vsel %vm2728, %v2812, %v2788
        %v2814 = vsel %vm2727, %v2496, %v2811
        %v2815 = vsel %vm2727, 0, %v2813
        %v2816 = vcosq.f32.pop %v2814
        %v2817 = vsinq.f32.pop %v2814
        %vm2818 = vweird.f32 %v2496
        %v2819 = vadd.s32 %v2815, 3
        %v2820 = vand.u32 %v2819, 3
        %vm2821 = vcmp.lt.s32.totalorder %v2820, 2
        %vm2822 = vcmp.eq.s32.totalorder %v2820, 0
        %v2823 = vxor.u32 %v2817, 2147483648
        %v2824 = vsel %vm2822, %v2816, %v2823
        %vm2825 = vcmp.eq.s32.totalorder %v2820, 2
        %v2826 = vxor.u32 %v2816, 2147483648
        %v2827 = vsel %vm2825, %v2826, %v2817
        %v2828 = vsel %vm2821, %v2824, %v2827
        %v2829 = vsel %vm2818, nan, %v2828
        %v2830 = vand.u32 2147483647, %v2498
        %vm2831 = vcmp.le.f32.partialorder %v2830, 0.7853982
        %vm2832 = vcmp.lt.s32.totalorder %v2498, 0
        %v2833 = vand.u32 %v2498, 2139095040
        %v2834 = vshrl.u32 %v2833, 23
        %v2835 = vsub.s32 %v2834, 127
        %v2836 = vand.u32 2147483647, %v2498
        %v2837 = vand.u32 %v2836, 8388607
        %v2838 = vor.u32 %v2837, 8388608
        %v2839 = vsub.s32 0, %v2838
        %v2840 = vadd.s32 %v2835, 1
        %vm2841 = vcmp.gt.s32.totalorder %v2840, 0
        %v2842 = vsel %vm2841, %v2840, 0
        %v2843 = vshrl.u32 %v2842, 5
        %v2844 = vand.u32 %v2842, 31
        %v2845 = vsub.s32 32, %v2844
        %v2846 = vshrl.u32 683565275, %v2845
        %v2847 = vshll.u32 683565275, %v2844
        %v2848 = vshrl.u32 2475754826, %v2845
        %v2849 = vor.u32 %v2847, %v2848
        %v2850 = vshll.u32 2475754826, %v2844
        %v2851 = vshrl.u32 2131351028, %v2845
        %v2852 = vor.u32 %v2850, %v2851
        %v2853 = vshll.u32 2131351028, %v2844
        %v2854 = vshrl.u32 2102212464, %v2845
        %v2855 = vor.u32 %v2853, %v2854
        %v2856 = vshll.u32 2102212464, %v2844
        %v2857 = vshrl.u32 920167782, %v2845
        %v2858 = vor.u32 %v2856, %v2857
        %v2859 = vshll.u32 920167782, %v2844
        %v2860 = vshrl.u32 1326507024, %v2845
        %v2861 = vor.u32 %v2859, %v2860
        %vm2862 = vcmp.lt.s32.totalorder %v2843, 1
        %vm2863 = vcmp.lt.s32.totalorder %v2843, 2
        %vm2864 = vcmp.lt.s32.totalorder %v2843, 3
        %vm2865 = vcmp.lt.s32.totalorder %v2843, 4
        %v2866 = vsel %vm2862, %v2846, %v2849
        %v2867 = vsel %vm2865, %v2855, 2102212464
        %v2868 = vsel %vm2864, %v2852, %v2867
        %v2869 = vsel %vm2863, %v2866, %v2868
        %v2870 = vsel %vm2862, %v2849, %v2852
        %v2871 = vsel %vm2865, %v2858, 920167782
        %v2872 = vsel %vm2864, %v2855, %v2871
        %v2873 = vsel %vm2863, %v2870, %v2872
        %v2874 = vsel %vm2862, %v2852, %v2855
        %v2875 = vsel %vm2865, %v2861, 1326507024
        %v2876 = vsel %vm2864, %v2858, %v2875
        %v2877 = vsel %vm2863, %v2874, %v2876
        %v2878 = vshll.u32 %v2838, 8
        %v2879 = vmul.u32.u64.compose %v2878, %v2877
        %v2880 = vextract.low.u32 %v2879
        %v2881 = vextract.high.u32 %v2879
        %v2882 = vmul.u32.u64.compose %v2878, %v2873
        %v2883 = vextract.low.u32 %v2882
        %v2884 = vextract.high.u32 %v2882
        %v2885 = vmul.u32 %v2878, %v2869
        %v2886 = vadd.s32 %v2881, %v2883
        %vm2887 = vc.u32 %v2881, %v2883
        %v2888 = vadd.s32 %v2884, 1
        %v2889 = vsel %vm2887, %v2888, %v2884
        %v2890 = vadd.s32 %v2885, %v2889
        %v2891 = vadd.s32 %v2890, 536870912
        %v2892 = vshrl.u32 %v2891, 30
        %v2893 = vshll.u32 %v2892, 30
        %v2894 = vsub.s32 %v2890, %v2893
        %vm2895 = vcmp.lt.s32.totalorder %v2894, 0
        %v2896 = vsub.s32 0, %v2894
        %v2897 = vsel %vm2895, %v2896, %v2894
        %v2898 = vclz %v2897
        %v2899 = vsub.s32 %v2898, 2
        %vm2900 = vcmp.gt.s32.totalorder 0, %v2899
        %v2901 = vsel %vm2900, 0, %v2899
        %v2902 = vsub.s32 32, %v2901
        %v2903 = vshll.u32 %v2894, %v2901
        %v2904 = vshrl.u32 %v2886, %v2902
        %v2905 = vor.u32 %v2903, %v2904
        %v2906 = vsub.s32 4294967266, %v2901
        %v2907 = vadd.s32 %v2906, 127
        %v2908 = vshll.u32 %v2907, 23
        %v2909 = vor.u32 4788187, %v2908
        %v2910 = vand.u32 2147483647, %v2909
        %v2912 = vcvt.s32.f32 %v2905
        %v2913 = vmul.f32 %v2912, %v2910
        %v2914 = vxor.u32 %v2913, 2147483648
        %v2915 = vsel %vm2832, %v2914, %v2913
        %v2916 = vsub.s32 4, %v2892
        %v2917 = vsel %vm2832, %v2916, %v2892
        %v2918 = vsel %vm2831, %v2498, %v2915
        %v2919 = vsel %vm2831, 0, %v2917
        %v2920 = vcosq.f32.pop %v2918
        %v2921 = vsinq.f32.pop %v2918
        %vm2922 = vweird.f32 %v2498
        %v2923 = vadd.s32 %v2919, 3
        %v2924 = vand.u32 %v2923, 3
        %vm2925 = vcmp.lt.s32.totalorder %v2924, 2
        %vm2926 = vcmp.eq.s32.totalorder %v2924, 0
        %v2927 = vxor.u32 %v2921, 2147483648
        %v2928 = vsel %vm2926, %v2920, %v2927
        %vm2929 = vcmp.eq.s32.totalorder %v2924, 2
        %v2930 = vxor.u32 %v2920, 2147483648
        %v2931 = vsel %vm2929, %v2930, %v2921
        %v2932 = vsel %vm2925, %v2928, %v2931
        %v2933 = vsel %vm2922, nan, %v2932
        %v2934 = vand.u32 2147483647, %v2413
        %vm2935 = vcmp.le.f32.partialorder %v2934, 0.7853982
        %vm2936 = vcmp.lt.s32.totalorder %v2413, 0
        %v2937 = vand.u32 %v2413, 2139095040
        %v2938 = vshrl.u32 %v2937, 23
        %v2939 = vsub.s32 %v2938, 127
        %v2940 = vand.u32 2147483647, %v2413
        %v2941 = vand.u32 %v2940, 8388607
        %v2942 = vor.u32 %v2941, 8388608
        %v2943 = vsub.s32 0, %v2942
        %v2944 = vadd.s32 %v2939, 1
        %vm2945 = vcmp.gt.s32.totalorder %v2944, 0
        %v2946 = vsel %vm2945, %v2944, 0
        %v2947 = vshrl.u32 %v2946, 5
        %v2948 = vand.u32 %v2946, 31
        %v2949 = vsub.s32 32, %v2948
        %v2950 = vshrl.u32 683565275, %v2949
        %v2951 = vshll.u32 683565275, %v2948
        %v2952 = vshrl.u32 2475754826, %v2949
        %v2953 = vor.u32 %v2951, %v2952
        %v2954 = vshll.u32 2475754826, %v2948
        %v2955 = vshrl.u32 2131351028, %v2949
        %v2956 = vor.u32 %v2954, %v2955
        %v2957 = vshll.u32 2131351028, %v2948
        %v2958 = vshrl.u32 2102212464, %v2949
        %v2959 = vor.u32 %v2957, %v2958
        %v2960 = vshll.u32 2102212464, %v2948
        %v2961 = vshrl.u32 920167782, %v2949
        %v2962 = vor.u32 %v2960, %v2961
        %v2963 = vshll.u32 920167782, %v2948
        %v2964 = vshrl.u32 1326507024, %v2949
        %v2965 = vor.u32 %v2963, %v2964
        %vm2966 = vcmp.lt.s32.totalorder %v2947, 1
        %vm2967 = vcmp.lt.s32.totalorder %v2947, 2
        %vm2968 = vcmp.lt.s32.totalorder %v2947, 3
        %vm2969 = vcmp.lt.s32.totalorder %v2947, 4
        %v2970 = vsel %vm2966, %v2950, %v2953
        %v2971 = vsel %vm2969, %v2959, 2102212464
        %v2972 = vsel %vm2968, %v2956, %v2971
        %v2973 = vsel %vm2967, %v2970, %v2972
        %v2974 = vsel %vm2966, %v2953, %v2956
        %v2975 = vsel %vm2969, %v2962, 920167782
        %v2976 = vsel %vm2968, %v2959, %v2975
        %v2977 = vsel %vm2967, %v2974, %v2976
        %v2978 = vsel %vm2966, %v2956, %v2959
        %v2979 = vsel %vm2969, %v2965, 1326507024
        %v2980 = vsel %vm2968, %v2962, %v2979
        %v2981 = vsel %vm2967, %v2978, %v2980
        %v2982 = vshll.u32 %v2942, 8
        %v2983 = vmul.u32.u64.compose %v2982, %v2981
        %v2984 = vextract.low.u32 %v2983
        %v2985 = vextract.high.u32 %v2983
        %v2986 = vmul.u32.u64.compose %v2982, %v2977
        %v2987 = vextract.low.u32 %v2986
        %v2988 = vextract.high.u32 %v2986
        %v2989 = vmul.u32 %v2982, %v2973
        %v2990 = vadd.s32 %v2985, %v2987
        %vm2991 = vc.u32 %v2985, %v2987
        %v2992 = vadd.s32 %v2988, 1
        %v2993 = vsel %vm2991, %v2992, %v2988
        %v2994 = vadd.s32 %v2989, %v2993
        %v2995 = vadd.s32 %v2994, 536870912
        %v2996 = vshrl.u32 %v2995, 30
        %v2997 = vshll.u32 %v2996, 30
        %v2998 = vsub.s32 %v2994, %v2997
        %vm2999 = vcmp.lt.s32.totalorder %v2998, 0
        %v3000 = vsub.s32 0, %v2998
        %v3001 = vsel %vm2999, %v3000, %v2998
        %v3002 = vclz %v3001
        %v3003 = vsub.s32 %v3002, 2
        %vm3004 = vcmp.gt.s32.totalorder 0, %v3003
        %v3005 = vsel %vm3004, 0, %v3003
        %v3006 = vsub.s32 32, %v3005
        %v3007 = vshll.u32 %v2998, %v3005
        %v3008 = vshrl.u32 %v2990, %v3006
        %v3009 = vor.u32 %v3007, %v3008
        %v3010 = vsub.s32 4294967266, %v3005
        %v3011 = vadd.s32 %v3010, 127
        %v3012 = vshll.u32 %v3011, 23
        %v3013 = vor.u32 4788187, %v3012
        %v3014 = vand.u32 2147483647, %v3013
        %v3016 = vcvt.s32.f32 %v3009
        %v3017 = vmul.f32 %v3016, %v3014
        %v3018 = vxor.u32 %v3017, 2147483648
        %v3019 = vsel %vm2936, %v3018, %v3017
        %v3020 = vsub.s32 4, %v2996
        %v3021 = vsel %vm2936, %v3020, %v2996
        %v3022 = vsel %vm2935, %v2413, %v3019
        %v3023 = vsel %vm2935, 0, %v3021
        %v3024 = vcosq.f32.pop %v3022
        %v3025 = vsinq.f32.pop %v3022
        %vm3026 = vweird.f32 %v2413
        %v3027 = vadd.s32 %v3023, 3
        %v3028 = vand.u32 %v3027, 3
        %vm3029 = vcmp.lt.s32.totalorder %v3028, 2
        %vm3030 = vcmp.eq.s32.totalorder %v3028, 0
        %v3031 = vxor.u32 %v3025, 2147483648
        %v3032 = vsel %vm3030, %v3024, %v3031
        %vm3033 = vcmp.eq.s32.totalorder %v3028, 2
        %v3034 = vxor.u32 %v3024, 2147483648
        %v3035 = vsel %vm3033, %v3034, %v3025
        %v3036 = vsel %vm3029, %v3032, %v3035
        %v3037 = vsel %vm3026, nan, %v3036
        %v3038 = vand.u32 2147483647, %v2415
        %vm3039 = vcmp.le.f32.partialorder %v3038, 0.7853982
        %vm3040 = vcmp.lt.s32.totalorder %v2415, 0
        %v3041 = vand.u32 %v2415, 2139095040
        %v3042 = vshrl.u32 %v3041, 23
        %v3043 = vsub.s32 %v3042, 127
        %v3044 = vand.u32 2147483647, %v2415
        %v3045 = vand.u32 %v3044, 8388607
        %v3046 = vor.u32 %v3045, 8388608
        %v3047 = vsub.s32 0, %v3046
        %v3048 = vadd.s32 %v3043, 1
        %vm3049 = vcmp.gt.s32.totalorder %v3048, 0
        %v3050 = vsel %vm3049, %v3048, 0
        %v3051 = vshrl.u32 %v3050, 5
        %v3052 = vand.u32 %v3050, 31
        %v3053 = vsub.s32 32, %v3052
        %v3054 = vshrl.u32 683565275, %v3053
        %v3055 = vshll.u32 683565275, %v3052
        %v3056 = vshrl.u32 2475754826, %v3053
        %v3057 = vor.u32 %v3055, %v3056
        %v3058 = vshll.u32 2475754826, %v3052
        %v3059 = vshrl.u32 2131351028, %v3053
        %v3060 = vor.u32 %v3058, %v3059
        %v3061 = vshll.u32 2131351028, %v3052
        %v3062 = vshrl.u32 2102212464, %v3053
        %v3063 = vor.u32 %v3061, %v3062
        %v3064 = vshll.u32 2102212464, %v3052
        %v3065 = vshrl.u32 920167782, %v3053
        %v3066 = vor.u32 %v3064, %v3065
        %v3067 = vshll.u32 920167782, %v3052
        %v3068 = vshrl.u32 1326507024, %v3053
        %v3069 = vor.u32 %v3067, %v3068
        %vm3070 = vcmp.lt.s32.totalorder %v3051, 1
        %vm3071 = vcmp.lt.s32.totalorder %v3051, 2
        %vm3072 = vcmp.lt.s32.totalorder %v3051, 3
        %vm3073 = vcmp.lt.s32.totalorder %v3051, 4
        %v3074 = vsel %vm3070, %v3054, %v3057
        %v3075 = vsel %vm3073, %v3063, 2102212464
        %v3076 = vsel %vm3072, %v3060, %v3075
        %v3077 = vsel %vm3071, %v3074, %v3076
        %v3078 = vsel %vm3070, %v3057, %v3060
        %v3079 = vsel %vm3073, %v3066, 920167782
        %v3080 = vsel %vm3072, %v3063, %v3079
        %v3081 = vsel %vm3071, %v3078, %v3080
        %v3082 = vsel %vm3070, %v3060, %v3063
        %v3083 = vsel %vm3073, %v3069, 1326507024
        %v3084 = vsel %vm3072, %v3066, %v3083
        %v3085 = vsel %vm3071, %v3082, %v3084
        %v3086 = vshll.u32 %v3046, 8
        %v3087 = vmul.u32.u64.compose %v3086, %v3085
        %v3088 = vextract.low.u32 %v3087
        %v3089 = vextract.high.u32 %v3087
        %v3090 = vmul.u32.u64.compose %v3086, %v3081
        %v3091 = vextract.low.u32 %v3090
        %v3092 = vextract.high.u32 %v3090
        %v3093 = vmul.u32 %v3086, %v3077
        %v3094 = vadd.s32 %v3089, %v3091
        %vm3095 = vc.u32 %v3089, %v3091
        %v3096 = vadd.s32 %v3092, 1
        %v3097 = vsel %vm3095, %v3096, %v3092
        %v3098 = vadd.s32 %v3093, %v3097
        %v3099 = vadd.s32 %v3098, 536870912
        %v3100 = vshrl.u32 %v3099, 30
        %v3101 = vshll.u32 %v3100, 30
        %v3102 = vsub.s32 %v3098, %v3101
        %vm3103 = vcmp.lt.s32.totalorder %v3102, 0
        %v3104 = vsub.s32 0, %v3102
        %v3105 = vsel %vm3103, %v3104, %v3102
        %v3106 = vclz %v3105
        %v3107 = vsub.s32 %v3106, 2
        %vm3108 = vcmp.gt.s32.totalorder 0, %v3107
        %v3109 = vsel %vm3108, 0, %v3107
        %v3110 = vsub.s32 32, %v3109
        %v3111 = vshll.u32 %v3102, %v3109
        %v3112 = vshrl.u32 %v3094, %v3110
        %v3113 = vor.u32 %v3111, %v3112
        %v3114 = vsub.s32 4294967266, %v3109
        %v3115 = vadd.s32 %v3114, 127
        %v3116 = vshll.u32 %v3115, 23
        %v3117 = vor.u32 4788187, %v3116
        %v3118 = vand.u32 2147483647, %v3117
        %v3120 = vcvt.s32.f32 %v3113
        %v3121 = vmul.f32 %v3120, %v3118
        %v3122 = vxor.u32 %v3121, 2147483648
        %v3123 = vsel %vm3040, %v3122, %v3121
        %v3124 = vsub.s32 4, %v3100
        %v3125 = vsel %vm3040, %v3124, %v3100
        %v3126 = vsel %vm3039, %v2415, %v3123
        %v3127 = vsel %vm3039, 0, %v3125
        %v3128 = vcosq.f32.pop %v3126
        %v3129 = vsinq.f32.pop %v3126
        %vm3130 = vweird.f32 %v2415
        %v3131 = vadd.s32 %v3127, 3
        %v3132 = vand.u32 %v3131, 3
        %vm3133 = vcmp.lt.s32.totalorder %v3132, 2
        %vm3134 = vcmp.eq.s32.totalorder %v3132, 0
        %v3135 = vxor.u32 %v3129, 2147483648
        %v3136 = vsel %vm3134, %v3128, %v3135
        %vm3137 = vcmp.eq.s32.totalorder %v3132, 2
        %v3138 = vxor.u32 %v3128, 2147483648
        %v3139 = vsel %vm3137, %v3138, %v3129
        %v3140 = vsel %vm3133, %v3136, %v3139
        %v3141 = vsel %vm3130, nan, %v3140
        %v3142 = vand.u32 2147483647, %v2502
        %vm3143 = vcmp.le.f32.partialorder %v3142, 0.7853982
        %vm3144 = vcmp.lt.s32.totalorder %v2502, 0
        %v3145 = vand.u32 %v2502, 2139095040
        %v3146 = vshrl.u32 %v3145, 23
        %v3147 = vsub.s32 %v3146, 127
        %v3148 = vand.u32 2147483647, %v2502
        %v3149 = vand.u32 %v3148, 8388607
        %v3150 = vor.u32 %v3149, 8388608
        %v3151 = vsub.s32 0, %v3150
        %v3152 = vadd.s32 %v3147, 1
        %vm3153 = vcmp.gt.s32.totalorder %v3152, 0
        %v3154 = vsel %vm3153, %v3152, 0
        %v3155 = vshrl.u32 %v3154, 5
        %v3156 = vand.u32 %v3154, 31
        %v3157 = vsub.s32 32, %v3156
        %v3158 = vshrl.u32 683565275, %v3157
        %v3159 = vshll.u32 683565275, %v3156
        %v3160 = vshrl.u32 2475754826, %v3157
        %v3161 = vor.u32 %v3159, %v3160
        %v3162 = vshll.u32 2475754826, %v3156
        %v3163 = vshrl.u32 2131351028, %v3157
        %v3164 = vor.u32 %v3162, %v3163
        %v3165 = vshll.u32 2131351028, %v3156
        %v3166 = vshrl.u32 2102212464, %v3157
        %v3167 = vor.u32 %v3165, %v3166
        %v3168 = vshll.u32 2102212464, %v3156
        %v3169 = vshrl.u32 920167782, %v3157
        %v3170 = vor.u32 %v3168, %v3169
        %v3171 = vshll.u32 920167782, %v3156
        %v3172 = vshrl.u32 1326507024, %v3157
        %v3173 = vor.u32 %v3171, %v3172
        %vm3174 = vcmp.lt.s32.totalorder %v3155, 1
        %vm3175 = vcmp.lt.s32.totalorder %v3155, 2
        %vm3176 = vcmp.lt.s32.totalorder %v3155, 3
        %vm3177 = vcmp.lt.s32.totalorder %v3155, 4
        %v3178 = vsel %vm3174, %v3158, %v3161
        %v3179 = vsel %vm3177, %v3167, 2102212464
        %v3180 = vsel %vm3176, %v3164, %v3179
        %v3181 = vsel %vm3175, %v3178, %v3180
        %v3182 = vsel %vm3174, %v3161, %v3164
        %v3183 = vsel %vm3177, %v3170, 920167782
        %v3184 = vsel %vm3176, %v3167, %v3183
        %v3185 = vsel %vm3175, %v3182, %v3184
        %v3186 = vsel %vm3174, %v3164, %v3167
        %v3187 = vsel %vm3177, %v3173, 1326507024
        %v3188 = vsel %vm3176, %v3170, %v3187
        %v3189 = vsel %vm3175, %v3186, %v3188
        %v3190 = vshll.u32 %v3150, 8
        %v3191 = vmul.u32.u64.compose %v3190, %v3189
        %v3192 = vextract.low.u32 %v3191
        %v3193 = vextract.high.u32 %v3191
        %v3194 = vmul.u32.u64.compose %v3190, %v3185
        %v3195 = vextract.low.u32 %v3194
        %v3196 = vextract.high.u32 %v3194
        %v3197 = vmul.u32 %v3190, %v3181
        %v3198 = vadd.s32 %v3193, %v3195
        %vm3199 = vc.u32 %v3193, %v3195
        %v3200 = vadd.s32 %v3196, 1
        %v3201 = vsel %vm3199, %v3200, %v3196
        %v3202 = vadd.s32 %v3197, %v3201
        %v3203 = vadd.s32 %v3202, 536870912
        %v3204 = vshrl.u32 %v3203, 30
        %v3205 = vshll.u32 %v3204, 30
        %v3206 = vsub.s32 %v3202, %v3205
        %vm3207 = vcmp.lt.s32.totalorder %v3206, 0
        %v3208 = vsub.s32 0, %v3206
        %v3209 = vsel %vm3207, %v3208, %v3206
        %v3210 = vclz %v3209
        %v3211 = vsub.s32 %v3210, 2
        %vm3212 = vcmp.gt.s32.totalorder 0, %v3211
        %v3213 = vsel %vm3212, 0, %v3211
        %v3214 = vsub.s32 32, %v3213
        %v3215 = vshll.u32 %v3206, %v3213
        %v3216 = vshrl.u32 %v3198, %v3214
        %v3217 = vor.u32 %v3215, %v3216
        %v3218 = vsub.s32 4294967266, %v3213
        %v3219 = vadd.s32 %v3218, 127
        %v3220 = vshll.u32 %v3219, 23
        %v3221 = vor.u32 4788187, %v3220
        %v3222 = vand.u32 2147483647, %v3221
        %v3224 = vcvt.s32.f32 %v3217
        %v3225 = vmul.f32 %v3224, %v3222
        %v3226 = vxor.u32 %v3225, 2147483648
        %v3227 = vsel %vm3144, %v3226, %v3225
        %v3228 = vsub.s32 4, %v3204
        %v3229 = vsel %vm3144, %v3228, %v3204
        %v3230 = vsel %vm3143, %v2502, %v3227
        %v3231 = vsel %vm3143, 0, %v3229
        %v3232 = vcosq.f32.pop %v3230
        %v3233 = vsinq.f32.pop %v3230
        %vm3234 = vweird.f32 %v2502
        %v3235 = vadd.s32 %v3231, 3
        %v3236 = vand.u32 %v3235, 3
        %vm3237 = vcmp.lt.s32.totalorder %v3236, 2
        %vm3238 = vcmp.eq.s32.totalorder %v3236, 0
        %v3239 = vxor.u32 %v3233, 2147483648
        %v3240 = vsel %vm3238, %v3232, %v3239
        %vm3241 = vcmp.eq.s32.totalorder %v3236, 2
        %v3242 = vxor.u32 %v3232, 2147483648
        %v3243 = vsel %vm3241, %v3242, %v3233
        %v3244 = vsel %vm3237, %v3240, %v3243
        %v3245 = vsel %vm3234, nan, %v3244
        %v3246 = vand.u32 2147483647, %v2504
        %vm3247 = vcmp.le.f32.partialorder %v3246, 0.7853982
        %vm3248 = vcmp.lt.s32.totalorder %v2504, 0
        %v3249 = vand.u32 %v2504, 2139095040
        %v3250 = vshrl.u32 %v3249, 23
        %v3251 = vsub.s32 %v3250, 127
        %v3252 = vand.u32 2147483647, %v2504
        %v3253 = vand.u32 %v3252, 8388607
        %v3254 = vor.u32 %v3253, 8388608
        %v3255 = vsub.s32 0, %v3254
        %v3256 = vadd.s32 %v3251, 1
        %vm3257 = vcmp.gt.s32.totalorder %v3256, 0
        %v3258 = vsel %vm3257, %v3256, 0
        %v3259 = vshrl.u32 %v3258, 5
        %v3260 = vand.u32 %v3258, 31
        %v3261 = vsub.s32 32, %v3260
        %v3262 = vshrl.u32 683565275, %v3261
        %v3263 = vshll.u32 683565275, %v3260
        %v3264 = vshrl.u32 2475754826, %v3261
        %v3265 = vor.u32 %v3263, %v3264
        %v3266 = vshll.u32 2475754826, %v3260
        %v3267 = vshrl.u32 2131351028, %v3261
        %v3268 = vor.u32 %v3266, %v3267
        %v3269 = vshll.u32 2131351028, %v3260
        %v3270 = vshrl.u32 2102212464, %v3261
        %v3271 = vor.u32 %v3269, %v3270
        %v3272 = vshll.u32 2102212464, %v3260
        %v3273 = vshrl.u32 920167782, %v3261
        %v3274 = vor.u32 %v3272, %v3273
        %v3275 = vshll.u32 920167782, %v3260
        %v3276 = vshrl.u32 1326507024, %v3261
        %v3277 = vor.u32 %v3275, %v3276
        %vm3278 = vcmp.lt.s32.totalorder %v3259, 1
        %vm3279 = vcmp.lt.s32.totalorder %v3259, 2
        %vm3280 = vcmp.lt.s32.totalorder %v3259, 3
        %vm3281 = vcmp.lt.s32.totalorder %v3259, 4
        %v3282 = vsel %vm3278, %v3262, %v3265
        %v3283 = vsel %vm3281, %v3271, 2102212464
        %v3284 = vsel %vm3280, %v3268, %v3283
        %v3285 = vsel %vm3279, %v3282, %v3284
        %v3286 = vsel %vm3278, %v3265, %v3268
        %v3287 = vsel %vm3281, %v3274, 920167782
        %v3288 = vsel %vm3280, %v3271, %v3287
        %v3289 = vsel %vm3279, %v3286, %v3288
        %v3290 = vsel %vm3278, %v3268, %v3271
        %v3291 = vsel %vm3281, %v3277, 1326507024
        %v3292 = vsel %vm3280, %v3274, %v3291
        %v3293 = vsel %vm3279, %v3290, %v3292
        %v3294 = vshll.u32 %v3254, 8
        %v3295 = vmul.u32.u64.compose %v3294, %v3293
        %v3296 = vextract.low.u32 %v3295
        %v3297 = vextract.high.u32 %v3295
        %v3298 = vmul.u32.u64.compose %v3294, %v3289
        %v3299 = vextract.low.u32 %v3298
        %v3300 = vextract.high.u32 %v3298
        %v3301 = vmul.u32 %v3294, %v3285
        %v3302 = vadd.s32 %v3297, %v3299
        %vm3303 = vc.u32 %v3297, %v3299
        %v3304 = vadd.s32 %v3300, 1
        %v3305 = vsel %vm3303, %v3304, %v3300
        %v3306 = vadd.s32 %v3301, %v3305
        %v3307 = vadd.s32 %v3306, 536870912
        %v3308 = vshrl.u32 %v3307, 30
        %v3309 = vshll.u32 %v3308, 30
        %v3310 = vsub.s32 %v3306, %v3309
        %vm3311 = vcmp.lt.s32.totalorder %v3310, 0
        %v3312 = vsub.s32 0, %v3310
        %v3313 = vsel %vm3311, %v3312, %v3310
        %v3314 = vclz %v3313
        %v3315 = vsub.s32 %v3314, 2
        %vm3316 = vcmp.gt.s32.totalorder 0, %v3315
        %v3317 = vsel %vm3316, 0, %v3315
        %v3318 = vsub.s32 32, %v3317
        %v3319 = vshll.u32 %v3310, %v3317
        %v3320 = vshrl.u32 %v3302, %v3318
        %v3321 = vor.u32 %v3319, %v3320
        %v3322 = vsub.s32 4294967266, %v3317
        %v3323 = vadd.s32 %v3322, 127
        %v3324 = vshll.u32 %v3323, 23
        %v3325 = vor.u32 4788187, %v3324
        %v3326 = vand.u32 2147483647, %v3325
        %v3328 = vcvt.s32.f32 %v3321
        %v3329 = vmul.f32 %v3328, %v3326
        %v3330 = vxor.u32 %v3329, 2147483648
        %v3331 = vsel %vm3248, %v3330, %v3329
        %v3332 = vsub.s32 4, %v3308
        %v3333 = vsel %vm3248, %v3332, %v3308
        %v3334 = vsel %vm3247, %v2504, %v3331
        %v3335 = vsel %vm3247, 0, %v3333
        %v3336 = vcosq.f32.pop %v3334
        %v3337 = vsinq.f32.pop %v3334
        %vm3338 = vweird.f32 %v2504
        %v3339 = vadd.s32 %v3335, 3
        %v3340 = vand.u32 %v3339, 3
        %vm3341 = vcmp.lt.s32.totalorder %v3340, 2
        %vm3342 = vcmp.eq.s32.totalorder %v3340, 0
        %v3343 = vxor.u32 %v3337, 2147483648
        %v3344 = vsel %vm3342, %v3336, %v3343
        %vm3345 = vcmp.eq.s32.totalorder %v3340, 2
        %v3346 = vxor.u32 %v3336, 2147483648
        %v3347 = vsel %vm3345, %v3346, %v3337
        %v3348 = vsel %vm3341, %v3344, %v3347
        %v3349 = vsel %vm3338, nan, %v3348
        %v3350 = vand.u32 2147483647, %v2419
        %vm3351 = vcmp.le.f32.partialorder %v3350, 0.7853982
        %vm3352 = vcmp.lt.s32.totalorder %v2419, 0
        %v3353 = vand.u32 %v2419, 2139095040
        %v3354 = vshrl.u32 %v3353, 23
        %v3355 = vsub.s32 %v3354, 127
        %v3356 = vand.u32 2147483647, %v2419
        %v3357 = vand.u32 %v3356, 8388607
        %v3358 = vor.u32 %v3357, 8388608
        %v3359 = vsub.s32 0, %v3358
        %v3360 = vadd.s32 %v3355, 1
        %vm3361 = vcmp.gt.s32.totalorder %v3360, 0
        %v3362 = vsel %vm3361, %v3360, 0
        %v3363 = vshrl.u32 %v3362, 5
        %v3364 = vand.u32 %v3362, 31
        %v3365 = vsub.s32 32, %v3364
        %v3366 = vshrl.u32 683565275, %v3365
        %v3367 = vshll.u32 683565275, %v3364
        %v3368 = vshrl.u32 2475754826, %v3365
        %v3369 = vor.u32 %v3367, %v3368
        %v3370 = vshll.u32 2475754826, %v3364
        %v3371 = vshrl.u32 2131351028, %v3365
        %v3372 = vor.u32 %v3370, %v3371
        %v3373 = vshll.u32 2131351028, %v3364
        %v3374 = vshrl.u32 2102212464, %v3365
        %v3375 = vor.u32 %v3373, %v3374
        %v3376 = vshll.u32 2102212464, %v3364
        %v3377 = vshrl.u32 920167782, %v3365
        %v3378 = vor.u32 %v3376, %v3377
        %v3379 = vshll.u32 920167782, %v3364
        %v3380 = vshrl.u32 1326507024, %v3365
        %v3381 = vor.u32 %v3379, %v3380
        %vm3382 = vcmp.lt.s32.totalorder %v3363, 1
        %vm3383 = vcmp.lt.s32.totalorder %v3363, 2
        %vm3384 = vcmp.lt.s32.totalorder %v3363, 3
        %vm3385 = vcmp.lt.s32.totalorder %v3363, 4
        %v3386 = vsel %vm3382, %v3366, %v3369
        %v3387 = vsel %vm3385, %v3375, 2102212464
        %v3388 = vsel %vm3384, %v3372, %v3387
        %v3389 = vsel %vm3383, %v3386, %v3388
        %v3390 = vsel %vm3382, %v3369, %v3372
        %v3391 = vsel %vm3385, %v3378, 920167782
        %v3392 = vsel %vm3384, %v3375, %v3391
        %v3393 = vsel %vm3383, %v3390, %v3392
        %v3394 = vsel %vm3382, %v3372, %v3375
        %v3395 = vsel %vm3385, %v3381, 1326507024
        %v3396 = vsel %vm3384, %v3378, %v3395
        %v3397 = vsel %vm3383, %v3394, %v3396
        %v3398 = vshll.u32 %v3358, 8
        %v3399 = vmul.u32.u64.compose %v3398, %v3397
        %v3400 = vextract.low.u32 %v3399
        %v3401 = vextract.high.u32 %v3399
        %v3402 = vmul.u32.u64.compose %v3398, %v3393
        %v3403 = vextract.low.u32 %v3402
        %v3404 = vextract.high.u32 %v3402
        %v3405 = vmul.u32 %v3398, %v3389
        %v3406 = vadd.s32 %v3401, %v3403
        %vm3407 = vc.u32 %v3401, %v3403
        %v3408 = vadd.s32 %v3404, 1
        %v3409 = vsel %vm3407, %v3408, %v3404
        %v3410 = vadd.s32 %v3405, %v3409
        %v3411 = vadd.s32 %v3410, 536870912
        %v3412 = vshrl.u32 %v3411, 30
        %v3413 = vshll.u32 %v3412, 30
        %v3414 = vsub.s32 %v3410, %v3413
        %vm3415 = vcmp.lt.s32.totalorder %v3414, 0
        %v3416 = vsub.s32 0, %v3414
        %v3417 = vsel %vm3415, %v3416, %v3414
        %v3418 = vclz %v3417
        %v3419 = vsub.s32 %v3418, 2
        %vm3420 = vcmp.gt.s32.totalorder 0, %v3419
        %v3421 = vsel %vm3420, 0, %v3419
        %v3422 = vsub.s32 32, %v3421
        %v3423 = vshll.u32 %v3414, %v3421
        %v3424 = vshrl.u32 %v3406, %v3422
        %v3425 = vor.u32 %v3423, %v3424
        %v3426 = vsub.s32 4294967266, %v3421
        %v3427 = vadd.s32 %v3426, 127
        %v3428 = vshll.u32 %v3427, 23
        %v3429 = vor.u32 4788187, %v3428
        %v3430 = vand.u32 2147483647, %v3429
        %v3432 = vcvt.s32.f32 %v3425
        %v3433 = vmul.f32 %v3432, %v3430
        %v3434 = vxor.u32 %v3433, 2147483648
        %v3435 = vsel %vm3352, %v3434, %v3433
        %v3436 = vsub.s32 4, %v3412
        %v3437 = vsel %vm3352, %v3436, %v3412
        %v3438 = vsel %vm3351, %v2419, %v3435
        %v3439 = vsel %vm3351, 0, %v3437
        %v3440 = vcosq.f32.pop %v3438
        %v3441 = vsinq.f32.pop %v3438
        %vm3442 = vweird.f32 %v2419
        %v3443 = vadd.s32 %v3439, 3
        %v3444 = vand.u32 %v3443, 3
        %vm3445 = vcmp.lt.s32.totalorder %v3444, 2
        %vm3446 = vcmp.eq.s32.totalorder %v3444, 0
        %v3447 = vxor.u32 %v3441, 2147483648
        %v3448 = vsel %vm3446, %v3440, %v3447
        %vm3449 = vcmp.eq.s32.totalorder %v3444, 2
        %v3450 = vxor.u32 %v3440, 2147483648
        %v3451 = vsel %vm3449, %v3450, %v3441
        %v3452 = vsel %vm3445, %v3448, %v3451
        %v3453 = vsel %vm3442, nan, %v3452
        %v3454 = vand.u32 2147483647, %v2421
        %vm3455 = vcmp.le.f32.partialorder %v3454, 0.7853982
        %vm3456 = vcmp.lt.s32.totalorder %v2421, 0
        %v3457 = vand.u32 %v2421, 2139095040
        %v3458 = vshrl.u32 %v3457, 23
        %v3459 = vsub.s32 %v3458, 127
        %v3460 = vand.u32 2147483647, %v2421
        %v3461 = vand.u32 %v3460, 8388607
        %v3462 = vor.u32 %v3461, 8388608
        %v3463 = vsub.s32 0, %v3462
        %v3464 = vadd.s32 %v3459, 1
        %vm3465 = vcmp.gt.s32.totalorder %v3464, 0
        %v3466 = vsel %vm3465, %v3464, 0
        %v3467 = vshrl.u32 %v3466, 5
        %v3468 = vand.u32 %v3466, 31
        %v3469 = vsub.s32 32, %v3468
        %v3470 = vshrl.u32 683565275, %v3469
        %v3471 = vshll.u32 683565275, %v3468
        %v3472 = vshrl.u32 2475754826, %v3469
        %v3473 = vor.u32 %v3471, %v3472
        %v3474 = vshll.u32 2475754826, %v3468
        %v3475 = vshrl.u32 2131351028, %v3469
        %v3476 = vor.u32 %v3474, %v3475
        %v3477 = vshll.u32 2131351028, %v3468
        %v3478 = vshrl.u32 2102212464, %v3469
        %v3479 = vor.u32 %v3477, %v3478
        %v3480 = vshll.u32 2102212464, %v3468
        %v3481 = vshrl.u32 920167782, %v3469
        %v3482 = vor.u32 %v3480, %v3481
        %v3483 = vshll.u32 920167782, %v3468
        %v3484 = vshrl.u32 1326507024, %v3469
        %v3485 = vor.u32 %v3483, %v3484
        %vm3486 = vcmp.lt.s32.totalorder %v3467, 1
        %vm3487 = vcmp.lt.s32.totalorder %v3467, 2
        %vm3488 = vcmp.lt.s32.totalorder %v3467, 3
        %vm3489 = vcmp.lt.s32.totalorder %v3467, 4
        %v3490 = vsel %vm3486, %v3470, %v3473
        %v3491 = vsel %vm3489, %v3479, 2102212464
        %v3492 = vsel %vm3488, %v3476, %v3491
        %v3493 = vsel %vm3487, %v3490, %v3492
        %v3494 = vsel %vm3486, %v3473, %v3476
        %v3495 = vsel %vm3489, %v3482, 920167782
        %v3496 = vsel %vm3488, %v3479, %v3495
        %v3497 = vsel %vm3487, %v3494, %v3496
        %v3498 = vsel %vm3486, %v3476, %v3479
        %v3499 = vsel %vm3489, %v3485, 1326507024
        %v3500 = vsel %vm3488, %v3482, %v3499
        %v3501 = vsel %vm3487, %v3498, %v3500
        %v3502 = vshll.u32 %v3462, 8
        %v3503 = vmul.u32.u64.compose %v3502, %v3501
        %v3504 = vextract.low.u32 %v3503
        %v3505 = vextract.high.u32 %v3503
        %v3506 = vmul.u32.u64.compose %v3502, %v3497
        %v3507 = vextract.low.u32 %v3506
        %v3508 = vextract.high.u32 %v3506
        %v3509 = vmul.u32 %v3502, %v3493
        %v3510 = vadd.s32 %v3505, %v3507
        %vm3511 = vc.u32 %v3505, %v3507
        %v3512 = vadd.s32 %v3508, 1
        %v3513 = vsel %vm3511, %v3512, %v3508
        %v3514 = vadd.s32 %v3509, %v3513
        %v3515 = vadd.s32 %v3514, 536870912
        %v3516 = vshrl.u32 %v3515, 30
        %v3517 = vshll.u32 %v3516, 30
        %v3518 = vsub.s32 %v3514, %v3517
        %vm3519 = vcmp.lt.s32.totalorder %v3518, 0
        %v3520 = vsub.s32 0, %v3518
        %v3521 = vsel %vm3519, %v3520, %v3518
        %v3522 = vclz %v3521
        %v3523 = vsub.s32 %v3522, 2
        %vm3524 = vcmp.gt.s32.totalorder 0, %v3523
        %v3525 = vsel %vm3524, 0, %v3523
        %v3526 = vsub.s32 32, %v3525
        %v3527 = vshll.u32 %v3518, %v3525
        %v3528 = vshrl.u32 %v3510, %v3526
        %v3529 = vor.u32 %v3527, %v3528
        %v3530 = vsub.s32 4294967266, %v3525
        %v3531 = vadd.s32 %v3530, 127
        %v3532 = vshll.u32 %v3531, 23
        %v3533 = vor.u32 4788187, %v3532
        %v3534 = vand.u32 2147483647, %v3533
        %v3536 = vcvt.s32.f32 %v3529
        %v3537 = vmul.f32 %v3536, %v3534
        %v3538 = vxor.u32 %v3537, 2147483648
        %v3539 = vsel %vm3456, %v3538, %v3537
        %v3540 = vsub.s32 4, %v3516
        %v3541 = vsel %vm3456, %v3540, %v3516
        %v3542 = vsel %vm3455, %v2421, %v3539
        %v3543 = vsel %vm3455, 0, %v3541
        %v3544 = vcosq.f32.pop %v3542
        %v3545 = vsinq.f32.pop %v3542
        %vm3546 = vweird.f32 %v2421
        %v3547 = vadd.s32 %v3543, 3
        %v3548 = vand.u32 %v3547, 3
        %vm3549 = vcmp.lt.s32.totalorder %v3548, 2
        %vm3550 = vcmp.eq.s32.totalorder %v3548, 0
        %v3551 = vxor.u32 %v3545, 2147483648
        %v3552 = vsel %vm3550, %v3544, %v3551
        %vm3553 = vcmp.eq.s32.totalorder %v3548, 2
        %v3554 = vxor.u32 %v3544, 2147483648
        %v3555 = vsel %vm3553, %v3554, %v3545
        %v3556 = vsel %vm3549, %v3552, %v3555
        %v3557 = vsel %vm3546, nan, %v3556
        %v3558 = vand.u32 2147483647, %v2508
        %vm3559 = vcmp.le.f32.partialorder %v3558, 0.7853982
        %vm3560 = vcmp.lt.s32.totalorder %v2508, 0
        %v3561 = vand.u32 %v2508, 2139095040
        %v3562 = vshrl.u32 %v3561, 23
        %v3563 = vsub.s32 %v3562, 127
        %v3564 = vand.u32 2147483647, %v2508
        %v3565 = vand.u32 %v3564, 8388607
        %v3566 = vor.u32 %v3565, 8388608
        %v3567 = vsub.s32 0, %v3566
        %v3568 = vadd.s32 %v3563, 1
        %vm3569 = vcmp.gt.s32.totalorder %v3568, 0
        %v3570 = vsel %vm3569, %v3568, 0
        %v3571 = vshrl.u32 %v3570, 5
        %v3572 = vand.u32 %v3570, 31
        %v3573 = vsub.s32 32, %v3572
        %v3574 = vshrl.u32 683565275, %v3573
        %v3575 = vshll.u32 683565275, %v3572
        %v3576 = vshrl.u32 2475754826, %v3573
        %v3577 = vor.u32 %v3575, %v3576
        %v3578 = vshll.u32 2475754826, %v3572
        %v3579 = vshrl.u32 2131351028, %v3573
        %v3580 = vor.u32 %v3578, %v3579
        %v3581 = vshll.u32 2131351028, %v3572
        %v3582 = vshrl.u32 2102212464, %v3573
        %v3583 = vor.u32 %v3581, %v3582
        %v3584 = vshll.u32 2102212464, %v3572
        %v3585 = vshrl.u32 920167782, %v3573
        %v3586 = vor.u32 %v3584, %v3585
        %v3587 = vshll.u32 920167782, %v3572
        %v3588 = vshrl.u32 1326507024, %v3573
        %v3589 = vor.u32 %v3587, %v3588
        %vm3590 = vcmp.lt.s32.totalorder %v3571, 1
        %vm3591 = vcmp.lt.s32.totalorder %v3571, 2
        %vm3592 = vcmp.lt.s32.totalorder %v3571, 3
        %vm3593 = vcmp.lt.s32.totalorder %v3571, 4
        %v3594 = vsel %vm3590, %v3574, %v3577
        %v3595 = vsel %vm3593, %v3583, 2102212464
        %v3596 = vsel %vm3592, %v3580, %v3595
        %v3597 = vsel %vm3591, %v3594, %v3596
        %v3598 = vsel %vm3590, %v3577, %v3580
        %v3599 = vsel %vm3593, %v3586, 920167782
        %v3600 = vsel %vm3592, %v3583, %v3599
        %v3601 = vsel %vm3591, %v3598, %v3600
        %v3602 = vsel %vm3590, %v3580, %v3583
        %v3603 = vsel %vm3593, %v3589, 1326507024
        %v3604 = vsel %vm3592, %v3586, %v3603
        %v3605 = vsel %vm3591, %v3602, %v3604
        %v3606 = vshll.u32 %v3566, 8
        %v3607 = vmul.u32.u64.compose %v3606, %v3605
        %v3608 = vextract.low.u32 %v3607
        %v3609 = vextract.high.u32 %v3607
        %v3610 = vmul.u32.u64.compose %v3606, %v3601
        %v3611 = vextract.low.u32 %v3610
        %v3612 = vextract.high.u32 %v3610
        %v3613 = vmul.u32 %v3606, %v3597
        %v3614 = vadd.s32 %v3609, %v3611
        %vm3615 = vc.u32 %v3609, %v3611
        %v3616 = vadd.s32 %v3612, 1
        %v3617 = vsel %vm3615, %v3616, %v3612
        %v3618 = vadd.s32 %v3613, %v3617
        %v3619 = vadd.s32 %v3618, 536870912
        %v3620 = vshrl.u32 %v3619, 30
        %v3621 = vshll.u32 %v3620, 30
        %v3622 = vsub.s32 %v3618, %v3621
        %vm3623 = vcmp.lt.s32.totalorder %v3622, 0
        %v3624 = vsub.s32 0, %v3622
        %v3625 = vsel %vm3623, %v3624, %v3622
        %v3626 = vclz %v3625
        %v3627 = vsub.s32 %v3626, 2
        %vm3628 = vcmp.gt.s32.totalorder 0, %v3627
        %v3629 = vsel %vm3628, 0, %v3627
        %v3630 = vsub.s32 32, %v3629
        %v3631 = vshll.u32 %v3622, %v3629
        %v3632 = vshrl.u32 %v3614, %v3630
        %v3633 = vor.u32 %v3631, %v3632
        %v3634 = vsub.s32 4294967266, %v3629
        %v3635 = vadd.s32 %v3634, 127
        %v3636 = vshll.u32 %v3635, 23
        %v3637 = vor.u32 4788187, %v3636
        %v3638 = vand.u32 2147483647, %v3637
        %v3640 = vcvt.s32.f32 %v3633
        %v3641 = vmul.f32 %v3640, %v3638
        %v3642 = vxor.u32 %v3641, 2147483648
        %v3643 = vsel %vm3560, %v3642, %v3641
        %v3644 = vsub.s32 4, %v3620
        %v3645 = vsel %vm3560, %v3644, %v3620
        %v3646 = vsel %vm3559, %v2508, %v3643
        %v3647 = vsel %vm3559, 0, %v3645
        %v3648 = vcosq.f32.pop %v3646
        %v3649 = vsinq.f32.pop %v3646
        %vm3650 = vweird.f32 %v2508
        %v3651 = vadd.s32 %v3647, 3
        %v3652 = vand.u32 %v3651, 3
        %vm3653 = vcmp.lt.s32.totalorder %v3652, 2
        %vm3654 = vcmp.eq.s32.totalorder %v3652, 0
        %v3655 = vxor.u32 %v3649, 2147483648
        %v3656 = vsel %vm3654, %v3648, %v3655
        %vm3657 = vcmp.eq.s32.totalorder %v3652, 2
        %v3658 = vxor.u32 %v3648, 2147483648
        %v3659 = vsel %vm3657, %v3658, %v3649
        %v3660 = vsel %vm3653, %v3656, %v3659
        %v3661 = vsel %vm3650, nan, %v3660
        %v3662 = vand.u32 2147483647, %v2510
        %vm3663 = vcmp.le.f32.partialorder %v3662, 0.7853982
        %vm3664 = vcmp.lt.s32.totalorder %v2510, 0
        %v3665 = vand.u32 %v2510, 2139095040
        %v3666 = vshrl.u32 %v3665, 23
        %v3667 = vsub.s32 %v3666, 127
        %v3668 = vand.u32 2147483647, %v2510
        %v3669 = vand.u32 %v3668, 8388607
        %v3670 = vor.u32 %v3669, 8388608
        %v3671 = vsub.s32 0, %v3670
        %v3672 = vadd.s32 %v3667, 1
        %vm3673 = vcmp.gt.s32.totalorder %v3672, 0
        %v3674 = vsel %vm3673, %v3672, 0
        %v3675 = vshrl.u32 %v3674, 5
        %v3676 = vand.u32 %v3674, 31
        %v3677 = vsub.s32 32, %v3676
        %v3678 = vshrl.u32 683565275, %v3677
        %v3679 = vshll.u32 683565275, %v3676
        %v3680 = vshrl.u32 2475754826, %v3677
        %v3681 = vor.u32 %v3679, %v3680
        %v3682 = vshll.u32 2475754826, %v3676
        %v3683 = vshrl.u32 2131351028, %v3677
        %v3684 = vor.u32 %v3682, %v3683
        %v3685 = vshll.u32 2131351028, %v3676
        %v3686 = vshrl.u32 2102212464, %v3677
        %v3687 = vor.u32 %v3685, %v3686
        %v3688 = vshll.u32 2102212464, %v3676
        %v3689 = vshrl.u32 920167782, %v3677
        %v3690 = vor.u32 %v3688, %v3689
        %v3691 = vshll.u32 920167782, %v3676
        %v3692 = vshrl.u32 1326507024, %v3677
        %v3693 = vor.u32 %v3691, %v3692
        %vm3694 = vcmp.lt.s32.totalorder %v3675, 1
        %vm3695 = vcmp.lt.s32.totalorder %v3675, 2
        %vm3696 = vcmp.lt.s32.totalorder %v3675, 3
        %vm3697 = vcmp.lt.s32.totalorder %v3675, 4
        %v3698 = vsel %vm3694, %v3678, %v3681
        %v3699 = vsel %vm3697, %v3687, 2102212464
        %v3700 = vsel %vm3696, %v3684, %v3699
        %v3701 = vsel %vm3695, %v3698, %v3700
        %v3702 = vsel %vm3694, %v3681, %v3684
        %v3703 = vsel %vm3697, %v3690, 920167782
        %v3704 = vsel %vm3696, %v3687, %v3703
        %v3705 = vsel %vm3695, %v3702, %v3704
        %v3706 = vsel %vm3694, %v3684, %v3687
        %v3707 = vsel %vm3697, %v3693, 1326507024
        %v3708 = vsel %vm3696, %v3690, %v3707
        %v3709 = vsel %vm3695, %v3706, %v3708
        %v3710 = vshll.u32 %v3670, 8
        %v3711 = vmul.u32.u64.compose %v3710, %v3709
        %v3712 = vextract.low.u32 %v3711
        %v3713 = vextract.high.u32 %v3711
        %v3714 = vmul.u32.u64.compose %v3710, %v3705
        %v3715 = vextract.low.u32 %v3714
        %v3716 = vextract.high.u32 %v3714
        %v3717 = vmul.u32 %v3710, %v3701
        %v3718 = vadd.s32 %v3713, %v3715
        %vm3719 = vc.u32 %v3713, %v3715
        %v3720 = vadd.s32 %v3716, 1
        %v3721 = vsel %vm3719, %v3720, %v3716
        %v3722 = vadd.s32 %v3717, %v3721
        %v3723 = vadd.s32 %v3722, 536870912
        %v3724 = vshrl.u32 %v3723, 30
        %v3725 = vshll.u32 %v3724, 30
        %v3726 = vsub.s32 %v3722, %v3725
        %vm3727 = vcmp.lt.s32.totalorder %v3726, 0
        %v3728 = vsub.s32 0, %v3726
        %v3729 = vsel %vm3727, %v3728, %v3726
        %v3730 = vclz %v3729
        %v3731 = vsub.s32 %v3730, 2
        %vm3732 = vcmp.gt.s32.totalorder 0, %v3731
        %v3733 = vsel %vm3732, 0, %v3731
        %v3734 = vsub.s32 32, %v3733
        %v3735 = vshll.u32 %v3726, %v3733
        %v3736 = vshrl.u32 %v3718, %v3734
        %v3737 = vor.u32 %v3735, %v3736
        %v3738 = vsub.s32 4294967266, %v3733
        %v3739 = vadd.s32 %v3738, 127
        %v3740 = vshll.u32 %v3739, 23
        %v3741 = vor.u32 4788187, %v3740
        %v3742 = vand.u32 2147483647, %v3741
        %v3744 = vcvt.s32.f32 %v3737
        %v3745 = vmul.f32 %v3744, %v3742
        %v3746 = vxor.u32 %v3745, 2147483648
        %v3747 = vsel %vm3664, %v3746, %v3745
        %v3748 = vsub.s32 4, %v3724
        %v3749 = vsel %vm3664, %v3748, %v3724
        %v3750 = vsel %vm3663, %v2510, %v3747
        %v3751 = vsel %vm3663, 0, %v3749
        %v3752 = vcosq.f32.pop %v3750
        %v3753 = vsinq.f32.pop %v3750
        %vm3754 = vweird.f32 %v2510
        %v3755 = vadd.s32 %v3751, 3
        %v3756 = vand.u32 %v3755, 3
        %vm3757 = vcmp.lt.s32.totalorder %v3756, 2
        %vm3758 = vcmp.eq.s32.totalorder %v3756, 0
        %v3759 = vxor.u32 %v3753, 2147483648
        %v3760 = vsel %vm3758, %v3752, %v3759
        %vm3761 = vcmp.eq.s32.totalorder %v3756, 2
        %v3762 = vxor.u32 %v3752, 2147483648
        %v3763 = vsel %vm3761, %v3762, %v3753
        %v3764 = vsel %vm3757, %v3760, %v3763
        %v3765 = vsel %vm3754, nan, %v3764
        %v3766 = vand.u32 2147483647, %v2425
        %vm3767 = vcmp.le.f32.partialorder %v3766, 0.7853982
        %vm3768 = vcmp.lt.s32.totalorder %v2425, 0
        %v3769 = vand.u32 %v2425, 2139095040
        %v3770 = vshrl.u32 %v3769, 23
        %v3771 = vsub.s32 %v3770, 127
        %v3772 = vand.u32 2147483647, %v2425
        %v3773 = vand.u32 %v3772, 8388607
        %v3774 = vor.u32 %v3773, 8388608
        %v3775 = vsub.s32 0, %v3774
        %v3776 = vadd.s32 %v3771, 1
        %vm3777 = vcmp.gt.s32.totalorder %v3776, 0
        %v3778 = vsel %vm3777, %v3776, 0
        %v3779 = vshrl.u32 %v3778, 5
        %v3780 = vand.u32 %v3778, 31
        %v3781 = vsub.s32 32, %v3780
        %v3782 = vshrl.u32 683565275, %v3781
        %v3783 = vshll.u32 683565275, %v3780
        %v3784 = vshrl.u32 2475754826, %v3781
        %v3785 = vor.u32 %v3783, %v3784
        %v3786 = vshll.u32 2475754826, %v3780
        %v3787 = vshrl.u32 2131351028, %v3781
        %v3788 = vor.u32 %v3786, %v3787
        %v3789 = vshll.u32 2131351028, %v3780
        %v3790 = vshrl.u32 2102212464, %v3781
        %v3791 = vor.u32 %v3789, %v3790
        %v3792 = vshll.u32 2102212464, %v3780
        %v3793 = vshrl.u32 920167782, %v3781
        %v3794 = vor.u32 %v3792, %v3793
        %v3795 = vshll.u32 920167782, %v3780
        %v3796 = vshrl.u32 1326507024, %v3781
        %v3797 = vor.u32 %v3795, %v3796
        %vm3798 = vcmp.lt.s32.totalorder %v3779, 1
        %vm3799 = vcmp.lt.s32.totalorder %v3779, 2
        %vm3800 = vcmp.lt.s32.totalorder %v3779, 3
        %vm3801 = vcmp.lt.s32.totalorder %v3779, 4
        %v3802 = vsel %vm3798, %v3782, %v3785
        %v3803 = vsel %vm3801, %v3791, 2102212464
        %v3804 = vsel %vm3800, %v3788, %v3803
        %v3805 = vsel %vm3799, %v3802, %v3804
        %v3806 = vsel %vm3798, %v3785, %v3788
        %v3807 = vsel %vm3801, %v3794, 920167782
        %v3808 = vsel %vm3800, %v3791, %v3807
        %v3809 = vsel %vm3799, %v3806, %v3808
        %v3810 = vsel %vm3798, %v3788, %v3791
        %v3811 = vsel %vm3801, %v3797, 1326507024
        %v3812 = vsel %vm3800, %v3794, %v3811
        %v3813 = vsel %vm3799, %v3810, %v3812
        %v3814 = vshll.u32 %v3774, 8
        %v3815 = vmul.u32.u64.compose %v3814, %v3813
        %v3816 = vextract.low.u32 %v3815
        %v3817 = vextract.high.u32 %v3815
        %v3818 = vmul.u32.u64.compose %v3814, %v3809
        %v3819 = vextract.low.u32 %v3818
        %v3820 = vextract.high.u32 %v3818
        %v3821 = vmul.u32 %v3814, %v3805
        %v3822 = vadd.s32 %v3817, %v3819
        %vm3823 = vc.u32 %v3817, %v3819
        %v3824 = vadd.s32 %v3820, 1
        %v3825 = vsel %vm3823, %v3824, %v3820
        %v3826 = vadd.s32 %v3821, %v3825
        %v3827 = vadd.s32 %v3826, 536870912
        %v3828 = vshrl.u32 %v3827, 30
        %v3829 = vshll.u32 %v3828, 30
        %v3830 = vsub.s32 %v3826, %v3829
        %vm3831 = vcmp.lt.s32.totalorder %v3830, 0
        %v3832 = vsub.s32 0, %v3830
        %v3833 = vsel %vm3831, %v3832, %v3830
        %v3834 = vclz %v3833
        %v3835 = vsub.s32 %v3834, 2
        %vm3836 = vcmp.gt.s32.totalorder 0, %v3835
        %v3837 = vsel %vm3836, 0, %v3835
        %v3838 = vsub.s32 32, %v3837
        %v3839 = vshll.u32 %v3830, %v3837
        %v3840 = vshrl.u32 %v3822, %v3838
        %v3841 = vor.u32 %v3839, %v3840
        %v3842 = vsub.s32 4294967266, %v3837
        %v3843 = vadd.s32 %v3842, 127
        %v3844 = vshll.u32 %v3843, 23
        %v3845 = vor.u32 4788187, %v3844
        %v3846 = vand.u32 2147483647, %v3845
        %v3848 = vcvt.s32.f32 %v3841
        %v3849 = vmul.f32 %v3848, %v3846
        %v3850 = vxor.u32 %v3849, 2147483648
        %v3851 = vsel %vm3768, %v3850, %v3849
        %v3852 = vsub.s32 4, %v3828
        %v3853 = vsel %vm3768, %v3852, %v3828
        %v3854 = vsel %vm3767, %v2425, %v3851
        %v3855 = vsel %vm3767, 0, %v3853
        %v3856 = vcosq.f32.pop %v3854
        %v3857 = vsinq.f32.pop %v3854
        %vm3858 = vweird.f32 %v2425
        %v3859 = vadd.s32 %v3855, 3
        %v3860 = vand.u32 %v3859, 3
        %vm3861 = vcmp.lt.s32.totalorder %v3860, 2
        %vm3862 = vcmp.eq.s32.totalorder %v3860, 0
        %v3863 = vxor.u32 %v3857, 2147483648
        %v3864 = vsel %vm3862, %v3856, %v3863
        %vm3865 = vcmp.eq.s32.totalorder %v3860, 2
        %v3866 = vxor.u32 %v3856, 2147483648
        %v3867 = vsel %vm3865, %v3866, %v3857
        %v3868 = vsel %vm3861, %v3864, %v3867
        %v3869 = vsel %vm3858, nan, %v3868
        %v3870 = vand.u32 2147483647, %v2427
        %vm3871 = vcmp.le.f32.partialorder %v3870, 0.7853982
        %vm3872 = vcmp.lt.s32.totalorder %v2427, 0
        %v3873 = vand.u32 %v2427, 2139095040
        %v3874 = vshrl.u32 %v3873, 23
        %v3875 = vsub.s32 %v3874, 127
        %v3876 = vand.u32 2147483647, %v2427
        %v3877 = vand.u32 %v3876, 8388607
        %v3878 = vor.u32 %v3877, 8388608
        %v3879 = vsub.s32 0, %v3878
        %v3880 = vadd.s32 %v3875, 1
        %vm3881 = vcmp.gt.s32.totalorder %v3880, 0
        %v3882 = vsel %vm3881, %v3880, 0
        %v3883 = vshrl.u32 %v3882, 5
        %v3884 = vand.u32 %v3882, 31
        %v3885 = vsub.s32 32, %v3884
        %v3886 = vshrl.u32 683565275, %v3885
        %v3887 = vshll.u32 683565275, %v3884
        %v3888 = vshrl.u32 2475754826, %v3885
        %v3889 = vor.u32 %v3887, %v3888
        %v3890 = vshll.u32 2475754826, %v3884
        %v3891 = vshrl.u32 2131351028, %v3885
        %v3892 = vor.u32 %v3890, %v3891
        %v3893 = vshll.u32 2131351028, %v3884
        %v3894 = vshrl.u32 2102212464, %v3885
        %v3895 = vor.u32 %v3893, %v3894
        %v3896 = vshll.u32 2102212464, %v3884
        %v3897 = vshrl.u32 920167782, %v3885
        %v3898 = vor.u32 %v3896, %v3897
        %v3899 = vshll.u32 920167782, %v3884
        %v3900 = vshrl.u32 1326507024, %v3885
        %v3901 = vor.u32 %v3899, %v3900
        %vm3902 = vcmp.lt.s32.totalorder %v3883, 1
        %vm3903 = vcmp.lt.s32.totalorder %v3883, 2
        %vm3904 = vcmp.lt.s32.totalorder %v3883, 3
        %vm3905 = vcmp.lt.s32.totalorder %v3883, 4
        %v3906 = vsel %vm3902, %v3886, %v3889
        %v3907 = vsel %vm3905, %v3895, 2102212464
        %v3908 = vsel %vm3904, %v3892, %v3907
        %v3909 = vsel %vm3903, %v3906, %v3908
        %v3910 = vsel %vm3902, %v3889, %v3892
        %v3911 = vsel %vm3905, %v3898, 920167782
        %v3912 = vsel %vm3904, %v3895, %v3911
        %v3913 = vsel %vm3903, %v3910, %v3912
        %v3914 = vsel %vm3902, %v3892, %v3895
        %v3915 = vsel %vm3905, %v3901, 1326507024
        %v3916 = vsel %vm3904, %v3898, %v3915
        %v3917 = vsel %vm3903, %v3914, %v3916
        %v3918 = vshll.u32 %v3878, 8
        %v3919 = vmul.u32.u64.compose %v3918, %v3917
        %v3920 = vextract.low.u32 %v3919
        %v3921 = vextract.high.u32 %v3919
        %v3922 = vmul.u32.u64.compose %v3918, %v3913
        %v3923 = vextract.low.u32 %v3922
        %v3924 = vextract.high.u32 %v3922
        %v3925 = vmul.u32 %v3918, %v3909
        %v3926 = vadd.s32 %v3921, %v3923
        %vm3927 = vc.u32 %v3921, %v3923
        %v3928 = vadd.s32 %v3924, 1
        %v3929 = vsel %vm3927, %v3928, %v3924
        %v3930 = vadd.s32 %v3925, %v3929
        %v3931 = vadd.s32 %v3930, 536870912
        %v3932 = vshrl.u32 %v3931, 30
        %v3933 = vshll.u32 %v3932, 30
        %v3934 = vsub.s32 %v3930, %v3933
        %vm3935 = vcmp.lt.s32.totalorder %v3934, 0
        %v3936 = vsub.s32 0, %v3934
        %v3937 = vsel %vm3935, %v3936, %v3934
        %v3938 = vclz %v3937
        %v3939 = vsub.s32 %v3938, 2
        %vm3940 = vcmp.gt.s32.totalorder 0, %v3939
        %v3941 = vsel %vm3940, 0, %v3939
        %v3942 = vsub.s32 32, %v3941
        %v3943 = vshll.u32 %v3934, %v3941
        %v3944 = vshrl.u32 %v3926, %v3942
        %v3945 = vor.u32 %v3943, %v3944
        %v3946 = vsub.s32 4294967266, %v3941
        %v3947 = vadd.s32 %v3946, 127
        %v3948 = vshll.u32 %v3947, 23
        %v3949 = vor.u32 4788187, %v3948
        %v3950 = vand.u32 2147483647, %v3949
        %v3952 = vcvt.s32.f32 %v3945
        %v3953 = vmul.f32 %v3952, %v3950
        %v3954 = vxor.u32 %v3953, 2147483648
        %v3955 = vsel %vm3872, %v3954, %v3953
        %v3956 = vsub.s32 4, %v3932
        %v3957 = vsel %vm3872, %v3956, %v3932
        %v3958 = vsel %vm3871, %v2427, %v3955
        %v3959 = vsel %vm3871, 0, %v3957
        %v3960 = vcosq.f32.pop %v3958
        %v3961 = vsinq.f32.pop %v3958
        %vm3962 = vweird.f32 %v2427
        %v3963 = vadd.s32 %v3959, 3
        %v3964 = vand.u32 %v3963, 3
        %vm3965 = vcmp.lt.s32.totalorder %v3964, 2
        %vm3966 = vcmp.eq.s32.totalorder %v3964, 0
        %v3967 = vxor.u32 %v3961, 2147483648
        %v3968 = vsel %vm3966, %v3960, %v3967
        %vm3969 = vcmp.eq.s32.totalorder %v3964, 2
        %v3970 = vxor.u32 %v3960, 2147483648
        %v3971 = vsel %vm3969, %v3970, %v3961
        %v3972 = vsel %vm3965, %v3968, %v3971
        %v3973 = vsel %vm3962, nan, %v3972
        %v3974 = vand.u32 2147483647, %v2514
        %vm3975 = vcmp.le.f32.partialorder %v3974, 0.7853982
        %vm3976 = vcmp.lt.s32.totalorder %v2514, 0
        %v3977 = vand.u32 %v2514, 2139095040
        %v3978 = vshrl.u32 %v3977, 23
        %v3979 = vsub.s32 %v3978, 127
        %v3980 = vand.u32 2147483647, %v2514
        %v3981 = vand.u32 %v3980, 8388607
        %v3982 = vor.u32 %v3981, 8388608
        %v3983 = vsub.s32 0, %v3982
        %v3984 = vadd.s32 %v3979, 1
        %vm3985 = vcmp.gt.s32.totalorder %v3984, 0
        %v3986 = vsel %vm3985, %v3984, 0
        %v3987 = vshrl.u32 %v3986, 5
        %v3988 = vand.u32 %v3986, 31
        %v3989 = vsub.s32 32, %v3988
        %v3990 = vshrl.u32 683565275, %v3989
        %v3991 = vshll.u32 683565275, %v3988
        %v3992 = vshrl.u32 2475754826, %v3989
        %v3993 = vor.u32 %v3991, %v3992
        %v3994 = vshll.u32 2475754826, %v3988
        %v3995 = vshrl.u32 2131351028, %v3989
        %v3996 = vor.u32 %v3994, %v3995
        %v3997 = vshll.u32 2131351028, %v3988
        %v3998 = vshrl.u32 2102212464, %v3989
        %v3999 = vor.u32 %v3997, %v3998
        %v4000 = vshll.u32 2102212464, %v3988
        %v4001 = vshrl.u32 920167782, %v3989
        %v4002 = vor.u32 %v4000, %v4001
        %v4003 = vshll.u32 920167782, %v3988
        %v4004 = vshrl.u32 1326507024, %v3989
        %v4005 = vor.u32 %v4003, %v4004
        %vm4006 = vcmp.lt.s32.totalorder %v3987, 1
        %vm4007 = vcmp.lt.s32.totalorder %v3987, 2
        %vm4008 = vcmp.lt.s32.totalorder %v3987, 3
        %vm4009 = vcmp.lt.s32.totalorder %v3987, 4
        %v4010 = vsel %vm4006, %v3990, %v3993
        %v4011 = vsel %vm4009, %v3999, 2102212464
        %v4012 = vsel %vm4008, %v3996, %v4011
        %v4013 = vsel %vm4007, %v4010, %v4012
        %v4014 = vsel %vm4006, %v3993, %v3996
        %v4015 = vsel %vm4009, %v4002, 920167782
        %v4016 = vsel %vm4008, %v3999, %v4015
        %v4017 = vsel %vm4007, %v4014, %v4016
        %v4018 = vsel %vm4006, %v3996, %v3999
        %v4019 = vsel %vm4009, %v4005, 1326507024
        %v4020 = vsel %vm4008, %v4002, %v4019
        %v4021 = vsel %vm4007, %v4018, %v4020
        %v4022 = vshll.u32 %v3982, 8
        %v4023 = vmul.u32.u64.compose %v4022, %v4021
        %v4024 = vextract.low.u32 %v4023
        %v4025 = vextract.high.u32 %v4023
        %v4026 = vmul.u32.u64.compose %v4022, %v4017
        %v4027 = vextract.low.u32 %v4026
        %v4028 = vextract.high.u32 %v4026
        %v4029 = vmul.u32 %v4022, %v4013
        %v4030 = vadd.s32 %v4025, %v4027
        %vm4031 = vc.u32 %v4025, %v4027
        %v4032 = vadd.s32 %v4028, 1
        %v4033 = vsel %vm4031, %v4032, %v4028
        %v4034 = vadd.s32 %v4029, %v4033
        %v4035 = vadd.s32 %v4034, 536870912
        %v4036 = vshrl.u32 %v4035, 30
        %v4037 = vshll.u32 %v4036, 30
        %v4038 = vsub.s32 %v4034, %v4037
        %vm4039 = vcmp.lt.s32.totalorder %v4038, 0
        %v4040 = vsub.s32 0, %v4038
        %v4041 = vsel %vm4039, %v4040, %v4038
        %v4042 = vclz %v4041
        %v4043 = vsub.s32 %v4042, 2
        %vm4044 = vcmp.gt.s32.totalorder 0, %v4043
        %v4045 = vsel %vm4044, 0, %v4043
        %v4046 = vsub.s32 32, %v4045
        %v4047 = vshll.u32 %v4038, %v4045
        %v4048 = vshrl.u32 %v4030, %v4046
        %v4049 = vor.u32 %v4047, %v4048
        %v4050 = vsub.s32 4294967266, %v4045
        %v4051 = vadd.s32 %v4050, 127
        %v4052 = vshll.u32 %v4051, 23
        %v4053 = vor.u32 4788187, %v4052
        %v4054 = vand.u32 2147483647, %v4053
        %v4056 = vcvt.s32.f32 %v4049
        %v4057 = vmul.f32 %v4056, %v4054
        %v4058 = vxor.u32 %v4057, 2147483648
        %v4059 = vsel %vm3976, %v4058, %v4057
        %v4060 = vsub.s32 4, %v4036
        %v4061 = vsel %vm3976, %v4060, %v4036
        %v4062 = vsel %vm3975, %v2514, %v4059
        %v4063 = vsel %vm3975, 0, %v4061
        %v4064 = vcosq.f32.pop %v4062
        %v4065 = vsinq.f32.pop %v4062
        %vm4066 = vweird.f32 %v2514
        %v4067 = vadd.s32 %v4063, 3
        %v4068 = vand.u32 %v4067, 3
        %vm4069 = vcmp.lt.s32.totalorder %v4068, 2
        %vm4070 = vcmp.eq.s32.totalorder %v4068, 0
        %v4071 = vxor.u32 %v4065, 2147483648
        %v4072 = vsel %vm4070, %v4064, %v4071
        %vm4073 = vcmp.eq.s32.totalorder %v4068, 2
        %v4074 = vxor.u32 %v4064, 2147483648
        %v4075 = vsel %vm4073, %v4074, %v4065
        %v4076 = vsel %vm4069, %v4072, %v4075
        %v4077 = vsel %vm4066, nan, %v4076
        %v4078 = vand.u32 2147483647, %v2516
        %vm4079 = vcmp.le.f32.partialorder %v4078, 0.7853982
        %vm4080 = vcmp.lt.s32.totalorder %v2516, 0
        %v4081 = vand.u32 %v2516, 2139095040
        %v4082 = vshrl.u32 %v4081, 23
        %v4083 = vsub.s32 %v4082, 127
        %v4084 = vand.u32 2147483647, %v2516
        %v4085 = vand.u32 %v4084, 8388607
        %v4086 = vor.u32 %v4085, 8388608
        %v4087 = vsub.s32 0, %v4086
        %v4088 = vadd.s32 %v4083, 1
        %vm4089 = vcmp.gt.s32.totalorder %v4088, 0
        %v4090 = vsel %vm4089, %v4088, 0
        %v4091 = vshrl.u32 %v4090, 5
        %v4092 = vand.u32 %v4090, 31
        %v4093 = vsub.s32 32, %v4092
        %v4094 = vshrl.u32 683565275, %v4093
        %v4095 = vshll.u32 683565275, %v4092
        %v4096 = vshrl.u32 2475754826, %v4093
        %v4097 = vor.u32 %v4095, %v4096
        %v4098 = vshll.u32 2475754826, %v4092
        %v4099 = vshrl.u32 2131351028, %v4093
        %v4100 = vor.u32 %v4098, %v4099
        %v4101 = vshll.u32 2131351028, %v4092
        %v4102 = vshrl.u32 2102212464, %v4093
        %v4103 = vor.u32 %v4101, %v4102
        %v4104 = vshll.u32 2102212464, %v4092
        %v4105 = vshrl.u32 920167782, %v4093
        %v4106 = vor.u32 %v4104, %v4105
        %v4107 = vshll.u32 920167782, %v4092
        %v4108 = vshrl.u32 1326507024, %v4093
        %v4109 = vor.u32 %v4107, %v4108
        %vm4110 = vcmp.lt.s32.totalorder %v4091, 1
        %vm4111 = vcmp.lt.s32.totalorder %v4091, 2
        %vm4112 = vcmp.lt.s32.totalorder %v4091, 3
        %vm4113 = vcmp.lt.s32.totalorder %v4091, 4
        %v4114 = vsel %vm4110, %v4094, %v4097
        %v4115 = vsel %vm4113, %v4103, 2102212464
        %v4116 = vsel %vm4112, %v4100, %v4115
        %v4117 = vsel %vm4111, %v4114, %v4116
        %v4118 = vsel %vm4110, %v4097, %v4100
        %v4119 = vsel %vm4113, %v4106, 920167782
        %v4120 = vsel %vm4112, %v4103, %v4119
        %v4121 = vsel %vm4111, %v4118, %v4120
        %v4122 = vsel %vm4110, %v4100, %v4103
        %v4123 = vsel %vm4113, %v4109, 1326507024
        %v4124 = vsel %vm4112, %v4106, %v4123
        %v4125 = vsel %vm4111, %v4122, %v4124
        %v4126 = vshll.u32 %v4086, 8
        %v4127 = vmul.u32.u64.compose %v4126, %v4125
        %v4128 = vextract.low.u32 %v4127
        %v4129 = vextract.high.u32 %v4127
        %v4130 = vmul.u32.u64.compose %v4126, %v4121
        %v4131 = vextract.low.u32 %v4130
        %v4132 = vextract.high.u32 %v4130
        %v4133 = vmul.u32 %v4126, %v4117
        %v4134 = vadd.s32 %v4129, %v4131
        %vm4135 = vc.u32 %v4129, %v4131
        %v4136 = vadd.s32 %v4132, 1
        %v4137 = vsel %vm4135, %v4136, %v4132
        %v4138 = vadd.s32 %v4133, %v4137
        %v4139 = vadd.s32 %v4138, 536870912
        %v4140 = vshrl.u32 %v4139, 30
        %v4141 = vshll.u32 %v4140, 30
        %v4142 = vsub.s32 %v4138, %v4141
        %vm4143 = vcmp.lt.s32.totalorder %v4142, 0
        %v4144 = vsub.s32 0, %v4142
        %v4145 = vsel %vm4143, %v4144, %v4142
        %v4146 = vclz %v4145
        %v4147 = vsub.s32 %v4146, 2
        %vm4148 = vcmp.gt.s32.totalorder 0, %v4147
        %v4149 = vsel %vm4148, 0, %v4147
        %v4150 = vsub.s32 32, %v4149
        %v4151 = vshll.u32 %v4142, %v4149
        %v4152 = vshrl.u32 %v4134, %v4150
        %v4153 = vor.u32 %v4151, %v4152
        %v4154 = vsub.s32 4294967266, %v4149
        %v4155 = vadd.s32 %v4154, 127
        %v4156 = vshll.u32 %v4155, 23
        %v4157 = vor.u32 4788187, %v4156
        %v4158 = vand.u32 2147483647, %v4157
        %v4160 = vcvt.s32.f32 %v4153
        %v4161 = vmul.f32 %v4160, %v4158
        %v4162 = vxor.u32 %v4161, 2147483648
        %v4163 = vsel %vm4080, %v4162, %v4161
        %v4164 = vsub.s32 4, %v4140
        %v4165 = vsel %vm4080, %v4164, %v4140
        %v4166 = vsel %vm4079, %v2516, %v4163
        %v4167 = vsel %vm4079, 0, %v4165
        %v4168 = vcosq.f32.pop %v4166
        %v4169 = vsinq.f32.pop %v4166
        %vm4170 = vweird.f32 %v2516
        %v4171 = vadd.s32 %v4167, 3
        %v4172 = vand.u32 %v4171, 3
        %vm4173 = vcmp.lt.s32.totalorder %v4172, 2
        %vm4174 = vcmp.eq.s32.totalorder %v4172, 0
        %v4175 = vxor.u32 %v4169, 2147483648
        %v4176 = vsel %vm4174, %v4168, %v4175
        %vm4177 = vcmp.eq.s32.totalorder %v4172, 2
        %v4178 = vxor.u32 %v4168, 2147483648
        %v4179 = vsel %vm4177, %v4178, %v4169
        %v4180 = vsel %vm4173, %v4176, %v4179
        %v4181 = vsel %vm4170, nan, %v4180
        %v4182 = vld [vmem:[%s5] sm:$0xff]
        %v4183 = vld [vmem:[%s5 + $0x8] sm:$0xff]
        %v4184 = vld [vmem:[%s5 + $0x10] sm:$0xff]
        %v4185 = vld [vmem:[%s5 + $0x18] sm:$0xff]
        %v4186 = vld [vmem:[%s6] sm:$0xff]
        %v4187 = vld [vmem:[%s6 + $0x8] sm:$0xff]
        %v4188 = vld [vmem:[%s6 + $0x10] sm:$0xff]
        %v4189 = vld [vmem:[%s6 + $0x18] sm:$0xff]
        %4191 = vset.pattern.permute.xlu0 0
        %4192 = vperm.xlu0 %4191, %v4186
        %v4193 = vpop.permute.xlu0 %4192
        %4196 = vset.pattern.permute.xlu0 0
        %4197 = vperm.xlu0 %4196, %v4187
        %v4198 = vpop.permute.xlu0 %4197
        %4201 = vset.pattern.permute.xlu0 0
        %4202 = vperm.xlu0 %4201, %v4188
        %v4203 = vpop.permute.xlu0 %4202
        %4206 = vset.pattern.permute.xlu0 0
        %4207 = vperm.xlu0 %4206, %v4189
        %v4208 = vpop.permute.xlu0 %4207
        %v4211 = vsel %vm2327, %v4182, 0
        %v4214 = vsel %vm2327, %v4183, 0
        %v4217 = vsel %vm2327, %v4184, 0
        %v4220 = vsel %vm2327, %v4185, 0
        %4222 = vmatprep.subr.mxu0 0.0
        %4223 = vmatpush1.msra.mxu0 0.0
        %4224 = vmatprep.subr.mxu0 0.0
        %4225 = vmatpush1.msra.mxu0 0.0
        %4226 = vmatprep.subr.mxu0 0.0
        %4227 = vmatpush1.msra.mxu0 0.0
        %4228 = vmatprep.subr.mxu0 0.0
        %4229 = vmatpush1.msra.mxu0 0.0
        %4230 = vmatprep.subr.mxu0 0.0
        %4231 = vmatpush1.msra.mxu0 0.0
        %4232 = vmatprep.subr.mxu0 0.0
        %4233 = vmatpush1.msra.mxu0 0.0
        %4234 = vmatprep.subr.mxu0 0.0
        %4235 = vmatpush1.msra.mxu0 0.0
        %4236 = vmatprep.subr.mxu0 0.0
        %4237 = vmatpush1.msra.mxu0 0.0
        %4238 = vmatprep.subr.mxu0 0.0
        %4239 = vmatpush1.msra.mxu0 0.0
        %4240 = vmatprep.subr.mxu0 0.0
        %4241 = vmatpush1.msra.mxu0 0.0
        %4242 = vmatprep.subr.mxu0 0.0
        %4243 = vmatpush1.msra.mxu0 0.0
        %4244 = vmatprep.subr.mxu0 0.0
        %4245 = vmatpush1.msra.mxu0 0.0
        %4246 = vmatprep.subr.mxu0 %v3973
        %4247 = vmatpush1.msra.mxu0 %v3869
        %4248 = vmatprep.subr.mxu0 %v3557
        %4249 = vmatpush1.msra.mxu0 %v3453
        %4250 = vmatprep.subr.mxu0 %v3141
        %4251 = vmatpush1.msra.mxu0 %v3037
        %4252 = vmatprep.subr.mxu0 %v2725
        %4253 = vmatpush1.msra.mxu0 %v2621
        %4254 = vmatprep.subr.mxu0 0.0
        %4255 = vmatpush2.msra.mxu0 0.0
        %4256 = vmatprep.subr.mxu0 0.0
        %4257 = vmatpush2.msra.mxu0 0.0
        %4258 = vmatprep.subr.mxu0 0.0
        %4259 = vmatpush2.msra.mxu0 0.0
        %4260 = vmatprep.subr.mxu0 0.0
        %4261 = vmatpush2.msra.mxu0 0.0
        %4262 = vmatprep.subr.mxu0 0.0
        %4263 = vmatpush2.msra.mxu0 0.0
        %4264 = vmatprep.subr.mxu0 0.0
        %4265 = vmatpush2.msra.mxu0 0.0
        %4266 = vmatprep.subr.mxu0 0.0
        %4267 = vmatpush2.msra.mxu0 0.0
        %4268 = vmatprep.subr.mxu0 0.0
        %4269 = vmatpush2.msra.mxu0 0.0
        %4270 = vmatprep.subr.mxu0 0.0
        %4271 = vmatpush2.msra.mxu0 0.0
        %4272 = vmatprep.subr.mxu0 0.0
        %4273 = vmatpush2.msra.mxu0 0.0
        %4274 = vmatprep.subr.mxu0 0.0
        %4275 = vmatpush2.msra.mxu0 0.0
        %4276 = vmatprep.subr.mxu0 0.0
        %4277 = vmatpush2.msra.mxu0 0.0
        %4278 = vmatprep.subr.mxu0 0.0
        %4279 = vmatpush2.msra.mxu0 0.0
        %4280 = vmatprep.subr.mxu0 0.0
        %4281 = vmatpush2.msra.mxu0 0.0
        %4282 = vmatprep.subr.mxu0 0.0
        %4283 = vmatpush2.msra.mxu0 0.0
        %4284 = vmatprep.subr.mxu0 0.0
        %4285 = vmatpush2.msra.mxu0 0.0
        %4286 = vmatprep.mubr.f32.mxu0 0.0
        %4287 = vmatmul.mubr.f32.gmra.mxu0 %v4211
        %v4288 = vpop.f32.mrf.mxu0
        %v4289 = vadd.f32 %v4193, %v4288
        %v4290 = vpop.f32.mrf.mxu0
        %v4291 = vadd.f32 %v4193, %v4290
        %4292 = vmatprep.mubr.f32.mxu0 0.0
        %4293 = vmatmul.mubr.f32.gmra.mxu0 %v4214
        %v4294 = vpop.f32.mrf.mxu0
        %v4295 = vadd.f32 %v4198, %v4294
        %v4296 = vpop.f32.mrf.mxu0
        %v4297 = vadd.f32 %v4198, %v4296
        %4298 = vmatprep.mubr.f32.mxu0 0.0
        %4299 = vmatmul.mubr.f32.gmra.mxu0 %v4217
        %v4300 = vpop.f32.mrf.mxu0
        %v4301 = vadd.f32 %v4203, %v4300
        %v4302 = vpop.f32.mrf.mxu0
        %v4303 = vadd.f32 %v4203, %v4302
        %4304 = vmatprep.mubr.f32.mxu0 0.0
        %4305 = vmatmul.mubr.f32.gmra.mxu0 %v4220
        %v4306 = vpop.f32.mrf.mxu0
        %v4307 = vadd.f32 %v4208, %v4306
        %v4308 = vpop.f32.mrf.mxu0
        %v4309 = vadd.f32 %v4208, %v4308
        %4310 = vdwg.mxu0
        %4311 = vmatprep.subr.mxu0 0.0
        %4312 = vmatpush1.msra.mxu0 0.0
        %4313 = vmatprep.subr.mxu0 0.0
        %4314 = vmatpush1.msra.mxu0 0.0
        %4315 = vmatprep.subr.mxu0 0.0
        %4316 = vmatpush1.msra.mxu0 0.0
        %4317 = vmatprep.subr.mxu0 0.0
        %4318 = vmatpush1.msra.mxu0 0.0
        %4319 = vmatprep.subr.mxu0 0.0
        %4320 = vmatpush1.msra.mxu0 0.0
        %4321 = vmatprep.subr.mxu0 0.0
        %4322 = vmatpush1.msra.mxu0 0.0
        %4323 = vmatprep.subr.mxu0 0.0
        %4324 = vmatpush1.msra.mxu0 0.0
        %4325 = vmatprep.subr.mxu0 0.0
        %4326 = vmatpush1.msra.mxu0 0.0
        %4327 = vmatprep.subr.mxu0 0.0
        %4328 = vmatpush1.msra.mxu0 0.0
        %4329 = vmatprep.subr.mxu0 0.0
        %4330 = vmatpush1.msra.mxu0 0.0
        %4331 = vmatprep.subr.mxu0 0.0
        %4332 = vmatpush1.msra.mxu0 0.0
        %4333 = vmatprep.subr.mxu0 0.0
        %4334 = vmatpush1.msra.mxu0 0.0
        %4335 = vmatprep.subr.mxu0 %v4181
        %4336 = vmatpush1.msra.mxu0 %v4077
        %4337 = vmatprep.subr.mxu0 %v3765
        %4338 = vmatpush1.msra.mxu0 %v3661
        %4339 = vmatprep.subr.mxu0 %v3349
        %4340 = vmatpush1.msra.mxu0 %v3245
        %4341 = vmatprep.subr.mxu0 %v2933
        %4342 = vmatpush1.msra.mxu0 %v2829
        %4343 = vmatprep.subr.mxu0 0.0
        %4344 = vmatpush2.msra.mxu0 0.0
        %4345 = vmatprep.subr.mxu0 0.0
        %4346 = vmatpush2.msra.mxu0 0.0
        %4347 = vmatprep.subr.mxu0 0.0
        %4348 = vmatpush2.msra.mxu0 0.0
        %4349 = vmatprep.subr.mxu0 0.0
        %4350 = vmatpush2.msra.mxu0 0.0
        %4351 = vmatprep.subr.mxu0 0.0
        %4352 = vmatpush2.msra.mxu0 0.0
        %4353 = vmatprep.subr.mxu0 0.0
        %4354 = vmatpush2.msra.mxu0 0.0
        %4355 = vmatprep.subr.mxu0 0.0
        %4356 = vmatpush2.msra.mxu0 0.0
        %4357 = vmatprep.subr.mxu0 0.0
        %4358 = vmatpush2.msra.mxu0 0.0
        %4359 = vmatprep.subr.mxu0 0.0
        %4360 = vmatpush2.msra.mxu0 0.0
        %4361 = vmatprep.subr.mxu0 0.0
        %4362 = vmatpush2.msra.mxu0 0.0
        %4363 = vmatprep.subr.mxu0 0.0
        %4364 = vmatpush2.msra.mxu0 0.0
        %4365 = vmatprep.subr.mxu0 0.0
        %4366 = vmatpush2.msra.mxu0 0.0
        %4367 = vmatprep.subr.mxu0 0.0
        %4368 = vmatpush2.msra.mxu0 0.0
        %4369 = vmatprep.subr.mxu0 0.0
        %4370 = vmatpush2.msra.mxu0 0.0
        %4371 = vmatprep.subr.mxu0 0.0
        %4372 = vmatpush2.msra.mxu0 0.0
        %4373 = vmatprep.subr.mxu0 0.0
        %4374 = vmatpush2.msra.mxu0 0.0
        %4375 = vmatprep.mubr.f32.mxu0 0.0
        %4376 = vmatmul.mubr.f32.gmra.mxu0 %v4211
        %v4377 = vpop.f32.mrf.mxu0
        %v4378 = vadd.f32 %v4193, %v4377
        %v4379 = vpop.f32.mrf.mxu0
        %v4380 = vadd.f32 %v4193, %v4379
        %4381 = vmatprep.mubr.f32.mxu0 0.0
        %4382 = vmatmul.mubr.f32.gmra.mxu0 %v4214
        %v4383 = vpop.f32.mrf.mxu0
        %v4384 = vadd.f32 %v4198, %v4383
        %v4385 = vpop.f32.mrf.mxu0
        %v4386 = vadd.f32 %v4198, %v4385
        %4387 = vmatprep.mubr.f32.mxu0 0.0
        %4388 = vmatmul.mubr.f32.gmra.mxu0 %v4217
        %v4389 = vpop.f32.mrf.mxu0
        %v4390 = vadd.f32 %v4203, %v4389
        %v4391 = vpop.f32.mrf.mxu0
        %v4392 = vadd.f32 %v4203, %v4391
        %4393 = vmatprep.mubr.f32.mxu0 0.0
        %4394 = vmatmul.mubr.f32.gmra.mxu0 %v4220
        %v4395 = vpop.f32.mrf.mxu0
        %v4396 = vadd.f32 %v4208, %v4395
        %v4397 = vpop.f32.mrf.mxu0
        %v4398 = vadd.f32 %v4208, %v4397
        %4399 = vdwg.mxu0
        %v4400 = vand.u32 2147483647, %v4289
        %vm4401 = vcmp.le.f32.partialorder %v4400, 0.7853982
        %vm4402 = vcmp.lt.s32.totalorder %v4289, 0
        %v4403 = vand.u32 %v4289, 2139095040
        %v4404 = vshrl.u32 %v4403, 23
        %v4405 = vsub.s32 %v4404, 127
        %v4406 = vand.u32 2147483647, %v4289
        %v4407 = vand.u32 %v4406, 8388607
        %v4408 = vor.u32 %v4407, 8388608
        %v4409 = vsub.s32 0, %v4408
        %v4410 = vadd.s32 %v4405, 1
        %vm4411 = vcmp.gt.s32.totalorder %v4410, 0
        %v4412 = vsel %vm4411, %v4410, 0
        %v4413 = vshrl.u32 %v4412, 5
        %v4414 = vand.u32 %v4412, 31
        %v4415 = vsub.s32 32, %v4414
        %v4416 = vshrl.u32 683565275, %v4415
        %v4417 = vshll.u32 683565275, %v4414
        %v4418 = vshrl.u32 2475754826, %v4415
        %v4419 = vor.u32 %v4417, %v4418
        %v4420 = vshll.u32 2475754826, %v4414
        %v4421 = vshrl.u32 2131351028, %v4415
        %v4422 = vor.u32 %v4420, %v4421
        %v4423 = vshll.u32 2131351028, %v4414
        %v4424 = vshrl.u32 2102212464, %v4415
        %v4425 = vor.u32 %v4423, %v4424
        %v4426 = vshll.u32 2102212464, %v4414
        %v4427 = vshrl.u32 920167782, %v4415
        %v4428 = vor.u32 %v4426, %v4427
        %v4429 = vshll.u32 920167782, %v4414
        %v4430 = vshrl.u32 1326507024, %v4415
        %v4431 = vor.u32 %v4429, %v4430
        %vm4432 = vcmp.lt.s32.totalorder %v4413, 1
        %vm4433 = vcmp.lt.s32.totalorder %v4413, 2
        %vm4434 = vcmp.lt.s32.totalorder %v4413, 3
        %vm4435 = vcmp.lt.s32.totalorder %v4413, 4
        %v4436 = vsel %vm4432, %v4416, %v4419
        %v4437 = vsel %vm4435, %v4425, 2102212464
        %v4438 = vsel %vm4434, %v4422, %v4437
        %v4439 = vsel %vm4433, %v4436, %v4438
        %v4440 = vsel %vm4432, %v4419, %v4422
        %v4441 = vsel %vm4435, %v4428, 920167782
        %v4442 = vsel %vm4434, %v4425, %v4441
        %v4443 = vsel %vm4433, %v4440, %v4442
        %v4444 = vsel %vm4432, %v4422, %v4425
        %v4445 = vsel %vm4435, %v4431, 1326507024
        %v4446 = vsel %vm4434, %v4428, %v4445
        %v4447 = vsel %vm4433, %v4444, %v4446
        %v4448 = vshll.u32 %v4408, 8
        %v4449 = vmul.u32.u64.compose %v4448, %v4447
        %v4450 = vextract.low.u32 %v4449
        %v4451 = vextract.high.u32 %v4449
        %v4452 = vmul.u32.u64.compose %v4448, %v4443
        %v4453 = vextract.low.u32 %v4452
        %v4454 = vextract.high.u32 %v4452
        %v4455 = vmul.u32 %v4448, %v4439
        %v4456 = vadd.s32 %v4451, %v4453
        %vm4457 = vc.u32 %v4451, %v4453
        %v4458 = vadd.s32 %v4454, 1
        %v4459 = vsel %vm4457, %v4458, %v4454
        %v4460 = vadd.s32 %v4455, %v4459
        %v4461 = vadd.s32 %v4460, 536870912
        %v4462 = vshrl.u32 %v4461, 30
        %v4463 = vshll.u32 %v4462, 30
        %v4464 = vsub.s32 %v4460, %v4463
        %vm4465 = vcmp.lt.s32.totalorder %v4464, 0
        %v4466 = vsub.s32 0, %v4464
        %v4467 = vsel %vm4465, %v4466, %v4464
        %v4468 = vclz %v4467
        %v4469 = vsub.s32 %v4468, 2
        %vm4470 = vcmp.gt.s32.totalorder 0, %v4469
        %v4471 = vsel %vm4470, 0, %v4469
        %v4472 = vsub.s32 32, %v4471
        %v4473 = vshll.u32 %v4464, %v4471
        %v4474 = vshrl.u32 %v4456, %v4472
        %v4475 = vor.u32 %v4473, %v4474
        %v4476 = vsub.s32 4294967266, %v4471
        %v4477 = vadd.s32 %v4476, 127
        %v4478 = vshll.u32 %v4477, 23
        %v4479 = vor.u32 4788187, %v4478
        %v4480 = vand.u32 2147483647, %v4479
        %v4482 = vcvt.s32.f32 %v4475
        %v4483 = vmul.f32 %v4482, %v4480
        %v4484 = vxor.u32 %v4483, 2147483648
        %v4485 = vsel %vm4402, %v4484, %v4483
        %v4486 = vsub.s32 4, %v4462
        %v4487 = vsel %vm4402, %v4486, %v4462
        %v4488 = vsel %vm4401, %v4289, %v4485
        %v4489 = vsel %vm4401, 0, %v4487
        %v4490 = vcosq.f32.pop %v4488
        %v4491 = vsinq.f32.pop %v4488
        %vm4492 = vweird.f32 %v4289
        %v4493 = vadd.s32 %v4489, 3
        %v4494 = vand.u32 %v4493, 3
        %vm4495 = vcmp.lt.s32.totalorder %v4494, 2
        %vm4496 = vcmp.eq.s32.totalorder %v4494, 0
        %v4497 = vxor.u32 %v4491, 2147483648
        %v4498 = vsel %vm4496, %v4490, %v4497
        %vm4499 = vcmp.eq.s32.totalorder %v4494, 2
        %v4500 = vxor.u32 %v4490, 2147483648
        %v4501 = vsel %vm4499, %v4500, %v4491
        %v4502 = vsel %vm4495, %v4498, %v4501
        %v4503 = vsel %vm4492, nan, %v4502
        %v4504 = vand.u32 2147483647, %v4291
        %vm4505 = vcmp.le.f32.partialorder %v4504, 0.7853982
        %vm4506 = vcmp.lt.s32.totalorder %v4291, 0
        %v4507 = vand.u32 %v4291, 2139095040
        %v4508 = vshrl.u32 %v4507, 23
        %v4509 = vsub.s32 %v4508, 127
        %v4510 = vand.u32 2147483647, %v4291
        %v4511 = vand.u32 %v4510, 8388607
        %v4512 = vor.u32 %v4511, 8388608
        %v4513 = vsub.s32 0, %v4512
        %v4514 = vadd.s32 %v4509, 1
        %vm4515 = vcmp.gt.s32.totalorder %v4514, 0
        %v4516 = vsel %vm4515, %v4514, 0
        %v4517 = vshrl.u32 %v4516, 5
        %v4518 = vand.u32 %v4516, 31
        %v4519 = vsub.s32 32, %v4518
        %v4520 = vshrl.u32 683565275, %v4519
        %v4521 = vshll.u32 683565275, %v4518
        %v4522 = vshrl.u32 2475754826, %v4519
        %v4523 = vor.u32 %v4521, %v4522
        %v4524 = vshll.u32 2475754826, %v4518
        %v4525 = vshrl.u32 2131351028, %v4519
        %v4526 = vor.u32 %v4524, %v4525
        %v4527 = vshll.u32 2131351028, %v4518
        %v4528 = vshrl.u32 2102212464, %v4519
        %v4529 = vor.u32 %v4527, %v4528
        %v4530 = vshll.u32 2102212464, %v4518
        %v4531 = vshrl.u32 920167782, %v4519
        %v4532 = vor.u32 %v4530, %v4531
        %v4533 = vshll.u32 920167782, %v4518
        %v4534 = vshrl.u32 1326507024, %v4519
        %v4535 = vor.u32 %v4533, %v4534
        %vm4536 = vcmp.lt.s32.totalorder %v4517, 1
        %vm4537 = vcmp.lt.s32.totalorder %v4517, 2
        %vm4538 = vcmp.lt.s32.totalorder %v4517, 3
        %vm4539 = vcmp.lt.s32.totalorder %v4517, 4
        %v4540 = vsel %vm4536, %v4520, %v4523
        %v4541 = vsel %vm4539, %v4529, 2102212464
        %v4542 = vsel %vm4538, %v4526, %v4541
        %v4543 = vsel %vm4537, %v4540, %v4542
        %v4544 = vsel %vm4536, %v4523, %v4526
        %v4545 = vsel %vm4539, %v4532, 920167782
        %v4546 = vsel %vm4538, %v4529, %v4545
        %v4547 = vsel %vm4537, %v4544, %v4546
        %v4548 = vsel %vm4536, %v4526, %v4529
        %v4549 = vsel %vm4539, %v4535, 1326507024
        %v4550 = vsel %vm4538, %v4532, %v4549
        %v4551 = vsel %vm4537, %v4548, %v4550
        %v4552 = vshll.u32 %v4512, 8
        %v4553 = vmul.u32.u64.compose %v4552, %v4551
        %v4554 = vextract.low.u32 %v4553
        %v4555 = vextract.high.u32 %v4553
        %v4556 = vmul.u32.u64.compose %v4552, %v4547
        %v4557 = vextract.low.u32 %v4556
        %v4558 = vextract.high.u32 %v4556
        %v4559 = vmul.u32 %v4552, %v4543
        %v4560 = vadd.s32 %v4555, %v4557
        %vm4561 = vc.u32 %v4555, %v4557
        %v4562 = vadd.s32 %v4558, 1
        %v4563 = vsel %vm4561, %v4562, %v4558
        %v4564 = vadd.s32 %v4559, %v4563
        %v4565 = vadd.s32 %v4564, 536870912
        %v4566 = vshrl.u32 %v4565, 30
        %v4567 = vshll.u32 %v4566, 30
        %v4568 = vsub.s32 %v4564, %v4567
        %vm4569 = vcmp.lt.s32.totalorder %v4568, 0
        %v4570 = vsub.s32 0, %v4568
        %v4571 = vsel %vm4569, %v4570, %v4568
        %v4572 = vclz %v4571
        %v4573 = vsub.s32 %v4572, 2
        %vm4574 = vcmp.gt.s32.totalorder 0, %v4573
        %v4575 = vsel %vm4574, 0, %v4573
        %v4576 = vsub.s32 32, %v4575
        %v4577 = vshll.u32 %v4568, %v4575
        %v4578 = vshrl.u32 %v4560, %v4576
        %v4579 = vor.u32 %v4577, %v4578
        %v4580 = vsub.s32 4294967266, %v4575
        %v4581 = vadd.s32 %v4580, 127
        %v4582 = vshll.u32 %v4581, 23
        %v4583 = vor.u32 4788187, %v4582
        %v4584 = vand.u32 2147483647, %v4583
        %v4586 = vcvt.s32.f32 %v4579
        %v4587 = vmul.f32 %v4586, %v4584
        %v4588 = vxor.u32 %v4587, 2147483648
        %v4589 = vsel %vm4506, %v4588, %v4587
        %v4590 = vsub.s32 4, %v4566
        %v4591 = vsel %vm4506, %v4590, %v4566
        %v4592 = vsel %vm4505, %v4291, %v4589
        %v4593 = vsel %vm4505, 0, %v4591
        %v4594 = vcosq.f32.pop %v4592
        %v4595 = vsinq.f32.pop %v4592
        %vm4596 = vweird.f32 %v4291
        %v4597 = vadd.s32 %v4593, 3
        %v4598 = vand.u32 %v4597, 3
        %vm4599 = vcmp.lt.s32.totalorder %v4598, 2
        %vm4600 = vcmp.eq.s32.totalorder %v4598, 0
        %v4601 = vxor.u32 %v4595, 2147483648
        %v4602 = vsel %vm4600, %v4594, %v4601
        %vm4603 = vcmp.eq.s32.totalorder %v4598, 2
        %v4604 = vxor.u32 %v4594, 2147483648
        %v4605 = vsel %vm4603, %v4604, %v4595
        %v4606 = vsel %vm4599, %v4602, %v4605
        %v4607 = vsel %vm4596, nan, %v4606
        %v4608 = vand.u32 2147483647, %v4378
        %vm4609 = vcmp.le.f32.partialorder %v4608, 0.7853982
        %vm4610 = vcmp.lt.s32.totalorder %v4378, 0
        %v4611 = vand.u32 %v4378, 2139095040
        %v4612 = vshrl.u32 %v4611, 23
        %v4613 = vsub.s32 %v4612, 127
        %v4614 = vand.u32 2147483647, %v4378
        %v4615 = vand.u32 %v4614, 8388607
        %v4616 = vor.u32 %v4615, 8388608
        %v4617 = vsub.s32 0, %v4616
        %v4618 = vadd.s32 %v4613, 1
        %vm4619 = vcmp.gt.s32.totalorder %v4618, 0
        %v4620 = vsel %vm4619, %v4618, 0
        %v4621 = vshrl.u32 %v4620, 5
        %v4622 = vand.u32 %v4620, 31
        %v4623 = vsub.s32 32, %v4622
        %v4624 = vshrl.u32 683565275, %v4623
        %v4625 = vshll.u32 683565275, %v4622
        %v4626 = vshrl.u32 2475754826, %v4623
        %v4627 = vor.u32 %v4625, %v4626
        %v4628 = vshll.u32 2475754826, %v4622
        %v4629 = vshrl.u32 2131351028, %v4623
        %v4630 = vor.u32 %v4628, %v4629
        %v4631 = vshll.u32 2131351028, %v4622
        %v4632 = vshrl.u32 2102212464, %v4623
        %v4633 = vor.u32 %v4631, %v4632
        %v4634 = vshll.u32 2102212464, %v4622
        %v4635 = vshrl.u32 920167782, %v4623
        %v4636 = vor.u32 %v4634, %v4635
        %v4637 = vshll.u32 920167782, %v4622
        %v4638 = vshrl.u32 1326507024, %v4623
        %v4639 = vor.u32 %v4637, %v4638
        %vm4640 = vcmp.lt.s32.totalorder %v4621, 1
        %vm4641 = vcmp.lt.s32.totalorder %v4621, 2
        %vm4642 = vcmp.lt.s32.totalorder %v4621, 3
        %vm4643 = vcmp.lt.s32.totalorder %v4621, 4
        %v4644 = vsel %vm4640, %v4624, %v4627
        %v4645 = vsel %vm4643, %v4633, 2102212464
        %v4646 = vsel %vm4642, %v4630, %v4645
        %v4647 = vsel %vm4641, %v4644, %v4646
        %v4648 = vsel %vm4640, %v4627, %v4630
        %v4649 = vsel %vm4643, %v4636, 920167782
        %v4650 = vsel %vm4642, %v4633, %v4649
        %v4651 = vsel %vm4641, %v4648, %v4650
        %v4652 = vsel %vm4640, %v4630, %v4633
        %v4653 = vsel %vm4643, %v4639, 1326507024
        %v4654 = vsel %vm4642, %v4636, %v4653
        %v4655 = vsel %vm4641, %v4652, %v4654
        %v4656 = vshll.u32 %v4616, 8
        %v4657 = vmul.u32.u64.compose %v4656, %v4655
        %v4658 = vextract.low.u32 %v4657
        %v4659 = vextract.high.u32 %v4657
        %v4660 = vmul.u32.u64.compose %v4656, %v4651
        %v4661 = vextract.low.u32 %v4660
        %v4662 = vextract.high.u32 %v4660
        %v4663 = vmul.u32 %v4656, %v4647
        %v4664 = vadd.s32 %v4659, %v4661
        %vm4665 = vc.u32 %v4659, %v4661
        %v4666 = vadd.s32 %v4662, 1
        %v4667 = vsel %vm4665, %v4666, %v4662
        %v4668 = vadd.s32 %v4663, %v4667
        %v4669 = vadd.s32 %v4668, 536870912
        %v4670 = vshrl.u32 %v4669, 30
        %v4671 = vshll.u32 %v4670, 30
        %v4672 = vsub.s32 %v4668, %v4671
        %vm4673 = vcmp.lt.s32.totalorder %v4672, 0
        %v4674 = vsub.s32 0, %v4672
        %v4675 = vsel %vm4673, %v4674, %v4672
        %v4676 = vclz %v4675
        %v4677 = vsub.s32 %v4676, 2
        %vm4678 = vcmp.gt.s32.totalorder 0, %v4677
        %v4679 = vsel %vm4678, 0, %v4677
        %v4680 = vsub.s32 32, %v4679
        %v4681 = vshll.u32 %v4672, %v4679
        %v4682 = vshrl.u32 %v4664, %v4680
        %v4683 = vor.u32 %v4681, %v4682
        %v4684 = vsub.s32 4294967266, %v4679
        %v4685 = vadd.s32 %v4684, 127
        %v4686 = vshll.u32 %v4685, 23
        %v4687 = vor.u32 4788187, %v4686
        %v4688 = vand.u32 2147483647, %v4687
        %v4690 = vcvt.s32.f32 %v4683
        %v4691 = vmul.f32 %v4690, %v4688
        %v4692 = vxor.u32 %v4691, 2147483648
        %v4693 = vsel %vm4610, %v4692, %v4691
        %v4694 = vsub.s32 4, %v4670
        %v4695 = vsel %vm4610, %v4694, %v4670
        %v4696 = vsel %vm4609, %v4378, %v4693
        %v4697 = vsel %vm4609, 0, %v4695
        %v4698 = vcosq.f32.pop %v4696
        %v4699 = vsinq.f32.pop %v4696
        %vm4700 = vweird.f32 %v4378
        %v4701 = vadd.s32 %v4697, 3
        %v4702 = vand.u32 %v4701, 3
        %vm4703 = vcmp.lt.s32.totalorder %v4702, 2
        %vm4704 = vcmp.eq.s32.totalorder %v4702, 0
        %v4705 = vxor.u32 %v4699, 2147483648
        %v4706 = vsel %vm4704, %v4698, %v4705
        %vm4707 = vcmp.eq.s32.totalorder %v4702, 2
        %v4708 = vxor.u32 %v4698, 2147483648
        %v4709 = vsel %vm4707, %v4708, %v4699
        %v4710 = vsel %vm4703, %v4706, %v4709
        %v4711 = vsel %vm4700, nan, %v4710
        %v4712 = vand.u32 2147483647, %v4380
        %vm4713 = vcmp.le.f32.partialorder %v4712, 0.7853982
        %vm4714 = vcmp.lt.s32.totalorder %v4380, 0
        %v4715 = vand.u32 %v4380, 2139095040
        %v4716 = vshrl.u32 %v4715, 23
        %v4717 = vsub.s32 %v4716, 127
        %v4718 = vand.u32 2147483647, %v4380
        %v4719 = vand.u32 %v4718, 8388607
        %v4720 = vor.u32 %v4719, 8388608
        %v4721 = vsub.s32 0, %v4720
        %v4722 = vadd.s32 %v4717, 1
        %vm4723 = vcmp.gt.s32.totalorder %v4722, 0
        %v4724 = vsel %vm4723, %v4722, 0
        %v4725 = vshrl.u32 %v4724, 5
        %v4726 = vand.u32 %v4724, 31
        %v4727 = vsub.s32 32, %v4726
        %v4728 = vshrl.u32 683565275, %v4727
        %v4729 = vshll.u32 683565275, %v4726
        %v4730 = vshrl.u32 2475754826, %v4727
        %v4731 = vor.u32 %v4729, %v4730
        %v4732 = vshll.u32 2475754826, %v4726
        %v4733 = vshrl.u32 2131351028, %v4727
        %v4734 = vor.u32 %v4732, %v4733
        %v4735 = vshll.u32 2131351028, %v4726
        %v4736 = vshrl.u32 2102212464, %v4727
        %v4737 = vor.u32 %v4735, %v4736
        %v4738 = vshll.u32 2102212464, %v4726
        %v4739 = vshrl.u32 920167782, %v4727
        %v4740 = vor.u32 %v4738, %v4739
        %v4741 = vshll.u32 920167782, %v4726
        %v4742 = vshrl.u32 1326507024, %v4727
        %v4743 = vor.u32 %v4741, %v4742
        %vm4744 = vcmp.lt.s32.totalorder %v4725, 1
        %vm4745 = vcmp.lt.s32.totalorder %v4725, 2
        %vm4746 = vcmp.lt.s32.totalorder %v4725, 3
        %vm4747 = vcmp.lt.s32.totalorder %v4725, 4
        %v4748 = vsel %vm4744, %v4728, %v4731
        %v4749 = vsel %vm4747, %v4737, 2102212464
        %v4750 = vsel %vm4746, %v4734, %v4749
        %v4751 = vsel %vm4745, %v4748, %v4750
        %v4752 = vsel %vm4744, %v4731, %v4734
        %v4753 = vsel %vm4747, %v4740, 920167782
        %v4754 = vsel %vm4746, %v4737, %v4753
        %v4755 = vsel %vm4745, %v4752, %v4754
        %v4756 = vsel %vm4744, %v4734, %v4737
        %v4757 = vsel %vm4747, %v4743, 1326507024
        %v4758 = vsel %vm4746, %v4740, %v4757
        %v4759 = vsel %vm4745, %v4756, %v4758
        %v4760 = vshll.u32 %v4720, 8
        %v4761 = vmul.u32.u64.compose %v4760, %v4759
        %v4762 = vextract.low.u32 %v4761
        %v4763 = vextract.high.u32 %v4761
        %v4764 = vmul.u32.u64.compose %v4760, %v4755
        %v4765 = vextract.low.u32 %v4764
        %v4766 = vextract.high.u32 %v4764
        %v4767 = vmul.u32 %v4760, %v4751
        %v4768 = vadd.s32 %v4763, %v4765
        %vm4769 = vc.u32 %v4763, %v4765
        %v4770 = vadd.s32 %v4766, 1
        %v4771 = vsel %vm4769, %v4770, %v4766
        %v4772 = vadd.s32 %v4767, %v4771
        %v4773 = vadd.s32 %v4772, 536870912
        %v4774 = vshrl.u32 %v4773, 30
        %v4775 = vshll.u32 %v4774, 30
        %v4776 = vsub.s32 %v4772, %v4775
        %vm4777 = vcmp.lt.s32.totalorder %v4776, 0
        %v4778 = vsub.s32 0, %v4776
        %v4779 = vsel %vm4777, %v4778, %v4776
        %v4780 = vclz %v4779
        %v4781 = vsub.s32 %v4780, 2
        %vm4782 = vcmp.gt.s32.totalorder 0, %v4781
        %v4783 = vsel %vm4782, 0, %v4781
        %v4784 = vsub.s32 32, %v4783
        %v4785 = vshll.u32 %v4776, %v4783
        %v4786 = vshrl.u32 %v4768, %v4784
        %v4787 = vor.u32 %v4785, %v4786
        %v4788 = vsub.s32 4294967266, %v4783
        %v4789 = vadd.s32 %v4788, 127
        %v4790 = vshll.u32 %v4789, 23
        %v4791 = vor.u32 4788187, %v4790
        %v4792 = vand.u32 2147483647, %v4791
        %v4794 = vcvt.s32.f32 %v4787
        %v4795 = vmul.f32 %v4794, %v4792
        %v4796 = vxor.u32 %v4795, 2147483648
        %v4797 = vsel %vm4714, %v4796, %v4795
        %v4798 = vsub.s32 4, %v4774
        %v4799 = vsel %vm4714, %v4798, %v4774
        %v4800 = vsel %vm4713, %v4380, %v4797
        %v4801 = vsel %vm4713, 0, %v4799
        %v4802 = vcosq.f32.pop %v4800
        %v4803 = vsinq.f32.pop %v4800
        %vm4804 = vweird.f32 %v4380
        %v4805 = vadd.s32 %v4801, 3
        %v4806 = vand.u32 %v4805, 3
        %vm4807 = vcmp.lt.s32.totalorder %v4806, 2
        %vm4808 = vcmp.eq.s32.totalorder %v4806, 0
        %v4809 = vxor.u32 %v4803, 2147483648
        %v4810 = vsel %vm4808, %v4802, %v4809
        %vm4811 = vcmp.eq.s32.totalorder %v4806, 2
        %v4812 = vxor.u32 %v4802, 2147483648
        %v4813 = vsel %vm4811, %v4812, %v4803
        %v4814 = vsel %vm4807, %v4810, %v4813
        %v4815 = vsel %vm4804, nan, %v4814
        %v4816 = vand.u32 2147483647, %v4295
        %vm4817 = vcmp.le.f32.partialorder %v4816, 0.7853982
        %vm4818 = vcmp.lt.s32.totalorder %v4295, 0
        %v4819 = vand.u32 %v4295, 2139095040
        %v4820 = vshrl.u32 %v4819, 23
        %v4821 = vsub.s32 %v4820, 127
        %v4822 = vand.u32 2147483647, %v4295
        %v4823 = vand.u32 %v4822, 8388607
        %v4824 = vor.u32 %v4823, 8388608
        %v4825 = vsub.s32 0, %v4824
        %v4826 = vadd.s32 %v4821, 1
        %vm4827 = vcmp.gt.s32.totalorder %v4826, 0
        %v4828 = vsel %vm4827, %v4826, 0
        %v4829 = vshrl.u32 %v4828, 5
        %v4830 = vand.u32 %v4828, 31
        %v4831 = vsub.s32 32, %v4830
        %v4832 = vshrl.u32 683565275, %v4831
        %v4833 = vshll.u32 683565275, %v4830
        %v4834 = vshrl.u32 2475754826, %v4831
        %v4835 = vor.u32 %v4833, %v4834
        %v4836 = vshll.u32 2475754826, %v4830
        %v4837 = vshrl.u32 2131351028, %v4831
        %v4838 = vor.u32 %v4836, %v4837
        %v4839 = vshll.u32 2131351028, %v4830
        %v4840 = vshrl.u32 2102212464, %v4831
        %v4841 = vor.u32 %v4839, %v4840
        %v4842 = vshll.u32 2102212464, %v4830
        %v4843 = vshrl.u32 920167782, %v4831
        %v4844 = vor.u32 %v4842, %v4843
        %v4845 = vshll.u32 920167782, %v4830
        %v4846 = vshrl.u32 1326507024, %v4831
        %v4847 = vor.u32 %v4845, %v4846
        %vm4848 = vcmp.lt.s32.totalorder %v4829, 1
        %vm4849 = vcmp.lt.s32.totalorder %v4829, 2
        %vm4850 = vcmp.lt.s32.totalorder %v4829, 3
        %vm4851 = vcmp.lt.s32.totalorder %v4829, 4
        %v4852 = vsel %vm4848, %v4832, %v4835
        %v4853 = vsel %vm4851, %v4841, 2102212464
        %v4854 = vsel %vm4850, %v4838, %v4853
        %v4855 = vsel %vm4849, %v4852, %v4854
        %v4856 = vsel %vm4848, %v4835, %v4838
        %v4857 = vsel %vm4851, %v4844, 920167782
        %v4858 = vsel %vm4850, %v4841, %v4857
        %v4859 = vsel %vm4849, %v4856, %v4858
        %v4860 = vsel %vm4848, %v4838, %v4841
        %v4861 = vsel %vm4851, %v4847, 1326507024
        %v4862 = vsel %vm4850, %v4844, %v4861
        %v4863 = vsel %vm4849, %v4860, %v4862
        %v4864 = vshll.u32 %v4824, 8
        %v4865 = vmul.u32.u64.compose %v4864, %v4863
        %v4866 = vextract.low.u32 %v4865
        %v4867 = vextract.high.u32 %v4865
        %v4868 = vmul.u32.u64.compose %v4864, %v4859
        %v4869 = vextract.low.u32 %v4868
        %v4870 = vextract.high.u32 %v4868
        %v4871 = vmul.u32 %v4864, %v4855
        %v4872 = vadd.s32 %v4867, %v4869
        %vm4873 = vc.u32 %v4867, %v4869
        %v4874 = vadd.s32 %v4870, 1
        %v4875 = vsel %vm4873, %v4874, %v4870
        %v4876 = vadd.s32 %v4871, %v4875
        %v4877 = vadd.s32 %v4876, 536870912
        %v4878 = vshrl.u32 %v4877, 30
        %v4879 = vshll.u32 %v4878, 30
        %v4880 = vsub.s32 %v4876, %v4879
        %vm4881 = vcmp.lt.s32.totalorder %v4880, 0
        %v4882 = vsub.s32 0, %v4880
        %v4883 = vsel %vm4881, %v4882, %v4880
        %v4884 = vclz %v4883
        %v4885 = vsub.s32 %v4884, 2
        %vm4886 = vcmp.gt.s32.totalorder 0, %v4885
        %v4887 = vsel %vm4886, 0, %v4885
        %v4888 = vsub.s32 32, %v4887
        %v4889 = vshll.u32 %v4880, %v4887
        %v4890 = vshrl.u32 %v4872, %v4888
        %v4891 = vor.u32 %v4889, %v4890
        %v4892 = vsub.s32 4294967266, %v4887
        %v4893 = vadd.s32 %v4892, 127
        %v4894 = vshll.u32 %v4893, 23
        %v4895 = vor.u32 4788187, %v4894
        %v4896 = vand.u32 2147483647, %v4895
        %v4898 = vcvt.s32.f32 %v4891
        %v4899 = vmul.f32 %v4898, %v4896
        %v4900 = vxor.u32 %v4899, 2147483648
        %v4901 = vsel %vm4818, %v4900, %v4899
        %v4902 = vsub.s32 4, %v4878
        %v4903 = vsel %vm4818, %v4902, %v4878
        %v4904 = vsel %vm4817, %v4295, %v4901
        %v4905 = vsel %vm4817, 0, %v4903
        %v4906 = vcosq.f32.pop %v4904
        %v4907 = vsinq.f32.pop %v4904
        %vm4908 = vweird.f32 %v4295
        %v4909 = vadd.s32 %v4905, 3
        %v4910 = vand.u32 %v4909, 3
        %vm4911 = vcmp.lt.s32.totalorder %v4910, 2
        %vm4912 = vcmp.eq.s32.totalorder %v4910, 0
        %v4913 = vxor.u32 %v4907, 2147483648
        %v4914 = vsel %vm4912, %v4906, %v4913
        %vm4915 = vcmp.eq.s32.totalorder %v4910, 2
        %v4916 = vxor.u32 %v4906, 2147483648
        %v4917 = vsel %vm4915, %v4916, %v4907
        %v4918 = vsel %vm4911, %v4914, %v4917
        %v4919 = vsel %vm4908, nan, %v4918
        %v4920 = vand.u32 2147483647, %v4297
        %vm4921 = vcmp.le.f32.partialorder %v4920, 0.7853982
        %vm4922 = vcmp.lt.s32.totalorder %v4297, 0
        %v4923 = vand.u32 %v4297, 2139095040
        %v4924 = vshrl.u32 %v4923, 23
        %v4925 = vsub.s32 %v4924, 127
        %v4926 = vand.u32 2147483647, %v4297
        %v4927 = vand.u32 %v4926, 8388607
        %v4928 = vor.u32 %v4927, 8388608
        %v4929 = vsub.s32 0, %v4928
        %v4930 = vadd.s32 %v4925, 1
        %vm4931 = vcmp.gt.s32.totalorder %v4930, 0
        %v4932 = vsel %vm4931, %v4930, 0
        %v4933 = vshrl.u32 %v4932, 5
        %v4934 = vand.u32 %v4932, 31
        %v4935 = vsub.s32 32, %v4934
        %v4936 = vshrl.u32 683565275, %v4935
        %v4937 = vshll.u32 683565275, %v4934
        %v4938 = vshrl.u32 2475754826, %v4935
        %v4939 = vor.u32 %v4937, %v4938
        %v4940 = vshll.u32 2475754826, %v4934
        %v4941 = vshrl.u32 2131351028, %v4935
        %v4942 = vor.u32 %v4940, %v4941
        %v4943 = vshll.u32 2131351028, %v4934
        %v4944 = vshrl.u32 2102212464, %v4935
        %v4945 = vor.u32 %v4943, %v4944
        %v4946 = vshll.u32 2102212464, %v4934
        %v4947 = vshrl.u32 920167782, %v4935
        %v4948 = vor.u32 %v4946, %v4947
        %v4949 = vshll.u32 920167782, %v4934
        %v4950 = vshrl.u32 1326507024, %v4935
        %v4951 = vor.u32 %v4949, %v4950
        %vm4952 = vcmp.lt.s32.totalorder %v4933, 1
        %vm4953 = vcmp.lt.s32.totalorder %v4933, 2
        %vm4954 = vcmp.lt.s32.totalorder %v4933, 3
        %vm4955 = vcmp.lt.s32.totalorder %v4933, 4
        %v4956 = vsel %vm4952, %v4936, %v4939
        %v4957 = vsel %vm4955, %v4945, 2102212464
        %v4958 = vsel %vm4954, %v4942, %v4957
        %v4959 = vsel %vm4953, %v4956, %v4958
        %v4960 = vsel %vm4952, %v4939, %v4942
        %v4961 = vsel %vm4955, %v4948, 920167782
        %v4962 = vsel %vm4954, %v4945, %v4961
        %v4963 = vsel %vm4953, %v4960, %v4962
        %v4964 = vsel %vm4952, %v4942, %v4945
        %v4965 = vsel %vm4955, %v4951, 1326507024
        %v4966 = vsel %vm4954, %v4948, %v4965
        %v4967 = vsel %vm4953, %v4964, %v4966
        %v4968 = vshll.u32 %v4928, 8
        %v4969 = vmul.u32.u64.compose %v4968, %v4967
        %v4970 = vextract.low.u32 %v4969
        %v4971 = vextract.high.u32 %v4969
        %v4972 = vmul.u32.u64.compose %v4968, %v4963
        %v4973 = vextract.low.u32 %v4972
        %v4974 = vextract.high.u32 %v4972
        %v4975 = vmul.u32 %v4968, %v4959
        %v4976 = vadd.s32 %v4971, %v4973
        %vm4977 = vc.u32 %v4971, %v4973
        %v4978 = vadd.s32 %v4974, 1
        %v4979 = vsel %vm4977, %v4978, %v4974
        %v4980 = vadd.s32 %v4975, %v4979
        %v4981 = vadd.s32 %v4980, 536870912
        %v4982 = vshrl.u32 %v4981, 30
        %v4983 = vshll.u32 %v4982, 30
        %v4984 = vsub.s32 %v4980, %v4983
        %vm4985 = vcmp.lt.s32.totalorder %v4984, 0
        %v4986 = vsub.s32 0, %v4984
        %v4987 = vsel %vm4985, %v4986, %v4984
        %v4988 = vclz %v4987
        %v4989 = vsub.s32 %v4988, 2
        %vm4990 = vcmp.gt.s32.totalorder 0, %v4989
        %v4991 = vsel %vm4990, 0, %v4989
        %v4992 = vsub.s32 32, %v4991
        %v4993 = vshll.u32 %v4984, %v4991
        %v4994 = vshrl.u32 %v4976, %v4992
        %v4995 = vor.u32 %v4993, %v4994
        %v4996 = vsub.s32 4294967266, %v4991
        %v4997 = vadd.s32 %v4996, 127
        %v4998 = vshll.u32 %v4997, 23
        %v4999 = vor.u32 4788187, %v4998
        %v5000 = vand.u32 2147483647, %v4999
        %v5002 = vcvt.s32.f32 %v4995
        %v5003 = vmul.f32 %v5002, %v5000
        %v5004 = vxor.u32 %v5003, 2147483648
        %v5005 = vsel %vm4922, %v5004, %v5003
        %v5006 = vsub.s32 4, %v4982
        %v5007 = vsel %vm4922, %v5006, %v4982
        %v5008 = vsel %vm4921, %v4297, %v5005
        %v5009 = vsel %vm4921, 0, %v5007
        %v5010 = vcosq.f32.pop %v5008
        %v5011 = vsinq.f32.pop %v5008
        %vm5012 = vweird.f32 %v4297
        %v5013 = vadd.s32 %v5009, 3
        %v5014 = vand.u32 %v5013, 3
        %vm5015 = vcmp.lt.s32.totalorder %v5014, 2
        %vm5016 = vcmp.eq.s32.totalorder %v5014, 0
        %v5017 = vxor.u32 %v5011, 2147483648
        %v5018 = vsel %vm5016, %v5010, %v5017
        %vm5019 = vcmp.eq.s32.totalorder %v5014, 2
        %v5020 = vxor.u32 %v5010, 2147483648
        %v5021 = vsel %vm5019, %v5020, %v5011
        %v5022 = vsel %vm5015, %v5018, %v5021
        %v5023 = vsel %vm5012, nan, %v5022
        %v5024 = vand.u32 2147483647, %v4384
        %vm5025 = vcmp.le.f32.partialorder %v5024, 0.7853982
        %vm5026 = vcmp.lt.s32.totalorder %v4384, 0
        %v5027 = vand.u32 %v4384, 2139095040
        %v5028 = vshrl.u32 %v5027, 23
        %v5029 = vsub.s32 %v5028, 127
        %v5030 = vand.u32 2147483647, %v4384
        %v5031 = vand.u32 %v5030, 8388607
        %v5032 = vor.u32 %v5031, 8388608
        %v5033 = vsub.s32 0, %v5032
        %v5034 = vadd.s32 %v5029, 1
        %vm5035 = vcmp.gt.s32.totalorder %v5034, 0
        %v5036 = vsel %vm5035, %v5034, 0
        %v5037 = vshrl.u32 %v5036, 5
        %v5038 = vand.u32 %v5036, 31
        %v5039 = vsub.s32 32, %v5038
        %v5040 = vshrl.u32 683565275, %v5039
        %v5041 = vshll.u32 683565275, %v5038
        %v5042 = vshrl.u32 2475754826, %v5039
        %v5043 = vor.u32 %v5041, %v5042
        %v5044 = vshll.u32 2475754826, %v5038
        %v5045 = vshrl.u32 2131351028, %v5039
        %v5046 = vor.u32 %v5044, %v5045
        %v5047 = vshll.u32 2131351028, %v5038
        %v5048 = vshrl.u32 2102212464, %v5039
        %v5049 = vor.u32 %v5047, %v5048
        %v5050 = vshll.u32 2102212464, %v5038
        %v5051 = vshrl.u32 920167782, %v5039
        %v5052 = vor.u32 %v5050, %v5051
        %v5053 = vshll.u32 920167782, %v5038
        %v5054 = vshrl.u32 1326507024, %v5039
        %v5055 = vor.u32 %v5053, %v5054
        %vm5056 = vcmp.lt.s32.totalorder %v5037, 1
        %vm5057 = vcmp.lt.s32.totalorder %v5037, 2
        %vm5058 = vcmp.lt.s32.totalorder %v5037, 3
        %vm5059 = vcmp.lt.s32.totalorder %v5037, 4
        %v5060 = vsel %vm5056, %v5040, %v5043
        %v5061 = vsel %vm5059, %v5049, 2102212464
        %v5062 = vsel %vm5058, %v5046, %v5061
        %v5063 = vsel %vm5057, %v5060, %v5062
        %v5064 = vsel %vm5056, %v5043, %v5046
        %v5065 = vsel %vm5059, %v5052, 920167782
        %v5066 = vsel %vm5058, %v5049, %v5065
        %v5067 = vsel %vm5057, %v5064, %v5066
        %v5068 = vsel %vm5056, %v5046, %v5049
        %v5069 = vsel %vm5059, %v5055, 1326507024
        %v5070 = vsel %vm5058, %v5052, %v5069
        %v5071 = vsel %vm5057, %v5068, %v5070
        %v5072 = vshll.u32 %v5032, 8
        %v5073 = vmul.u32.u64.compose %v5072, %v5071
        %v5074 = vextract.low.u32 %v5073
        %v5075 = vextract.high.u32 %v5073
        %v5076 = vmul.u32.u64.compose %v5072, %v5067
        %v5077 = vextract.low.u32 %v5076
        %v5078 = vextract.high.u32 %v5076
        %v5079 = vmul.u32 %v5072, %v5063
        %v5080 = vadd.s32 %v5075, %v5077
        %vm5081 = vc.u32 %v5075, %v5077
        %v5082 = vadd.s32 %v5078, 1
        %v5083 = vsel %vm5081, %v5082, %v5078
        %v5084 = vadd.s32 %v5079, %v5083
        %v5085 = vadd.s32 %v5084, 536870912
        %v5086 = vshrl.u32 %v5085, 30
        %v5087 = vshll.u32 %v5086, 30
        %v5088 = vsub.s32 %v5084, %v5087
        %vm5089 = vcmp.lt.s32.totalorder %v5088, 0
        %v5090 = vsub.s32 0, %v5088
        %v5091 = vsel %vm5089, %v5090, %v5088
        %v5092 = vclz %v5091
        %v5093 = vsub.s32 %v5092, 2
        %vm5094 = vcmp.gt.s32.totalorder 0, %v5093
        %v5095 = vsel %vm5094, 0, %v5093
        %v5096 = vsub.s32 32, %v5095
        %v5097 = vshll.u32 %v5088, %v5095
        %v5098 = vshrl.u32 %v5080, %v5096
        %v5099 = vor.u32 %v5097, %v5098
        %v5100 = vsub.s32 4294967266, %v5095
        %v5101 = vadd.s32 %v5100, 127
        %v5102 = vshll.u32 %v5101, 23
        %v5103 = vor.u32 4788187, %v5102
        %v5104 = vand.u32 2147483647, %v5103
        %v5106 = vcvt.s32.f32 %v5099
        %v5107 = vmul.f32 %v5106, %v5104
        %v5108 = vxor.u32 %v5107, 2147483648
        %v5109 = vsel %vm5026, %v5108, %v5107
        %v5110 = vsub.s32 4, %v5086
        %v5111 = vsel %vm5026, %v5110, %v5086
        %v5112 = vsel %vm5025, %v4384, %v5109
        %v5113 = vsel %vm5025, 0, %v5111
        %v5114 = vcosq.f32.pop %v5112
        %v5115 = vsinq.f32.pop %v5112
        %vm5116 = vweird.f32 %v4384
        %v5117 = vadd.s32 %v5113, 3
        %v5118 = vand.u32 %v5117, 3
        %vm5119 = vcmp.lt.s32.totalorder %v5118, 2
        %vm5120 = vcmp.eq.s32.totalorder %v5118, 0
        %v5121 = vxor.u32 %v5115, 2147483648
        %v5122 = vsel %vm5120, %v5114, %v5121
        %vm5123 = vcmp.eq.s32.totalorder %v5118, 2
        %v5124 = vxor.u32 %v5114, 2147483648
        %v5125 = vsel %vm5123, %v5124, %v5115
        %v5126 = vsel %vm5119, %v5122, %v5125
        %v5127 = vsel %vm5116, nan, %v5126
        %v5128 = vand.u32 2147483647, %v4386
        %vm5129 = vcmp.le.f32.partialorder %v5128, 0.7853982
        %vm5130 = vcmp.lt.s32.totalorder %v4386, 0
        %v5131 = vand.u32 %v4386, 2139095040
        %v5132 = vshrl.u32 %v5131, 23
        %v5133 = vsub.s32 %v5132, 127
        %v5134 = vand.u32 2147483647, %v4386
        %v5135 = vand.u32 %v5134, 8388607
        %v5136 = vor.u32 %v5135, 8388608
        %v5137 = vsub.s32 0, %v5136
        %v5138 = vadd.s32 %v5133, 1
        %vm5139 = vcmp.gt.s32.totalorder %v5138, 0
        %v5140 = vsel %vm5139, %v5138, 0
        %v5141 = vshrl.u32 %v5140, 5
        %v5142 = vand.u32 %v5140, 31
        %v5143 = vsub.s32 32, %v5142
        %v5144 = vshrl.u32 683565275, %v5143
        %v5145 = vshll.u32 683565275, %v5142
        %v5146 = vshrl.u32 2475754826, %v5143
        %v5147 = vor.u32 %v5145, %v5146
        %v5148 = vshll.u32 2475754826, %v5142
        %v5149 = vshrl.u32 2131351028, %v5143
        %v5150 = vor.u32 %v5148, %v5149
        %v5151 = vshll.u32 2131351028, %v5142
        %v5152 = vshrl.u32 2102212464, %v5143
        %v5153 = vor.u32 %v5151, %v5152
        %v5154 = vshll.u32 2102212464, %v5142
        %v5155 = vshrl.u32 920167782, %v5143
        %v5156 = vor.u32 %v5154, %v5155
        %v5157 = vshll.u32 920167782, %v5142
        %v5158 = vshrl.u32 1326507024, %v5143
        %v5159 = vor.u32 %v5157, %v5158
        %vm5160 = vcmp.lt.s32.totalorder %v5141, 1
        %vm5161 = vcmp.lt.s32.totalorder %v5141, 2
        %vm5162 = vcmp.lt.s32.totalorder %v5141, 3
        %vm5163 = vcmp.lt.s32.totalorder %v5141, 4
        %v5164 = vsel %vm5160, %v5144, %v5147
        %v5165 = vsel %vm5163, %v5153, 2102212464
        %v5166 = vsel %vm5162, %v5150, %v5165
        %v5167 = vsel %vm5161, %v5164, %v5166
        %v5168 = vsel %vm5160, %v5147, %v5150
        %v5169 = vsel %vm5163, %v5156, 920167782
        %v5170 = vsel %vm5162, %v5153, %v5169
        %v5171 = vsel %vm5161, %v5168, %v5170
        %v5172 = vsel %vm5160, %v5150, %v5153
        %v5173 = vsel %vm5163, %v5159, 1326507024
        %v5174 = vsel %vm5162, %v5156, %v5173
        %v5175 = vsel %vm5161, %v5172, %v5174
        %v5176 = vshll.u32 %v5136, 8
        %v5177 = vmul.u32.u64.compose %v5176, %v5175
        %v5178 = vextract.low.u32 %v5177
        %v5179 = vextract.high.u32 %v5177
        %v5180 = vmul.u32.u64.compose %v5176, %v5171
        %v5181 = vextract.low.u32 %v5180
        %v5182 = vextract.high.u32 %v5180
        %v5183 = vmul.u32 %v5176, %v5167
        %v5184 = vadd.s32 %v5179, %v5181
        %vm5185 = vc.u32 %v5179, %v5181
        %v5186 = vadd.s32 %v5182, 1
        %v5187 = vsel %vm5185, %v5186, %v5182
        %v5188 = vadd.s32 %v5183, %v5187
        %v5189 = vadd.s32 %v5188, 536870912
        %v5190 = vshrl.u32 %v5189, 30
        %v5191 = vshll.u32 %v5190, 30
        %v5192 = vsub.s32 %v5188, %v5191
        %vm5193 = vcmp.lt.s32.totalorder %v5192, 0
        %v5194 = vsub.s32 0, %v5192
        %v5195 = vsel %vm5193, %v5194, %v5192
        %v5196 = vclz %v5195
        %v5197 = vsub.s32 %v5196, 2
        %vm5198 = vcmp.gt.s32.totalorder 0, %v5197
        %v5199 = vsel %vm5198, 0, %v5197
        %v5200 = vsub.s32 32, %v5199
        %v5201 = vshll.u32 %v5192, %v5199
        %v5202 = vshrl.u32 %v5184, %v5200
        %v5203 = vor.u32 %v5201, %v5202
        %v5204 = vsub.s32 4294967266, %v5199
        %v5205 = vadd.s32 %v5204, 127
        %v5206 = vshll.u32 %v5205, 23
        %v5207 = vor.u32 4788187, %v5206
        %v5208 = vand.u32 2147483647, %v5207
        %v5210 = vcvt.s32.f32 %v5203
        %v5211 = vmul.f32 %v5210, %v5208
        %v5212 = vxor.u32 %v5211, 2147483648
        %v5213 = vsel %vm5130, %v5212, %v5211
        %v5214 = vsub.s32 4, %v5190
        %v5215 = vsel %vm5130, %v5214, %v5190
        %v5216 = vsel %vm5129, %v4386, %v5213
        %v5217 = vsel %vm5129, 0, %v5215
        %v5218 = vcosq.f32.pop %v5216
        %v5219 = vsinq.f32.pop %v5216
        %vm5220 = vweird.f32 %v4386
        %v5221 = vadd.s32 %v5217, 3
        %v5222 = vand.u32 %v5221, 3
        %vm5223 = vcmp.lt.s32.totalorder %v5222, 2
        %vm5224 = vcmp.eq.s32.totalorder %v5222, 0
        %v5225 = vxor.u32 %v5219, 2147483648
        %v5226 = vsel %vm5224, %v5218, %v5225
        %vm5227 = vcmp.eq.s32.totalorder %v5222, 2
        %v5228 = vxor.u32 %v5218, 2147483648
        %v5229 = vsel %vm5227, %v5228, %v5219
        %v5230 = vsel %vm5223, %v5226, %v5229
        %v5231 = vsel %vm5220, nan, %v5230
        %v5232 = vand.u32 2147483647, %v4301
        %vm5233 = vcmp.le.f32.partialorder %v5232, 0.7853982
        %vm5234 = vcmp.lt.s32.totalorder %v4301, 0
        %v5235 = vand.u32 %v4301, 2139095040
        %v5236 = vshrl.u32 %v5235, 23
        %v5237 = vsub.s32 %v5236, 127
        %v5238 = vand.u32 2147483647, %v4301
        %v5239 = vand.u32 %v5238, 8388607
        %v5240 = vor.u32 %v5239, 8388608
        %v5241 = vsub.s32 0, %v5240
        %v5242 = vadd.s32 %v5237, 1
        %vm5243 = vcmp.gt.s32.totalorder %v5242, 0
        %v5244 = vsel %vm5243, %v5242, 0
        %v5245 = vshrl.u32 %v5244, 5
        %v5246 = vand.u32 %v5244, 31
        %v5247 = vsub.s32 32, %v5246
        %v5248 = vshrl.u32 683565275, %v5247
        %v5249 = vshll.u32 683565275, %v5246
        %v5250 = vshrl.u32 2475754826, %v5247
        %v5251 = vor.u32 %v5249, %v5250
        %v5252 = vshll.u32 2475754826, %v5246
        %v5253 = vshrl.u32 2131351028, %v5247
        %v5254 = vor.u32 %v5252, %v5253
        %v5255 = vshll.u32 2131351028, %v5246
        %v5256 = vshrl.u32 2102212464, %v5247
        %v5257 = vor.u32 %v5255, %v5256
        %v5258 = vshll.u32 2102212464, %v5246
        %v5259 = vshrl.u32 920167782, %v5247
        %v5260 = vor.u32 %v5258, %v5259
        %v5261 = vshll.u32 920167782, %v5246
        %v5262 = vshrl.u32 1326507024, %v5247
        %v5263 = vor.u32 %v5261, %v5262
        %vm5264 = vcmp.lt.s32.totalorder %v5245, 1
        %vm5265 = vcmp.lt.s32.totalorder %v5245, 2
        %vm5266 = vcmp.lt.s32.totalorder %v5245, 3
        %vm5267 = vcmp.lt.s32.totalorder %v5245, 4
        %v5268 = vsel %vm5264, %v5248, %v5251
        %v5269 = vsel %vm5267, %v5257, 2102212464
        %v5270 = vsel %vm5266, %v5254, %v5269
        %v5271 = vsel %vm5265, %v5268, %v5270
        %v5272 = vsel %vm5264, %v5251, %v5254
        %v5273 = vsel %vm5267, %v5260, 920167782
        %v5274 = vsel %vm5266, %v5257, %v5273
        %v5275 = vsel %vm5265, %v5272, %v5274
        %v5276 = vsel %vm5264, %v5254, %v5257
        %v5277 = vsel %vm5267, %v5263, 1326507024
        %v5278 = vsel %vm5266, %v5260, %v5277
        %v5279 = vsel %vm5265, %v5276, %v5278
        %v5280 = vshll.u32 %v5240, 8
        %v5281 = vmul.u32.u64.compose %v5280, %v5279
        %v5282 = vextract.low.u32 %v5281
        %v5283 = vextract.high.u32 %v5281
        %v5284 = vmul.u32.u64.compose %v5280, %v5275
        %v5285 = vextract.low.u32 %v5284
        %v5286 = vextract.high.u32 %v5284
        %v5287 = vmul.u32 %v5280, %v5271
        %v5288 = vadd.s32 %v5283, %v5285
        %vm5289 = vc.u32 %v5283, %v5285
        %v5290 = vadd.s32 %v5286, 1
        %v5291 = vsel %vm5289, %v5290, %v5286
        %v5292 = vadd.s32 %v5287, %v5291
        %v5293 = vadd.s32 %v5292, 536870912
        %v5294 = vshrl.u32 %v5293, 30
        %v5295 = vshll.u32 %v5294, 30
        %v5296 = vsub.s32 %v5292, %v5295
        %vm5297 = vcmp.lt.s32.totalorder %v5296, 0
        %v5298 = vsub.s32 0, %v5296
        %v5299 = vsel %vm5297, %v5298, %v5296
        %v5300 = vclz %v5299
        %v5301 = vsub.s32 %v5300, 2
        %vm5302 = vcmp.gt.s32.totalorder 0, %v5301
        %v5303 = vsel %vm5302, 0, %v5301
        %v5304 = vsub.s32 32, %v5303
        %v5305 = vshll.u32 %v5296, %v5303
        %v5306 = vshrl.u32 %v5288, %v5304
        %v5307 = vor.u32 %v5305, %v5306
        %v5308 = vsub.s32 4294967266, %v5303
        %v5309 = vadd.s32 %v5308, 127
        %v5310 = vshll.u32 %v5309, 23
        %v5311 = vor.u32 4788187, %v5310
        %v5312 = vand.u32 2147483647, %v5311
        %v5314 = vcvt.s32.f32 %v5307
        %v5315 = vmul.f32 %v5314, %v5312
        %v5316 = vxor.u32 %v5315, 2147483648
        %v5317 = vsel %vm5234, %v5316, %v5315
        %v5318 = vsub.s32 4, %v5294
        %v5319 = vsel %vm5234, %v5318, %v5294
        %v5320 = vsel %vm5233, %v4301, %v5317
        %v5321 = vsel %vm5233, 0, %v5319
        %v5322 = vcosq.f32.pop %v5320
        %v5323 = vsinq.f32.pop %v5320
        %vm5324 = vweird.f32 %v4301
        %v5325 = vadd.s32 %v5321, 3
        %v5326 = vand.u32 %v5325, 3
        %vm5327 = vcmp.lt.s32.totalorder %v5326, 2
        %vm5328 = vcmp.eq.s32.totalorder %v5326, 0
        %v5329 = vxor.u32 %v5323, 2147483648
        %v5330 = vsel %vm5328, %v5322, %v5329
        %vm5331 = vcmp.eq.s32.totalorder %v5326, 2
        %v5332 = vxor.u32 %v5322, 2147483648
        %v5333 = vsel %vm5331, %v5332, %v5323
        %v5334 = vsel %vm5327, %v5330, %v5333
        %v5335 = vsel %vm5324, nan, %v5334
        %v5336 = vand.u32 2147483647, %v4303
        %vm5337 = vcmp.le.f32.partialorder %v5336, 0.7853982
        %vm5338 = vcmp.lt.s32.totalorder %v4303, 0
        %v5339 = vand.u32 %v4303, 2139095040
        %v5340 = vshrl.u32 %v5339, 23
        %v5341 = vsub.s32 %v5340, 127
        %v5342 = vand.u32 2147483647, %v4303
        %v5343 = vand.u32 %v5342, 8388607
        %v5344 = vor.u32 %v5343, 8388608
        %v5345 = vsub.s32 0, %v5344
        %v5346 = vadd.s32 %v5341, 1
        %vm5347 = vcmp.gt.s32.totalorder %v5346, 0
        %v5348 = vsel %vm5347, %v5346, 0
        %v5349 = vshrl.u32 %v5348, 5
        %v5350 = vand.u32 %v5348, 31
        %v5351 = vsub.s32 32, %v5350
        %v5352 = vshrl.u32 683565275, %v5351
        %v5353 = vshll.u32 683565275, %v5350
        %v5354 = vshrl.u32 2475754826, %v5351
        %v5355 = vor.u32 %v5353, %v5354
        %v5356 = vshll.u32 2475754826, %v5350
        %v5357 = vshrl.u32 2131351028, %v5351
        %v5358 = vor.u32 %v5356, %v5357
        %v5359 = vshll.u32 2131351028, %v5350
        %v5360 = vshrl.u32 2102212464, %v5351
        %v5361 = vor.u32 %v5359, %v5360
        %v5362 = vshll.u32 2102212464, %v5350
        %v5363 = vshrl.u32 920167782, %v5351
        %v5364 = vor.u32 %v5362, %v5363
        %v5365 = vshll.u32 920167782, %v5350
        %v5366 = vshrl.u32 1326507024, %v5351
        %v5367 = vor.u32 %v5365, %v5366
        %vm5368 = vcmp.lt.s32.totalorder %v5349, 1
        %vm5369 = vcmp.lt.s32.totalorder %v5349, 2
        %vm5370 = vcmp.lt.s32.totalorder %v5349, 3
        %vm5371 = vcmp.lt.s32.totalorder %v5349, 4
        %v5372 = vsel %vm5368, %v5352, %v5355
        %v5373 = vsel %vm5371, %v5361, 2102212464
        %v5374 = vsel %vm5370, %v5358, %v5373
        %v5375 = vsel %vm5369, %v5372, %v5374
        %v5376 = vsel %vm5368, %v5355, %v5358
        %v5377 = vsel %vm5371, %v5364, 920167782
        %v5378 = vsel %vm5370, %v5361, %v5377
        %v5379 = vsel %vm5369, %v5376, %v5378
        %v5380 = vsel %vm5368, %v5358, %v5361
        %v5381 = vsel %vm5371, %v5367, 1326507024
        %v5382 = vsel %vm5370, %v5364, %v5381
        %v5383 = vsel %vm5369, %v5380, %v5382
        %v5384 = vshll.u32 %v5344, 8
        %v5385 = vmul.u32.u64.compose %v5384, %v5383
        %v5386 = vextract.low.u32 %v5385
        %v5387 = vextract.high.u32 %v5385
        %v5388 = vmul.u32.u64.compose %v5384, %v5379
        %v5389 = vextract.low.u32 %v5388
        %v5390 = vextract.high.u32 %v5388
        %v5391 = vmul.u32 %v5384, %v5375
        %v5392 = vadd.s32 %v5387, %v5389
        %vm5393 = vc.u32 %v5387, %v5389
        %v5394 = vadd.s32 %v5390, 1
        %v5395 = vsel %vm5393, %v5394, %v5390
        %v5396 = vadd.s32 %v5391, %v5395
        %v5397 = vadd.s32 %v5396, 536870912
        %v5398 = vshrl.u32 %v5397, 30
        %v5399 = vshll.u32 %v5398, 30
        %v5400 = vsub.s32 %v5396, %v5399
        %vm5401 = vcmp.lt.s32.totalorder %v5400, 0
        %v5402 = vsub.s32 0, %v5400
        %v5403 = vsel %vm5401, %v5402, %v5400
        %v5404 = vclz %v5403
        %v5405 = vsub.s32 %v5404, 2
        %vm5406 = vcmp.gt.s32.totalorder 0, %v5405
        %v5407 = vsel %vm5406, 0, %v5405
        %v5408 = vsub.s32 32, %v5407
        %v5409 = vshll.u32 %v5400, %v5407
        %v5410 = vshrl.u32 %v5392, %v5408
        %v5411 = vor.u32 %v5409, %v5410
        %v5412 = vsub.s32 4294967266, %v5407
        %v5413 = vadd.s32 %v5412, 127
        %v5414 = vshll.u32 %v5413, 23
        %v5415 = vor.u32 4788187, %v5414
        %v5416 = vand.u32 2147483647, %v5415
        %v5418 = vcvt.s32.f32 %v5411
        %v5419 = vmul.f32 %v5418, %v5416
        %v5420 = vxor.u32 %v5419, 2147483648
        %v5421 = vsel %vm5338, %v5420, %v5419
        %v5422 = vsub.s32 4, %v5398
        %v5423 = vsel %vm5338, %v5422, %v5398
        %v5424 = vsel %vm5337, %v4303, %v5421
        %v5425 = vsel %vm5337, 0, %v5423
        %v5426 = vcosq.f32.pop %v5424
        %v5427 = vsinq.f32.pop %v5424
        %vm5428 = vweird.f32 %v4303
        %v5429 = vadd.s32 %v5425, 3
        %v5430 = vand.u32 %v5429, 3
        %vm5431 = vcmp.lt.s32.totalorder %v5430, 2
        %vm5432 = vcmp.eq.s32.totalorder %v5430, 0
        %v5433 = vxor.u32 %v5427, 2147483648
        %v5434 = vsel %vm5432, %v5426, %v5433
        %vm5435 = vcmp.eq.s32.totalorder %v5430, 2
        %v5436 = vxor.u32 %v5426, 2147483648
        %v5437 = vsel %vm5435, %v5436, %v5427
        %v5438 = vsel %vm5431, %v5434, %v5437
        %v5439 = vsel %vm5428, nan, %v5438
        %v5440 = vand.u32 2147483647, %v4390
        %vm5441 = vcmp.le.f32.partialorder %v5440, 0.7853982
        %vm5442 = vcmp.lt.s32.totalorder %v4390, 0
        %v5443 = vand.u32 %v4390, 2139095040
        %v5444 = vshrl.u32 %v5443, 23
        %v5445 = vsub.s32 %v5444, 127
        %v5446 = vand.u32 2147483647, %v4390
        %v5447 = vand.u32 %v5446, 8388607
        %v5448 = vor.u32 %v5447, 8388608
        %v5449 = vsub.s32 0, %v5448
        %v5450 = vadd.s32 %v5445, 1
        %vm5451 = vcmp.gt.s32.totalorder %v5450, 0
        %v5452 = vsel %vm5451, %v5450, 0
        %v5453 = vshrl.u32 %v5452, 5
        %v5454 = vand.u32 %v5452, 31
        %v5455 = vsub.s32 32, %v5454
        %v5456 = vshrl.u32 683565275, %v5455
        %v5457 = vshll.u32 683565275, %v5454
        %v5458 = vshrl.u32 2475754826, %v5455
        %v5459 = vor.u32 %v5457, %v5458
        %v5460 = vshll.u32 2475754826, %v5454
        %v5461 = vshrl.u32 2131351028, %v5455
        %v5462 = vor.u32 %v5460, %v5461
        %v5463 = vshll.u32 2131351028, %v5454
        %v5464 = vshrl.u32 2102212464, %v5455
        %v5465 = vor.u32 %v5463, %v5464
        %v5466 = vshll.u32 2102212464, %v5454
        %v5467 = vshrl.u32 920167782, %v5455
        %v5468 = vor.u32 %v5466, %v5467
        %v5469 = vshll.u32 920167782, %v5454
        %v5470 = vshrl.u32 1326507024, %v5455
        %v5471 = vor.u32 %v5469, %v5470
        %vm5472 = vcmp.lt.s32.totalorder %v5453, 1
        %vm5473 = vcmp.lt.s32.totalorder %v5453, 2
        %vm5474 = vcmp.lt.s32.totalorder %v5453, 3
        %vm5475 = vcmp.lt.s32.totalorder %v5453, 4
        %v5476 = vsel %vm5472, %v5456, %v5459
        %v5477 = vsel %vm5475, %v5465, 2102212464
        %v5478 = vsel %vm5474, %v5462, %v5477
        %v5479 = vsel %vm5473, %v5476, %v5478
        %v5480 = vsel %vm5472, %v5459, %v5462
        %v5481 = vsel %vm5475, %v5468, 920167782
        %v5482 = vsel %vm5474, %v5465, %v5481
        %v5483 = vsel %vm5473, %v5480, %v5482
        %v5484 = vsel %vm5472, %v5462, %v5465
        %v5485 = vsel %vm5475, %v5471, 1326507024
        %v5486 = vsel %vm5474, %v5468, %v5485
        %v5487 = vsel %vm5473, %v5484, %v5486
        %v5488 = vshll.u32 %v5448, 8
        %v5489 = vmul.u32.u64.compose %v5488, %v5487
        %v5490 = vextract.low.u32 %v5489
        %v5491 = vextract.high.u32 %v5489
        %v5492 = vmul.u32.u64.compose %v5488, %v5483
        %v5493 = vextract.low.u32 %v5492
        %v5494 = vextract.high.u32 %v5492
        %v5495 = vmul.u32 %v5488, %v5479
        %v5496 = vadd.s32 %v5491, %v5493
        %vm5497 = vc.u32 %v5491, %v5493
        %v5498 = vadd.s32 %v5494, 1
        %v5499 = vsel %vm5497, %v5498, %v5494
        %v5500 = vadd.s32 %v5495, %v5499
        %v5501 = vadd.s32 %v5500, 536870912
        %v5502 = vshrl.u32 %v5501, 30
        %v5503 = vshll.u32 %v5502, 30
        %v5504 = vsub.s32 %v5500, %v5503
        %vm5505 = vcmp.lt.s32.totalorder %v5504, 0
        %v5506 = vsub.s32 0, %v5504
        %v5507 = vsel %vm5505, %v5506, %v5504
        %v5508 = vclz %v5507
        %v5509 = vsub.s32 %v5508, 2
        %vm5510 = vcmp.gt.s32.totalorder 0, %v5509
        %v5511 = vsel %vm5510, 0, %v5509
        %v5512 = vsub.s32 32, %v5511
        %v5513 = vshll.u32 %v5504, %v5511
        %v5514 = vshrl.u32 %v5496, %v5512
        %v5515 = vor.u32 %v5513, %v5514
        %v5516 = vsub.s32 4294967266, %v5511
        %v5517 = vadd.s32 %v5516, 127
        %v5518 = vshll.u32 %v5517, 23
        %v5519 = vor.u32 4788187, %v5518
        %v5520 = vand.u32 2147483647, %v5519
        %v5522 = vcvt.s32.f32 %v5515
        %v5523 = vmul.f32 %v5522, %v5520
        %v5524 = vxor.u32 %v5523, 2147483648
        %v5525 = vsel %vm5442, %v5524, %v5523
        %v5526 = vsub.s32 4, %v5502
        %v5527 = vsel %vm5442, %v5526, %v5502
        %v5528 = vsel %vm5441, %v4390, %v5525
        %v5529 = vsel %vm5441, 0, %v5527
        %v5530 = vcosq.f32.pop %v5528
        %v5531 = vsinq.f32.pop %v5528
        %vm5532 = vweird.f32 %v4390
        %v5533 = vadd.s32 %v5529, 3
        %v5534 = vand.u32 %v5533, 3
        %vm5535 = vcmp.lt.s32.totalorder %v5534, 2
        %vm5536 = vcmp.eq.s32.totalorder %v5534, 0
        %v5537 = vxor.u32 %v5531, 2147483648
        %v5538 = vsel %vm5536, %v5530, %v5537
        %vm5539 = vcmp.eq.s32.totalorder %v5534, 2
        %v5540 = vxor.u32 %v5530, 2147483648
        %v5541 = vsel %vm5539, %v5540, %v5531
        %v5542 = vsel %vm5535, %v5538, %v5541
        %v5543 = vsel %vm5532, nan, %v5542
        %v5544 = vand.u32 2147483647, %v4392
        %vm5545 = vcmp.le.f32.partialorder %v5544, 0.7853982
        %vm5546 = vcmp.lt.s32.totalorder %v4392, 0
        %v5547 = vand.u32 %v4392, 2139095040
        %v5548 = vshrl.u32 %v5547, 23
        %v5549 = vsub.s32 %v5548, 127
        %v5550 = vand.u32 2147483647, %v4392
        %v5551 = vand.u32 %v5550, 8388607
        %v5552 = vor.u32 %v5551, 8388608
        %v5553 = vsub.s32 0, %v5552
        %v5554 = vadd.s32 %v5549, 1
        %vm5555 = vcmp.gt.s32.totalorder %v5554, 0
        %v5556 = vsel %vm5555, %v5554, 0
        %v5557 = vshrl.u32 %v5556, 5
        %v5558 = vand.u32 %v5556, 31
        %v5559 = vsub.s32 32, %v5558
        %v5560 = vshrl.u32 683565275, %v5559
        %v5561 = vshll.u32 683565275, %v5558
        %v5562 = vshrl.u32 2475754826, %v5559
        %v5563 = vor.u32 %v5561, %v5562
        %v5564 = vshll.u32 2475754826, %v5558
        %v5565 = vshrl.u32 2131351028, %v5559
        %v5566 = vor.u32 %v5564, %v5565
        %v5567 = vshll.u32 2131351028, %v5558
        %v5568 = vshrl.u32 2102212464, %v5559
        %v5569 = vor.u32 %v5567, %v5568
        %v5570 = vshll.u32 2102212464, %v5558
        %v5571 = vshrl.u32 920167782, %v5559
        %v5572 = vor.u32 %v5570, %v5571
        %v5573 = vshll.u32 920167782, %v5558
        %v5574 = vshrl.u32 1326507024, %v5559
        %v5575 = vor.u32 %v5573, %v5574
        %vm5576 = vcmp.lt.s32.totalorder %v5557, 1
        %vm5577 = vcmp.lt.s32.totalorder %v5557, 2
        %vm5578 = vcmp.lt.s32.totalorder %v5557, 3
        %vm5579 = vcmp.lt.s32.totalorder %v5557, 4
        %v5580 = vsel %vm5576, %v5560, %v5563
        %v5581 = vsel %vm5579, %v5569, 2102212464
        %v5582 = vsel %vm5578, %v5566, %v5581
        %v5583 = vsel %vm5577, %v5580, %v5582
        %v5584 = vsel %vm5576, %v5563, %v5566
        %v5585 = vsel %vm5579, %v5572, 920167782
        %v5586 = vsel %vm5578, %v5569, %v5585
        %v5587 = vsel %vm5577, %v5584, %v5586
        %v5588 = vsel %vm5576, %v5566, %v5569
        %v5589 = vsel %vm5579, %v5575, 1326507024
        %v5590 = vsel %vm5578, %v5572, %v5589
        %v5591 = vsel %vm5577, %v5588, %v5590
        %v5592 = vshll.u32 %v5552, 8
        %v5593 = vmul.u32.u64.compose %v5592, %v5591
        %v5594 = vextract.low.u32 %v5593
        %v5595 = vextract.high.u32 %v5593
        %v5596 = vmul.u32.u64.compose %v5592, %v5587
        %v5597 = vextract.low.u32 %v5596
        %v5598 = vextract.high.u32 %v5596
        %v5599 = vmul.u32 %v5592, %v5583
        %v5600 = vadd.s32 %v5595, %v5597
        %vm5601 = vc.u32 %v5595, %v5597
        %v5602 = vadd.s32 %v5598, 1
        %v5603 = vsel %vm5601, %v5602, %v5598
        %v5604 = vadd.s32 %v5599, %v5603
        %v5605 = vadd.s32 %v5604, 536870912
        %v5606 = vshrl.u32 %v5605, 30
        %v5607 = vshll.u32 %v5606, 30
        %v5608 = vsub.s32 %v5604, %v5607
        %vm5609 = vcmp.lt.s32.totalorder %v5608, 0
        %v5610 = vsub.s32 0, %v5608
        %v5611 = vsel %vm5609, %v5610, %v5608
        %v5612 = vclz %v5611
        %v5613 = vsub.s32 %v5612, 2
        %vm5614 = vcmp.gt.s32.totalorder 0, %v5613
        %v5615 = vsel %vm5614, 0, %v5613
        %v5616 = vsub.s32 32, %v5615
        %v5617 = vshll.u32 %v5608, %v5615
        %v5618 = vshrl.u32 %v5600, %v5616
        %v5619 = vor.u32 %v5617, %v5618
        %v5620 = vsub.s32 4294967266, %v5615
        %v5621 = vadd.s32 %v5620, 127
        %v5622 = vshll.u32 %v5621, 23
        %v5623 = vor.u32 4788187, %v5622
        %v5624 = vand.u32 2147483647, %v5623
        %v5626 = vcvt.s32.f32 %v5619
        %v5627 = vmul.f32 %v5626, %v5624
        %v5628 = vxor.u32 %v5627, 2147483648
        %v5629 = vsel %vm5546, %v5628, %v5627
        %v5630 = vsub.s32 4, %v5606
        %v5631 = vsel %vm5546, %v5630, %v5606
        %v5632 = vsel %vm5545, %v4392, %v5629
        %v5633 = vsel %vm5545, 0, %v5631
        %v5634 = vcosq.f32.pop %v5632
        %v5635 = vsinq.f32.pop %v5632
        %vm5636 = vweird.f32 %v4392
        %v5637 = vadd.s32 %v5633, 3
        %v5638 = vand.u32 %v5637, 3
        %vm5639 = vcmp.lt.s32.totalorder %v5638, 2
        %vm5640 = vcmp.eq.s32.totalorder %v5638, 0
        %v5641 = vxor.u32 %v5635, 2147483648
        %v5642 = vsel %vm5640, %v5634, %v5641
        %vm5643 = vcmp.eq.s32.totalorder %v5638, 2
        %v5644 = vxor.u32 %v5634, 2147483648
        %v5645 = vsel %vm5643, %v5644, %v5635
        %v5646 = vsel %vm5639, %v5642, %v5645
        %v5647 = vsel %vm5636, nan, %v5646
        %v5648 = vand.u32 2147483647, %v4307
        %vm5649 = vcmp.le.f32.partialorder %v5648, 0.7853982
        %vm5650 = vcmp.lt.s32.totalorder %v4307, 0
        %v5651 = vand.u32 %v4307, 2139095040
        %v5652 = vshrl.u32 %v5651, 23
        %v5653 = vsub.s32 %v5652, 127
        %v5654 = vand.u32 2147483647, %v4307
        %v5655 = vand.u32 %v5654, 8388607
        %v5656 = vor.u32 %v5655, 8388608
        %v5657 = vsub.s32 0, %v5656
        %v5658 = vadd.s32 %v5653, 1
        %vm5659 = vcmp.gt.s32.totalorder %v5658, 0
        %v5660 = vsel %vm5659, %v5658, 0
        %v5661 = vshrl.u32 %v5660, 5
        %v5662 = vand.u32 %v5660, 31
        %v5663 = vsub.s32 32, %v5662
        %v5664 = vshrl.u32 683565275, %v5663
        %v5665 = vshll.u32 683565275, %v5662
        %v5666 = vshrl.u32 2475754826, %v5663
        %v5667 = vor.u32 %v5665, %v5666
        %v5668 = vshll.u32 2475754826, %v5662
        %v5669 = vshrl.u32 2131351028, %v5663
        %v5670 = vor.u32 %v5668, %v5669
        %v5671 = vshll.u32 2131351028, %v5662
        %v5672 = vshrl.u32 2102212464, %v5663
        %v5673 = vor.u32 %v5671, %v5672
        %v5674 = vshll.u32 2102212464, %v5662
        %v5675 = vshrl.u32 920167782, %v5663
        %v5676 = vor.u32 %v5674, %v5675
        %v5677 = vshll.u32 920167782, %v5662
        %v5678 = vshrl.u32 1326507024, %v5663
        %v5679 = vor.u32 %v5677, %v5678
        %vm5680 = vcmp.lt.s32.totalorder %v5661, 1
        %vm5681 = vcmp.lt.s32.totalorder %v5661, 2
        %vm5682 = vcmp.lt.s32.totalorder %v5661, 3
        %vm5683 = vcmp.lt.s32.totalorder %v5661, 4
        %v5684 = vsel %vm5680, %v5664, %v5667
        %v5685 = vsel %vm5683, %v5673, 2102212464
        %v5686 = vsel %vm5682, %v5670, %v5685
        %v5687 = vsel %vm5681, %v5684, %v5686
        %v5688 = vsel %vm5680, %v5667, %v5670
        %v5689 = vsel %vm5683, %v5676, 920167782
        %v5690 = vsel %vm5682, %v5673, %v5689
        %v5691 = vsel %vm5681, %v5688, %v5690
        %v5692 = vsel %vm5680, %v5670, %v5673
        %v5693 = vsel %vm5683, %v5679, 1326507024
        %v5694 = vsel %vm5682, %v5676, %v5693
        %v5695 = vsel %vm5681, %v5692, %v5694
        %v5696 = vshll.u32 %v5656, 8
        %v5697 = vmul.u32.u64.compose %v5696, %v5695
        %v5698 = vextract.low.u32 %v5697
        %v5699 = vextract.high.u32 %v5697
        %v5700 = vmul.u32.u64.compose %v5696, %v5691
        %v5701 = vextract.low.u32 %v5700
        %v5702 = vextract.high.u32 %v5700
        %v5703 = vmul.u32 %v5696, %v5687
        %v5704 = vadd.s32 %v5699, %v5701
        %vm5705 = vc.u32 %v5699, %v5701
        %v5706 = vadd.s32 %v5702, 1
        %v5707 = vsel %vm5705, %v5706, %v5702
        %v5708 = vadd.s32 %v5703, %v5707
        %v5709 = vadd.s32 %v5708, 536870912
        %v5710 = vshrl.u32 %v5709, 30
        %v5711 = vshll.u32 %v5710, 30
        %v5712 = vsub.s32 %v5708, %v5711
        %vm5713 = vcmp.lt.s32.totalorder %v5712, 0
        %v5714 = vsub.s32 0, %v5712
        %v5715 = vsel %vm5713, %v5714, %v5712
        %v5716 = vclz %v5715
        %v5717 = vsub.s32 %v5716, 2
        %vm5718 = vcmp.gt.s32.totalorder 0, %v5717
        %v5719 = vsel %vm5718, 0, %v5717
        %v5720 = vsub.s32 32, %v5719
        %v5721 = vshll.u32 %v5712, %v5719
        %v5722 = vshrl.u32 %v5704, %v5720
        %v5723 = vor.u32 %v5721, %v5722
        %v5724 = vsub.s32 4294967266, %v5719
        %v5725 = vadd.s32 %v5724, 127
        %v5726 = vshll.u32 %v5725, 23
        %v5727 = vor.u32 4788187, %v5726
        %v5728 = vand.u32 2147483647, %v5727
        %v5730 = vcvt.s32.f32 %v5723
        %v5731 = vmul.f32 %v5730, %v5728
        %v5732 = vxor.u32 %v5731, 2147483648
        %v5733 = vsel %vm5650, %v5732, %v5731
        %v5734 = vsub.s32 4, %v5710
        %v5735 = vsel %vm5650, %v5734, %v5710
        %v5736 = vsel %vm5649, %v4307, %v5733
        %v5737 = vsel %vm5649, 0, %v5735
        %v5738 = vcosq.f32.pop %v5736
        %v5739 = vsinq.f32.pop %v5736
        %vm5740 = vweird.f32 %v4307
        %v5741 = vadd.s32 %v5737, 3
        %v5742 = vand.u32 %v5741, 3
        %vm5743 = vcmp.lt.s32.totalorder %v5742, 2
        %vm5744 = vcmp.eq.s32.totalorder %v5742, 0
        %v5745 = vxor.u32 %v5739, 2147483648
        %v5746 = vsel %vm5744, %v5738, %v5745
        %vm5747 = vcmp.eq.s32.totalorder %v5742, 2
        %v5748 = vxor.u32 %v5738, 2147483648
        %v5749 = vsel %vm5747, %v5748, %v5739
        %v5750 = vsel %vm5743, %v5746, %v5749
        %v5751 = vsel %vm5740, nan, %v5750
        %v5752 = vand.u32 2147483647, %v4309
        %vm5753 = vcmp.le.f32.partialorder %v5752, 0.7853982
        %vm5754 = vcmp.lt.s32.totalorder %v4309, 0
        %v5755 = vand.u32 %v4309, 2139095040
        %v5756 = vshrl.u32 %v5755, 23
        %v5757 = vsub.s32 %v5756, 127
        %v5758 = vand.u32 2147483647, %v4309
        %v5759 = vand.u32 %v5758, 8388607
        %v5760 = vor.u32 %v5759, 8388608
        %v5761 = vsub.s32 0, %v5760
        %v5762 = vadd.s32 %v5757, 1
        %vm5763 = vcmp.gt.s32.totalorder %v5762, 0
        %v5764 = vsel %vm5763, %v5762, 0
        %v5765 = vshrl.u32 %v5764, 5
        %v5766 = vand.u32 %v5764, 31
        %v5767 = vsub.s32 32, %v5766
        %v5768 = vshrl.u32 683565275, %v5767
        %v5769 = vshll.u32 683565275, %v5766
        %v5770 = vshrl.u32 2475754826, %v5767
        %v5771 = vor.u32 %v5769, %v5770
        %v5772 = vshll.u32 2475754826, %v5766
        %v5773 = vshrl.u32 2131351028, %v5767
        %v5774 = vor.u32 %v5772, %v5773
        %v5775 = vshll.u32 2131351028, %v5766
        %v5776 = vshrl.u32 2102212464, %v5767
        %v5777 = vor.u32 %v5775, %v5776
        %v5778 = vshll.u32 2102212464, %v5766
        %v5779 = vshrl.u32 920167782, %v5767
        %v5780 = vor.u32 %v5778, %v5779
        %v5781 = vshll.u32 920167782, %v5766
        %v5782 = vshrl.u32 1326507024, %v5767
        %v5783 = vor.u32 %v5781, %v5782
        %vm5784 = vcmp.lt.s32.totalorder %v5765, 1
        %vm5785 = vcmp.lt.s32.totalorder %v5765, 2
        %vm5786 = vcmp.lt.s32.totalorder %v5765, 3
        %vm5787 = vcmp.lt.s32.totalorder %v5765, 4
        %v5788 = vsel %vm5784, %v5768, %v5771
        %v5789 = vsel %vm5787, %v5777, 2102212464
        %v5790 = vsel %vm5786, %v5774, %v5789
        %v5791 = vsel %vm5785, %v5788, %v5790
        %v5792 = vsel %vm5784, %v5771, %v5774
        %v5793 = vsel %vm5787, %v5780, 920167782
        %v5794 = vsel %vm5786, %v5777, %v5793
        %v5795 = vsel %vm5785, %v5792, %v5794
        %v5796 = vsel %vm5784, %v5774, %v5777
        %v5797 = vsel %vm5787, %v5783, 1326507024
        %v5798 = vsel %vm5786, %v5780, %v5797
        %v5799 = vsel %vm5785, %v5796, %v5798
        %v5800 = vshll.u32 %v5760, 8
        %v5801 = vmul.u32.u64.compose %v5800, %v5799
        %v5802 = vextract.low.u32 %v5801
        %v5803 = vextract.high.u32 %v5801
        %v5804 = vmul.u32.u64.compose %v5800, %v5795
        %v5805 = vextract.low.u32 %v5804
        %v5806 = vextract.high.u32 %v5804
        %v5807 = vmul.u32 %v5800, %v5791
        %v5808 = vadd.s32 %v5803, %v5805
        %vm5809 = vc.u32 %v5803, %v5805
        %v5810 = vadd.s32 %v5806, 1
        %v5811 = vsel %vm5809, %v5810, %v5806
        %v5812 = vadd.s32 %v5807, %v5811
        %v5813 = vadd.s32 %v5812, 536870912
        %v5814 = vshrl.u32 %v5813, 30
        %v5815 = vshll.u32 %v5814, 30
        %v5816 = vsub.s32 %v5812, %v5815
        %vm5817 = vcmp.lt.s32.totalorder %v5816, 0
        %v5818 = vsub.s32 0, %v5816
        %v5819 = vsel %vm5817, %v5818, %v5816
        %v5820 = vclz %v5819
        %v5821 = vsub.s32 %v5820, 2
        %vm5822 = vcmp.gt.s32.totalorder 0, %v5821
        %v5823 = vsel %vm5822, 0, %v5821
        %v5824 = vsub.s32 32, %v5823
        %v5825 = vshll.u32 %v5816, %v5823
        %v5826 = vshrl.u32 %v5808, %v5824
        %v5827 = vor.u32 %v5825, %v5826
        %v5828 = vsub.s32 4294967266, %v5823
        %v5829 = vadd.s32 %v5828, 127
        %v5830 = vshll.u32 %v5829, 23
        %v5831 = vor.u32 4788187, %v5830
        %v5832 = vand.u32 2147483647, %v5831
        %v5834 = vcvt.s32.f32 %v5827
        %v5835 = vmul.f32 %v5834, %v5832
        %v5836 = vxor.u32 %v5835, 2147483648
        %v5837 = vsel %vm5754, %v5836, %v5835
        %v5838 = vsub.s32 4, %v5814
        %v5839 = vsel %vm5754, %v5838, %v5814
        %v5840 = vsel %vm5753, %v4309, %v5837
        %v5841 = vsel %vm5753, 0, %v5839
        %v5842 = vcosq.f32.pop %v5840
        %v5843 = vsinq.f32.pop %v5840
        %vm5844 = vweird.f32 %v4309
        %v5845 = vadd.s32 %v5841, 3
        %v5846 = vand.u32 %v5845, 3
        %vm5847 = vcmp.lt.s32.totalorder %v5846, 2
        %vm5848 = vcmp.eq.s32.totalorder %v5846, 0
        %v5849 = vxor.u32 %v5843, 2147483648
        %v5850 = vsel %vm5848, %v5842, %v5849
        %vm5851 = vcmp.eq.s32.totalorder %v5846, 2
        %v5852 = vxor.u32 %v5842, 2147483648
        %v5853 = vsel %vm5851, %v5852, %v5843
        %v5854 = vsel %vm5847, %v5850, %v5853
        %v5855 = vsel %vm5844, nan, %v5854
        %v5856 = vand.u32 2147483647, %v4396
        %vm5857 = vcmp.le.f32.partialorder %v5856, 0.7853982
        %vm5858 = vcmp.lt.s32.totalorder %v4396, 0
        %v5859 = vand.u32 %v4396, 2139095040
        %v5860 = vshrl.u32 %v5859, 23
        %v5861 = vsub.s32 %v5860, 127
        %v5862 = vand.u32 2147483647, %v4396
        %v5863 = vand.u32 %v5862, 8388607
        %v5864 = vor.u32 %v5863, 8388608
        %v5865 = vsub.s32 0, %v5864
        %v5866 = vadd.s32 %v5861, 1
        %vm5867 = vcmp.gt.s32.totalorder %v5866, 0
        %v5868 = vsel %vm5867, %v5866, 0
        %v5869 = vshrl.u32 %v5868, 5
        %v5870 = vand.u32 %v5868, 31
        %v5871 = vsub.s32 32, %v5870
        %v5872 = vshrl.u32 683565275, %v5871
        %v5873 = vshll.u32 683565275, %v5870
        %v5874 = vshrl.u32 2475754826, %v5871
        %v5875 = vor.u32 %v5873, %v5874
        %v5876 = vshll.u32 2475754826, %v5870
        %v5877 = vshrl.u32 2131351028, %v5871
        %v5878 = vor.u32 %v5876, %v5877
        %v5879 = vshll.u32 2131351028, %v5870
        %v5880 = vshrl.u32 2102212464, %v5871
        %v5881 = vor.u32 %v5879, %v5880
        %v5882 = vshll.u32 2102212464, %v5870
        %v5883 = vshrl.u32 920167782, %v5871
        %v5884 = vor.u32 %v5882, %v5883
        %v5885 = vshll.u32 920167782, %v5870
        %v5886 = vshrl.u32 1326507024, %v5871
        %v5887 = vor.u32 %v5885, %v5886
        %vm5888 = vcmp.lt.s32.totalorder %v5869, 1
        %vm5889 = vcmp.lt.s32.totalorder %v5869, 2
        %vm5890 = vcmp.lt.s32.totalorder %v5869, 3
        %vm5891 = vcmp.lt.s32.totalorder %v5869, 4
        %v5892 = vsel %vm5888, %v5872, %v5875
        %v5893 = vsel %vm5891, %v5881, 2102212464
        %v5894 = vsel %vm5890, %v5878, %v5893
        %v5895 = vsel %vm5889, %v5892, %v5894
        %v5896 = vsel %vm5888, %v5875, %v5878
        %v5897 = vsel %vm5891, %v5884, 920167782
        %v5898 = vsel %vm5890, %v5881, %v5897
        %v5899 = vsel %vm5889, %v5896, %v5898
        %v5900 = vsel %vm5888, %v5878, %v5881
        %v5901 = vsel %vm5891, %v5887, 1326507024
        %v5902 = vsel %vm5890, %v5884, %v5901
        %v5903 = vsel %vm5889, %v5900, %v5902
        %v5904 = vshll.u32 %v5864, 8
        %v5905 = vmul.u32.u64.compose %v5904, %v5903
        %v5906 = vextract.low.u32 %v5905
        %v5907 = vextract.high.u32 %v5905
        %v5908 = vmul.u32.u64.compose %v5904, %v5899
        %v5909 = vextract.low.u32 %v5908
        %v5910 = vextract.high.u32 %v5908
        %v5911 = vmul.u32 %v5904, %v5895
        %v5912 = vadd.s32 %v5907, %v5909
        %vm5913 = vc.u32 %v5907, %v5909
        %v5914 = vadd.s32 %v5910, 1
        %v5915 = vsel %vm5913, %v5914, %v5910
        %v5916 = vadd.s32 %v5911, %v5915
        %v5917 = vadd.s32 %v5916, 536870912
        %v5918 = vshrl.u32 %v5917, 30
        %v5919 = vshll.u32 %v5918, 30
        %v5920 = vsub.s32 %v5916, %v5919
        %vm5921 = vcmp.lt.s32.totalorder %v5920, 0
        %v5922 = vsub.s32 0, %v5920
        %v5923 = vsel %vm5921, %v5922, %v5920
        %v5924 = vclz %v5923
        %v5925 = vsub.s32 %v5924, 2
        %vm5926 = vcmp.gt.s32.totalorder 0, %v5925
        %v5927 = vsel %vm5926, 0, %v5925
        %v5928 = vsub.s32 32, %v5927
        %v5929 = vshll.u32 %v5920, %v5927
        %v5930 = vshrl.u32 %v5912, %v5928
        %v5931 = vor.u32 %v5929, %v5930
        %v5932 = vsub.s32 4294967266, %v5927
        %v5933 = vadd.s32 %v5932, 127
        %v5934 = vshll.u32 %v5933, 23
        %v5935 = vor.u32 4788187, %v5934
        %v5936 = vand.u32 2147483647, %v5935
        %v5938 = vcvt.s32.f32 %v5931
        %v5939 = vmul.f32 %v5938, %v5936
        %v5940 = vxor.u32 %v5939, 2147483648
        %v5941 = vsel %vm5858, %v5940, %v5939
        %v5942 = vsub.s32 4, %v5918
        %v5943 = vsel %vm5858, %v5942, %v5918
        %v5944 = vsel %vm5857, %v4396, %v5941
        %v5945 = vsel %vm5857, 0, %v5943
        %v5946 = vcosq.f32.pop %v5944
        %v5947 = vsinq.f32.pop %v5944
        %vm5948 = vweird.f32 %v4396
        %v5949 = vadd.s32 %v5945, 3
        %v5950 = vand.u32 %v5949, 3
        %vm5951 = vcmp.lt.s32.totalorder %v5950, 2
        %vm5952 = vcmp.eq.s32.totalorder %v5950, 0
        %v5953 = vxor.u32 %v5947, 2147483648
        %v5954 = vsel %vm5952, %v5946, %v5953
        %vm5955 = vcmp.eq.s32.totalorder %v5950, 2
        %v5956 = vxor.u32 %v5946, 2147483648
        %v5957 = vsel %vm5955, %v5956, %v5947
        %v5958 = vsel %vm5951, %v5954, %v5957
        %v5959 = vsel %vm5948, nan, %v5958
        %v5960 = vand.u32 2147483647, %v4398
        %vm5961 = vcmp.le.f32.partialorder %v5960, 0.7853982
        %vm5962 = vcmp.lt.s32.totalorder %v4398, 0
        %v5963 = vand.u32 %v4398, 2139095040
        %v5964 = vshrl.u32 %v5963, 23
        %v5965 = vsub.s32 %v5964, 127
        %v5966 = vand.u32 2147483647, %v4398
        %v5967 = vand.u32 %v5966, 8388607
        %v5968 = vor.u32 %v5967, 8388608
        %v5969 = vsub.s32 0, %v5968
        %v5970 = vadd.s32 %v5965, 1
        %vm5971 = vcmp.gt.s32.totalorder %v5970, 0
        %v5972 = vsel %vm5971, %v5970, 0
        %v5973 = vshrl.u32 %v5972, 5
        %v5974 = vand.u32 %v5972, 31
        %v5975 = vsub.s32 32, %v5974
        %v5976 = vshrl.u32 683565275, %v5975
        %v5977 = vshll.u32 683565275, %v5974
        %v5978 = vshrl.u32 2475754826, %v5975
        %v5979 = vor.u32 %v5977, %v5978
        %v5980 = vshll.u32 2475754826, %v5974
        %v5981 = vshrl.u32 2131351028, %v5975
        %v5982 = vor.u32 %v5980, %v5981
        %v5983 = vshll.u32 2131351028, %v5974
        %v5984 = vshrl.u32 2102212464, %v5975
        %v5985 = vor.u32 %v5983, %v5984
        %v5986 = vshll.u32 2102212464, %v5974
        %v5987 = vshrl.u32 920167782, %v5975
        %v5988 = vor.u32 %v5986, %v5987
        %v5989 = vshll.u32 920167782, %v5974
        %v5990 = vshrl.u32 1326507024, %v5975
        %v5991 = vor.u32 %v5989, %v5990
        %vm5992 = vcmp.lt.s32.totalorder %v5973, 1
        %vm5993 = vcmp.lt.s32.totalorder %v5973, 2
        %vm5994 = vcmp.lt.s32.totalorder %v5973, 3
        %vm5995 = vcmp.lt.s32.totalorder %v5973, 4
        %v5996 = vsel %vm5992, %v5976, %v5979
        %v5997 = vsel %vm5995, %v5985, 2102212464
        %v5998 = vsel %vm5994, %v5982, %v5997
        %v5999 = vsel %vm5993, %v5996, %v5998
        %v6000 = vsel %vm5992, %v5979, %v5982
        %v6001 = vsel %vm5995, %v5988, 920167782
        %v6002 = vsel %vm5994, %v5985, %v6001
        %v6003 = vsel %vm5993, %v6000, %v6002
        %v6004 = vsel %vm5992, %v5982, %v5985
        %v6005 = vsel %vm5995, %v5991, 1326507024
        %v6006 = vsel %vm5994, %v5988, %v6005
        %v6007 = vsel %vm5993, %v6004, %v6006
        %v6008 = vshll.u32 %v5968, 8
        %v6009 = vmul.u32.u64.compose %v6008, %v6007
        %v6010 = vextract.low.u32 %v6009
        %v6011 = vextract.high.u32 %v6009
        %v6012 = vmul.u32.u64.compose %v6008, %v6003
        %v6013 = vextract.low.u32 %v6012
        %v6014 = vextract.high.u32 %v6012
        %v6015 = vmul.u32 %v6008, %v5999
        %v6016 = vadd.s32 %v6011, %v6013
        %vm6017 = vc.u32 %v6011, %v6013
        %v6018 = vadd.s32 %v6014, 1
        %v6019 = vsel %vm6017, %v6018, %v6014
        %v6020 = vadd.s32 %v6015, %v6019
        %v6021 = vadd.s32 %v6020, 536870912
        %v6022 = vshrl.u32 %v6021, 30
        %v6023 = vshll.u32 %v6022, 30
        %v6024 = vsub.s32 %v6020, %v6023
        %vm6025 = vcmp.lt.s32.totalorder %v6024, 0
        %v6026 = vsub.s32 0, %v6024
        %v6027 = vsel %vm6025, %v6026, %v6024
        %v6028 = vclz %v6027
        %v6029 = vsub.s32 %v6028, 2
        %vm6030 = vcmp.gt.s32.totalorder 0, %v6029
        %v6031 = vsel %vm6030, 0, %v6029
        %v6032 = vsub.s32 32, %v6031
        %v6033 = vshll.u32 %v6024, %v6031
        %v6034 = vshrl.u32 %v6016, %v6032
        %v6035 = vor.u32 %v6033, %v6034
        %v6036 = vsub.s32 4294967266, %v6031
        %v6037 = vadd.s32 %v6036, 127
        %v6038 = vshll.u32 %v6037, 23
        %v6039 = vor.u32 4788187, %v6038
        %v6040 = vand.u32 2147483647, %v6039
        %v6042 = vcvt.s32.f32 %v6035
        %v6043 = vmul.f32 %v6042, %v6040
        %v6044 = vxor.u32 %v6043, 2147483648
        %v6045 = vsel %vm5962, %v6044, %v6043
        %v6046 = vsub.s32 4, %v6022
        %v6047 = vsel %vm5962, %v6046, %v6022
        %v6048 = vsel %vm5961, %v4398, %v6045
        %v6049 = vsel %vm5961, 0, %v6047
        %v6050 = vcosq.f32.pop %v6048
        %v6051 = vsinq.f32.pop %v6048
        %vm6052 = vweird.f32 %v4398
        %v6053 = vadd.s32 %v6049, 3
        %v6054 = vand.u32 %v6053, 3
        %vm6055 = vcmp.lt.s32.totalorder %v6054, 2
        %vm6056 = vcmp.eq.s32.totalorder %v6054, 0
        %v6057 = vxor.u32 %v6051, 2147483648
        %v6058 = vsel %vm6056, %v6050, %v6057
        %vm6059 = vcmp.eq.s32.totalorder %v6054, 2
        %v6060 = vxor.u32 %v6050, 2147483648
        %v6061 = vsel %vm6059, %v6060, %v6051
        %v6062 = vsel %vm6055, %v6058, %v6061
        %v6063 = vsel %vm6052, nan, %v6062
        %v6064 = vld [vmem:[%s7] sm:$0xff]
        %v6065 = vld [vmem:[%s7 + $0x8] sm:$0xff]
        %v6066 = vld [vmem:[%s7 + $0x10] sm:$0xff]
        %v6067 = vld [vmem:[%s7 + $0x18] sm:$0xff]
        %v6068 = vld [vmem:[%s8] sm:$0xff]
        %v6069 = vld [vmem:[%s8 + $0x8] sm:$0xff]
        %v6070 = vld [vmem:[%s8 + $0x10] sm:$0xff]
        %v6071 = vld [vmem:[%s8 + $0x18] sm:$0xff]
        %6073 = vset.pattern.permute.xlu0 0
        %6074 = vperm.xlu0 %6073, %v6068
        %v6075 = vpop.permute.xlu0 %6074
        %6078 = vset.pattern.permute.xlu0 0
        %6079 = vperm.xlu0 %6078, %v6069
        %v6080 = vpop.permute.xlu0 %6079
        %6083 = vset.pattern.permute.xlu0 0
        %6084 = vperm.xlu0 %6083, %v6070
        %v6085 = vpop.permute.xlu0 %6084
        %6088 = vset.pattern.permute.xlu0 0
        %6089 = vperm.xlu0 %6088, %v6071
        %v6090 = vpop.permute.xlu0 %6089
        %v6093 = vsel %vm2327, %v6064, 0
        %v6096 = vsel %vm2327, %v6065, 0
        %v6099 = vsel %vm2327, %v6066, 0
        %v6102 = vsel %vm2327, %v6067, 0
        %6104 = vmatprep.subr.mxu0 0.0
        %6105 = vmatpush1.msra.mxu0 0.0
        %6106 = vmatprep.subr.mxu0 0.0
        %6107 = vmatpush1.msra.mxu0 0.0
        %6108 = vmatprep.subr.mxu0 0.0
        %6109 = vmatpush1.msra.mxu0 0.0
        %6110 = vmatprep.subr.mxu0 0.0
        %6111 = vmatpush1.msra.mxu0 0.0
        %6112 = vmatprep.subr.mxu0 0.0
        %6113 = vmatpush1.msra.mxu0 0.0
        %6114 = vmatprep.subr.mxu0 0.0
        %6115 = vmatpush1.msra.mxu0 0.0
        %6116 = vmatprep.subr.mxu0 0.0
        %6117 = vmatpush1.msra.mxu0 0.0
        %6118 = vmatprep.subr.mxu0 0.0
        %6119 = vmatpush1.msra.mxu0 0.0
        %6120 = vmatprep.subr.mxu0 0.0
        %6121 = vmatpush1.msra.mxu0 0.0
        %6122 = vmatprep.subr.mxu0 0.0
        %6123 = vmatpush1.msra.mxu0 0.0
        %6124 = vmatprep.subr.mxu0 0.0
        %6125 = vmatpush1.msra.mxu0 0.0
        %6126 = vmatprep.subr.mxu0 0.0
        %6127 = vmatpush1.msra.mxu0 0.0
        %6128 = vmatprep.subr.mxu0 %v5855
        %6129 = vmatpush1.msra.mxu0 %v5751
        %6130 = vmatprep.subr.mxu0 %v5439
        %6131 = vmatpush1.msra.mxu0 %v5335
        %6132 = vmatprep.subr.mxu0 %v5023
        %6133 = vmatpush1.msra.mxu0 %v4919
        %6134 = vmatprep.subr.mxu0 %v4607
        %6135 = vmatpush1.msra.mxu0 %v4503
        %6136 = vmatprep.subr.mxu0 0.0
        %6137 = vmatpush2.msra.mxu0 0.0
        %6138 = vmatprep.subr.mxu0 0.0
        %6139 = vmatpush2.msra.mxu0 0.0
        %6140 = vmatprep.subr.mxu0 0.0
        %6141 = vmatpush2.msra.mxu0 0.0
        %6142 = vmatprep.subr.mxu0 0.0
        %6143 = vmatpush2.msra.mxu0 0.0
        %6144 = vmatprep.subr.mxu0 0.0
        %6145 = vmatpush2.msra.mxu0 0.0
        %6146 = vmatprep.subr.mxu0 0.0
        %6147 = vmatpush2.msra.mxu0 0.0
        %6148 = vmatprep.subr.mxu0 0.0
        %6149 = vmatpush2.msra.mxu0 0.0
        %6150 = vmatprep.subr.mxu0 0.0
        %6151 = vmatpush2.msra.mxu0 0.0
        %6152 = vmatprep.subr.mxu0 0.0
        %6153 = vmatpush2.msra.mxu0 0.0
        %6154 = vmatprep.subr.mxu0 0.0
        %6155 = vmatpush2.msra.mxu0 0.0
        %6156 = vmatprep.subr.mxu0 0.0
        %6157 = vmatpush2.msra.mxu0 0.0
        %6158 = vmatprep.subr.mxu0 0.0
        %6159 = vmatpush2.msra.mxu0 0.0
        %6160 = vmatprep.subr.mxu0 0.0
        %6161 = vmatpush2.msra.mxu0 0.0
        %6162 = vmatprep.subr.mxu0 0.0
        %6163 = vmatpush2.msra.mxu0 0.0
        %6164 = vmatprep.subr.mxu0 0.0
        %6165 = vmatpush2.msra.mxu0 0.0
        %6166 = vmatprep.subr.mxu0 0.0
        %6167 = vmatpush2.msra.mxu0 0.0
        %6168 = vmatprep.mubr.f32.mxu0 0.0
        %6169 = vmatmul.mubr.f32.gmra.mxu0 %v6093
        %v6170 = vpop.f32.mrf.mxu0
        %v6171 = vadd.f32 %v6075, %v6170
        %v6172 = vpop.f32.mrf.mxu0
        %v6173 = vadd.f32 %v6075, %v6172
        %6174 = vmatprep.mubr.f32.mxu0 0.0
        %6175 = vmatmul.mubr.f32.gmra.mxu0 %v6096
        %v6176 = vpop.f32.mrf.mxu0
        %v6177 = vadd.f32 %v6080, %v6176
        %v6178 = vpop.f32.mrf.mxu0
        %v6179 = vadd.f32 %v6080, %v6178
        %6180 = vmatprep.mubr.f32.mxu0 0.0
        %6181 = vmatmul.mubr.f32.gmra.mxu0 %v6099
        %v6182 = vpop.f32.mrf.mxu0
        %v6183 = vadd.f32 %v6085, %v6182
        %v6184 = vpop.f32.mrf.mxu0
        %v6185 = vadd.f32 %v6085, %v6184
        %6186 = vmatprep.mubr.f32.mxu0 0.0
        %6187 = vmatmul.mubr.f32.gmra.mxu0 %v6102
        %v6188 = vpop.f32.mrf.mxu0
        %v6189 = vadd.f32 %v6090, %v6188
        %v6190 = vpop.f32.mrf.mxu0
        %v6191 = vadd.f32 %v6090, %v6190
        %6192 = vdwg.mxu0
        %6193 = vmatprep.subr.mxu0 0.0
        %6194 = vmatpush1.msra.mxu0 0.0
        %6195 = vmatprep.subr.mxu0 0.0
        %6196 = vmatpush1.msra.mxu0 0.0
        %6197 = vmatprep.subr.mxu0 0.0
        %6198 = vmatpush1.msra.mxu0 0.0
        %6199 = vmatprep.subr.mxu0 0.0
        %6200 = vmatpush1.msra.mxu0 0.0
        %6201 = vmatprep.subr.mxu0 0.0
        %6202 = vmatpush1.msra.mxu0 0.0
        %6203 = vmatprep.subr.mxu0 0.0
        %6204 = vmatpush1.msra.mxu0 0.0
        %6205 = vmatprep.subr.mxu0 0.0
        %6206 = vmatpush1.msra.mxu0 0.0
        %6207 = vmatprep.subr.mxu0 0.0
        %6208 = vmatpush1.msra.mxu0 0.0
        %6209 = vmatprep.subr.mxu0 0.0
        %6210 = vmatpush1.msra.mxu0 0.0
        %6211 = vmatprep.subr.mxu0 0.0
        %6212 = vmatpush1.msra.mxu0 0.0
        %6213 = vmatprep.subr.mxu0 0.0
        %6214 = vmatpush1.msra.mxu0 0.0
        %6215 = vmatprep.subr.mxu0 0.0
        %6216 = vmatpush1.msra.mxu0 0.0
        %6217 = vmatprep.subr.mxu0 %v6063
        %6218 = vmatpush1.msra.mxu0 %v5959
        %6219 = vmatprep.subr.mxu0 %v5647
        %6220 = vmatpush1.msra.mxu0 %v5543
        %6221 = vmatprep.subr.mxu0 %v5231
        %6222 = vmatpush1.msra.mxu0 %v5127
        %6223 = vmatprep.subr.mxu0 %v4815
        %6224 = vmatpush1.msra.mxu0 %v4711
        %6225 = vmatprep.subr.mxu0 0.0
        %6226 = vmatpush2.msra.mxu0 0.0
        %6227 = vmatprep.subr.mxu0 0.0
        %6228 = vmatpush2.msra.mxu0 0.0
        %6229 = vmatprep.subr.mxu0 0.0
        %6230 = vmatpush2.msra.mxu0 0.0
        %6231 = vmatprep.subr.mxu0 0.0
        %6232 = vmatpush2.msra.mxu0 0.0
        %6233 = vmatprep.subr.mxu0 0.0
        %6234 = vmatpush2.msra.mxu0 0.0
        %6235 = vmatprep.subr.mxu0 0.0
        %6236 = vmatpush2.msra.mxu0 0.0
        %6237 = vmatprep.subr.mxu0 0.0
        %6238 = vmatpush2.msra.mxu0 0.0
        %6239 = vmatprep.subr.mxu0 0.0
        %6240 = vmatpush2.msra.mxu0 0.0
        %6241 = vmatprep.subr.mxu0 0.0
        %6242 = vmatpush2.msra.mxu0 0.0
        %6243 = vmatprep.subr.mxu0 0.0
        %6244 = vmatpush2.msra.mxu0 0.0
        %6245 = vmatprep.subr.mxu0 0.0
        %6246 = vmatpush2.msra.mxu0 0.0
        %6247 = vmatprep.subr.mxu0 0.0
        %6248 = vmatpush2.msra.mxu0 0.0
        %6249 = vmatprep.subr.mxu0 0.0
        %6250 = vmatpush2.msra.mxu0 0.0
        %6251 = vmatprep.subr.mxu0 0.0
        %6252 = vmatpush2.msra.mxu0 0.0
        %6253 = vmatprep.subr.mxu0 0.0
        %6254 = vmatpush2.msra.mxu0 0.0
        %6255 = vmatprep.subr.mxu0 0.0
        %6256 = vmatpush2.msra.mxu0 0.0
        %6257 = vmatprep.mubr.f32.mxu0 0.0
        %6258 = vmatmul.mubr.f32.gmra.mxu0 %v6093
        %v6259 = vpop.f32.mrf.mxu0
        %v6260 = vadd.f32 %v6075, %v6259
        %v6261 = vpop.f32.mrf.mxu0
        %v6262 = vadd.f32 %v6075, %v6261
        %6263 = vmatprep.mubr.f32.mxu0 0.0
        %6264 = vmatmul.mubr.f32.gmra.mxu0 %v6096
        %v6265 = vpop.f32.mrf.mxu0
        %v6266 = vadd.f32 %v6080, %v6265
        %v6267 = vpop.f32.mrf.mxu0
        %v6268 = vadd.f32 %v6080, %v6267
        %6269 = vmatprep.mubr.f32.mxu0 0.0
        %6270 = vmatmul.mubr.f32.gmra.mxu0 %v6099
        %v6271 = vpop.f32.mrf.mxu0
        %v6272 = vadd.f32 %v6085, %v6271
        %v6273 = vpop.f32.mrf.mxu0
        %v6274 = vadd.f32 %v6085, %v6273
        %6275 = vmatprep.mubr.f32.mxu0 0.0
        %6276 = vmatmul.mubr.f32.gmra.mxu0 %v6102
        %v6277 = vpop.f32.mrf.mxu0
        %v6278 = vadd.f32 %v6090, %v6277
        %v6279 = vpop.f32.mrf.mxu0
        %v6280 = vadd.f32 %v6090, %v6279
        %6281 = vdwg.mxu0
        %v6282 = vand.u32 2147483647, %v6171
        %vm6283 = vcmp.le.f32.partialorder %v6282, 0.7853982
        %vm6284 = vcmp.lt.s32.totalorder %v6171, 0
        %v6285 = vand.u32 %v6171, 2139095040
        %v6286 = vshrl.u32 %v6285, 23
        %v6287 = vsub.s32 %v6286, 127
        %v6288 = vand.u32 2147483647, %v6171
        %v6289 = vand.u32 %v6288, 8388607
        %v6290 = vor.u32 %v6289, 8388608
        %v6291 = vsub.s32 0, %v6290
        %v6292 = vadd.s32 %v6287, 1
        %vm6293 = vcmp.gt.s32.totalorder %v6292, 0
        %v6294 = vsel %vm6293, %v6292, 0
        %v6295 = vshrl.u32 %v6294, 5
        %v6296 = vand.u32 %v6294, 31
        %v6297 = vsub.s32 32, %v6296
        %v6298 = vshrl.u32 683565275, %v6297
        %v6299 = vshll.u32 683565275, %v6296
        %v6300 = vshrl.u32 2475754826, %v6297
        %v6301 = vor.u32 %v6299, %v6300
        %v6302 = vshll.u32 2475754826, %v6296
        %v6303 = vshrl.u32 2131351028, %v6297
        %v6304 = vor.u32 %v6302, %v6303
        %v6305 = vshll.u32 2131351028, %v6296
        %v6306 = vshrl.u32 2102212464, %v6297
        %v6307 = vor.u32 %v6305, %v6306
        %v6308 = vshll.u32 2102212464, %v6296
        %v6309 = vshrl.u32 920167782, %v6297
        %v6310 = vor.u32 %v6308, %v6309
        %v6311 = vshll.u32 920167782, %v6296
        %v6312 = vshrl.u32 1326507024, %v6297
        %v6313 = vor.u32 %v6311, %v6312
        %vm6314 = vcmp.lt.s32.totalorder %v6295, 1
        %vm6315 = vcmp.lt.s32.totalorder %v6295, 2
        %vm6316 = vcmp.lt.s32.totalorder %v6295, 3
        %vm6317 = vcmp.lt.s32.totalorder %v6295, 4
        %v6318 = vsel %vm6314, %v6298, %v6301
        %v6319 = vsel %vm6317, %v6307, 2102212464
        %v6320 = vsel %vm6316, %v6304, %v6319
        %v6321 = vsel %vm6315, %v6318, %v6320
        %v6322 = vsel %vm6314, %v6301, %v6304
        %v6323 = vsel %vm6317, %v6310, 920167782
        %v6324 = vsel %vm6316, %v6307, %v6323
        %v6325 = vsel %vm6315, %v6322, %v6324
        %v6326 = vsel %vm6314, %v6304, %v6307
        %v6327 = vsel %vm6317, %v6313, 1326507024
        %v6328 = vsel %vm6316, %v6310, %v6327
        %v6329 = vsel %vm6315, %v6326, %v6328
        %v6330 = vshll.u32 %v6290, 8
        %v6331 = vmul.u32.u64.compose %v6330, %v6329
        %v6332 = vextract.low.u32 %v6331
        %v6333 = vextract.high.u32 %v6331
        %v6334 = vmul.u32.u64.compose %v6330, %v6325
        %v6335 = vextract.low.u32 %v6334
        %v6336 = vextract.high.u32 %v6334
        %v6337 = vmul.u32 %v6330, %v6321
        %v6338 = vadd.s32 %v6333, %v6335
        %vm6339 = vc.u32 %v6333, %v6335
        %v6340 = vadd.s32 %v6336, 1
        %v6341 = vsel %vm6339, %v6340, %v6336
        %v6342 = vadd.s32 %v6337, %v6341
        %v6343 = vadd.s32 %v6342, 536870912
        %v6344 = vshrl.u32 %v6343, 30
        %v6345 = vshll.u32 %v6344, 30
        %v6346 = vsub.s32 %v6342, %v6345
        %vm6347 = vcmp.lt.s32.totalorder %v6346, 0
        %v6348 = vsub.s32 0, %v6346
        %v6349 = vsel %vm6347, %v6348, %v6346
        %v6350 = vclz %v6349
        %v6351 = vsub.s32 %v6350, 2
        %vm6352 = vcmp.gt.s32.totalorder 0, %v6351
        %v6353 = vsel %vm6352, 0, %v6351
        %v6354 = vsub.s32 32, %v6353
        %v6355 = vshll.u32 %v6346, %v6353
        %v6356 = vshrl.u32 %v6338, %v6354
        %v6357 = vor.u32 %v6355, %v6356
        %v6358 = vsub.s32 4294967266, %v6353
        %v6359 = vadd.s32 %v6358, 127
        %v6360 = vshll.u32 %v6359, 23
        %v6361 = vor.u32 4788187, %v6360
        %v6362 = vand.u32 2147483647, %v6361
        %v6364 = vcvt.s32.f32 %v6357
        %v6365 = vmul.f32 %v6364, %v6362
        %v6366 = vxor.u32 %v6365, 2147483648
        %v6367 = vsel %vm6284, %v6366, %v6365
        %v6368 = vsub.s32 4, %v6344
        %v6369 = vsel %vm6284, %v6368, %v6344
        %v6370 = vsel %vm6283, %v6171, %v6367
        %v6371 = vsel %vm6283, 0, %v6369
        %v6372 = vcosq.f32.pop %v6370
        %v6373 = vsinq.f32.pop %v6370
        %vm6374 = vweird.f32 %v6171
        %v6375 = vadd.s32 %v6371, 3
        %v6376 = vand.u32 %v6375, 3
        %vm6377 = vcmp.lt.s32.totalorder %v6376, 2
        %vm6378 = vcmp.eq.s32.totalorder %v6376, 0
        %v6379 = vxor.u32 %v6373, 2147483648
        %v6380 = vsel %vm6378, %v6372, %v6379
        %vm6381 = vcmp.eq.s32.totalorder %v6376, 2
        %v6382 = vxor.u32 %v6372, 2147483648
        %v6383 = vsel %vm6381, %v6382, %v6373
        %v6384 = vsel %vm6377, %v6380, %v6383
        %v6385 = vsel %vm6374, nan, %v6384
        %v6386 = vand.u32 2147483647, %v6173
        %vm6387 = vcmp.le.f32.partialorder %v6386, 0.7853982
        %vm6388 = vcmp.lt.s32.totalorder %v6173, 0
        %v6389 = vand.u32 %v6173, 2139095040
        %v6390 = vshrl.u32 %v6389, 23
        %v6391 = vsub.s32 %v6390, 127
        %v6392 = vand.u32 2147483647, %v6173
        %v6393 = vand.u32 %v6392, 8388607
        %v6394 = vor.u32 %v6393, 8388608
        %v6395 = vsub.s32 0, %v6394
        %v6396 = vadd.s32 %v6391, 1
        %vm6397 = vcmp.gt.s32.totalorder %v6396, 0
        %v6398 = vsel %vm6397, %v6396, 0
        %v6399 = vshrl.u32 %v6398, 5
        %v6400 = vand.u32 %v6398, 31
        %v6401 = vsub.s32 32, %v6400
        %v6402 = vshrl.u32 683565275, %v6401
        %v6403 = vshll.u32 683565275, %v6400
        %v6404 = vshrl.u32 2475754826, %v6401
        %v6405 = vor.u32 %v6403, %v6404
        %v6406 = vshll.u32 2475754826, %v6400
        %v6407 = vshrl.u32 2131351028, %v6401
        %v6408 = vor.u32 %v6406, %v6407
        %v6409 = vshll.u32 2131351028, %v6400
        %v6410 = vshrl.u32 2102212464, %v6401
        %v6411 = vor.u32 %v6409, %v6410
        %v6412 = vshll.u32 2102212464, %v6400
        %v6413 = vshrl.u32 920167782, %v6401
        %v6414 = vor.u32 %v6412, %v6413
        %v6415 = vshll.u32 920167782, %v6400
        %v6416 = vshrl.u32 1326507024, %v6401
        %v6417 = vor.u32 %v6415, %v6416
        %vm6418 = vcmp.lt.s32.totalorder %v6399, 1
        %vm6419 = vcmp.lt.s32.totalorder %v6399, 2
        %vm6420 = vcmp.lt.s32.totalorder %v6399, 3
        %vm6421 = vcmp.lt.s32.totalorder %v6399, 4
        %v6422 = vsel %vm6418, %v6402, %v6405
        %v6423 = vsel %vm6421, %v6411, 2102212464
        %v6424 = vsel %vm6420, %v6408, %v6423
        %v6425 = vsel %vm6419, %v6422, %v6424
        %v6426 = vsel %vm6418, %v6405, %v6408
        %v6427 = vsel %vm6421, %v6414, 920167782
        %v6428 = vsel %vm6420, %v6411, %v6427
        %v6429 = vsel %vm6419, %v6426, %v6428
        %v6430 = vsel %vm6418, %v6408, %v6411
        %v6431 = vsel %vm6421, %v6417, 1326507024
        %v6432 = vsel %vm6420, %v6414, %v6431
        %v6433 = vsel %vm6419, %v6430, %v6432
        %v6434 = vshll.u32 %v6394, 8
        %v6435 = vmul.u32.u64.compose %v6434, %v6433
        %v6436 = vextract.low.u32 %v6435
        %v6437 = vextract.high.u32 %v6435
        %v6438 = vmul.u32.u64.compose %v6434, %v6429
        %v6439 = vextract.low.u32 %v6438
        %v6440 = vextract.high.u32 %v6438
        %v6441 = vmul.u32 %v6434, %v6425
        %v6442 = vadd.s32 %v6437, %v6439
        %vm6443 = vc.u32 %v6437, %v6439
        %v6444 = vadd.s32 %v6440, 1
        %v6445 = vsel %vm6443, %v6444, %v6440
        %v6446 = vadd.s32 %v6441, %v6445
        %v6447 = vadd.s32 %v6446, 536870912
        %v6448 = vshrl.u32 %v6447, 30
        %v6449 = vshll.u32 %v6448, 30
        %v6450 = vsub.s32 %v6446, %v6449
        %vm6451 = vcmp.lt.s32.totalorder %v6450, 0
        %v6452 = vsub.s32 0, %v6450
        %v6453 = vsel %vm6451, %v6452, %v6450
        %v6454 = vclz %v6453
        %v6455 = vsub.s32 %v6454, 2
        %vm6456 = vcmp.gt.s32.totalorder 0, %v6455
        %v6457 = vsel %vm6456, 0, %v6455
        %v6458 = vsub.s32 32, %v6457
        %v6459 = vshll.u32 %v6450, %v6457
        %v6460 = vshrl.u32 %v6442, %v6458
        %v6461 = vor.u32 %v6459, %v6460
        %v6462 = vsub.s32 4294967266, %v6457
        %v6463 = vadd.s32 %v6462, 127
        %v6464 = vshll.u32 %v6463, 23
        %v6465 = vor.u32 4788187, %v6464
        %v6466 = vand.u32 2147483647, %v6465
        %v6468 = vcvt.s32.f32 %v6461
        %v6469 = vmul.f32 %v6468, %v6466
        %v6470 = vxor.u32 %v6469, 2147483648
        %v6471 = vsel %vm6388, %v6470, %v6469
        %v6472 = vsub.s32 4, %v6448
        %v6473 = vsel %vm6388, %v6472, %v6448
        %v6474 = vsel %vm6387, %v6173, %v6471
        %v6475 = vsel %vm6387, 0, %v6473
        %v6476 = vcosq.f32.pop %v6474
        %v6477 = vsinq.f32.pop %v6474
        %vm6478 = vweird.f32 %v6173
        %v6479 = vadd.s32 %v6475, 3
        %v6480 = vand.u32 %v6479, 3
        %vm6481 = vcmp.lt.s32.totalorder %v6480, 2
        %vm6482 = vcmp.eq.s32.totalorder %v6480, 0
        %v6483 = vxor.u32 %v6477, 2147483648
        %v6484 = vsel %vm6482, %v6476, %v6483
        %vm6485 = vcmp.eq.s32.totalorder %v6480, 2
        %v6486 = vxor.u32 %v6476, 2147483648
        %v6487 = vsel %vm6485, %v6486, %v6477
        %v6488 = vsel %vm6481, %v6484, %v6487
        %v6489 = vsel %vm6478, nan, %v6488
        %v6490 = vand.u32 2147483647, %v6260
        %vm6491 = vcmp.le.f32.partialorder %v6490, 0.7853982
        %vm6492 = vcmp.lt.s32.totalorder %v6260, 0
        %v6493 = vand.u32 %v6260, 2139095040
        %v6494 = vshrl.u32 %v6493, 23
        %v6495 = vsub.s32 %v6494, 127
        %v6496 = vand.u32 2147483647, %v6260
        %v6497 = vand.u32 %v6496, 8388607
        %v6498 = vor.u32 %v6497, 8388608
        %v6499 = vsub.s32 0, %v6498
        %v6500 = vadd.s32 %v6495, 1
        %vm6501 = vcmp.gt.s32.totalorder %v6500, 0
        %v6502 = vsel %vm6501, %v6500, 0
        %v6503 = vshrl.u32 %v6502, 5
        %v6504 = vand.u32 %v6502, 31
        %v6505 = vsub.s32 32, %v6504
        %v6506 = vshrl.u32 683565275, %v6505
        %v6507 = vshll.u32 683565275, %v6504
        %v6508 = vshrl.u32 2475754826, %v6505
        %v6509 = vor.u32 %v6507, %v6508
        %v6510 = vshll.u32 2475754826, %v6504
        %v6511 = vshrl.u32 2131351028, %v6505
        %v6512 = vor.u32 %v6510, %v6511
        %v6513 = vshll.u32 2131351028, %v6504
        %v6514 = vshrl.u32 2102212464, %v6505
        %v6515 = vor.u32 %v6513, %v6514
        %v6516 = vshll.u32 2102212464, %v6504
        %v6517 = vshrl.u32 920167782, %v6505
        %v6518 = vor.u32 %v6516, %v6517
        %v6519 = vshll.u32 920167782, %v6504
        %v6520 = vshrl.u32 1326507024, %v6505
        %v6521 = vor.u32 %v6519, %v6520
        %vm6522 = vcmp.lt.s32.totalorder %v6503, 1
        %vm6523 = vcmp.lt.s32.totalorder %v6503, 2
        %vm6524 = vcmp.lt.s32.totalorder %v6503, 3
        %vm6525 = vcmp.lt.s32.totalorder %v6503, 4
        %v6526 = vsel %vm6522, %v6506, %v6509
        %v6527 = vsel %vm6525, %v6515, 2102212464
        %v6528 = vsel %vm6524, %v6512, %v6527
        %v6529 = vsel %vm6523, %v6526, %v6528
        %v6530 = vsel %vm6522, %v6509, %v6512
        %v6531 = vsel %vm6525, %v6518, 920167782
        %v6532 = vsel %vm6524, %v6515, %v6531
        %v6533 = vsel %vm6523, %v6530, %v6532
        %v6534 = vsel %vm6522, %v6512, %v6515
        %v6535 = vsel %vm6525, %v6521, 1326507024
        %v6536 = vsel %vm6524, %v6518, %v6535
        %v6537 = vsel %vm6523, %v6534, %v6536
        %v6538 = vshll.u32 %v6498, 8
        %v6539 = vmul.u32.u64.compose %v6538, %v6537
        %v6540 = vextract.low.u32 %v6539
        %v6541 = vextract.high.u32 %v6539
        %v6542 = vmul.u32.u64.compose %v6538, %v6533
        %v6543 = vextract.low.u32 %v6542
        %v6544 = vextract.high.u32 %v6542
        %v6545 = vmul.u32 %v6538, %v6529
        %v6546 = vadd.s32 %v6541, %v6543
        %vm6547 = vc.u32 %v6541, %v6543
        %v6548 = vadd.s32 %v6544, 1
        %v6549 = vsel %vm6547, %v6548, %v6544
        %v6550 = vadd.s32 %v6545, %v6549
        %v6551 = vadd.s32 %v6550, 536870912
        %v6552 = vshrl.u32 %v6551, 30
        %v6553 = vshll.u32 %v6552, 30
        %v6554 = vsub.s32 %v6550, %v6553
        %vm6555 = vcmp.lt.s32.totalorder %v6554, 0
        %v6556 = vsub.s32 0, %v6554
        %v6557 = vsel %vm6555, %v6556, %v6554
        %v6558 = vclz %v6557
        %v6559 = vsub.s32 %v6558, 2
        %vm6560 = vcmp.gt.s32.totalorder 0, %v6559
        %v6561 = vsel %vm6560, 0, %v6559
        %v6562 = vsub.s32 32, %v6561
        %v6563 = vshll.u32 %v6554, %v6561
        %v6564 = vshrl.u32 %v6546, %v6562
        %v6565 = vor.u32 %v6563, %v6564
        %v6566 = vsub.s32 4294967266, %v6561
        %v6567 = vadd.s32 %v6566, 127
        %v6568 = vshll.u32 %v6567, 23
        %v6569 = vor.u32 4788187, %v6568
        %v6570 = vand.u32 2147483647, %v6569
        %v6572 = vcvt.s32.f32 %v6565
        %v6573 = vmul.f32 %v6572, %v6570
        %v6574 = vxor.u32 %v6573, 2147483648
        %v6575 = vsel %vm6492, %v6574, %v6573
        %v6576 = vsub.s32 4, %v6552
        %v6577 = vsel %vm6492, %v6576, %v6552
        %v6578 = vsel %vm6491, %v6260, %v6575
        %v6579 = vsel %vm6491, 0, %v6577
        %v6580 = vcosq.f32.pop %v6578
        %v6581 = vsinq.f32.pop %v6578
        %vm6582 = vweird.f32 %v6260
        %v6583 = vadd.s32 %v6579, 3
        %v6584 = vand.u32 %v6583, 3
        %vm6585 = vcmp.lt.s32.totalorder %v6584, 2
        %vm6586 = vcmp.eq.s32.totalorder %v6584, 0
        %v6587 = vxor.u32 %v6581, 2147483648
        %v6588 = vsel %vm6586, %v6580, %v6587
        %vm6589 = vcmp.eq.s32.totalorder %v6584, 2
        %v6590 = vxor.u32 %v6580, 2147483648
        %v6591 = vsel %vm6589, %v6590, %v6581
        %v6592 = vsel %vm6585, %v6588, %v6591
        %v6593 = vsel %vm6582, nan, %v6592
        %v6594 = vand.u32 2147483647, %v6262
        %vm6595 = vcmp.le.f32.partialorder %v6594, 0.7853982
        %vm6596 = vcmp.lt.s32.totalorder %v6262, 0
        %v6597 = vand.u32 %v6262, 2139095040
        %v6598 = vshrl.u32 %v6597, 23
        %v6599 = vsub.s32 %v6598, 127
        %v6600 = vand.u32 2147483647, %v6262
        %v6601 = vand.u32 %v6600, 8388607
        %v6602 = vor.u32 %v6601, 8388608
        %v6603 = vsub.s32 0, %v6602
        %v6604 = vadd.s32 %v6599, 1
        %vm6605 = vcmp.gt.s32.totalorder %v6604, 0
        %v6606 = vsel %vm6605, %v6604, 0
        %v6607 = vshrl.u32 %v6606, 5
        %v6608 = vand.u32 %v6606, 31
        %v6609 = vsub.s32 32, %v6608
        %v6610 = vshrl.u32 683565275, %v6609
        %v6611 = vshll.u32 683565275, %v6608
        %v6612 = vshrl.u32 2475754826, %v6609
        %v6613 = vor.u32 %v6611, %v6612
        %v6614 = vshll.u32 2475754826, %v6608
        %v6615 = vshrl.u32 2131351028, %v6609
        %v6616 = vor.u32 %v6614, %v6615
        %v6617 = vshll.u32 2131351028, %v6608
        %v6618 = vshrl.u32 2102212464, %v6609
        %v6619 = vor.u32 %v6617, %v6618
        %v6620 = vshll.u32 2102212464, %v6608
        %v6621 = vshrl.u32 920167782, %v6609
        %v6622 = vor.u32 %v6620, %v6621
        %v6623 = vshll.u32 920167782, %v6608
        %v6624 = vshrl.u32 1326507024, %v6609
        %v6625 = vor.u32 %v6623, %v6624
        %vm6626 = vcmp.lt.s32.totalorder %v6607, 1
        %vm6627 = vcmp.lt.s32.totalorder %v6607, 2
        %vm6628 = vcmp.lt.s32.totalorder %v6607, 3
        %vm6629 = vcmp.lt.s32.totalorder %v6607, 4
        %v6630 = vsel %vm6626, %v6610, %v6613
        %v6631 = vsel %vm6629, %v6619, 2102212464
        %v6632 = vsel %vm6628, %v6616, %v6631
        %v6633 = vsel %vm6627, %v6630, %v6632
        %v6634 = vsel %vm6626, %v6613, %v6616
        %v6635 = vsel %vm6629, %v6622, 920167782
        %v6636 = vsel %vm6628, %v6619, %v6635
        %v6637 = vsel %vm6627, %v6634, %v6636
        %v6638 = vsel %vm6626, %v6616, %v6619
        %v6639 = vsel %vm6629, %v6625, 1326507024
        %v6640 = vsel %vm6628, %v6622, %v6639
        %v6641 = vsel %vm6627, %v6638, %v6640
        %v6642 = vshll.u32 %v6602, 8
        %v6643 = vmul.u32.u64.compose %v6642, %v6641
        %v6644 = vextract.low.u32 %v6643
        %v6645 = vextract.high.u32 %v6643
        %v6646 = vmul.u32.u64.compose %v6642, %v6637
        %v6647 = vextract.low.u32 %v6646
        %v6648 = vextract.high.u32 %v6646
        %v6649 = vmul.u32 %v6642, %v6633
        %v6650 = vadd.s32 %v6645, %v6647
        %vm6651 = vc.u32 %v6645, %v6647
        %v6652 = vadd.s32 %v6648, 1
        %v6653 = vsel %vm6651, %v6652, %v6648
        %v6654 = vadd.s32 %v6649, %v6653
        %v6655 = vadd.s32 %v6654, 536870912
        %v6656 = vshrl.u32 %v6655, 30
        %v6657 = vshll.u32 %v6656, 30
        %v6658 = vsub.s32 %v6654, %v6657
        %vm6659 = vcmp.lt.s32.totalorder %v6658, 0
        %v6660 = vsub.s32 0, %v6658
        %v6661 = vsel %vm6659, %v6660, %v6658
        %v6662 = vclz %v6661
        %v6663 = vsub.s32 %v6662, 2
        %vm6664 = vcmp.gt.s32.totalorder 0, %v6663
        %v6665 = vsel %vm6664, 0, %v6663
        %v6666 = vsub.s32 32, %v6665
        %v6667 = vshll.u32 %v6658, %v6665
        %v6668 = vshrl.u32 %v6650, %v6666
        %v6669 = vor.u32 %v6667, %v6668
        %v6670 = vsub.s32 4294967266, %v6665
        %v6671 = vadd.s32 %v6670, 127
        %v6672 = vshll.u32 %v6671, 23
        %v6673 = vor.u32 4788187, %v6672
        %v6674 = vand.u32 2147483647, %v6673
        %v6676 = vcvt.s32.f32 %v6669
        %v6677 = vmul.f32 %v6676, %v6674
        %v6678 = vxor.u32 %v6677, 2147483648
        %v6679 = vsel %vm6596, %v6678, %v6677
        %v6680 = vsub.s32 4, %v6656
        %v6681 = vsel %vm6596, %v6680, %v6656
        %v6682 = vsel %vm6595, %v6262, %v6679
        %v6683 = vsel %vm6595, 0, %v6681
        %v6684 = vcosq.f32.pop %v6682
        %v6685 = vsinq.f32.pop %v6682
        %vm6686 = vweird.f32 %v6262
        %v6687 = vadd.s32 %v6683, 3
        %v6688 = vand.u32 %v6687, 3
        %vm6689 = vcmp.lt.s32.totalorder %v6688, 2
        %vm6690 = vcmp.eq.s32.totalorder %v6688, 0
        %v6691 = vxor.u32 %v6685, 2147483648
        %v6692 = vsel %vm6690, %v6684, %v6691
        %vm6693 = vcmp.eq.s32.totalorder %v6688, 2
        %v6694 = vxor.u32 %v6684, 2147483648
        %v6695 = vsel %vm6693, %v6694, %v6685
        %v6696 = vsel %vm6689, %v6692, %v6695
        %v6697 = vsel %vm6686, nan, %v6696
        %v6698 = vand.u32 2147483647, %v6177
        %vm6699 = vcmp.le.f32.partialorder %v6698, 0.7853982
        %vm6700 = vcmp.lt.s32.totalorder %v6177, 0
        %v6701 = vand.u32 %v6177, 2139095040
        %v6702 = vshrl.u32 %v6701, 23
        %v6703 = vsub.s32 %v6702, 127
        %v6704 = vand.u32 2147483647, %v6177
        %v6705 = vand.u32 %v6704, 8388607
        %v6706 = vor.u32 %v6705, 8388608
        %v6707 = vsub.s32 0, %v6706
        %v6708 = vadd.s32 %v6703, 1
        %vm6709 = vcmp.gt.s32.totalorder %v6708, 0
        %v6710 = vsel %vm6709, %v6708, 0
        %v6711 = vshrl.u32 %v6710, 5
        %v6712 = vand.u32 %v6710, 31
        %v6713 = vsub.s32 32, %v6712
        %v6714 = vshrl.u32 683565275, %v6713
        %v6715 = vshll.u32 683565275, %v6712
        %v6716 = vshrl.u32 2475754826, %v6713
        %v6717 = vor.u32 %v6715, %v6716
        %v6718 = vshll.u32 2475754826, %v6712
        %v6719 = vshrl.u32 2131351028, %v6713
        %v6720 = vor.u32 %v6718, %v6719
        %v6721 = vshll.u32 2131351028, %v6712
        %v6722 = vshrl.u32 2102212464, %v6713
        %v6723 = vor.u32 %v6721, %v6722
        %v6724 = vshll.u32 2102212464, %v6712
        %v6725 = vshrl.u32 920167782, %v6713
        %v6726 = vor.u32 %v6724, %v6725
        %v6727 = vshll.u32 920167782, %v6712
        %v6728 = vshrl.u32 1326507024, %v6713
        %v6729 = vor.u32 %v6727, %v6728
        %vm6730 = vcmp.lt.s32.totalorder %v6711, 1
        %vm6731 = vcmp.lt.s32.totalorder %v6711, 2
        %vm6732 = vcmp.lt.s32.totalorder %v6711, 3
        %vm6733 = vcmp.lt.s32.totalorder %v6711, 4
        %v6734 = vsel %vm6730, %v6714, %v6717
        %v6735 = vsel %vm6733, %v6723, 2102212464
        %v6736 = vsel %vm6732, %v6720, %v6735
        %v6737 = vsel %vm6731, %v6734, %v6736
        %v6738 = vsel %vm6730, %v6717, %v6720
        %v6739 = vsel %vm6733, %v6726, 920167782
        %v6740 = vsel %vm6732, %v6723, %v6739
        %v6741 = vsel %vm6731, %v6738, %v6740
        %v6742 = vsel %vm6730, %v6720, %v6723
        %v6743 = vsel %vm6733, %v6729, 1326507024
        %v6744 = vsel %vm6732, %v6726, %v6743
        %v6745 = vsel %vm6731, %v6742, %v6744
        %v6746 = vshll.u32 %v6706, 8
        %v6747 = vmul.u32.u64.compose %v6746, %v6745
        %v6748 = vextract.low.u32 %v6747
        %v6749 = vextract.high.u32 %v6747
        %v6750 = vmul.u32.u64.compose %v6746, %v6741
        %v6751 = vextract.low.u32 %v6750
        %v6752 = vextract.high.u32 %v6750
        %v6753 = vmul.u32 %v6746, %v6737
        %v6754 = vadd.s32 %v6749, %v6751
        %vm6755 = vc.u32 %v6749, %v6751
        %v6756 = vadd.s32 %v6752, 1
        %v6757 = vsel %vm6755, %v6756, %v6752
        %v6758 = vadd.s32 %v6753, %v6757
        %v6759 = vadd.s32 %v6758, 536870912
        %v6760 = vshrl.u32 %v6759, 30
        %v6761 = vshll.u32 %v6760, 30
        %v6762 = vsub.s32 %v6758, %v6761
        %vm6763 = vcmp.lt.s32.totalorder %v6762, 0
        %v6764 = vsub.s32 0, %v6762
        %v6765 = vsel %vm6763, %v6764, %v6762
        %v6766 = vclz %v6765
        %v6767 = vsub.s32 %v6766, 2
        %vm6768 = vcmp.gt.s32.totalorder 0, %v6767
        %v6769 = vsel %vm6768, 0, %v6767
        %v6770 = vsub.s32 32, %v6769
        %v6771 = vshll.u32 %v6762, %v6769
        %v6772 = vshrl.u32 %v6754, %v6770
        %v6773 = vor.u32 %v6771, %v6772
        %v6774 = vsub.s32 4294967266, %v6769
        %v6775 = vadd.s32 %v6774, 127
        %v6776 = vshll.u32 %v6775, 23
        %v6777 = vor.u32 4788187, %v6776
        %v6778 = vand.u32 2147483647, %v6777
        %v6780 = vcvt.s32.f32 %v6773
        %v6781 = vmul.f32 %v6780, %v6778
        %v6782 = vxor.u32 %v6781, 2147483648
        %v6783 = vsel %vm6700, %v6782, %v6781
        %v6784 = vsub.s32 4, %v6760
        %v6785 = vsel %vm6700, %v6784, %v6760
        %v6786 = vsel %vm6699, %v6177, %v6783
        %v6787 = vsel %vm6699, 0, %v6785
        %v6788 = vcosq.f32.pop %v6786
        %v6789 = vsinq.f32.pop %v6786
        %vm6790 = vweird.f32 %v6177
        %v6791 = vadd.s32 %v6787, 3
        %v6792 = vand.u32 %v6791, 3
        %vm6793 = vcmp.lt.s32.totalorder %v6792, 2
        %vm6794 = vcmp.eq.s32.totalorder %v6792, 0
        %v6795 = vxor.u32 %v6789, 2147483648
        %v6796 = vsel %vm6794, %v6788, %v6795
        %vm6797 = vcmp.eq.s32.totalorder %v6792, 2
        %v6798 = vxor.u32 %v6788, 2147483648
        %v6799 = vsel %vm6797, %v6798, %v6789
        %v6800 = vsel %vm6793, %v6796, %v6799
        %v6801 = vsel %vm6790, nan, %v6800
        %v6802 = vand.u32 2147483647, %v6179
        %vm6803 = vcmp.le.f32.partialorder %v6802, 0.7853982
        %vm6804 = vcmp.lt.s32.totalorder %v6179, 0
        %v6805 = vand.u32 %v6179, 2139095040
        %v6806 = vshrl.u32 %v6805, 23
        %v6807 = vsub.s32 %v6806, 127
        %v6808 = vand.u32 2147483647, %v6179
        %v6809 = vand.u32 %v6808, 8388607
        %v6810 = vor.u32 %v6809, 8388608
        %v6811 = vsub.s32 0, %v6810
        %v6812 = vadd.s32 %v6807, 1
        %vm6813 = vcmp.gt.s32.totalorder %v6812, 0
        %v6814 = vsel %vm6813, %v6812, 0
        %v6815 = vshrl.u32 %v6814, 5
        %v6816 = vand.u32 %v6814, 31
        %v6817 = vsub.s32 32, %v6816
        %v6818 = vshrl.u32 683565275, %v6817
        %v6819 = vshll.u32 683565275, %v6816
        %v6820 = vshrl.u32 2475754826, %v6817
        %v6821 = vor.u32 %v6819, %v6820
        %v6822 = vshll.u32 2475754826, %v6816
        %v6823 = vshrl.u32 2131351028, %v6817
        %v6824 = vor.u32 %v6822, %v6823
        %v6825 = vshll.u32 2131351028, %v6816
        %v6826 = vshrl.u32 2102212464, %v6817
        %v6827 = vor.u32 %v6825, %v6826
        %v6828 = vshll.u32 2102212464, %v6816
        %v6829 = vshrl.u32 920167782, %v6817
        %v6830 = vor.u32 %v6828, %v6829
        %v6831 = vshll.u32 920167782, %v6816
        %v6832 = vshrl.u32 1326507024, %v6817
        %v6833 = vor.u32 %v6831, %v6832
        %vm6834 = vcmp.lt.s32.totalorder %v6815, 1
        %vm6835 = vcmp.lt.s32.totalorder %v6815, 2
        %vm6836 = vcmp.lt.s32.totalorder %v6815, 3
        %vm6837 = vcmp.lt.s32.totalorder %v6815, 4
        %v6838 = vsel %vm6834, %v6818, %v6821
        %v6839 = vsel %vm6837, %v6827, 2102212464
        %v6840 = vsel %vm6836, %v6824, %v6839
        %v6841 = vsel %vm6835, %v6838, %v6840
        %v6842 = vsel %vm6834, %v6821, %v6824
        %v6843 = vsel %vm6837, %v6830, 920167782
        %v6844 = vsel %vm6836, %v6827, %v6843
        %v6845 = vsel %vm6835, %v6842, %v6844
        %v6846 = vsel %vm6834, %v6824, %v6827
        %v6847 = vsel %vm6837, %v6833, 1326507024
        %v6848 = vsel %vm6836, %v6830, %v6847
        %v6849 = vsel %vm6835, %v6846, %v6848
        %v6850 = vshll.u32 %v6810, 8
        %v6851 = vmul.u32.u64.compose %v6850, %v6849
        %v6852 = vextract.low.u32 %v6851
        %v6853 = vextract.high.u32 %v6851
        %v6854 = vmul.u32.u64.compose %v6850, %v6845
        %v6855 = vextract.low.u32 %v6854
        %v6856 = vextract.high.u32 %v6854
        %v6857 = vmul.u32 %v6850, %v6841
        %v6858 = vadd.s32 %v6853, %v6855
        %vm6859 = vc.u32 %v6853, %v6855
        %v6860 = vadd.s32 %v6856, 1
        %v6861 = vsel %vm6859, %v6860, %v6856
        %v6862 = vadd.s32 %v6857, %v6861
        %v6863 = vadd.s32 %v6862, 536870912
        %v6864 = vshrl.u32 %v6863, 30
        %v6865 = vshll.u32 %v6864, 30
        %v6866 = vsub.s32 %v6862, %v6865
        %vm6867 = vcmp.lt.s32.totalorder %v6866, 0
        %v6868 = vsub.s32 0, %v6866
        %v6869 = vsel %vm6867, %v6868, %v6866
        %v6870 = vclz %v6869
        %v6871 = vsub.s32 %v6870, 2
        %vm6872 = vcmp.gt.s32.totalorder 0, %v6871
        %v6873 = vsel %vm6872, 0, %v6871
        %v6874 = vsub.s32 32, %v6873
        %v6875 = vshll.u32 %v6866, %v6873
        %v6876 = vshrl.u32 %v6858, %v6874
        %v6877 = vor.u32 %v6875, %v6876
        %v6878 = vsub.s32 4294967266, %v6873
        %v6879 = vadd.s32 %v6878, 127
        %v6880 = vshll.u32 %v6879, 23
        %v6881 = vor.u32 4788187, %v6880
        %v6882 = vand.u32 2147483647, %v6881
        %v6884 = vcvt.s32.f32 %v6877
        %v6885 = vmul.f32 %v6884, %v6882
        %v6886 = vxor.u32 %v6885, 2147483648
        %v6887 = vsel %vm6804, %v6886, %v6885
        %v6888 = vsub.s32 4, %v6864
        %v6889 = vsel %vm6804, %v6888, %v6864
        %v6890 = vsel %vm6803, %v6179, %v6887
        %v6891 = vsel %vm6803, 0, %v6889
        %v6892 = vcosq.f32.pop %v6890
        %v6893 = vsinq.f32.pop %v6890
        %vm6894 = vweird.f32 %v6179
        %v6895 = vadd.s32 %v6891, 3
        %v6896 = vand.u32 %v6895, 3
        %vm6897 = vcmp.lt.s32.totalorder %v6896, 2
        %vm6898 = vcmp.eq.s32.totalorder %v6896, 0
        %v6899 = vxor.u32 %v6893, 2147483648
        %v6900 = vsel %vm6898, %v6892, %v6899
        %vm6901 = vcmp.eq.s32.totalorder %v6896, 2
        %v6902 = vxor.u32 %v6892, 2147483648
        %v6903 = vsel %vm6901, %v6902, %v6893
        %v6904 = vsel %vm6897, %v6900, %v6903
        %v6905 = vsel %vm6894, nan, %v6904
        %v6906 = vand.u32 2147483647, %v6266
        %vm6907 = vcmp.le.f32.partialorder %v6906, 0.7853982
        %vm6908 = vcmp.lt.s32.totalorder %v6266, 0
        %v6909 = vand.u32 %v6266, 2139095040
        %v6910 = vshrl.u32 %v6909, 23
        %v6911 = vsub.s32 %v6910, 127
        %v6912 = vand.u32 2147483647, %v6266
        %v6913 = vand.u32 %v6912, 8388607
        %v6914 = vor.u32 %v6913, 8388608
        %v6915 = vsub.s32 0, %v6914
        %v6916 = vadd.s32 %v6911, 1
        %vm6917 = vcmp.gt.s32.totalorder %v6916, 0
        %v6918 = vsel %vm6917, %v6916, 0
        %v6919 = vshrl.u32 %v6918, 5
        %v6920 = vand.u32 %v6918, 31
        %v6921 = vsub.s32 32, %v6920
        %v6922 = vshrl.u32 683565275, %v6921
        %v6923 = vshll.u32 683565275, %v6920
        %v6924 = vshrl.u32 2475754826, %v6921
        %v6925 = vor.u32 %v6923, %v6924
        %v6926 = vshll.u32 2475754826, %v6920
        %v6927 = vshrl.u32 2131351028, %v6921
        %v6928 = vor.u32 %v6926, %v6927
        %v6929 = vshll.u32 2131351028, %v6920
        %v6930 = vshrl.u32 2102212464, %v6921
        %v6931 = vor.u32 %v6929, %v6930
        %v6932 = vshll.u32 2102212464, %v6920
        %v6933 = vshrl.u32 920167782, %v6921
        %v6934 = vor.u32 %v6932, %v6933
        %v6935 = vshll.u32 920167782, %v6920
        %v6936 = vshrl.u32 1326507024, %v6921
        %v6937 = vor.u32 %v6935, %v6936
        %vm6938 = vcmp.lt.s32.totalorder %v6919, 1
        %vm6939 = vcmp.lt.s32.totalorder %v6919, 2
        %vm6940 = vcmp.lt.s32.totalorder %v6919, 3
        %vm6941 = vcmp.lt.s32.totalorder %v6919, 4
        %v6942 = vsel %vm6938, %v6922, %v6925
        %v6943 = vsel %vm6941, %v6931, 2102212464
        %v6944 = vsel %vm6940, %v6928, %v6943
        %v6945 = vsel %vm6939, %v6942, %v6944
        %v6946 = vsel %vm6938, %v6925, %v6928
        %v6947 = vsel %vm6941, %v6934, 920167782
        %v6948 = vsel %vm6940, %v6931, %v6947
        %v6949 = vsel %vm6939, %v6946, %v6948
        %v6950 = vsel %vm6938, %v6928, %v6931
        %v6951 = vsel %vm6941, %v6937, 1326507024
        %v6952 = vsel %vm6940, %v6934, %v6951
        %v6953 = vsel %vm6939, %v6950, %v6952
        %v6954 = vshll.u32 %v6914, 8
        %v6955 = vmul.u32.u64.compose %v6954, %v6953
        %v6956 = vextract.low.u32 %v6955
        %v6957 = vextract.high.u32 %v6955
        %v6958 = vmul.u32.u64.compose %v6954, %v6949
        %v6959 = vextract.low.u32 %v6958
        %v6960 = vextract.high.u32 %v6958
        %v6961 = vmul.u32 %v6954, %v6945
        %v6962 = vadd.s32 %v6957, %v6959
        %vm6963 = vc.u32 %v6957, %v6959
        %v6964 = vadd.s32 %v6960, 1
        %v6965 = vsel %vm6963, %v6964, %v6960
        %v6966 = vadd.s32 %v6961, %v6965
        %v6967 = vadd.s32 %v6966, 536870912
        %v6968 = vshrl.u32 %v6967, 30
        %v6969 = vshll.u32 %v6968, 30
        %v6970 = vsub.s32 %v6966, %v6969
        %vm6971 = vcmp.lt.s32.totalorder %v6970, 0
        %v6972 = vsub.s32 0, %v6970
        %v6973 = vsel %vm6971, %v6972, %v6970
        %v6974 = vclz %v6973
        %v6975 = vsub.s32 %v6974, 2
        %vm6976 = vcmp.gt.s32.totalorder 0, %v6975
        %v6977 = vsel %vm6976, 0, %v6975
        %v6978 = vsub.s32 32, %v6977
        %v6979 = vshll.u32 %v6970, %v6977
        %v6980 = vshrl.u32 %v6962, %v6978
        %v6981 = vor.u32 %v6979, %v6980
        %v6982 = vsub.s32 4294967266, %v6977
        %v6983 = vadd.s32 %v6982, 127
        %v6984 = vshll.u32 %v6983, 23
        %v6985 = vor.u32 4788187, %v6984
        %v6986 = vand.u32 2147483647, %v6985
        %v6988 = vcvt.s32.f32 %v6981
        %v6989 = vmul.f32 %v6988, %v6986
        %v6990 = vxor.u32 %v6989, 2147483648
        %v6991 = vsel %vm6908, %v6990, %v6989
        %v6992 = vsub.s32 4, %v6968
        %v6993 = vsel %vm6908, %v6992, %v6968
        %v6994 = vsel %vm6907, %v6266, %v6991
        %v6995 = vsel %vm6907, 0, %v6993
        %v6996 = vcosq.f32.pop %v6994
        %v6997 = vsinq.f32.pop %v6994
        %vm6998 = vweird.f32 %v6266
        %v6999 = vadd.s32 %v6995, 3
        %v7000 = vand.u32 %v6999, 3
        %vm7001 = vcmp.lt.s32.totalorder %v7000, 2
        %vm7002 = vcmp.eq.s32.totalorder %v7000, 0
        %v7003 = vxor.u32 %v6997, 2147483648
        %v7004 = vsel %vm7002, %v6996, %v7003
        %vm7005 = vcmp.eq.s32.totalorder %v7000, 2
        %v7006 = vxor.u32 %v6996, 2147483648
        %v7007 = vsel %vm7005, %v7006, %v6997
        %v7008 = vsel %vm7001, %v7004, %v7007
        %v7009 = vsel %vm6998, nan, %v7008
        %v7010 = vand.u32 2147483647, %v6268
        %vm7011 = vcmp.le.f32.partialorder %v7010, 0.7853982
        %vm7012 = vcmp.lt.s32.totalorder %v6268, 0
        %v7013 = vand.u32 %v6268, 2139095040
        %v7014 = vshrl.u32 %v7013, 23
        %v7015 = vsub.s32 %v7014, 127
        %v7016 = vand.u32 2147483647, %v6268
        %v7017 = vand.u32 %v7016, 8388607
        %v7018 = vor.u32 %v7017, 8388608
        %v7019 = vsub.s32 0, %v7018
        %v7020 = vadd.s32 %v7015, 1
        %vm7021 = vcmp.gt.s32.totalorder %v7020, 0
        %v7022 = vsel %vm7021, %v7020, 0
        %v7023 = vshrl.u32 %v7022, 5
        %v7024 = vand.u32 %v7022, 31
        %v7025 = vsub.s32 32, %v7024
        %v7026 = vshrl.u32 683565275, %v7025
        %v7027 = vshll.u32 683565275, %v7024
        %v7028 = vshrl.u32 2475754826, %v7025
        %v7029 = vor.u32 %v7027, %v7028
        %v7030 = vshll.u32 2475754826, %v7024
        %v7031 = vshrl.u32 2131351028, %v7025
        %v7032 = vor.u32 %v7030, %v7031
        %v7033 = vshll.u32 2131351028, %v7024
        %v7034 = vshrl.u32 2102212464, %v7025
        %v7035 = vor.u32 %v7033, %v7034
        %v7036 = vshll.u32 2102212464, %v7024
        %v7037 = vshrl.u32 920167782, %v7025
        %v7038 = vor.u32 %v7036, %v7037
        %v7039 = vshll.u32 920167782, %v7024
        %v7040 = vshrl.u32 1326507024, %v7025
        %v7041 = vor.u32 %v7039, %v7040
        %vm7042 = vcmp.lt.s32.totalorder %v7023, 1
        %vm7043 = vcmp.lt.s32.totalorder %v7023, 2
        %vm7044 = vcmp.lt.s32.totalorder %v7023, 3
        %vm7045 = vcmp.lt.s32.totalorder %v7023, 4
        %v7046 = vsel %vm7042, %v7026, %v7029
        %v7047 = vsel %vm7045, %v7035, 2102212464
        %v7048 = vsel %vm7044, %v7032, %v7047
        %v7049 = vsel %vm7043, %v7046, %v7048
        %v7050 = vsel %vm7042, %v7029, %v7032
        %v7051 = vsel %vm7045, %v7038, 920167782
        %v7052 = vsel %vm7044, %v7035, %v7051
        %v7053 = vsel %vm7043, %v7050, %v7052
        %v7054 = vsel %vm7042, %v7032, %v7035
        %v7055 = vsel %vm7045, %v7041, 1326507024
        %v7056 = vsel %vm7044, %v7038, %v7055
        %v7057 = vsel %vm7043, %v7054, %v7056
        %v7058 = vshll.u32 %v7018, 8
        %v7059 = vmul.u32.u64.compose %v7058, %v7057
        %v7060 = vextract.low.u32 %v7059
        %v7061 = vextract.high.u32 %v7059
        %v7062 = vmul.u32.u64.compose %v7058, %v7053
        %v7063 = vextract.low.u32 %v7062
        %v7064 = vextract.high.u32 %v7062
        %v7065 = vmul.u32 %v7058, %v7049
        %v7066 = vadd.s32 %v7061, %v7063
        %vm7067 = vc.u32 %v7061, %v7063
        %v7068 = vadd.s32 %v7064, 1
        %v7069 = vsel %vm7067, %v7068, %v7064
        %v7070 = vadd.s32 %v7065, %v7069
        %v7071 = vadd.s32 %v7070, 536870912
        %v7072 = vshrl.u32 %v7071, 30
        %v7073 = vshll.u32 %v7072, 30
        %v7074 = vsub.s32 %v7070, %v7073
        %vm7075 = vcmp.lt.s32.totalorder %v7074, 0
        %v7076 = vsub.s32 0, %v7074
        %v7077 = vsel %vm7075, %v7076, %v7074
        %v7078 = vclz %v7077
        %v7079 = vsub.s32 %v7078, 2
        %vm7080 = vcmp.gt.s32.totalorder 0, %v7079
        %v7081 = vsel %vm7080, 0, %v7079
        %v7082 = vsub.s32 32, %v7081
        %v7083 = vshll.u32 %v7074, %v7081
        %v7084 = vshrl.u32 %v7066, %v7082
        %v7085 = vor.u32 %v7083, %v7084
        %v7086 = vsub.s32 4294967266, %v7081
        %v7087 = vadd.s32 %v7086, 127
        %v7088 = vshll.u32 %v7087, 23
        %v7089 = vor.u32 4788187, %v7088
        %v7090 = vand.u32 2147483647, %v7089
        %v7092 = vcvt.s32.f32 %v7085
        %v7093 = vmul.f32 %v7092, %v7090
        %v7094 = vxor.u32 %v7093, 2147483648
        %v7095 = vsel %vm7012, %v7094, %v7093
        %v7096 = vsub.s32 4, %v7072
        %v7097 = vsel %vm7012, %v7096, %v7072
        %v7098 = vsel %vm7011, %v6268, %v7095
        %v7099 = vsel %vm7011, 0, %v7097
        %v7100 = vcosq.f32.pop %v7098
        %v7101 = vsinq.f32.pop %v7098
        %vm7102 = vweird.f32 %v6268
        %v7103 = vadd.s32 %v7099, 3
        %v7104 = vand.u32 %v7103, 3
        %vm7105 = vcmp.lt.s32.totalorder %v7104, 2
        %vm7106 = vcmp.eq.s32.totalorder %v7104, 0
        %v7107 = vxor.u32 %v7101, 2147483648
        %v7108 = vsel %vm7106, %v7100, %v7107
        %vm7109 = vcmp.eq.s32.totalorder %v7104, 2
        %v7110 = vxor.u32 %v7100, 2147483648
        %v7111 = vsel %vm7109, %v7110, %v7101
        %v7112 = vsel %vm7105, %v7108, %v7111
        %v7113 = vsel %vm7102, nan, %v7112
        %v7114 = vand.u32 2147483647, %v6183
        %vm7115 = vcmp.le.f32.partialorder %v7114, 0.7853982
        %vm7116 = vcmp.lt.s32.totalorder %v6183, 0
        %v7117 = vand.u32 %v6183, 2139095040
        %v7118 = vshrl.u32 %v7117, 23
        %v7119 = vsub.s32 %v7118, 127
        %v7120 = vand.u32 2147483647, %v6183
        %v7121 = vand.u32 %v7120, 8388607
        %v7122 = vor.u32 %v7121, 8388608
        %v7123 = vsub.s32 0, %v7122
        %v7124 = vadd.s32 %v7119, 1
        %vm7125 = vcmp.gt.s32.totalorder %v7124, 0
        %v7126 = vsel %vm7125, %v7124, 0
        %v7127 = vshrl.u32 %v7126, 5
        %v7128 = vand.u32 %v7126, 31
        %v7129 = vsub.s32 32, %v7128
        %v7130 = vshrl.u32 683565275, %v7129
        %v7131 = vshll.u32 683565275, %v7128
        %v7132 = vshrl.u32 2475754826, %v7129
        %v7133 = vor.u32 %v7131, %v7132
        %v7134 = vshll.u32 2475754826, %v7128
        %v7135 = vshrl.u32 2131351028, %v7129
        %v7136 = vor.u32 %v7134, %v7135
        %v7137 = vshll.u32 2131351028, %v7128
        %v7138 = vshrl.u32 2102212464, %v7129
        %v7139 = vor.u32 %v7137, %v7138
        %v7140 = vshll.u32 2102212464, %v7128
        %v7141 = vshrl.u32 920167782, %v7129
        %v7142 = vor.u32 %v7140, %v7141
        %v7143 = vshll.u32 920167782, %v7128
        %v7144 = vshrl.u32 1326507024, %v7129
        %v7145 = vor.u32 %v7143, %v7144
        %vm7146 = vcmp.lt.s32.totalorder %v7127, 1
        %vm7147 = vcmp.lt.s32.totalorder %v7127, 2
        %vm7148 = vcmp.lt.s32.totalorder %v7127, 3
        %vm7149 = vcmp.lt.s32.totalorder %v7127, 4
        %v7150 = vsel %vm7146, %v7130, %v7133
        %v7151 = vsel %vm7149, %v7139, 2102212464
        %v7152 = vsel %vm7148, %v7136, %v7151
        %v7153 = vsel %vm7147, %v7150, %v7152
        %v7154 = vsel %vm7146, %v7133, %v7136
        %v7155 = vsel %vm7149, %v7142, 920167782
        %v7156 = vsel %vm7148, %v7139, %v7155
        %v7157 = vsel %vm7147, %v7154, %v7156
        %v7158 = vsel %vm7146, %v7136, %v7139
        %v7159 = vsel %vm7149, %v7145, 1326507024
        %v7160 = vsel %vm7148, %v7142, %v7159
        %v7161 = vsel %vm7147, %v7158, %v7160
        %v7162 = vshll.u32 %v7122, 8
        %v7163 = vmul.u32.u64.compose %v7162, %v7161
        %v7164 = vextract.low.u32 %v7163
        %v7165 = vextract.high.u32 %v7163
        %v7166 = vmul.u32.u64.compose %v7162, %v7157
        %v7167 = vextract.low.u32 %v7166
        %v7168 = vextract.high.u32 %v7166
        %v7169 = vmul.u32 %v7162, %v7153
        %v7170 = vadd.s32 %v7165, %v7167
        %vm7171 = vc.u32 %v7165, %v7167
        %v7172 = vadd.s32 %v7168, 1
        %v7173 = vsel %vm7171, %v7172, %v7168
        %v7174 = vadd.s32 %v7169, %v7173
        %v7175 = vadd.s32 %v7174, 536870912
        %v7176 = vshrl.u32 %v7175, 30
        %v7177 = vshll.u32 %v7176, 30
        %v7178 = vsub.s32 %v7174, %v7177
        %vm7179 = vcmp.lt.s32.totalorder %v7178, 0
        %v7180 = vsub.s32 0, %v7178
        %v7181 = vsel %vm7179, %v7180, %v7178
        %v7182 = vclz %v7181
        %v7183 = vsub.s32 %v7182, 2
        %vm7184 = vcmp.gt.s32.totalorder 0, %v7183
        %v7185 = vsel %vm7184, 0, %v7183
        %v7186 = vsub.s32 32, %v7185
        %v7187 = vshll.u32 %v7178, %v7185
        %v7188 = vshrl.u32 %v7170, %v7186
        %v7189 = vor.u32 %v7187, %v7188
        %v7190 = vsub.s32 4294967266, %v7185
        %v7191 = vadd.s32 %v7190, 127
        %v7192 = vshll.u32 %v7191, 23
        %v7193 = vor.u32 4788187, %v7192
        %v7194 = vand.u32 2147483647, %v7193
        %v7196 = vcvt.s32.f32 %v7189
        %v7197 = vmul.f32 %v7196, %v7194
        %v7198 = vxor.u32 %v7197, 2147483648
        %v7199 = vsel %vm7116, %v7198, %v7197
        %v7200 = vsub.s32 4, %v7176
        %v7201 = vsel %vm7116, %v7200, %v7176
        %v7202 = vsel %vm7115, %v6183, %v7199
        %v7203 = vsel %vm7115, 0, %v7201
        %v7204 = vcosq.f32.pop %v7202
        %v7205 = vsinq.f32.pop %v7202
        %vm7206 = vweird.f32 %v6183
        %v7207 = vadd.s32 %v7203, 3
        %v7208 = vand.u32 %v7207, 3
        %vm7209 = vcmp.lt.s32.totalorder %v7208, 2
        %vm7210 = vcmp.eq.s32.totalorder %v7208, 0
        %v7211 = vxor.u32 %v7205, 2147483648
        %v7212 = vsel %vm7210, %v7204, %v7211
        %vm7213 = vcmp.eq.s32.totalorder %v7208, 2
        %v7214 = vxor.u32 %v7204, 2147483648
        %v7215 = vsel %vm7213, %v7214, %v7205
        %v7216 = vsel %vm7209, %v7212, %v7215
        %v7217 = vsel %vm7206, nan, %v7216
        %v7218 = vand.u32 2147483647, %v6185
        %vm7219 = vcmp.le.f32.partialorder %v7218, 0.7853982
        %vm7220 = vcmp.lt.s32.totalorder %v6185, 0
        %v7221 = vand.u32 %v6185, 2139095040
        %v7222 = vshrl.u32 %v7221, 23
        %v7223 = vsub.s32 %v7222, 127
        %v7224 = vand.u32 2147483647, %v6185
        %v7225 = vand.u32 %v7224, 8388607
        %v7226 = vor.u32 %v7225, 8388608
        %v7227 = vsub.s32 0, %v7226
        %v7228 = vadd.s32 %v7223, 1
        %vm7229 = vcmp.gt.s32.totalorder %v7228, 0
        %v7230 = vsel %vm7229, %v7228, 0
        %v7231 = vshrl.u32 %v7230, 5
        %v7232 = vand.u32 %v7230, 31
        %v7233 = vsub.s32 32, %v7232
        %v7234 = vshrl.u32 683565275, %v7233
        %v7235 = vshll.u32 683565275, %v7232
        %v7236 = vshrl.u32 2475754826, %v7233
        %v7237 = vor.u32 %v7235, %v7236
        %v7238 = vshll.u32 2475754826, %v7232
        %v7239 = vshrl.u32 2131351028, %v7233
        %v7240 = vor.u32 %v7238, %v7239
        %v7241 = vshll.u32 2131351028, %v7232
        %v7242 = vshrl.u32 2102212464, %v7233
        %v7243 = vor.u32 %v7241, %v7242
        %v7244 = vshll.u32 2102212464, %v7232
        %v7245 = vshrl.u32 920167782, %v7233
        %v7246 = vor.u32 %v7244, %v7245
        %v7247 = vshll.u32 920167782, %v7232
        %v7248 = vshrl.u32 1326507024, %v7233
        %v7249 = vor.u32 %v7247, %v7248
        %vm7250 = vcmp.lt.s32.totalorder %v7231, 1
        %vm7251 = vcmp.lt.s32.totalorder %v7231, 2
        %vm7252 = vcmp.lt.s32.totalorder %v7231, 3
        %vm7253 = vcmp.lt.s32.totalorder %v7231, 4
        %v7254 = vsel %vm7250, %v7234, %v7237
        %v7255 = vsel %vm7253, %v7243, 2102212464
        %v7256 = vsel %vm7252, %v7240, %v7255
        %v7257 = vsel %vm7251, %v7254, %v7256
        %v7258 = vsel %vm7250, %v7237, %v7240
        %v7259 = vsel %vm7253, %v7246, 920167782
        %v7260 = vsel %vm7252, %v7243, %v7259
        %v7261 = vsel %vm7251, %v7258, %v7260
        %v7262 = vsel %vm7250, %v7240, %v7243
        %v7263 = vsel %vm7253, %v7249, 1326507024
        %v7264 = vsel %vm7252, %v7246, %v7263
        %v7265 = vsel %vm7251, %v7262, %v7264
        %v7266 = vshll.u32 %v7226, 8
        %v7267 = vmul.u32.u64.compose %v7266, %v7265
        %v7268 = vextract.low.u32 %v7267
        %v7269 = vextract.high.u32 %v7267
        %v7270 = vmul.u32.u64.compose %v7266, %v7261
        %v7271 = vextract.low.u32 %v7270
        %v7272 = vextract.high.u32 %v7270
        %v7273 = vmul.u32 %v7266, %v7257
        %v7274 = vadd.s32 %v7269, %v7271
        %vm7275 = vc.u32 %v7269, %v7271
        %v7276 = vadd.s32 %v7272, 1
        %v7277 = vsel %vm7275, %v7276, %v7272
        %v7278 = vadd.s32 %v7273, %v7277
        %v7279 = vadd.s32 %v7278, 536870912
        %v7280 = vshrl.u32 %v7279, 30
        %v7281 = vshll.u32 %v7280, 30
        %v7282 = vsub.s32 %v7278, %v7281
        %vm7283 = vcmp.lt.s32.totalorder %v7282, 0
        %v7284 = vsub.s32 0, %v7282
        %v7285 = vsel %vm7283, %v7284, %v7282
        %v7286 = vclz %v7285
        %v7287 = vsub.s32 %v7286, 2
        %vm7288 = vcmp.gt.s32.totalorder 0, %v7287
        %v7289 = vsel %vm7288, 0, %v7287
        %v7290 = vsub.s32 32, %v7289
        %v7291 = vshll.u32 %v7282, %v7289
        %v7292 = vshrl.u32 %v7274, %v7290
        %v7293 = vor.u32 %v7291, %v7292
        %v7294 = vsub.s32 4294967266, %v7289
        %v7295 = vadd.s32 %v7294, 127
        %v7296 = vshll.u32 %v7295, 23
        %v7297 = vor.u32 4788187, %v7296
        %v7298 = vand.u32 2147483647, %v7297
        %v7300 = vcvt.s32.f32 %v7293
        %v7301 = vmul.f32 %v7300, %v7298
        %v7302 = vxor.u32 %v7301, 2147483648
        %v7303 = vsel %vm7220, %v7302, %v7301
        %v7304 = vsub.s32 4, %v7280
        %v7305 = vsel %vm7220, %v7304, %v7280
        %v7306 = vsel %vm7219, %v6185, %v7303
        %v7307 = vsel %vm7219, 0, %v7305
        %v7308 = vcosq.f32.pop %v7306
        %v7309 = vsinq.f32.pop %v7306
        %vm7310 = vweird.f32 %v6185
        %v7311 = vadd.s32 %v7307, 3
        %v7312 = vand.u32 %v7311, 3
        %vm7313 = vcmp.lt.s32.totalorder %v7312, 2
        %vm7314 = vcmp.eq.s32.totalorder %v7312, 0
        %v7315 = vxor.u32 %v7309, 2147483648
        %v7316 = vsel %vm7314, %v7308, %v7315
        %vm7317 = vcmp.eq.s32.totalorder %v7312, 2
        %v7318 = vxor.u32 %v7308, 2147483648
        %v7319 = vsel %vm7317, %v7318, %v7309
        %v7320 = vsel %vm7313, %v7316, %v7319
        %v7321 = vsel %vm7310, nan, %v7320
        %v7322 = vand.u32 2147483647, %v6272
        %vm7323 = vcmp.le.f32.partialorder %v7322, 0.7853982
        %vm7324 = vcmp.lt.s32.totalorder %v6272, 0
        %v7325 = vand.u32 %v6272, 2139095040
        %v7326 = vshrl.u32 %v7325, 23
        %v7327 = vsub.s32 %v7326, 127
        %v7328 = vand.u32 2147483647, %v6272
        %v7329 = vand.u32 %v7328, 8388607
        %v7330 = vor.u32 %v7329, 8388608
        %v7331 = vsub.s32 0, %v7330
        %v7332 = vadd.s32 %v7327, 1
        %vm7333 = vcmp.gt.s32.totalorder %v7332, 0
        %v7334 = vsel %vm7333, %v7332, 0
        %v7335 = vshrl.u32 %v7334, 5
        %v7336 = vand.u32 %v7334, 31
        %v7337 = vsub.s32 32, %v7336
        %v7338 = vshrl.u32 683565275, %v7337
        %v7339 = vshll.u32 683565275, %v7336
        %v7340 = vshrl.u32 2475754826, %v7337
        %v7341 = vor.u32 %v7339, %v7340
        %v7342 = vshll.u32 2475754826, %v7336
        %v7343 = vshrl.u32 2131351028, %v7337
        %v7344 = vor.u32 %v7342, %v7343
        %v7345 = vshll.u32 2131351028, %v7336
        %v7346 = vshrl.u32 2102212464, %v7337
        %v7347 = vor.u32 %v7345, %v7346
        %v7348 = vshll.u32 2102212464, %v7336
        %v7349 = vshrl.u32 920167782, %v7337
        %v7350 = vor.u32 %v7348, %v7349
        %v7351 = vshll.u32 920167782, %v7336
        %v7352 = vshrl.u32 1326507024, %v7337
        %v7353 = vor.u32 %v7351, %v7352
        %vm7354 = vcmp.lt.s32.totalorder %v7335, 1
        %vm7355 = vcmp.lt.s32.totalorder %v7335, 2
        %vm7356 = vcmp.lt.s32.totalorder %v7335, 3
        %vm7357 = vcmp.lt.s32.totalorder %v7335, 4
        %v7358 = vsel %vm7354, %v7338, %v7341
        %v7359 = vsel %vm7357, %v7347, 2102212464
        %v7360 = vsel %vm7356, %v7344, %v7359
        %v7361 = vsel %vm7355, %v7358, %v7360
        %v7362 = vsel %vm7354, %v7341, %v7344
        %v7363 = vsel %vm7357, %v7350, 920167782
        %v7364 = vsel %vm7356, %v7347, %v7363
        %v7365 = vsel %vm7355, %v7362, %v7364
        %v7366 = vsel %vm7354, %v7344, %v7347
        %v7367 = vsel %vm7357, %v7353, 1326507024
        %v7368 = vsel %vm7356, %v7350, %v7367
        %v7369 = vsel %vm7355, %v7366, %v7368
        %v7370 = vshll.u32 %v7330, 8
        %v7371 = vmul.u32.u64.compose %v7370, %v7369
        %v7372 = vextract.low.u32 %v7371
        %v7373 = vextract.high.u32 %v7371
        %v7374 = vmul.u32.u64.compose %v7370, %v7365
        %v7375 = vextract.low.u32 %v7374
        %v7376 = vextract.high.u32 %v7374
        %v7377 = vmul.u32 %v7370, %v7361
        %v7378 = vadd.s32 %v7373, %v7375
        %vm7379 = vc.u32 %v7373, %v7375
        %v7380 = vadd.s32 %v7376, 1
        %v7381 = vsel %vm7379, %v7380, %v7376
        %v7382 = vadd.s32 %v7377, %v7381
        %v7383 = vadd.s32 %v7382, 536870912
        %v7384 = vshrl.u32 %v7383, 30
        %v7385 = vshll.u32 %v7384, 30
        %v7386 = vsub.s32 %v7382, %v7385
        %vm7387 = vcmp.lt.s32.totalorder %v7386, 0
        %v7388 = vsub.s32 0, %v7386
        %v7389 = vsel %vm7387, %v7388, %v7386
        %v7390 = vclz %v7389
        %v7391 = vsub.s32 %v7390, 2
        %vm7392 = vcmp.gt.s32.totalorder 0, %v7391
        %v7393 = vsel %vm7392, 0, %v7391
        %v7394 = vsub.s32 32, %v7393
        %v7395 = vshll.u32 %v7386, %v7393
        %v7396 = vshrl.u32 %v7378, %v7394
        %v7397 = vor.u32 %v7395, %v7396
        %v7398 = vsub.s32 4294967266, %v7393
        %v7399 = vadd.s32 %v7398, 127
        %v7400 = vshll.u32 %v7399, 23
        %v7401 = vor.u32 4788187, %v7400
        %v7402 = vand.u32 2147483647, %v7401
        %v7404 = vcvt.s32.f32 %v7397
        %v7405 = vmul.f32 %v7404, %v7402
        %v7406 = vxor.u32 %v7405, 2147483648
        %v7407 = vsel %vm7324, %v7406, %v7405
        %v7408 = vsub.s32 4, %v7384
        %v7409 = vsel %vm7324, %v7408, %v7384
        %v7410 = vsel %vm7323, %v6272, %v7407
        %v7411 = vsel %vm7323, 0, %v7409
        %v7412 = vcosq.f32.pop %v7410
        %v7413 = vsinq.f32.pop %v7410
        %vm7414 = vweird.f32 %v6272
        %v7415 = vadd.s32 %v7411, 3
        %v7416 = vand.u32 %v7415, 3
        %vm7417 = vcmp.lt.s32.totalorder %v7416, 2
        %vm7418 = vcmp.eq.s32.totalorder %v7416, 0
        %v7419 = vxor.u32 %v7413, 2147483648
        %v7420 = vsel %vm7418, %v7412, %v7419
        %vm7421 = vcmp.eq.s32.totalorder %v7416, 2
        %v7422 = vxor.u32 %v7412, 2147483648
        %v7423 = vsel %vm7421, %v7422, %v7413
        %v7424 = vsel %vm7417, %v7420, %v7423
        %v7425 = vsel %vm7414, nan, %v7424
        %v7426 = vand.u32 2147483647, %v6274
        %vm7427 = vcmp.le.f32.partialorder %v7426, 0.7853982
        %vm7428 = vcmp.lt.s32.totalorder %v6274, 0
        %v7429 = vand.u32 %v6274, 2139095040
        %v7430 = vshrl.u32 %v7429, 23
        %v7431 = vsub.s32 %v7430, 127
        %v7432 = vand.u32 2147483647, %v6274
        %v7433 = vand.u32 %v7432, 8388607
        %v7434 = vor.u32 %v7433, 8388608
        %v7435 = vsub.s32 0, %v7434
        %v7436 = vadd.s32 %v7431, 1
        %vm7437 = vcmp.gt.s32.totalorder %v7436, 0
        %v7438 = vsel %vm7437, %v7436, 0
        %v7439 = vshrl.u32 %v7438, 5
        %v7440 = vand.u32 %v7438, 31
        %v7441 = vsub.s32 32, %v7440
        %v7442 = vshrl.u32 683565275, %v7441
        %v7443 = vshll.u32 683565275, %v7440
        %v7444 = vshrl.u32 2475754826, %v7441
        %v7445 = vor.u32 %v7443, %v7444
        %v7446 = vshll.u32 2475754826, %v7440
        %v7447 = vshrl.u32 2131351028, %v7441
        %v7448 = vor.u32 %v7446, %v7447
        %v7449 = vshll.u32 2131351028, %v7440
        %v7450 = vshrl.u32 2102212464, %v7441
        %v7451 = vor.u32 %v7449, %v7450
        %v7452 = vshll.u32 2102212464, %v7440
        %v7453 = vshrl.u32 920167782, %v7441
        %v7454 = vor.u32 %v7452, %v7453
        %v7455 = vshll.u32 920167782, %v7440
        %v7456 = vshrl.u32 1326507024, %v7441
        %v7457 = vor.u32 %v7455, %v7456
        %vm7458 = vcmp.lt.s32.totalorder %v7439, 1
        %vm7459 = vcmp.lt.s32.totalorder %v7439, 2
        %vm7460 = vcmp.lt.s32.totalorder %v7439, 3
        %vm7461 = vcmp.lt.s32.totalorder %v7439, 4
        %v7462 = vsel %vm7458, %v7442, %v7445
        %v7463 = vsel %vm7461, %v7451, 2102212464
        %v7464 = vsel %vm7460, %v7448, %v7463
        %v7465 = vsel %vm7459, %v7462, %v7464
        %v7466 = vsel %vm7458, %v7445, %v7448
        %v7467 = vsel %vm7461, %v7454, 920167782
        %v7468 = vsel %vm7460, %v7451, %v7467
        %v7469 = vsel %vm7459, %v7466, %v7468
        %v7470 = vsel %vm7458, %v7448, %v7451
        %v7471 = vsel %vm7461, %v7457, 1326507024
        %v7472 = vsel %vm7460, %v7454, %v7471
        %v7473 = vsel %vm7459, %v7470, %v7472
        %v7474 = vshll.u32 %v7434, 8
        %v7475 = vmul.u32.u64.compose %v7474, %v7473
        %v7476 = vextract.low.u32 %v7475
        %v7477 = vextract.high.u32 %v7475
        %v7478 = vmul.u32.u64.compose %v7474, %v7469
        %v7479 = vextract.low.u32 %v7478
        %v7480 = vextract.high.u32 %v7478
        %v7481 = vmul.u32 %v7474, %v7465
        %v7482 = vadd.s32 %v7477, %v7479
        %vm7483 = vc.u32 %v7477, %v7479
        %v7484 = vadd.s32 %v7480, 1
        %v7485 = vsel %vm7483, %v7484, %v7480
        %v7486 = vadd.s32 %v7481, %v7485
        %v7487 = vadd.s32 %v7486, 536870912
        %v7488 = vshrl.u32 %v7487, 30
        %v7489 = vshll.u32 %v7488, 30
        %v7490 = vsub.s32 %v7486, %v7489
        %vm7491 = vcmp.lt.s32.totalorder %v7490, 0
        %v7492 = vsub.s32 0, %v7490
        %v7493 = vsel %vm7491, %v7492, %v7490
        %v7494 = vclz %v7493
        %v7495 = vsub.s32 %v7494, 2
        %vm7496 = vcmp.gt.s32.totalorder 0, %v7495
        %v7497 = vsel %vm7496, 0, %v7495
        %v7498 = vsub.s32 32, %v7497
        %v7499 = vshll.u32 %v7490, %v7497
        %v7500 = vshrl.u32 %v7482, %v7498
        %v7501 = vor.u32 %v7499, %v7500
        %v7502 = vsub.s32 4294967266, %v7497
        %v7503 = vadd.s32 %v7502, 127
        %v7504 = vshll.u32 %v7503, 23
        %v7505 = vor.u32 4788187, %v7504
        %v7506 = vand.u32 2147483647, %v7505
        %v7508 = vcvt.s32.f32 %v7501
        %v7509 = vmul.f32 %v7508, %v7506
        %v7510 = vxor.u32 %v7509, 2147483648
        %v7511 = vsel %vm7428, %v7510, %v7509
        %v7512 = vsub.s32 4, %v7488
        %v7513 = vsel %vm7428, %v7512, %v7488
        %v7514 = vsel %vm7427, %v6274, %v7511
        %v7515 = vsel %vm7427, 0, %v7513
        %v7516 = vcosq.f32.pop %v7514
        %v7517 = vsinq.f32.pop %v7514
        %vm7518 = vweird.f32 %v6274
        %v7519 = vadd.s32 %v7515, 3
        %v7520 = vand.u32 %v7519, 3
        %vm7521 = vcmp.lt.s32.totalorder %v7520, 2
        %vm7522 = vcmp.eq.s32.totalorder %v7520, 0
        %v7523 = vxor.u32 %v7517, 2147483648
        %v7524 = vsel %vm7522, %v7516, %v7523
        %vm7525 = vcmp.eq.s32.totalorder %v7520, 2
        %v7526 = vxor.u32 %v7516, 2147483648
        %v7527 = vsel %vm7525, %v7526, %v7517
        %v7528 = vsel %vm7521, %v7524, %v7527
        %v7529 = vsel %vm7518, nan, %v7528
        %v7530 = vand.u32 2147483647, %v6189
        %vm7531 = vcmp.le.f32.partialorder %v7530, 0.7853982
        %vm7532 = vcmp.lt.s32.totalorder %v6189, 0
        %v7533 = vand.u32 %v6189, 2139095040
        %v7534 = vshrl.u32 %v7533, 23
        %v7535 = vsub.s32 %v7534, 127
        %v7536 = vand.u32 2147483647, %v6189
        %v7537 = vand.u32 %v7536, 8388607
        %v7538 = vor.u32 %v7537, 8388608
        %v7539 = vsub.s32 0, %v7538
        %v7540 = vadd.s32 %v7535, 1
        %vm7541 = vcmp.gt.s32.totalorder %v7540, 0
        %v7542 = vsel %vm7541, %v7540, 0
        %v7543 = vshrl.u32 %v7542, 5
        %v7544 = vand.u32 %v7542, 31
        %v7545 = vsub.s32 32, %v7544
        %v7546 = vshrl.u32 683565275, %v7545
        %v7547 = vshll.u32 683565275, %v7544
        %v7548 = vshrl.u32 2475754826, %v7545
        %v7549 = vor.u32 %v7547, %v7548
        %v7550 = vshll.u32 2475754826, %v7544
        %v7551 = vshrl.u32 2131351028, %v7545
        %v7552 = vor.u32 %v7550, %v7551
        %v7553 = vshll.u32 2131351028, %v7544
        %v7554 = vshrl.u32 2102212464, %v7545
        %v7555 = vor.u32 %v7553, %v7554
        %v7556 = vshll.u32 2102212464, %v7544
        %v7557 = vshrl.u32 920167782, %v7545
        %v7558 = vor.u32 %v7556, %v7557
        %v7559 = vshll.u32 920167782, %v7544
        %v7560 = vshrl.u32 1326507024, %v7545
        %v7561 = vor.u32 %v7559, %v7560
        %vm7562 = vcmp.lt.s32.totalorder %v7543, 1
        %vm7563 = vcmp.lt.s32.totalorder %v7543, 2
        %vm7564 = vcmp.lt.s32.totalorder %v7543, 3
        %vm7565 = vcmp.lt.s32.totalorder %v7543, 4
        %v7566 = vsel %vm7562, %v7546, %v7549
        %v7567 = vsel %vm7565, %v7555, 2102212464
        %v7568 = vsel %vm7564, %v7552, %v7567
        %v7569 = vsel %vm7563, %v7566, %v7568
        %v7570 = vsel %vm7562, %v7549, %v7552
        %v7571 = vsel %vm7565, %v7558, 920167782
        %v7572 = vsel %vm7564, %v7555, %v7571
        %v7573 = vsel %vm7563, %v7570, %v7572
        %v7574 = vsel %vm7562, %v7552, %v7555
        %v7575 = vsel %vm7565, %v7561, 1326507024
        %v7576 = vsel %vm7564, %v7558, %v7575
        %v7577 = vsel %vm7563, %v7574, %v7576
        %v7578 = vshll.u32 %v7538, 8
        %v7579 = vmul.u32.u64.compose %v7578, %v7577
        %v7580 = vextract.low.u32 %v7579
        %v7581 = vextract.high.u32 %v7579
        %v7582 = vmul.u32.u64.compose %v7578, %v7573
        %v7583 = vextract.low.u32 %v7582
        %v7584 = vextract.high.u32 %v7582
        %v7585 = vmul.u32 %v7578, %v7569
        %v7586 = vadd.s32 %v7581, %v7583
        %vm7587 = vc.u32 %v7581, %v7583
        %v7588 = vadd.s32 %v7584, 1
        %v7589 = vsel %vm7587, %v7588, %v7584
        %v7590 = vadd.s32 %v7585, %v7589
        %v7591 = vadd.s32 %v7590, 536870912
        %v7592 = vshrl.u32 %v7591, 30
        %v7593 = vshll.u32 %v7592, 30
        %v7594 = vsub.s32 %v7590, %v7593
        %vm7595 = vcmp.lt.s32.totalorder %v7594, 0
        %v7596 = vsub.s32 0, %v7594
        %v7597 = vsel %vm7595, %v7596, %v7594
        %v7598 = vclz %v7597
        %v7599 = vsub.s32 %v7598, 2
        %vm7600 = vcmp.gt.s32.totalorder 0, %v7599
        %v7601 = vsel %vm7600, 0, %v7599
        %v7602 = vsub.s32 32, %v7601
        %v7603 = vshll.u32 %v7594, %v7601
        %v7604 = vshrl.u32 %v7586, %v7602
        %v7605 = vor.u32 %v7603, %v7604
        %v7606 = vsub.s32 4294967266, %v7601
        %v7607 = vadd.s32 %v7606, 127
        %v7608 = vshll.u32 %v7607, 23
        %v7609 = vor.u32 4788187, %v7608
        %v7610 = vand.u32 2147483647, %v7609
        %v7612 = vcvt.s32.f32 %v7605
        %v7613 = vmul.f32 %v7612, %v7610
        %v7614 = vxor.u32 %v7613, 2147483648
        %v7615 = vsel %vm7532, %v7614, %v7613
        %v7616 = vsub.s32 4, %v7592
        %v7617 = vsel %vm7532, %v7616, %v7592
        %v7618 = vsel %vm7531, %v6189, %v7615
        %v7619 = vsel %vm7531, 0, %v7617
        %v7620 = vcosq.f32.pop %v7618
        %v7621 = vsinq.f32.pop %v7618
        %vm7622 = vweird.f32 %v6189
        %v7623 = vadd.s32 %v7619, 3
        %v7624 = vand.u32 %v7623, 3
        %vm7625 = vcmp.lt.s32.totalorder %v7624, 2
        %vm7626 = vcmp.eq.s32.totalorder %v7624, 0
        %v7627 = vxor.u32 %v7621, 2147483648
        %v7628 = vsel %vm7626, %v7620, %v7627
        %vm7629 = vcmp.eq.s32.totalorder %v7624, 2
        %v7630 = vxor.u32 %v7620, 2147483648
        %v7631 = vsel %vm7629, %v7630, %v7621
        %v7632 = vsel %vm7625, %v7628, %v7631
        %v7633 = vsel %vm7622, nan, %v7632
        %v7634 = vand.u32 2147483647, %v6191
        %vm7635 = vcmp.le.f32.partialorder %v7634, 0.7853982
        %vm7636 = vcmp.lt.s32.totalorder %v6191, 0
        %v7637 = vand.u32 %v6191, 2139095040
        %v7638 = vshrl.u32 %v7637, 23
        %v7639 = vsub.s32 %v7638, 127
        %v7640 = vand.u32 2147483647, %v6191
        %v7641 = vand.u32 %v7640, 8388607
        %v7642 = vor.u32 %v7641, 8388608
        %v7643 = vsub.s32 0, %v7642
        %v7644 = vadd.s32 %v7639, 1
        %vm7645 = vcmp.gt.s32.totalorder %v7644, 0
        %v7646 = vsel %vm7645, %v7644, 0
        %v7647 = vshrl.u32 %v7646, 5
        %v7648 = vand.u32 %v7646, 31
        %v7649 = vsub.s32 32, %v7648
        %v7650 = vshrl.u32 683565275, %v7649
        %v7651 = vshll.u32 683565275, %v7648
        %v7652 = vshrl.u32 2475754826, %v7649
        %v7653 = vor.u32 %v7651, %v7652
        %v7654 = vshll.u32 2475754826, %v7648
        %v7655 = vshrl.u32 2131351028, %v7649
        %v7656 = vor.u32 %v7654, %v7655
        %v7657 = vshll.u32 2131351028, %v7648
        %v7658 = vshrl.u32 2102212464, %v7649
        %v7659 = vor.u32 %v7657, %v7658
        %v7660 = vshll.u32 2102212464, %v7648
        %v7661 = vshrl.u32 920167782, %v7649
        %v7662 = vor.u32 %v7660, %v7661
        %v7663 = vshll.u32 920167782, %v7648
        %v7664 = vshrl.u32 1326507024, %v7649
        %v7665 = vor.u32 %v7663, %v7664
        %vm7666 = vcmp.lt.s32.totalorder %v7647, 1
        %vm7667 = vcmp.lt.s32.totalorder %v7647, 2
        %vm7668 = vcmp.lt.s32.totalorder %v7647, 3
        %vm7669 = vcmp.lt.s32.totalorder %v7647, 4
        %v7670 = vsel %vm7666, %v7650, %v7653
        %v7671 = vsel %vm7669, %v7659, 2102212464
        %v7672 = vsel %vm7668, %v7656, %v7671
        %v7673 = vsel %vm7667, %v7670, %v7672
        %v7674 = vsel %vm7666, %v7653, %v7656
        %v7675 = vsel %vm7669, %v7662, 920167782
        %v7676 = vsel %vm7668, %v7659, %v7675
        %v7677 = vsel %vm7667, %v7674, %v7676
        %v7678 = vsel %vm7666, %v7656, %v7659
        %v7679 = vsel %vm7669, %v7665, 1326507024
        %v7680 = vsel %vm7668, %v7662, %v7679
        %v7681 = vsel %vm7667, %v7678, %v7680
        %v7682 = vshll.u32 %v7642, 8
        %v7683 = vmul.u32.u64.compose %v7682, %v7681
        %v7684 = vextract.low.u32 %v7683
        %v7685 = vextract.high.u32 %v7683
        %v7686 = vmul.u32.u64.compose %v7682, %v7677
        %v7687 = vextract.low.u32 %v7686
        %v7688 = vextract.high.u32 %v7686
        %v7689 = vmul.u32 %v7682, %v7673
        %v7690 = vadd.s32 %v7685, %v7687
        %vm7691 = vc.u32 %v7685, %v7687
        %v7692 = vadd.s32 %v7688, 1
        %v7693 = vsel %vm7691, %v7692, %v7688
        %v7694 = vadd.s32 %v7689, %v7693
        %v7695 = vadd.s32 %v7694, 536870912
        %v7696 = vshrl.u32 %v7695, 30
        %v7697 = vshll.u32 %v7696, 30
        %v7698 = vsub.s32 %v7694, %v7697
        %vm7699 = vcmp.lt.s32.totalorder %v7698, 0
        %v7700 = vsub.s32 0, %v7698
        %v7701 = vsel %vm7699, %v7700, %v7698
        %v7702 = vclz %v7701
        %v7703 = vsub.s32 %v7702, 2
        %vm7704 = vcmp.gt.s32.totalorder 0, %v7703
        %v7705 = vsel %vm7704, 0, %v7703
        %v7706 = vsub.s32 32, %v7705
        %v7707 = vshll.u32 %v7698, %v7705
        %v7708 = vshrl.u32 %v7690, %v7706
        %v7709 = vor.u32 %v7707, %v7708
        %v7710 = vsub.s32 4294967266, %v7705
        %v7711 = vadd.s32 %v7710, 127
        %v7712 = vshll.u32 %v7711, 23
        %v7713 = vor.u32 4788187, %v7712
        %v7714 = vand.u32 2147483647, %v7713
        %v7716 = vcvt.s32.f32 %v7709
        %v7717 = vmul.f32 %v7716, %v7714
        %v7718 = vxor.u32 %v7717, 2147483648
        %v7719 = vsel %vm7636, %v7718, %v7717
        %v7720 = vsub.s32 4, %v7696
        %v7721 = vsel %vm7636, %v7720, %v7696
        %v7722 = vsel %vm7635, %v6191, %v7719
        %v7723 = vsel %vm7635, 0, %v7721
        %v7724 = vcosq.f32.pop %v7722
        %v7725 = vsinq.f32.pop %v7722
        %vm7726 = vweird.f32 %v6191
        %v7727 = vadd.s32 %v7723, 3
        %v7728 = vand.u32 %v7727, 3
        %vm7729 = vcmp.lt.s32.totalorder %v7728, 2
        %vm7730 = vcmp.eq.s32.totalorder %v7728, 0
        %v7731 = vxor.u32 %v7725, 2147483648
        %v7732 = vsel %vm7730, %v7724, %v7731
        %vm7733 = vcmp.eq.s32.totalorder %v7728, 2
        %v7734 = vxor.u32 %v7724, 2147483648
        %v7735 = vsel %vm7733, %v7734, %v7725
        %v7736 = vsel %vm7729, %v7732, %v7735
        %v7737 = vsel %vm7726, nan, %v7736
        %v7738 = vand.u32 2147483647, %v6278
        %vm7739 = vcmp.le.f32.partialorder %v7738, 0.7853982
        %vm7740 = vcmp.lt.s32.totalorder %v6278, 0
        %v7741 = vand.u32 %v6278, 2139095040
        %v7742 = vshrl.u32 %v7741, 23
        %v7743 = vsub.s32 %v7742, 127
        %v7744 = vand.u32 2147483647, %v6278
        %v7745 = vand.u32 %v7744, 8388607
        %v7746 = vor.u32 %v7745, 8388608
        %v7747 = vsub.s32 0, %v7746
        %v7748 = vadd.s32 %v7743, 1
        %vm7749 = vcmp.gt.s32.totalorder %v7748, 0
        %v7750 = vsel %vm7749, %v7748, 0
        %v7751 = vshrl.u32 %v7750, 5
        %v7752 = vand.u32 %v7750, 31
        %v7753 = vsub.s32 32, %v7752
        %v7754 = vshrl.u32 683565275, %v7753
        %v7755 = vshll.u32 683565275, %v7752
        %v7756 = vshrl.u32 2475754826, %v7753
        %v7757 = vor.u32 %v7755, %v7756
        %v7758 = vshll.u32 2475754826, %v7752
        %v7759 = vshrl.u32 2131351028, %v7753
        %v7760 = vor.u32 %v7758, %v7759
        %v7761 = vshll.u32 2131351028, %v7752
        %v7762 = vshrl.u32 2102212464, %v7753
        %v7763 = vor.u32 %v7761, %v7762
        %v7764 = vshll.u32 2102212464, %v7752
        %v7765 = vshrl.u32 920167782, %v7753
        %v7766 = vor.u32 %v7764, %v7765
        %v7767 = vshll.u32 920167782, %v7752
        %v7768 = vshrl.u32 1326507024, %v7753
        %v7769 = vor.u32 %v7767, %v7768
        %vm7770 = vcmp.lt.s32.totalorder %v7751, 1
        %vm7771 = vcmp.lt.s32.totalorder %v7751, 2
        %vm7772 = vcmp.lt.s32.totalorder %v7751, 3
        %vm7773 = vcmp.lt.s32.totalorder %v7751, 4
        %v7774 = vsel %vm7770, %v7754, %v7757
        %v7775 = vsel %vm7773, %v7763, 2102212464
        %v7776 = vsel %vm7772, %v7760, %v7775
        %v7777 = vsel %vm7771, %v7774, %v7776
        %v7778 = vsel %vm7770, %v7757, %v7760
        %v7779 = vsel %vm7773, %v7766, 920167782
        %v7780 = vsel %vm7772, %v7763, %v7779
        %v7781 = vsel %vm7771, %v7778, %v7780
        %v7782 = vsel %vm7770, %v7760, %v7763
        %v7783 = vsel %vm7773, %v7769, 1326507024
        %v7784 = vsel %vm7772, %v7766, %v7783
        %v7785 = vsel %vm7771, %v7782, %v7784
        %v7786 = vshll.u32 %v7746, 8
        %v7787 = vmul.u32.u64.compose %v7786, %v7785
        %v7788 = vextract.low.u32 %v7787
        %v7789 = vextract.high.u32 %v7787
        %v7790 = vmul.u32.u64.compose %v7786, %v7781
        %v7791 = vextract.low.u32 %v7790
        %v7792 = vextract.high.u32 %v7790
        %v7793 = vmul.u32 %v7786, %v7777
        %v7794 = vadd.s32 %v7789, %v7791
        %vm7795 = vc.u32 %v7789, %v7791
        %v7796 = vadd.s32 %v7792, 1
        %v7797 = vsel %vm7795, %v7796, %v7792
        %v7798 = vadd.s32 %v7793, %v7797
        %v7799 = vadd.s32 %v7798, 536870912
        %v7800 = vshrl.u32 %v7799, 30
        %v7801 = vshll.u32 %v7800, 30
        %v7802 = vsub.s32 %v7798, %v7801
        %vm7803 = vcmp.lt.s32.totalorder %v7802, 0
        %v7804 = vsub.s32 0, %v7802
        %v7805 = vsel %vm7803, %v7804, %v7802
        %v7806 = vclz %v7805
        %v7807 = vsub.s32 %v7806, 2
        %vm7808 = vcmp.gt.s32.totalorder 0, %v7807
        %v7809 = vsel %vm7808, 0, %v7807
        %v7810 = vsub.s32 32, %v7809
        %v7811 = vshll.u32 %v7802, %v7809
        %v7812 = vshrl.u32 %v7794, %v7810
        %v7813 = vor.u32 %v7811, %v7812
        %v7814 = vsub.s32 4294967266, %v7809
        %v7815 = vadd.s32 %v7814, 127
        %v7816 = vshll.u32 %v7815, 23
        %v7817 = vor.u32 4788187, %v7816
        %v7818 = vand.u32 2147483647, %v7817
        %v7820 = vcvt.s32.f32 %v7813
        %v7821 = vmul.f32 %v7820, %v7818
        %v7822 = vxor.u32 %v7821, 2147483648
        %v7823 = vsel %vm7740, %v7822, %v7821
        %v7824 = vsub.s32 4, %v7800
        %v7825 = vsel %vm7740, %v7824, %v7800
        %v7826 = vsel %vm7739, %v6278, %v7823
        %v7827 = vsel %vm7739, 0, %v7825
        %v7828 = vcosq.f32.pop %v7826
        %v7829 = vsinq.f32.pop %v7826
        %vm7830 = vweird.f32 %v6278
        %v7831 = vadd.s32 %v7827, 3
        %v7832 = vand.u32 %v7831, 3
        %vm7833 = vcmp.lt.s32.totalorder %v7832, 2
        %vm7834 = vcmp.eq.s32.totalorder %v7832, 0
        %v7835 = vxor.u32 %v7829, 2147483648
        %v7836 = vsel %vm7834, %v7828, %v7835
        %vm7837 = vcmp.eq.s32.totalorder %v7832, 2
        %v7838 = vxor.u32 %v7828, 2147483648
        %v7839 = vsel %vm7837, %v7838, %v7829
        %v7840 = vsel %vm7833, %v7836, %v7839
        %v7841 = vsel %vm7830, nan, %v7840
        %v7842 = vand.u32 2147483647, %v6280
        %vm7843 = vcmp.le.f32.partialorder %v7842, 0.7853982
        %vm7844 = vcmp.lt.s32.totalorder %v6280, 0
        %v7845 = vand.u32 %v6280, 2139095040
        %v7846 = vshrl.u32 %v7845, 23
        %v7847 = vsub.s32 %v7846, 127
        %v7848 = vand.u32 2147483647, %v6280
        %v7849 = vand.u32 %v7848, 8388607
        %v7850 = vor.u32 %v7849, 8388608
        %v7851 = vsub.s32 0, %v7850
        %v7852 = vadd.s32 %v7847, 1
        %vm7853 = vcmp.gt.s32.totalorder %v7852, 0
        %v7854 = vsel %vm7853, %v7852, 0
        %v7855 = vshrl.u32 %v7854, 5
        %v7856 = vand.u32 %v7854, 31
        %v7857 = vsub.s32 32, %v7856
        %v7858 = vshrl.u32 683565275, %v7857
        %v7859 = vshll.u32 683565275, %v7856
        %v7860 = vshrl.u32 2475754826, %v7857
        %v7861 = vor.u32 %v7859, %v7860
        %v7862 = vshll.u32 2475754826, %v7856
        %v7863 = vshrl.u32 2131351028, %v7857
        %v7864 = vor.u32 %v7862, %v7863
        %v7865 = vshll.u32 2131351028, %v7856
        %v7866 = vshrl.u32 2102212464, %v7857
        %v7867 = vor.u32 %v7865, %v7866
        %v7868 = vshll.u32 2102212464, %v7856
        %v7869 = vshrl.u32 920167782, %v7857
        %v7870 = vor.u32 %v7868, %v7869
        %v7871 = vshll.u32 920167782, %v7856
        %v7872 = vshrl.u32 1326507024, %v7857
        %v7873 = vor.u32 %v7871, %v7872
        %vm7874 = vcmp.lt.s32.totalorder %v7855, 1
        %vm7875 = vcmp.lt.s32.totalorder %v7855, 2
        %vm7876 = vcmp.lt.s32.totalorder %v7855, 3
        %vm7877 = vcmp.lt.s32.totalorder %v7855, 4
        %v7878 = vsel %vm7874, %v7858, %v7861
        %v7879 = vsel %vm7877, %v7867, 2102212464
        %v7880 = vsel %vm7876, %v7864, %v7879
        %v7881 = vsel %vm7875, %v7878, %v7880
        %v7882 = vsel %vm7874, %v7861, %v7864
        %v7883 = vsel %vm7877, %v7870, 920167782
        %v7884 = vsel %vm7876, %v7867, %v7883
        %v7885 = vsel %vm7875, %v7882, %v7884
        %v7886 = vsel %vm7874, %v7864, %v7867
        %v7887 = vsel %vm7877, %v7873, 1326507024
        %v7888 = vsel %vm7876, %v7870, %v7887
        %v7889 = vsel %vm7875, %v7886, %v7888
        %v7890 = vshll.u32 %v7850, 8
        %v7891 = vmul.u32.u64.compose %v7890, %v7889
        %v7892 = vextract.low.u32 %v7891
        %v7893 = vextract.high.u32 %v7891
        %v7894 = vmul.u32.u64.compose %v7890, %v7885
        %v7895 = vextract.low.u32 %v7894
        %v7896 = vextract.high.u32 %v7894
        %v7897 = vmul.u32 %v7890, %v7881
        %v7898 = vadd.s32 %v7893, %v7895
        %vm7899 = vc.u32 %v7893, %v7895
        %v7900 = vadd.s32 %v7896, 1
        %v7901 = vsel %vm7899, %v7900, %v7896
        %v7902 = vadd.s32 %v7897, %v7901
        %v7903 = vadd.s32 %v7902, 536870912
        %v7904 = vshrl.u32 %v7903, 30
        %v7905 = vshll.u32 %v7904, 30
        %v7906 = vsub.s32 %v7902, %v7905
        %vm7907 = vcmp.lt.s32.totalorder %v7906, 0
        %v7908 = vsub.s32 0, %v7906
        %v7909 = vsel %vm7907, %v7908, %v7906
        %v7910 = vclz %v7909
        %v7911 = vsub.s32 %v7910, 2
        %vm7912 = vcmp.gt.s32.totalorder 0, %v7911
        %v7913 = vsel %vm7912, 0, %v7911
        %v7914 = vsub.s32 32, %v7913
        %v7915 = vshll.u32 %v7906, %v7913
        %v7916 = vshrl.u32 %v7898, %v7914
        %v7917 = vor.u32 %v7915, %v7916
        %v7918 = vsub.s32 4294967266, %v7913
        %v7919 = vadd.s32 %v7918, 127
        %v7920 = vshll.u32 %v7919, 23
        %v7921 = vor.u32 4788187, %v7920
        %v7922 = vand.u32 2147483647, %v7921
        %v7924 = vcvt.s32.f32 %v7917
        %v7925 = vmul.f32 %v7924, %v7922
        %v7926 = vxor.u32 %v7925, 2147483648
        %v7927 = vsel %vm7844, %v7926, %v7925
        %v7928 = vsub.s32 4, %v7904
        %v7929 = vsel %vm7844, %v7928, %v7904
        %v7930 = vsel %vm7843, %v6280, %v7927
        %v7931 = vsel %vm7843, 0, %v7929
        %v7932 = vcosq.f32.pop %v7930
        %v7933 = vsinq.f32.pop %v7930
        %vm7934 = vweird.f32 %v6280
        %v7935 = vadd.s32 %v7931, 3
        %v7936 = vand.u32 %v7935, 3
        %vm7937 = vcmp.lt.s32.totalorder %v7936, 2
        %vm7938 = vcmp.eq.s32.totalorder %v7936, 0
        %v7939 = vxor.u32 %v7933, 2147483648
        %v7940 = vsel %vm7938, %v7932, %v7939
        %vm7941 = vcmp.eq.s32.totalorder %v7936, 2
        %v7942 = vxor.u32 %v7932, 2147483648
        %v7943 = vsel %vm7941, %v7942, %v7933
        %v7944 = vsel %vm7937, %v7940, %v7943
        %v7945 = vsel %vm7934, nan, %v7944
        %v7946 = vld [vmem:[%s9] sm:$0x7]
        %v7947 = vld [vmem:[%s10] sm:$0x7]
        %7949 = vset.pattern.permute.xlu0 0
        %7950 = vperm.xlu0 %7949, %v7947
        %v7951 = vpop.permute.xlu0 %7950
        %v7954 = vsel %vm2327, %v7946, 0
        %7956 = vmatprep.subr.mxu0 0.0
        %7957 = vmatpush1.msra.mxu0 0.0
        %7958 = vmatprep.subr.mxu0 0.0
        %7959 = vmatpush1.msra.mxu0 0.0
        %7960 = vmatprep.subr.mxu0 0.0
        %7961 = vmatpush1.msra.mxu0 0.0
        %7962 = vmatprep.subr.mxu0 0.0
        %7963 = vmatpush1.msra.mxu0 0.0
        %7964 = vmatprep.subr.mxu0 0.0
        %7965 = vmatpush1.msra.mxu0 0.0
        %7966 = vmatprep.subr.mxu0 0.0
        %7967 = vmatpush1.msra.mxu0 0.0
        %7968 = vmatprep.subr.mxu0 0.0
        %7969 = vmatpush1.msra.mxu0 0.0
        %7970 = vmatprep.subr.mxu0 0.0
        %7971 = vmatpush1.msra.mxu0 0.0
        %7972 = vmatprep.subr.mxu0 0.0
        %7973 = vmatpush1.msra.mxu0 0.0
        %7974 = vmatprep.subr.mxu0 0.0
        %7975 = vmatpush1.msra.mxu0 0.0
        %7976 = vmatprep.subr.mxu0 0.0
        %7977 = vmatpush1.msra.mxu0 0.0
        %7978 = vmatprep.subr.mxu0 0.0
        %7979 = vmatpush1.msra.mxu0 0.0
        %7980 = vmatprep.subr.mxu0 %v7737
        %7981 = vmatpush1.msra.mxu0 %v7633
        %7982 = vmatprep.subr.mxu0 %v7321
        %7983 = vmatpush1.msra.mxu0 %v7217
        %7984 = vmatprep.subr.mxu0 %v6905
        %7985 = vmatpush1.msra.mxu0 %v6801
        %7986 = vmatprep.subr.mxu0 %v6489
        %7987 = vmatpush1.msra.mxu0 %v6385
        %7988 = vmatprep.subr.mxu0 0.0
        %7989 = vmatpush2.msra.mxu0 0.0
        %7990 = vmatprep.subr.mxu0 0.0
        %7991 = vmatpush2.msra.mxu0 0.0
        %7992 = vmatprep.subr.mxu0 0.0
        %7993 = vmatpush2.msra.mxu0 0.0
        %7994 = vmatprep.subr.mxu0 0.0
        %7995 = vmatpush2.msra.mxu0 0.0
        %7996 = vmatprep.subr.mxu0 0.0
        %7997 = vmatpush2.msra.mxu0 0.0
        %7998 = vmatprep.subr.mxu0 0.0
        %7999 = vmatpush2.msra.mxu0 0.0
        %8000 = vmatprep.subr.mxu0 0.0
        %8001 = vmatpush2.msra.mxu0 0.0
        %8002 = vmatprep.subr.mxu0 0.0
        %8003 = vmatpush2.msra.mxu0 0.0
        %8004 = vmatprep.subr.mxu0 0.0
        %8005 = vmatpush2.msra.mxu0 0.0
        %8006 = vmatprep.subr.mxu0 0.0
        %8007 = vmatpush2.msra.mxu0 0.0
        %8008 = vmatprep.subr.mxu0 0.0
        %8009 = vmatpush2.msra.mxu0 0.0
        %8010 = vmatprep.subr.mxu0 0.0
        %8011 = vmatpush2.msra.mxu0 0.0
        %8012 = vmatprep.subr.mxu0 0.0
        %8013 = vmatpush2.msra.mxu0 0.0
        %8014 = vmatprep.subr.mxu0 0.0
        %8015 = vmatpush2.msra.mxu0 0.0
        %8016 = vmatprep.subr.mxu0 0.0
        %8017 = vmatpush2.msra.mxu0 0.0
        %8018 = vmatprep.subr.mxu0 0.0
        %8019 = vmatpush2.msra.mxu0 0.0
        %8020 = vmatprep.mubr.f32.mxu0 0.0
        %8021 = vmatmul.mubr.f32.gmra.mxu0 %v7954
        %v8022 = vpop.f32.mrf.mxu0
        %v8023 = vadd.f32 %v7951, %v8022
        %v8024 = vpop.f32.mrf.mxu0
        %v8025 = vadd.f32 %v7951, %v8024
        %8026 = vdwg.mxu0
        %8027 = vmatprep.subr.mxu0 0.0
        %8028 = vmatpush1.msra.mxu0 0.0
        %8029 = vmatprep.subr.mxu0 0.0
        %8030 = vmatpush1.msra.mxu0 0.0
        %8031 = vmatprep.subr.mxu0 0.0
        %8032 = vmatpush1.msra.mxu0 0.0
        %8033 = vmatprep.subr.mxu0 0.0
        %8034 = vmatpush1.msra.mxu0 0.0
        %8035 = vmatprep.subr.mxu0 0.0
        %8036 = vmatpush1.msra.mxu0 0.0
        %8037 = vmatprep.subr.mxu0 0.0
        %8038 = vmatpush1.msra.mxu0 0.0
        %8039 = vmatprep.subr.mxu0 0.0
        %8040 = vmatpush1.msra.mxu0 0.0
        %8041 = vmatprep.subr.mxu0 0.0
        %8042 = vmatpush1.msra.mxu0 0.0
        %8043 = vmatprep.subr.mxu0 0.0
        %8044 = vmatpush1.msra.mxu0 0.0
        %8045 = vmatprep.subr.mxu0 0.0
        %8046 = vmatpush1.msra.mxu0 0.0
        %8047 = vmatprep.subr.mxu0 0.0
        %8048 = vmatpush1.msra.mxu0 0.0
        %8049 = vmatprep.subr.mxu0 0.0
        %8050 = vmatpush1.msra.mxu0 0.0
        %8051 = vmatprep.subr.mxu0 %v7945
        %8052 = vmatpush1.msra.mxu0 %v7841
        %8053 = vmatprep.subr.mxu0 %v7529
        %8054 = vmatpush1.msra.mxu0 %v7425
        %8055 = vmatprep.subr.mxu0 %v7113
        %8056 = vmatpush1.msra.mxu0 %v7009
        %8057 = vmatprep.subr.mxu0 %v6697
        %8058 = vmatpush1.msra.mxu0 %v6593
        %8059 = vmatprep.subr.mxu0 0.0
        %8060 = vmatpush2.msra.mxu0 0.0
        %8061 = vmatprep.subr.mxu0 0.0
        %8062 = vmatpush2.msra.mxu0 0.0
        %8063 = vmatprep.subr.mxu0 0.0
        %8064 = vmatpush2.msra.mxu0 0.0
        %8065 = vmatprep.subr.mxu0 0.0
        %8066 = vmatpush2.msra.mxu0 0.0
        %8067 = vmatprep.subr.mxu0 0.0
        %8068 = vmatpush2.msra.mxu0 0.0
        %8069 = vmatprep.subr.mxu0 0.0
        %8070 = vmatpush2.msra.mxu0 0.0
        %8071 = vmatprep.subr.mxu0 0.0
        %8072 = vmatpush2.msra.mxu0 0.0
        %8073 = vmatprep.subr.mxu0 0.0
        %8074 = vmatpush2.msra.mxu0 0.0
        %8075 = vmatprep.subr.mxu0 0.0
        %8076 = vmatpush2.msra.mxu0 0.0
        %8077 = vmatprep.subr.mxu0 0.0
        %8078 = vmatpush2.msra.mxu0 0.0
        %8079 = vmatprep.subr.mxu0 0.0
        %8080 = vmatpush2.msra.mxu0 0.0
        %8081 = vmatprep.subr.mxu0 0.0
        %8082 = vmatpush2.msra.mxu0 0.0
        %8083 = vmatprep.subr.mxu0 0.0
        %8084 = vmatpush2.msra.mxu0 0.0
        %8085 = vmatprep.subr.mxu0 0.0
        %8086 = vmatpush2.msra.mxu0 0.0
        %8087 = vmatprep.subr.mxu0 0.0
        %8088 = vmatpush2.msra.mxu0 0.0
        %8089 = vmatprep.subr.mxu0 0.0
        %8090 = vmatpush2.msra.mxu0 0.0
        %8091 = vmatprep.mubr.f32.mxu0 0.0
        %8092 = vmatmul.mubr.f32.gmra.mxu0 %v7954
        %v8093 = vpop.f32.mrf.mxu0
        %v8094 = vadd.f32 %v7951, %v8093
        %v8095 = vpop.f32.mrf.mxu0
        %v8096 = vadd.f32 %v7951, %v8095
        %8097 = vdwg.mxu0
        %v8102 = vcombine.low %v8023, %v8025
        %v8103 = vcombine.low %v8094, %v8096
        %8106 = vst [vmem:[%s380] sm:$0x77] %v8102
        %8107 = vst [vmem:[%s380 + $0x8] sm:$0x77] %v8103
        %s8108 = sand.u32 %s269, 1
        %s8109 = scalar_lea.sflag [#allocation3], %s8108
        %s8110 = sand.u32 %s269, 1
        %s8111 = smul.addr %s8110, 16
        %s8112 = scalar_lea.vmem [#allocation2], %s8111
        // Predicated region
        $region65: #{tpu_custom_call.1} parent=63 // pred_check
          %p8113 = pneg %p279
        $region66: #{tpu_custom_call.1} parent=63 // pred_check_branch
          %8115 = sbr.rel (%p8113) target = $region68
        $region67: #{tpu_custom_call.1} parent=63 // pred_region
          %s8116 = smul.u32 4, %s25
          %s8118 = ssub.s32 256, 256
          %8119 = vsyncadd %s8109, %s8118
          %s8120 = smul.addr %s8116, 64
          %s8121 = scalar_lea.hbm %s11, %s8120
          %s8123 = sshll.u32 %s8112, 4
          %s8124 = int_to_ptr.vmem [resolvable:$true] %s8123
          %8126 = dma.vmem_to_hbm [thread:$0]  %s8124, 256, %s8121, %s8109
        $region68: #{tpu_custom_call.1} parent=63 // pred_fallthru
          _
      $region64: #{tpu_custom_call.1} parent=5 // pred_fallthru
        _
      %p8127 = scmp.le.s32.totalorder 2, %s20
      // Predicated region
      $region69: #{tpu_custom_call.1} parent=5 // pred_check
        %p8128 = pneg %p8127
      $region70: #{tpu_custom_call.1} parent=5 // pred_check_branch
        %8130 = sbr.rel (%p8128) target = $region72
      $region71: #{tpu_custom_call.1} parent=5 // pred_region
        %s8131 = ssub.s32 %s20, 2
        // Predicated region
        $region73: #{tpu_custom_call.1} parent=71 // pred_check
          %p8132 = pneg %p285
        $region74: #{tpu_custom_call.1} parent=71 // pred_check_branch
          %8134 = sbr.rel (%p8132) target = $region76
        $region75: #{tpu_custom_call.1} parent=71 // pred_region
          %s8135 = sand.u32 %s270, 1
          %s8136 = scalar_lea.sflag [#allocation3], %s8135
          %s8137 = sand.u32 %s270, 1
          %s8138 = smul.addr %s8137, 16
          %s8139 = scalar_lea.vmem [#allocation2], %s8138
          %8140 = dma.done %s8136, 256
        $region76: #{tpu_custom_call.1} parent=71 // pred_fallthru
          _
      $region72: #{tpu_custom_call.1} parent=5 // pred_fallthru
        _
    $region6: #{tpu_custom_call.1} parent=1 // loop_footer
      %s24 = sadd.s32 1, %s20
    $region7: #{tpu_custom_call.1} parent=1 // loop_footer_branch
      %19 = sbr.rel target = $region3
    $region8: #{tpu_custom_call.1} parent=1 // loop_exit
      _
    %8141 = vsyncpa [#allocation3], 1
    %s8142 = scalar_lea.sflag [#allocation3], 1
    %8143 = vsyncpa %s8142, 1

</llo_original>
